<compile_context>
chip_gen: v7x
topology: tpu7x:2x2x1
jax: 0.10.0
libtpu: 0.0.40
codegen_flags: <defaults>
</compile_context>

<pallas_src>
import jax
import jax.numpy as jnp
from jax.experimental import pallas as pl
from jax.experimental.pallas import tpu as pltpu

IN_FEATURES = 256 * 66 * 2   # 33792
HIDDEN = 64
OUTPUT_DIM = 1
NEG_SLOPE = 0.1


def _leaky_relu(x, slope=NEG_SLOPE):
    return jnp.where(x > 0, x, slope * x)


def regressor_kernel(x_ref, w1_ref, b1_ref, w2_ref, b2_ref, w3_ref, b3_ref,
                     o_ref, acc_ref):
    # grid = (batch_tiles, k_tiles); reduction axis is last.
    k = pl.program_id(1)

    @pl.when(k == 0)
    def _():
        acc_ref[...] = jnp.zeros_like(acc_ref)

    # Partial product of the big (bt, tk) x (tk, 64) matmul for this K tile.
    # x/W1 tiles may be bf16; accumulation stays f32 on the MXU.
    acc_ref[...] += jnp.dot(x_ref[...], w1_ref[...],
                            preferred_element_type=jnp.float32)

    @pl.when(k == pl.num_programs(1) - 1)
    def _():
        h1 = _leaky_relu(acc_ref[...] + b1_ref[...])                 # (bt, 64)
        h2 = _leaky_relu(jnp.dot(h1, w2_ref[...],
                                 preferred_element_type=jnp.float32)
                         + b2_ref[...])                              # (bt, 64)
        r = jnp.dot(h2, w3_ref[...],
                    preferred_element_type=jnp.float32) + b3_ref[...]
        o_ref[...] = r.astype(o_ref.dtype)


def _pick_batch_tile(B, cap=256):
    """Largest divisor of B that is <= cap (keeps VMEM bounded for big B)."""
    if B <= cap:
        return B
    for bt in range(cap, 0, -1):
        if B % bt == 0:
            return bt
    return B


def regressor_forward(x, w1, b1, w2, b2, w3, b3, *, tk=16896, bt=None,
                      stream_dtype=jnp.bfloat16):
    B, K = x.shape
    assert K == IN_FEATURES and K % tk == 0 and tk % 128 == 0
    kt = K // tk

    # Batch tiling: full batch for small B; tile (and shard across cores) for
    # large B so the x block does not blow VMEM.
    if bt is None:
        bt = _pick_batch_tile(B)
    assert B % bt == 0
    nb = B // bt

    # Stream the big operands in bf16 (halves HBM bytes); keep epilogue f32.
    if stream_dtype is not None:
        x_s = x.astype(stream_dtype)
        w1_s = w1.astype(stream_dtype)
    else:
        x_s, w1_s = x, w1
    sbytes = jnp.dtype(x_s.dtype).itemsize

    # VMEM budget: the (tk, 64) W1 block is lane-padded to 128 lanes; x rows
    # are sublane-padded (8 for f32, 16 for bf16).  Both double-buffered by
    # the pipeline; 4 MiB headroom covers the small resident epilogue weights,
    # accumulator scratch and output tile.
    w1_buf = tk * 128 * sbytes
    x_buf = max(bt, 32 // sbytes) * tk * sbytes
    vmem_limit = int(min(max(2 * (w1_buf + x_buf) + (4 << 20), 16 << 20),
                         56 << 20))

    flops = 2 * B * (K * HIDDEN + HIDDEN * HIDDEN + HIDDEN * OUTPUT_DIM)
    bytes_accessed = ((K * HIDDEN + B * K) * sbytes
                      + (HIDDEN * HIDDEN + HIDDEN * OUTPUT_DIM
                         + 2 * HIDDEN + OUTPUT_DIM + B * OUTPUT_DIM) * 4)

    out = pl.pallas_call(
        regressor_kernel,
        out_shape=jax.ShapeDtypeStruct((B, OUTPUT_DIM), jnp.float32),
        grid_spec=pltpu.PrefetchScalarGridSpec(
            num_scalar_prefetch=0,
            grid=(nb, kt),
            in_specs=[
                pl.BlockSpec((bt, tk), lambda b, k: (b, k)),              # x
                pl.BlockSpec((tk, HIDDEN), lambda b, k: (k, 0)),          # W1
                pl.BlockSpec((1, HIDDEN), lambda b, k: (0, 0)),           # b1
                pl.BlockSpec((HIDDEN, HIDDEN), lambda b, k: (0, 0)),      # W2
                pl.BlockSpec((1, HIDDEN), lambda b, k: (0, 0)),           # b2
                pl.BlockSpec((HIDDEN, OUTPUT_DIM), lambda b, k: (0, 0)),  # W3
                pl.BlockSpec((1, OUTPUT_DIM), lambda b, k: (0, 0)),       # b3
            ],
            out_specs=pl.BlockSpec((bt, OUTPUT_DIM), lambda b, k: (b, 0)),
            scratch_shapes=[pltpu.VMEM((bt, HIDDEN), jnp.float32)],
        ),
        compiler_params=pltpu.CompilerParams(
            dimension_semantics=("parallel", "arbitrary"),
            vmem_limit_bytes=vmem_limit),
        cost_estimate=pl.CostEstimate(
            flops=flops, transcendentals=0, bytes_accessed=bytes_accessed),
    )(x_s, w1_s, b1, w2, b2, w3, b3)
    # Matches PyTorch's r.view(-1)
    return out.reshape(-1)


def init_params(key):
    # Deterministic synthetic init (PyTorch-like uniform(-1/sqrt(fan_in), ...)).
    k1, k2, k3, k4, k5, k6 = jax.random.split(key, 6)
    s1 = 1.0 / jnp.sqrt(IN_FEATURES)
    s2 = 1.0 / jnp.sqrt(HIDDEN)
    w1 = jax.random.uniform(k1, (IN_FEATURES, HIDDEN), jnp.float32, -s1, s1)
    b1 = jax.random.uniform(k2, (1, HIDDEN), jnp.float32, -s1, s1)
    w2 = jax.random.uniform(k3, (HIDDEN, HIDDEN), jnp.float32, -s2, s2)
    b2 = jax.random.uniform(k4, (1, HIDDEN), jnp.float32, -s2, s2)
    w3 = jax.random.uniform(k5, (HIDDEN, OUTPUT_DIM), jnp.float32, -s2, s2)
    b3 = jax.random.uniform(k6, (1, OUTPUT_DIM), jnp.float32, -s2, s2)
    return w1, b1, w2, b2, w3, b3


def reference_forward(x, w1, b1, w2, b2, w3, b3):
    h1 = _leaky_relu(x @ w1 + b1)
    h2 = _leaky_relu(h1 @ w2 + b2)
    return (h2 @ w3 + b3).reshape(-1)


def reference_forward_bf16_stream(x, w1, b1, w2, b2, w3, b3):
    # Matches the kernel's streaming numerics: bf16 x/W1, f32 accumulation.
    h1 = jnp.dot(x.astype(jnp.bfloat16), w1.astype(jnp.bfloat16),
                 preferred_element_type=jnp.float32) + b1
    h1 = _leaky_relu(h1)
    h2 = _leaky_relu(h1 @ w2 + b2)
    return (h2 @ w3 + b3).reshape(-1)


if __name__ == "__main__":
    key = jax.random.PRNGKey(0)
    kx, kp = jax.random.split(key)

    B = 2
    x = jax.random.normal(kx, (B, IN_FEATURES), jnp.float32)
    params = init_params(kp)

    out = regressor_forward(x, *params)
    out = jax.block_until_ready(out)
    assert out.shape == (B * OUTPUT_DIM,)

    # Relaxed check vs the pure-f32 reference (bf16 streaming changes numerics
    # slightly; accumulation is still f32).
    ref_f32 = reference_forward(x, *params)
    assert jnp.allclose(out, ref_f32, rtol=5e-2, atol=5e-2), (out, ref_f32)

    # Tight check vs a reference that mirrors the kernel's bf16 streaming.
    ref_bf16 = reference_forward_bf16_stream(x, *params)
    assert jnp.allclose(out, ref_bf16, rtol=2e-3, atol=2e-3), (out, ref_bf16)

    print("KERNEL_OK")
</pallas_src>

<mosaic_0001>
module attributes {stable_mosaic.version = 11 : i64} {
  func.func @regressor_kernel(%arg0: i32, %arg1: i32, %arg2: memref<2x16896xbf16, #tpu.memory_space<vmem>>, %arg3: memref<16896x64xbf16, #tpu.memory_space<vmem>>, %arg4: memref<1x64xf32, #tpu.memory_space<vmem>>, %arg5: memref<64x64xf32, #tpu.memory_space<vmem>>, %arg6: memref<1x64xf32, #tpu.memory_space<vmem>>, %arg7: memref<64x1xf32, #tpu.memory_space<vmem>>, %arg8: memref<1x1xf32, #tpu.memory_space<vmem>>, %arg9: memref<2x1xf32, #tpu.memory_space<vmem>>, %arg10: memref<2x64xf32, #tpu.memory_space<vmem>>) attributes {dimension_semantics = [#tpu.dimension_semantics<parallel>, #tpu.dimension_semantics<arbitrary>], iteration_bounds = array<i64: 1, 2>, scalar_prefetch = 0 : i64, scratch_operands = 1 : i64, tpu.core_type = #tpu.core_type<tc>, window_params = [{transform_indices = @transform_0, window_bounds = array<i64: 2, 16896>}, {transform_indices = @transform_1, window_bounds = array<i64: 16896, 64>}, {pipeline_mode = #tpu.pipeline_mode<synchronous>, transform_indices = @transform_2, window_bounds = array<i64: 1, 64>}, {pipeline_mode = #tpu.pipeline_mode<synchronous>, transform_indices = @transform_3, window_bounds = array<i64: 64, 64>}, {pipeline_mode = #tpu.pipeline_mode<synchronous>, transform_indices = @transform_4, window_bounds = array<i64: 1, 64>}, {pipeline_mode = #tpu.pipeline_mode<synchronous>, transform_indices = @transform_5, window_bounds = array<i64: 64, 1>}, {pipeline_mode = #tpu.pipeline_mode<synchronous>, transform_indices = @transform_6, window_bounds = array<i64: 1, 1>}, {transform_indices = @transform_7, window_bounds = array<i64: 2, 1>}]} {
    %c0_i32 = arith.constant 0 : i32
    %0 = arith.cmpi eq, %arg1, %c0_i32 : i32
    %1 = arith.extui %0 : i1 to i32
    %c0_i32_0 = arith.constant 0 : i32
    %2 = arith.cmpi ne, %1, %c0_i32_0 : i32
    scf.if %2 {
      %cst_9 = arith.constant 0.000000e+00 : f32
      %12 = vector.broadcast %cst_9 : f32 to vector<2x64xf32>
      %c0_10 = arith.constant 0 : index
      %c0_11 = arith.constant 0 : index
      %13 = vector.load %arg10[%c0_10, %c0_11] : memref<2x64xf32, #tpu.memory_space<vmem>>, vector<2x64xf32>
      tpu.vector_store %arg10[%c0_10, %c0_11], %12 {strides = array<i32>} : memref<2x64xf32, #tpu.memory_space<vmem>>, vector<2x64xf32>,
    } else {
    }
    %c0 = arith.constant 0 : index
    %c0_1 = arith.constant 0 : index
    %3 = vector.load %arg10[%c0, %c0_1] : memref<2x64xf32, #tpu.memory_space<vmem>>, vector<2x64xf32>
    %c0_2 = arith.constant 0 : index
    %c0_3 = arith.constant 0 : index
    %4 = vector.load %arg2[%c0_2, %c0_3] : memref<2x16896xbf16, #tpu.memory_space<vmem>>, vector<2x16896xbf16>
    %c0_4 = arith.constant 0 : index
    %c0_5 = arith.constant 0 : index
    %5 = vector.load %arg3[%c0_4, %c0_5] : memref<16896x64xbf16, #tpu.memory_space<vmem>>, vector<16896x64xbf16>
    %cst = arith.constant dense<0.000000e+00> : vector<2x64xf32>
    %6 = tpu.matmul %4, %5, %cst {dimension_numbers = #tpu.dot_dimension_numbers<[1], [0], [0], [1], [0, 0, 1, 1], [], []>} : vector<2x16896xbf16>, vector<16896x64xbf16>, vector<2x64xf32> -> vector<2x64xf32>
    %7 = arith.addf %3, %6 : vector<2x64xf32>
    %c0_6 = arith.constant 0 : index
    %c0_7 = arith.constant 0 : index
    %8 = vector.load %arg10[%c0_6, %c0_7] : memref<2x64xf32, #tpu.memory_space<vmem>>, vector<2x64xf32>
    tpu.vector_store %arg10[%c0_6, %c0_7], %7 {strides = array<i32>} : memref<2x64xf32, #tpu.memory_space<vmem>>, vector<2x64xf32>,
    %c1_i32 = arith.constant 1 : i32
    %9 = arith.cmpi eq, %arg1, %c1_i32 : i32
    %10 = arith.extui %9 : i1 to i32
    %c0_i32_8 = arith.constant 0 : i32
    %11 = arith.cmpi ne, %10, %c0_i32_8 : i32
    scf.if %11 {
      %c0_9 = arith.constant 0 : index
      %c0_10 = arith.constant 0 : index
      %12 = vector.load %arg10[%c0_9, %c0_10] : memref<2x64xf32, #tpu.memory_space<vmem>>, vector<2x64xf32>
      %c0_11 = arith.constant 0 : index
      %c0_12 = arith.constant 0 : index
      %13 = vector.load %arg4[%c0_11, %c0_12] : memref<1x64xf32, #tpu.memory_space<vmem>>, vector<1x64xf32>
      %14 = vector.broadcast %13 : vector<1x64xf32> to vector<2x64xf32>
      %15 = arith.addf %12, %14 : vector<2x64xf32>
      %cst_13 = arith.constant 0.000000e+00 : f32
      %16 = vector.broadcast %cst_13 : f32 to vector<2x64xf32>
      %17 = arith.cmpf ogt, %15, %16 : vector<2x64xf32>
      %cst_14 = arith.constant 1.000000e-01 : f32
      %18 = vector.broadcast %cst_14 : f32 to vector<2x64xf32>
      %19 = arith.mulf %18, %15 : vector<2x64xf32>
      %20 = arith.select %17, %15, %19 : vector<2x64xi1>, vector<2x64xf32>
      %c0_15 = arith.constant 0 : index
      %c0_16 = arith.constant 0 : index
      %21 = vector.load %arg5[%c0_15, %c0_16] : memref<64x64xf32, #tpu.memory_space<vmem>>, vector<64x64xf32>
      %cst_17 = arith.constant dense<0.000000e+00> : vector<2x64xf32>
      %22 = tpu.matmul %20, %21, %cst_17 {dimension_numbers = #tpu.dot_dimension_numbers<[1], [0], [0], [1], [0, 0, 1, 1], [], []>} : vector<2x64xf32>, vector<64x64xf32>, vector<2x64xf32> -> vector<2x64xf32>
      %c0_18 = arith.constant 0 : index
      %c0_19 = arith.constant 0 : index
      %23 = vector.load %arg6[%c0_18, %c0_19] : memref<1x64xf32, #tpu.memory_space<vmem>>, vector<1x64xf32>
      %24 = vector.broadcast %23 : vector<1x64xf32> to vector<2x64xf32>
      %25 = arith.addf %22, %24 : vector<2x64xf32>
      %cst_20 = arith.constant 0.000000e+00 : f32
      %26 = vector.broadcast %cst_20 : f32 to vector<2x64xf32>
      %27 = arith.cmpf ogt, %25, %26 : vector<2x64xf32>
      %cst_21 = arith.constant 1.000000e-01 : f32
      %28 = vector.broadcast %cst_21 : f32 to vector<2x64xf32>
      %29 = arith.mulf %28, %25 : vector<2x64xf32>
      %30 = arith.select %27, %25, %29 : vector<2x64xi1>, vector<2x64xf32>
      %c0_22 = arith.constant 0 : index
      %c0_23 = arith.constant 0 : index
      %31 = vector.load %arg7[%c0_22, %c0_23] : memref<64x1xf32, #tpu.memory_space<vmem>>, vector<64x1xf32>
      %cst_24 = arith.constant dense<0.000000e+00> : vector<2x1xf32>
      %32 = tpu.matmul %30, %31, %cst_24 {dimension_numbers = #tpu.dot_dimension_numbers<[1], [0], [0], [1], [0, 0, 1, 1], [], []>} : vector<2x64xf32>, vector<64x1xf32>, vector<2x1xf32> -> vector<2x1xf32>
      %c0_25 = arith.constant 0 : index
      %c0_26 = arith.constant 0 : index
      %33 = vector.load %arg8[%c0_25, %c0_26] : memref<1x1xf32, #tpu.memory_space<vmem>>, vector<1x1xf32>
      %34 = vector.broadcast %33 : vector<1x1xf32> to vector<2x1xf32>
      %35 = arith.addf %32, %34 : vector<2x1xf32>
      %c0_27 = arith.constant 0 : index
      %c0_28 = arith.constant 0 : index
      %36 = vector.load %arg9[%c0_27, %c0_28] : memref<2x1xf32, #tpu.memory_space<vmem>>, vector<2x1xf32>
      tpu.vector_store %arg9[%c0_27, %c0_28], %35 {strides = array<i32>} : memref<2x1xf32, #tpu.memory_space<vmem>>, vector<2x1xf32>,
    } else {
    }
    return
  }
  func.func @transform_0(%arg0: i32, %arg1: i32) -> (i32, i32) {
    %c0_i32 = arith.constant 0 : i32
    return %arg0, %arg1 : i32, i32
  }
  func.func @transform_1(%arg0: i32, %arg1: i32) -> (i32, i32) {
    %c0_i32 = arith.constant 0 : i32
    %c0_i32_0 = arith.constant 0 : i32
    return %arg1, %c0_i32 : i32, i32
  }
  func.func @transform_2(%arg0: i32, %arg1: i32) -> (i32, i32) {
    %c0_i32 = arith.constant 0 : i32
    %c0_i32_0 = arith.constant 0 : i32
    %c0_i32_1 = arith.constant 0 : i32
    return %c0_i32, %c0_i32_0 : i32, i32
  }
  func.func @transform_3(%arg0: i32, %arg1: i32) -> (i32, i32) {
    %c0_i32 = arith.constant 0 : i32
    %c0_i32_0 = arith.constant 0 : i32
    %c0_i32_1 = arith.constant 0 : i32
    return %c0_i32, %c0_i32_0 : i32, i32
  }
  func.func @transform_4(%arg0: i32, %arg1: i32) -> (i32, i32) {
    %c0_i32 = arith.constant 0 : i32
    %c0_i32_0 = arith.constant 0 : i32
    %c0_i32_1 = arith.constant 0 : i32
    return %c0_i32, %c0_i32_0 : i32, i32
  }
  func.func @transform_5(%arg0: i32, %arg1: i32) -> (i32, i32) {
    %c0_i32 = arith.constant 0 : i32
    %c0_i32_0 = arith.constant 0 : i32
    %c0_i32_1 = arith.constant 0 : i32
    return %c0_i32, %c0_i32_0 : i32, i32
  }
  func.func @transform_6(%arg0: i32, %arg1: i32) -> (i32, i32) {
    %c0_i32 = arith.constant 0 : i32
    %c0_i32_0 = arith.constant 0 : i32
    %c0_i32_1 = arith.constant 0 : i32
    return %c0_i32, %c0_i32_0 : i32, i32
  }
  func.func @transform_7(%arg0: i32, %arg1: i32) -> (i32, i32) {
    %c0_i32 = arith.constant 0 : i32
    %c0_i32_0 = arith.constant 0 : i32
    return %arg0, %c0_i32 : i32, i32
  }
}

</mosaic_0001>

<llo_original>
// kernel: tpu_custom_call.1
$region0: #{tpu_custom_call.1}
  #allocation0 [shape = 'u32[]', space=smem, size = 0x4, offset = 0x4, fixed_abs, tag = 'smem constant byte address 0x4 - core index']
  #allocation1 [shape = 'u32[144,128]{1,0:T(1,128)}', space=vmem, size = 0x12000, scoped, tag = 'internal scratch']
  #allocation2 [shape = 'f32[2,64]{1,0:T(2,128)}', space=vmem, size = 0x400, scoped, tag = 'scratch operand']
  #allocation3 [shape = 'f32[1,1]{1,0:T(1,128)S(1)}', space=vmem, size = 0x200, scoped, tag = 'scoped memory for tpu_custom_call.1']
  %s0 = inlined_call_operand.vmem [shape: bf16[2,33792], index: 0, kind: input, shape index: {}]
  %s1 = inlined_call_operand.vmem [shape: bf16[33792,64], index: 1, kind: input, shape index: {}]
  %s2 = inlined_call_operand.vmem [shape: f32[1,64], index: 2, kind: input, shape index: {}]
  %s3 = inlined_call_operand.vmem [shape: f32[64,64], index: 3, kind: input, shape index: {}]
  %s4 = inlined_call_operand.vmem [shape: f32[1,64], index: 4, kind: input, shape index: {}]
  %s5 = inlined_call_operand.vmem [shape: f32[64,1], index: 5, kind: input, shape index: {}]
  %s6 = inlined_call_operand.<no memory space> [shape: f32[1,1], index: 6, kind: input, shape index: {}]
  %s7 = inlined_call_operand.vmem [shape: f32[2,1], index: 7, kind: output, shape index: {}]
  %s8 = sld [smem:[#allocation0]]
  $region69: #{tpu_custom_call.1} parent=0
    _
  %s10 = ssub.s32 1, %s8
  %s11 = scalar_select 0, %s10, %s8
  %v12 = vstv %s6
  %13 = vst [vmem:[#allocation3] sm:$0x1] %v12
  loop: start=0, step=1, limit=4
  $region2: #{tpu_custom_call.1} parent=0 // loop_pre_header
    _
  $region3: #{tpu_custom_call.1} parent=0 // loop_header
    %s15 = sphi 0, %s19
    %p16 = scmp.ge.s32.totalorder %s15, 4
    %s22 = sphi 0, %s34
    %s23 = sphi 0, %s30
    %s24 = sphi 0, %s22
    %s25 = sphi 0, %s23
    %s26 = sphi 0, %s24
    %s27 = sphi 0, %s25
    %s39 = sphi 0, %s41
    %s42 = sphi 0, %s39
    %s43 = sphi 0, %s42
    %s59 = sphi 0, %s43
    %s65 = sphi 0, %s67
    %s68 = sphi 0, %s65
    %s69 = sphi 0, %s68
    %s85 = sphi 0, %s69
    %s89 = sphi 0, %s89
    %s91 = sphi 0, %s89
    %s92 = sphi 0, %s91
    %s106 = sphi 0, %s92
    %s110 = sphi 0, %s110
    %s112 = sphi 0, %s110
    %s113 = sphi 0, %s112
    %s127 = sphi 0, %s113
    %s131 = sphi 0, %s131
    %s133 = sphi 0, %s131
    %s134 = sphi 0, %s133
    %s148 = sphi 0, %s134
    %s152 = sphi 0, %s152
    %s154 = sphi 0, %s152
    %s155 = sphi 0, %s154
    %s169 = sphi 0, %s155
    %s173 = sphi 0, %s173
    %s175 = sphi 0, %s173
    %s176 = sphi 0, %s175
    %s190 = sphi 0, %s176
    %s196 = sphi 0, %s198
    %s199 = sphi 0, %s196
    %s200 = sphi 0, %s199
    %s216 = sphi 0, %s200
  $region4: #{tpu_custom_call.1} parent=0 // loop_header_branch
    %18 = sbr.rel (%p16) target = $region8
  $region5: #{tpu_custom_call.1} parent=0 // loop_body
    %s20 = ssub.s32 %s15, 1
    %s21 = ssub.s32 %s15, 2
    %s28 = sadd.s32 1, %s23
    %p29 = scmp.ge.s32.totalorder %s28, 2
    %s30 = scalar_select %p29, 0, %s28
    %s31 = sadd.s32 1, %s22
    %s32 = scalar_select %p29, %s31, %s22
    %p33 = scmp.ge.s32.totalorder %s32, 1
    %s34 = scalar_select %p33, 0, %s32
    %s35 = ssub.s32 %s22, %s34
    %s36 = ssub.s32 %s23, %s30
    %s37 = sor.u32 %s35, %s36
    %p38 = scmp.eq.s32.totalorder %s37, 0
    %s40 = sadd.s32 %s39, 1
    %s41 = scalar_select %p38, %s39, %s40
    %p44 = pneg %p38
    %p45 = scmp.eq.s32.totalorder %s15, 1
    %p46 = por %p44, %p45
    %p47 = scmp.ne.s32.totalorder %s39, %s42
    %p48 = scmp.eq.s32.totalorder %s15, 0
    %p49 = por %p47, %p48
    %p50 = scmp.ne.s32.totalorder %s39, %s42
    %p51 = scmp.eq.s32.totalorder %s20, 1
    %p52 = por %p50, %p51
    %p53 = scmp.ne.s32.totalorder %s42, %s43
    %p54 = scmp.eq.s32.totalorder %s20, 0
    %p55 = por %p53, %p54
    %p56 = scmp.ne.s32.totalorder %s42, %s43
    %p57 = scmp.eq.s32.totalorder %s21, 1
    %p58 = por %p56, %p57
    %p60 = scmp.ne.s32.totalorder %s43, %s59
    %p61 = scmp.eq.s32.totalorder %s21, 0
    %p62 = por %p60, %p61
    %s63 = ssub.s32 %s23, %s30
    %p64 = scmp.eq.s32.totalorder %s63, 0
    %s66 = sadd.s32 %s65, 1
    %s67 = scalar_select %p64, %s65, %s66
    %p70 = pneg %p64
    %p71 = scmp.eq.s32.totalorder %s15, 1
    %p72 = por %p70, %p71
    %p73 = scmp.ne.s32.totalorder %s65, %s68
    %p74 = scmp.eq.s32.totalorder %s15, 0
    %p75 = por %p73, %p74
    %p76 = scmp.ne.s32.totalorder %s65, %s68
    %p77 = scmp.eq.s32.totalorder %s20, 1
    %p78 = por %p76, %p77
    %p79 = scmp.ne.s32.totalorder %s68, %s69
    %p80 = scmp.eq.s32.totalorder %s20, 0
    %p81 = por %p79, %p80
    %p82 = scmp.ne.s32.totalorder %s68, %s69
    %p83 = scmp.eq.s32.totalorder %s21, 1
    %p84 = por %p82, %p83
    %p86 = scmp.ne.s32.totalorder %s69, %s85
    %p87 = scmp.eq.s32.totalorder %s21, 0
    %p88 = por %p86, %p87
    %s90 = sadd.s32 %s89, 1
    %p93 = scmp.eq.s32.totalorder %s15, 1
    %p94 = scmp.ne.s32.totalorder %s89, %s91
    %p95 = scmp.eq.s32.totalorder %s15, 0
    %p96 = por %p94, %p95
    %p97 = scmp.ne.s32.totalorder %s89, %s91
    %p98 = scmp.eq.s32.totalorder %s20, 1
    %p99 = por %p97, %p98
    %p100 = scmp.ne.s32.totalorder %s91, %s92
    %p101 = scmp.eq.s32.totalorder %s20, 0
    %p102 = por %p100, %p101
    %p103 = scmp.ne.s32.totalorder %s91, %s92
    %p104 = scmp.eq.s32.totalorder %s21, 1
    %p105 = por %p103, %p104
    %p107 = scmp.ne.s32.totalorder %s92, %s106
    %p108 = scmp.eq.s32.totalorder %s21, 0
    %p109 = por %p107, %p108
    %s111 = sadd.s32 %s110, 1
    %p114 = scmp.eq.s32.totalorder %s15, 1
    %p115 = scmp.ne.s32.totalorder %s110, %s112
    %p116 = scmp.eq.s32.totalorder %s15, 0
    %p117 = por %p115, %p116
    %p118 = scmp.ne.s32.totalorder %s110, %s112
    %p119 = scmp.eq.s32.totalorder %s20, 1
    %p120 = por %p118, %p119
    %p121 = scmp.ne.s32.totalorder %s112, %s113
    %p122 = scmp.eq.s32.totalorder %s20, 0
    %p123 = por %p121, %p122
    %p124 = scmp.ne.s32.totalorder %s112, %s113
    %p125 = scmp.eq.s32.totalorder %s21, 1
    %p126 = por %p124, %p125
    %p128 = scmp.ne.s32.totalorder %s113, %s127
    %p129 = scmp.eq.s32.totalorder %s21, 0
    %p130 = por %p128, %p129
    %s132 = sadd.s32 %s131, 1
    %p135 = scmp.eq.s32.totalorder %s15, 1
    %p136 = scmp.ne.s32.totalorder %s131, %s133
    %p137 = scmp.eq.s32.totalorder %s15, 0
    %p138 = por %p136, %p137
    %p139 = scmp.ne.s32.totalorder %s131, %s133
    %p140 = scmp.eq.s32.totalorder %s20, 1
    %p141 = por %p139, %p140
    %p142 = scmp.ne.s32.totalorder %s133, %s134
    %p143 = scmp.eq.s32.totalorder %s20, 0
    %p144 = por %p142, %p143
    %p145 = scmp.ne.s32.totalorder %s133, %s134
    %p146 = scmp.eq.s32.totalorder %s21, 1
    %p147 = por %p145, %p146
    %p149 = scmp.ne.s32.totalorder %s134, %s148
    %p150 = scmp.eq.s32.totalorder %s21, 0
    %p151 = por %p149, %p150
    %s153 = sadd.s32 %s152, 1
    %p156 = scmp.eq.s32.totalorder %s15, 1
    %p157 = scmp.ne.s32.totalorder %s152, %s154
    %p158 = scmp.eq.s32.totalorder %s15, 0
    %p159 = por %p157, %p158
    %p160 = scmp.ne.s32.totalorder %s152, %s154
    %p161 = scmp.eq.s32.totalorder %s20, 1
    %p162 = por %p160, %p161
    %p163 = scmp.ne.s32.totalorder %s154, %s155
    %p164 = scmp.eq.s32.totalorder %s20, 0
    %p165 = por %p163, %p164
    %p166 = scmp.ne.s32.totalorder %s154, %s155
    %p167 = scmp.eq.s32.totalorder %s21, 1
    %p168 = por %p166, %p167
    %p170 = scmp.ne.s32.totalorder %s155, %s169
    %p171 = scmp.eq.s32.totalorder %s21, 0
    %p172 = por %p170, %p171
    %s174 = sadd.s32 %s173, 1
    %p177 = scmp.eq.s32.totalorder %s15, 1
    %p178 = scmp.ne.s32.totalorder %s173, %s175
    %p179 = scmp.eq.s32.totalorder %s15, 0
    %p180 = por %p178, %p179
    %p181 = scmp.ne.s32.totalorder %s173, %s175
    %p182 = scmp.eq.s32.totalorder %s20, 1
    %p183 = por %p181, %p182
    %p184 = scmp.ne.s32.totalorder %s175, %s176
    %p185 = scmp.eq.s32.totalorder %s20, 0
    %p186 = por %p184, %p185
    %p187 = scmp.ne.s32.totalorder %s175, %s176
    %p188 = scmp.eq.s32.totalorder %s21, 1
    %p189 = por %p187, %p188
    %p191 = scmp.ne.s32.totalorder %s176, %s190
    %p192 = scmp.eq.s32.totalorder %s21, 0
    %p193 = por %p191, %p192
    %s194 = ssub.s32 %s22, %s34
    %p195 = scmp.eq.s32.totalorder %s194, 0
    %s197 = sadd.s32 %s196, 1
    %s198 = scalar_select %p195, %s196, %s197
    %p201 = pneg %p195
    %p202 = scmp.eq.s32.totalorder %s15, 1
    %p203 = por %p201, %p202
    %p204 = scmp.ne.s32.totalorder %s196, %s199
    %p205 = scmp.eq.s32.totalorder %s15, 0
    %p206 = por %p204, %p205
    %p207 = scmp.ne.s32.totalorder %s196, %s199
    %p208 = scmp.eq.s32.totalorder %s20, 1
    %p209 = por %p207, %p208
    %p210 = scmp.ne.s32.totalorder %s199, %s200
    %p211 = scmp.eq.s32.totalorder %s20, 0
    %p212 = por %p210, %p211
    %p213 = scmp.ne.s32.totalorder %s199, %s200
    %p214 = scmp.eq.s32.totalorder %s21, 1
    %p215 = por %p213, %p214
    %p217 = scmp.ne.s32.totalorder %s200, %s216
    %p218 = scmp.eq.s32.totalorder %s21, 0
    %p219 = por %p217, %p218
    %p220 = scmp.le.s32.totalorder 1, %s15
    %p221 = scmp.lt.s32.totalorder %s15, 3
    %p222 = pnand %p220, %p221
    %p223 = pneg %p222
    // Predicated region
    $region9: #{tpu_custom_call.1} parent=5 // pred_check
      _
    $region10: #{tpu_custom_call.1} parent=5 // pred_check_branch
      %225 = sbr.rel (%p222) target = $region12
    $region11: #{tpu_custom_call.1} parent=5 // pred_region
      %s226 = ssub.s32 %s15, 1
      // Predicated region
      $region13: #{tpu_custom_call.1} parent=11 // pred_check
        %p227 = pneg %p102
      $region14: #{tpu_custom_call.1} parent=11 // pred_check_branch
        %229 = sbr.rel (%p227) target = $region16
      $region15: #{tpu_custom_call.1} parent=11 // pred_region
        _
      $region16: #{tpu_custom_call.1} parent=11 // pred_fallthru
        _
      // Predicated region
      $region17: #{tpu_custom_call.1} parent=11 // pred_check
        %p230 = pneg %p123
      $region18: #{tpu_custom_call.1} parent=11 // pred_check_branch
        %232 = sbr.rel (%p230) target = $region20
      $region19: #{tpu_custom_call.1} parent=11 // pred_region
        _
      $region20: #{tpu_custom_call.1} parent=11 // pred_fallthru
        _
      // Predicated region
      $region21: #{tpu_custom_call.1} parent=11 // pred_check
        %p233 = pneg %p144
      $region22: #{tpu_custom_call.1} parent=11 // pred_check_branch
        %235 = sbr.rel (%p233) target = $region24
      $region23: #{tpu_custom_call.1} parent=11 // pred_region
        _
      $region24: #{tpu_custom_call.1} parent=11 // pred_fallthru
        _
      // Predicated region
      $region25: #{tpu_custom_call.1} parent=11 // pred_check
        %p236 = pneg %p165
      $region26: #{tpu_custom_call.1} parent=11 // pred_check_branch
        %238 = sbr.rel (%p236) target = $region28
      $region27: #{tpu_custom_call.1} parent=11 // pred_region
        _
      $region28: #{tpu_custom_call.1} parent=11 // pred_fallthru
        _
      // Predicated region
      $region29: #{tpu_custom_call.1} parent=11 // pred_check
        %p239 = pneg %p186
      $region30: #{tpu_custom_call.1} parent=11 // pred_check_branch
        %241 = sbr.rel (%p239) target = $region32
      $region31: #{tpu_custom_call.1} parent=11 // pred_region
        _
      $region32: #{tpu_custom_call.1} parent=11 // pred_fallthru
        _
    $region12: #{tpu_custom_call.1} parent=5 // pred_fallthru
      _
    %p242 = scmp.lt.s32.totalorder %s15, 2
    // Predicated region
    $region33: #{tpu_custom_call.1} parent=5 // pred_check
      %p243 = pneg %p242
    $region34: #{tpu_custom_call.1} parent=5 // pred_check_branch
      %245 = sbr.rel (%p243) target = $region36
    $region35: #{tpu_custom_call.1} parent=5 // pred_region
      // Predicated region
      $region37: #{tpu_custom_call.1} parent=35 // pred_check
        %p246 = pneg %p49
      $region38: #{tpu_custom_call.1} parent=35 // pred_check_branch
        %248 = sbr.rel (%p246) target = $region40
      $region39: #{tpu_custom_call.1} parent=35 // pred_region
        %s249 = smul.u32 132, %s23
        %p250 = scmp.lt.s32.totalorder %s22, 0
        %s251 = scalar_select %p250, %s22, 0
        %p252 = scmp.lt.s32.totalorder %s249, 263
        %s253 = scalar_select %p252, %s249, 263
        %s254 = smul.addr %s251, 264
        %s255 = sadd.s32 %s253, %s254
        %s256 = scalar_lea.vmem %s0, %s255
        %s257 = smul.u32 132, %s23
      $region40: #{tpu_custom_call.1} parent=35 // pred_fallthru
        _
      // Predicated region
      $region41: #{tpu_custom_call.1} parent=35 // pred_check
        %p258 = pneg %p75
      $region42: #{tpu_custom_call.1} parent=35 // pred_check_branch
        %260 = sbr.rel (%p258) target = $region44
      $region43: #{tpu_custom_call.1} parent=35 // pred_region
        %s261 = smul.u32 2112, %s23
        %p262 = scmp.lt.s32.totalorder %s261, 4223
        %s263 = scalar_select %p262, %s261, 4223
        %s264 = smul.addr %s263, 4
        %s265 = scalar_lea.vmem %s1, %s264
        %s266 = smul.u32 2112, %s23
      $region44: #{tpu_custom_call.1} parent=35 // pred_fallthru
        _
    $region36: #{tpu_custom_call.1} parent=5 // pred_fallthru
      _
    %p267 = scmp.le.s32.totalorder 1, %s15
    %p268 = scmp.lt.s32.totalorder %s15, 3
    %p269 = pnand %p267, %p268
    %p270 = pneg %p269
    // Predicated region
    $region45: #{tpu_custom_call.1} parent=5 // pred_check
      _
    $region46: #{tpu_custom_call.1} parent=5 // pred_check_branch
      %272 = sbr.rel (%p269) target = $region48
    $region47: #{tpu_custom_call.1} parent=5 // pred_region
      %s273 = ssub.s32 %s15, 1
      %s274 = smul.u32 132, %s25
      %p275 = scmp.lt.s32.totalorder %s24, 0
      %s276 = scalar_select %p275, %s24, 0
      %p277 = scmp.lt.s32.totalorder %s274, 263
      %s278 = scalar_select %p277, %s274, 263
      %s279 = smul.addr %s276, 264
      %s280 = sadd.s32 %s278, %s279
      %s281 = scalar_lea.vmem %s0, %s280
      %p282 = pneg %p55
      %p283 = pneg %p52
      %s284 = smul.u32 2112, %s25
      %p285 = scmp.lt.s32.totalorder %s284, 4223
      %s286 = scalar_select %p285, %s284, 4223
      %s287 = smul.addr %s286, 4
      %s288 = scalar_lea.vmem %s1, %s287
      %p289 = pneg %p81
      %p290 = pneg %p78
      %p291 = pneg %p102
      %p292 = pneg %p99
      %p293 = pneg %p123
      %p294 = pneg %p120
      %p295 = pneg %p144
      %p296 = pneg %p141
      %p297 = pneg %p165
      %p298 = pneg %p162
      %p299 = pneg %p186
      %p300 = pneg %p183
      %p301 = pneg %p212
      %p302 = pneg %p209
      %p303 = scmp.lt.s32.totalorder %s24, 0
      %s304 = scalar_select %p303, %s24, 0
      %s305 = smul.addr %s304, 2
      %s306 = scalar_lea.vmem %s7, %s305
      %s307 = smul.u32 132, %s25
      %p308 = scmp.lt.s32.totalorder %s24, 0
      %s309 = scalar_select %p308, %s24, 0
      %p310 = scmp.lt.s32.totalorder %s307, 263
      %s311 = scalar_select %p310, %s307, 263
      %s312 = smul.addr %s309, 264
      %s313 = sadd.s32 %s311, %s312
      %s314 = scalar_lea.vmem %s0, %s313
      %s315 = smul.u32 132, %s25
      %s316 = smul.u32 2112, %s25
      %p317 = scmp.lt.s32.totalorder %s316, 4223
      %s318 = scalar_select %p317, %s316, 4223
      %s319 = smul.addr %s318, 4
      %s320 = scalar_lea.vmem %s1, %s319
      %s321 = smul.u32 2112, %s25
      %p322 = scmp.lt.s32.totalorder %s24, 0
      %s323 = scalar_select %p322, %s24, 0
      %s324 = smul.addr %s323, 2
      %s325 = scalar_lea.vmem %s7, %s324
      %p327 = scmp.eq.s32.totalorder %s25, 0
      // Predicated region
      $region49: #{tpu_custom_call.1} parent=47 // pred_check
        %p328 = pneg %p327
      $region50: #{tpu_custom_call.1} parent=47 // pred_check_branch
        %330 = sbr.rel (%p328) target = $region52
      $region51: #{tpu_custom_call.1} parent=47 // pred_region
        %vm331 = vcmask 517120
        %332 = vst.msk [vmem:[#allocation2] sm:$0x3] %vm331, 0.0
      $region52: #{tpu_custom_call.1} parent=47 // pred_fallthru
        _
      %v333 = vld [vmem:[#allocation2] sm:$0x3]
      %v334 = vld [vmem:[%s314] sm:$0xff]
      %v335 = vld [vmem:[%s314 + $0x8] sm:$0xff]
      %v336 = vld [vmem:[%s314 + $0x10] sm:$0xff]
      %v337 = vld [vmem:[%s314 + $0x18] sm:$0xff]
      %v338 = vld [vmem:[%s314 + $0x20] sm:$0xff]
      %v339 = vld [vmem:[%s314 + $0x28] sm:$0xff]
      %v340 = vld [vmem:[%s314 + $0x30] sm:$0xff]
      %v341 = vld [vmem:[%s314 + $0x38] sm:$0xff]
      %v342 = vld [vmem:[%s314 + $0x40] sm:$0xff]
      %v343 = vld [vmem:[%s314 + $0x48] sm:$0xff]
      %v344 = vld [vmem:[%s314 + $0x50] sm:$0xff]
      %v345 = vld [vmem:[%s314 + $0x58] sm:$0xff]
      %v346 = vld [vmem:[%s314 + $0x60] sm:$0xff]
      %v347 = vld [vmem:[%s314 + $0x68] sm:$0xff]
      %v348 = vld [vmem:[%s314 + $0x70] sm:$0xff]
      %v349 = vld [vmem:[%s314 + $0x78] sm:$0xff]
      %v350 = vld [vmem:[%s314 + $0x80] sm:$0xf]
      %v351 = vld [vmem:[%s320] sm:$0xf]
      %v352 = vld [vmem:[%s320 + $0x4] sm:$0xf]
      %v353 = vld [vmem:[%s320 + $0x8] sm:$0xf]
      %v354 = vld [vmem:[%s320 + $0xc] sm:$0xf]
      %v355 = vld [vmem:[%s320 + $0x10] sm:$0xf]
      %v356 = vld [vmem:[%s320 + $0x14] sm:$0xf]
      %v357 = vld [vmem:[%s320 + $0x18] sm:$0xf]
      %v358 = vld [vmem:[%s320 + $0x1c] sm:$0xf]
      %v359 = vld [vmem:[%s320 + $0x20] sm:$0xf]
      %v360 = vld [vmem:[%s320 + $0x24] sm:$0xf]
      %v361 = vld [vmem:[%s320 + $0x28] sm:$0xf]
      %v362 = vld [vmem:[%s320 + $0x2c] sm:$0xf]
      %v363 = vld [vmem:[%s320 + $0x30] sm:$0xf]
      %v364 = vld [vmem:[%s320 + $0x34] sm:$0xf]
      %v365 = vld [vmem:[%s320 + $0x38] sm:$0xf]
      %v366 = vld [vmem:[%s320 + $0x3c] sm:$0xf]
      %v367 = vld [vmem:[%s320 + $0x40] sm:$0xf]
      %v368 = vld [vmem:[%s320 + $0x44] sm:$0xf]
      %v369 = vld [vmem:[%s320 + $0x48] sm:$0xf]
      %v370 = vld [vmem:[%s320 + $0x4c] sm:$0xf]
      %v371 = vld [vmem:[%s320 + $0x50] sm:$0xf]
      %v372 = vld [vmem:[%s320 + $0x54] sm:$0xf]
      %v373 = vld [vmem:[%s320 + $0x58] sm:$0xf]
      %v374 = vld [vmem:[%s320 + $0x5c] sm:$0xf]
      %v375 = vld [vmem:[%s320 + $0x60] sm:$0xf]
      %v376 = vld [vmem:[%s320 + $0x64] sm:$0xf]
      %v377 = vld [vmem:[%s320 + $0x68] sm:$0xf]
      %v378 = vld [vmem:[%s320 + $0x6c] sm:$0xf]
      %v379 = vld [vmem:[%s320 + $0x70] sm:$0xf]
      %v380 = vld [vmem:[%s320 + $0x74] sm:$0xf]
      %v381 = vld [vmem:[%s320 + $0x78] sm:$0xf]
      %v382 = vld [vmem:[%s320 + $0x7c] sm:$0xf]
      %v383 = vld [vmem:[%s320 + $0x80] sm:$0xf]
      %v384 = vld [vmem:[%s320 + $0x84] sm:$0xf]
      %v385 = vld [vmem:[%s320 + $0x88] sm:$0xf]
      %v386 = vld [vmem:[%s320 + $0x8c] sm:$0xf]
      %v387 = vld [vmem:[%s320 + $0x90] sm:$0xf]
      %v388 = vld [vmem:[%s320 + $0x94] sm:$0xf]
      %v389 = vld [vmem:[%s320 + $0x98] sm:$0xf]
      %v390 = vld [vmem:[%s320 + $0x9c] sm:$0xf]
      %v391 = vld [vmem:[%s320 + $0xa0] sm:$0xf]
      %v392 = vld [vmem:[%s320 + $0xa4] sm:$0xf]
      %v393 = vld [vmem:[%s320 + $0xa8] sm:$0xf]
      %v394 = vld [vmem:[%s320 + $0xac] sm:$0xf]
      %v395 = vld [vmem:[%s320 + $0xb0] sm:$0xf]
      %v396 = vld [vmem:[%s320 + $0xb4] sm:$0xf]
      %v397 = vld [vmem:[%s320 + $0xb8] sm:$0xf]
      %v398 = vld [vmem:[%s320 + $0xbc] sm:$0xf]
      %v399 = vld [vmem:[%s320 + $0xc0] sm:$0xf]
      %v400 = vld [vmem:[%s320 + $0xc4] sm:$0xf]
      %v401 = vld [vmem:[%s320 + $0xc8] sm:$0xf]
      %v402 = vld [vmem:[%s320 + $0xcc] sm:$0xf]
      %v403 = vld [vmem:[%s320 + $0xd0] sm:$0xf]
      %v404 = vld [vmem:[%s320 + $0xd4] sm:$0xf]
      %v405 = vld [vmem:[%s320 + $0xd8] sm:$0xf]
      %v406 = vld [vmem:[%s320 + $0xdc] sm:$0xf]
      %v407 = vld [vmem:[%s320 + $0xe0] sm:$0xf]
      %v408 = vld [vmem:[%s320 + $0xe4] sm:$0xf]
      %v409 = vld [vmem:[%s320 + $0xe8] sm:$0xf]
      %v410 = vld [vmem:[%s320 + $0xec] sm:$0xf]
      %v411 = vld [vmem:[%s320 + $0xf0] sm:$0xf]
      %v412 = vld [vmem:[%s320 + $0xf4] sm:$0xf]
      %v413 = vld [vmem:[%s320 + $0xf8] sm:$0xf]
      %v414 = vld [vmem:[%s320 + $0xfc] sm:$0xf]
      %v415 = vld [vmem:[%s320 + $0x100] sm:$0xf]
      %v416 = vld [vmem:[%s320 + $0x104] sm:$0xf]
      %v417 = vld [vmem:[%s320 + $0x108] sm:$0xf]
      %v418 = vld [vmem:[%s320 + $0x10c] sm:$0xf]
      %v419 = vld [vmem:[%s320 + $0x110] sm:$0xf]
      %v420 = vld [vmem:[%s320 + $0x114] sm:$0xf]
      %v421 = vld [vmem:[%s320 + $0x118] sm:$0xf]
      %v422 = vld [vmem:[%s320 + $0x11c] sm:$0xf]
      %v423 = vld [vmem:[%s320 + $0x120] sm:$0xf]
      %v424 = vld [vmem:[%s320 + $0x124] sm:$0xf]
      %v425 = vld [vmem:[%s320 + $0x128] sm:$0xf]
      %v426 = vld [vmem:[%s320 + $0x12c] sm:$0xf]
      %v427 = vld [vmem:[%s320 + $0x130] sm:$0xf]
      %v428 = vld [vmem:[%s320 + $0x134] sm:$0xf]
      %v429 = vld [vmem:[%s320 + $0x138] sm:$0xf]
      %v430 = vld [vmem:[%s320 + $0x13c] sm:$0xf]
      %v431 = vld [vmem:[%s320 + $0x140] sm:$0xf]
      %v432 = vld [vmem:[%s320 + $0x144] sm:$0xf]
      %v433 = vld [vmem:[%s320 + $0x148] sm:$0xf]
      %v434 = vld [vmem:[%s320 + $0x14c] sm:$0xf]
      %v435 = vld [vmem:[%s320 + $0x150] sm:$0xf]
      %v436 = vld [vmem:[%s320 + $0x154] sm:$0xf]
      %v437 = vld [vmem:[%s320 + $0x158] sm:$0xf]
      %v438 = vld [vmem:[%s320 + $0x15c] sm:$0xf]
      %v439 = vld [vmem:[%s320 + $0x160] sm:$0xf]
      %v440 = vld [vmem:[%s320 + $0x164] sm:$0xf]
      %v441 = vld [vmem:[%s320 + $0x168] sm:$0xf]
      %v442 = vld [vmem:[%s320 + $0x16c] sm:$0xf]
      %v443 = vld [vmem:[%s320 + $0x170] sm:$0xf]
      %v444 = vld [vmem:[%s320 + $0x174] sm:$0xf]
      %v445 = vld [vmem:[%s320 + $0x178] sm:$0xf]
      %v446 = vld [vmem:[%s320 + $0x17c] sm:$0xf]
      %v447 = vld [vmem:[%s320 + $0x180] sm:$0xf]
      %v448 = vld [vmem:[%s320 + $0x184] sm:$0xf]
      %v449 = vld [vmem:[%s320 + $0x188] sm:$0xf]
      %v450 = vld [vmem:[%s320 + $0x18c] sm:$0xf]
      %v451 = vld [vmem:[%s320 + $0x190] sm:$0xf]
      %v452 = vld [vmem:[%s320 + $0x194] sm:$0xf]
      %v453 = vld [vmem:[%s320 + $0x198] sm:$0xf]
      %v454 = vld [vmem:[%s320 + $0x19c] sm:$0xf]
      %v455 = vld [vmem:[%s320 + $0x1a0] sm:$0xf]
      %v456 = vld [vmem:[%s320 + $0x1a4] sm:$0xf]
      %v457 = vld [vmem:[%s320 + $0x1a8] sm:$0xf]
      %v458 = vld [vmem:[%s320 + $0x1ac] sm:$0xf]
      %v459 = vld [vmem:[%s320 + $0x1b0] sm:$0xf]
      %v460 = vld [vmem:[%s320 + $0x1b4] sm:$0xf]
      %v461 = vld [vmem:[%s320 + $0x1b8] sm:$0xf]
      %v462 = vld [vmem:[%s320 + $0x1bc] sm:$0xf]
      %v463 = vld [vmem:[%s320 + $0x1c0] sm:$0xf]
      %v464 = vld [vmem:[%s320 + $0x1c4] sm:$0xf]
      %v465 = vld [vmem:[%s320 + $0x1c8] sm:$0xf]
      %v466 = vld [vmem:[%s320 + $0x1cc] sm:$0xf]
      %v467 = vld [vmem:[%s320 + $0x1d0] sm:$0xf]
      %v468 = vld [vmem:[%s320 + $0x1d4] sm:$0xf]
      %v469 = vld [vmem:[%s320 + $0x1d8] sm:$0xf]
      %v470 = vld [vmem:[%s320 + $0x1dc] sm:$0xf]
      %v471 = vld [vmem:[%s320 + $0x1e0] sm:$0xf]
      %v472 = vld [vmem:[%s320 + $0x1e4] sm:$0xf]
      %v473 = vld [vmem:[%s320 + $0x1e8] sm:$0xf]
      %v474 = vld [vmem:[%s320 + $0x1ec] sm:$0xf]
      %v475 = vld [vmem:[%s320 + $0x1f0] sm:$0xf]
      %v476 = vld [vmem:[%s320 + $0x1f4] sm:$0xf]
      %v477 = vld [vmem:[%s320 + $0x1f8] sm:$0xf]
      %v478 = vld [vmem:[%s320 + $0x1fc] sm:$0xf]
      %v479 = vld [vmem:[%s320 + $0x200] sm:$0xf]
      %v480 = vld [vmem:[%s320 + $0x204] sm:$0xf]
      %v481 = vld [vmem:[%s320 + $0x208] sm:$0xf]
      %v482 = vld [vmem:[%s320 + $0x20c] sm:$0xf]
      %v483 = vld [vmem:[%s320 + $0x210] sm:$0xf]
      %v484 = vld [vmem:[%s320 + $0x214] sm:$0xf]
      %v485 = vld [vmem:[%s320 + $0x218] sm:$0xf]
      %v486 = vld [vmem:[%s320 + $0x21c] sm:$0xf]
      %v487 = vld [vmem:[%s320 + $0x220] sm:$0xf]
      %v488 = vld [vmem:[%s320 + $0x224] sm:$0xf]
      %v489 = vld [vmem:[%s320 + $0x228] sm:$0xf]
      %v490 = vld [vmem:[%s320 + $0x22c] sm:$0xf]
      %v491 = vld [vmem:[%s320 + $0x230] sm:$0xf]
      %v492 = vld [vmem:[%s320 + $0x234] sm:$0xf]
      %v493 = vld [vmem:[%s320 + $0x238] sm:$0xf]
      %v494 = vld [vmem:[%s320 + $0x23c] sm:$0xf]
      %v495 = vld [vmem:[%s320 + $0x240] sm:$0xf]
      %v496 = vld [vmem:[%s320 + $0x244] sm:$0xf]
      %v497 = vld [vmem:[%s320 + $0x248] sm:$0xf]
      %v498 = vld [vmem:[%s320 + $0x24c] sm:$0xf]
      %v499 = vld [vmem:[%s320 + $0x250] sm:$0xf]
      %v500 = vld [vmem:[%s320 + $0x254] sm:$0xf]
      %v501 = vld [vmem:[%s320 + $0x258] sm:$0xf]
      %v502 = vld [vmem:[%s320 + $0x25c] sm:$0xf]
      %v503 = vld [vmem:[%s320 + $0x260] sm:$0xf]
      %v504 = vld [vmem:[%s320 + $0x264] sm:$0xf]
      %v505 = vld [vmem:[%s320 + $0x268] sm:$0xf]
      %v506 = vld [vmem:[%s320 + $0x26c] sm:$0xf]
      %v507 = vld [vmem:[%s320 + $0x270] sm:$0xf]
      %v508 = vld [vmem:[%s320 + $0x274] sm:$0xf]
      %v509 = vld [vmem:[%s320 + $0x278] sm:$0xf]
      %v510 = vld [vmem:[%s320 + $0x27c] sm:$0xf]
      %v511 = vld [vmem:[%s320 + $0x280] sm:$0xf]
      %v512 = vld [vmem:[%s320 + $0x284] sm:$0xf]
      %v513 = vld [vmem:[%s320 + $0x288] sm:$0xf]
      %v514 = vld [vmem:[%s320 + $0x28c] sm:$0xf]
      %v515 = vld [vmem:[%s320 + $0x290] sm:$0xf]
      %v516 = vld [vmem:[%s320 + $0x294] sm:$0xf]
      %v517 = vld [vmem:[%s320 + $0x298] sm:$0xf]
      %v518 = vld [vmem:[%s320 + $0x29c] sm:$0xf]
      %v519 = vld [vmem:[%s320 + $0x2a0] sm:$0xf]
      %v520 = vld [vmem:[%s320 + $0x2a4] sm:$0xf]
      %v521 = vld [vmem:[%s320 + $0x2a8] sm:$0xf]
      %v522 = vld [vmem:[%s320 + $0x2ac] sm:$0xf]
      %v523 = vld [vmem:[%s320 + $0x2b0] sm:$0xf]
      %v524 = vld [vmem:[%s320 + $0x2b4] sm:$0xf]
      %v525 = vld [vmem:[%s320 + $0x2b8] sm:$0xf]
      %v526 = vld [vmem:[%s320 + $0x2bc] sm:$0xf]
      %v527 = vld [vmem:[%s320 + $0x2c0] sm:$0xf]
      %v528 = vld [vmem:[%s320 + $0x2c4] sm:$0xf]
      %v529 = vld [vmem:[%s320 + $0x2c8] sm:$0xf]
      %v530 = vld [vmem:[%s320 + $0x2cc] sm:$0xf]
      %v531 = vld [vmem:[%s320 + $0x2d0] sm:$0xf]
      %v532 = vld [vmem:[%s320 + $0x2d4] sm:$0xf]
      %v533 = vld [vmem:[%s320 + $0x2d8] sm:$0xf]
      %v534 = vld [vmem:[%s320 + $0x2dc] sm:$0xf]
      %v535 = vld [vmem:[%s320 + $0x2e0] sm:$0xf]
      %v536 = vld [vmem:[%s320 + $0x2e4] sm:$0xf]
      %v537 = vld [vmem:[%s320 + $0x2e8] sm:$0xf]
      %v538 = vld [vmem:[%s320 + $0x2ec] sm:$0xf]
      %v539 = vld [vmem:[%s320 + $0x2f0] sm:$0xf]
      %v540 = vld [vmem:[%s320 + $0x2f4] sm:$0xf]
      %v541 = vld [vmem:[%s320 + $0x2f8] sm:$0xf]
      %v542 = vld [vmem:[%s320 + $0x2fc] sm:$0xf]
      %v543 = vld [vmem:[%s320 + $0x300] sm:$0xf]
      %v544 = vld [vmem:[%s320 + $0x304] sm:$0xf]
      %v545 = vld [vmem:[%s320 + $0x308] sm:$0xf]
      %v546 = vld [vmem:[%s320 + $0x30c] sm:$0xf]
      %v547 = vld [vmem:[%s320 + $0x310] sm:$0xf]
      %v548 = vld [vmem:[%s320 + $0x314] sm:$0xf]
      %v549 = vld [vmem:[%s320 + $0x318] sm:$0xf]
      %v550 = vld [vmem:[%s320 + $0x31c] sm:$0xf]
      %v551 = vld [vmem:[%s320 + $0x320] sm:$0xf]
      %v552 = vld [vmem:[%s320 + $0x324] sm:$0xf]
      %v553 = vld [vmem:[%s320 + $0x328] sm:$0xf]
      %v554 = vld [vmem:[%s320 + $0x32c] sm:$0xf]
      %v555 = vld [vmem:[%s320 + $0x330] sm:$0xf]
      %v556 = vld [vmem:[%s320 + $0x334] sm:$0xf]
      %v557 = vld [vmem:[%s320 + $0x338] sm:$0xf]
      %v558 = vld [vmem:[%s320 + $0x33c] sm:$0xf]
      %v559 = vld [vmem:[%s320 + $0x340] sm:$0xf]
      %v560 = vld [vmem:[%s320 + $0x344] sm:$0xf]
      %v561 = vld [vmem:[%s320 + $0x348] sm:$0xf]
      %v562 = vld [vmem:[%s320 + $0x34c] sm:$0xf]
      %v563 = vld [vmem:[%s320 + $0x350] sm:$0xf]
      %v564 = vld [vmem:[%s320 + $0x354] sm:$0xf]
      %v565 = vld [vmem:[%s320 + $0x358] sm:$0xf]
      %v566 = vld [vmem:[%s320 + $0x35c] sm:$0xf]
      %v567 = vld [vmem:[%s320 + $0x360] sm:$0xf]
      %v568 = vld [vmem:[%s320 + $0x364] sm:$0xf]
      %v569 = vld [vmem:[%s320 + $0x368] sm:$0xf]
      %v570 = vld [vmem:[%s320 + $0x36c] sm:$0xf]
      %v571 = vld [vmem:[%s320 + $0x370] sm:$0xf]
      %v572 = vld [vmem:[%s320 + $0x374] sm:$0xf]
      %v573 = vld [vmem:[%s320 + $0x378] sm:$0xf]
      %v574 = vld [vmem:[%s320 + $0x37c] sm:$0xf]
      %v575 = vld [vmem:[%s320 + $0x380] sm:$0xf]
      %v576 = vld [vmem:[%s320 + $0x384] sm:$0xf]
      %v577 = vld [vmem:[%s320 + $0x388] sm:$0xf]
      %v578 = vld [vmem:[%s320 + $0x38c] sm:$0xf]
      %v579 = vld [vmem:[%s320 + $0x390] sm:$0xf]
      %v580 = vld [vmem:[%s320 + $0x394] sm:$0xf]
      %v581 = vld [vmem:[%s320 + $0x398] sm:$0xf]
      %v582 = vld [vmem:[%s320 + $0x39c] sm:$0xf]
      %v583 = vld [vmem:[%s320 + $0x3a0] sm:$0xf]
      %v584 = vld [vmem:[%s320 + $0x3a4] sm:$0xf]
      %v585 = vld [vmem:[%s320 + $0x3a8] sm:$0xf]
      %v586 = vld [vmem:[%s320 + $0x3ac] sm:$0xf]
      %v587 = vld [vmem:[%s320 + $0x3b0] sm:$0xf]
      %v588 = vld [vmem:[%s320 + $0x3b4] sm:$0xf]
      %v589 = vld [vmem:[%s320 + $0x3b8] sm:$0xf]
      %v590 = vld [vmem:[%s320 + $0x3bc] sm:$0xf]
      %v591 = vld [vmem:[%s320 + $0x3c0] sm:$0xf]
      %v592 = vld [vmem:[%s320 + $0x3c4] sm:$0xf]
      %v593 = vld [vmem:[%s320 + $0x3c8] sm:$0xf]
      %v594 = vld [vmem:[%s320 + $0x3cc] sm:$0xf]
      %v595 = vld [vmem:[%s320 + $0x3d0] sm:$0xf]
      %v596 = vld [vmem:[%s320 + $0x3d4] sm:$0xf]
      %v597 = vld [vmem:[%s320 + $0x3d8] sm:$0xf]
      %v598 = vld [vmem:[%s320 + $0x3dc] sm:$0xf]
      %v599 = vld [vmem:[%s320 + $0x3e0] sm:$0xf]
      %v600 = vld [vmem:[%s320 + $0x3e4] sm:$0xf]
      %v601 = vld [vmem:[%s320 + $0x3e8] sm:$0xf]
      %v602 = vld [vmem:[%s320 + $0x3ec] sm:$0xf]
      %v603 = vld [vmem:[%s320 + $0x3f0] sm:$0xf]
      %v604 = vld [vmem:[%s320 + $0x3f4] sm:$0xf]
      %v605 = vld [vmem:[%s320 + $0x3f8] sm:$0xf]
      %v606 = vld [vmem:[%s320 + $0x3fc] sm:$0xf]
      %v607 = vld [vmem:[%s320 + $0x400] sm:$0xf]
      %v608 = vld [vmem:[%s320 + $0x404] sm:$0xf]
      %v609 = vld [vmem:[%s320 + $0x408] sm:$0xf]
      %v610 = vld [vmem:[%s320 + $0x40c] sm:$0xf]
      %v611 = vld [vmem:[%s320 + $0x410] sm:$0xf]
      %v612 = vld [vmem:[%s320 + $0x414] sm:$0xf]
      %v613 = vld [vmem:[%s320 + $0x418] sm:$0xf]
      %v614 = vld [vmem:[%s320 + $0x41c] sm:$0xf]
      %v615 = vld [vmem:[%s320 + $0x420] sm:$0xf]
      %v616 = vld [vmem:[%s320 + $0x424] sm:$0xf]
      %v617 = vld [vmem:[%s320 + $0x428] sm:$0xf]
      %v618 = vld [vmem:[%s320 + $0x42c] sm:$0xf]
      %v619 = vld [vmem:[%s320 + $0x430] sm:$0xf]
      %v620 = vld [vmem:[%s320 + $0x434] sm:$0xf]
      %v621 = vld [vmem:[%s320 + $0x438] sm:$0xf]
      %v622 = vld [vmem:[%s320 + $0x43c] sm:$0xf]
      %v623 = vld [vmem:[%s320 + $0x440] sm:$0xf]
      %v624 = vld [vmem:[%s320 + $0x444] sm:$0xf]
      %v625 = vld [vmem:[%s320 + $0x448] sm:$0xf]
      %v626 = vld [vmem:[%s320 + $0x44c] sm:$0xf]
      %v627 = vld [vmem:[%s320 + $0x450] sm:$0xf]
      %v628 = vld [vmem:[%s320 + $0x454] sm:$0xf]
      %v629 = vld [vmem:[%s320 + $0x458] sm:$0xf]
      %v630 = vld [vmem:[%s320 + $0x45c] sm:$0xf]
      %v631 = vld [vmem:[%s320 + $0x460] sm:$0xf]
      %v632 = vld [vmem:[%s320 + $0x464] sm:$0xf]
      %v633 = vld [vmem:[%s320 + $0x468] sm:$0xf]
      %v634 = vld [vmem:[%s320 + $0x46c] sm:$0xf]
      %v635 = vld [vmem:[%s320 + $0x470] sm:$0xf]
      %v636 = vld [vmem:[%s320 + $0x474] sm:$0xf]
      %v637 = vld [vmem:[%s320 + $0x478] sm:$0xf]
      %v638 = vld [vmem:[%s320 + $0x47c] sm:$0xf]
      %v639 = vld [vmem:[%s320 + $0x480] sm:$0xf]
      %v640 = vld [vmem:[%s320 + $0x484] sm:$0xf]
      %v641 = vld [vmem:[%s320 + $0x488] sm:$0xf]
      %v642 = vld [vmem:[%s320 + $0x48c] sm:$0xf]
      %v643 = vld [vmem:[%s320 + $0x490] sm:$0xf]
      %v644 = vld [vmem:[%s320 + $0x494] sm:$0xf]
      %v645 = vld [vmem:[%s320 + $0x498] sm:$0xf]
      %v646 = vld [vmem:[%s320 + $0x49c] sm:$0xf]
      %v647 = vld [vmem:[%s320 + $0x4a0] sm:$0xf]
      %v648 = vld [vmem:[%s320 + $0x4a4] sm:$0xf]
      %v649 = vld [vmem:[%s320 + $0x4a8] sm:$0xf]
      %v650 = vld [vmem:[%s320 + $0x4ac] sm:$0xf]
      %v651 = vld [vmem:[%s320 + $0x4b0] sm:$0xf]
      %v652 = vld [vmem:[%s320 + $0x4b4] sm:$0xf]
      %v653 = vld [vmem:[%s320 + $0x4b8] sm:$0xf]
      %v654 = vld [vmem:[%s320 + $0x4bc] sm:$0xf]
      %v655 = vld [vmem:[%s320 + $0x4c0] sm:$0xf]
      %v656 = vld [vmem:[%s320 + $0x4c4] sm:$0xf]
      %v657 = vld [vmem:[%s320 + $0x4c8] sm:$0xf]
      %v658 = vld [vmem:[%s320 + $0x4cc] sm:$0xf]
      %v659 = vld [vmem:[%s320 + $0x4d0] sm:$0xf]
      %v660 = vld [vmem:[%s320 + $0x4d4] sm:$0xf]
      %v661 = vld [vmem:[%s320 + $0x4d8] sm:$0xf]
      %v662 = vld [vmem:[%s320 + $0x4dc] sm:$0xf]
      %v663 = vld [vmem:[%s320 + $0x4e0] sm:$0xf]
      %v664 = vld [vmem:[%s320 + $0x4e4] sm:$0xf]
      %v665 = vld [vmem:[%s320 + $0x4e8] sm:$0xf]
      %v666 = vld [vmem:[%s320 + $0x4ec] sm:$0xf]
      %v667 = vld [vmem:[%s320 + $0x4f0] sm:$0xf]
      %v668 = vld [vmem:[%s320 + $0x4f4] sm:$0xf]
      %v669 = vld [vmem:[%s320 + $0x4f8] sm:$0xf]
      %v670 = vld [vmem:[%s320 + $0x4fc] sm:$0xf]
      %v671 = vld [vmem:[%s320 + $0x500] sm:$0xf]
      %v672 = vld [vmem:[%s320 + $0x504] sm:$0xf]
      %v673 = vld [vmem:[%s320 + $0x508] sm:$0xf]
      %v674 = vld [vmem:[%s320 + $0x50c] sm:$0xf]
      %v675 = vld [vmem:[%s320 + $0x510] sm:$0xf]
      %v676 = vld [vmem:[%s320 + $0x514] sm:$0xf]
      %v677 = vld [vmem:[%s320 + $0x518] sm:$0xf]
      %v678 = vld [vmem:[%s320 + $0x51c] sm:$0xf]
      %v679 = vld [vmem:[%s320 + $0x520] sm:$0xf]
      %v680 = vld [vmem:[%s320 + $0x524] sm:$0xf]
      %v681 = vld [vmem:[%s320 + $0x528] sm:$0xf]
      %v682 = vld [vmem:[%s320 + $0x52c] sm:$0xf]
      %v683 = vld [vmem:[%s320 + $0x530] sm:$0xf]
      %v684 = vld [vmem:[%s320 + $0x534] sm:$0xf]
      %v685 = vld [vmem:[%s320 + $0x538] sm:$0xf]
      %v686 = vld [vmem:[%s320 + $0x53c] sm:$0xf]
      %v687 = vld [vmem:[%s320 + $0x540] sm:$0xf]
      %v688 = vld [vmem:[%s320 + $0x544] sm:$0xf]
      %v689 = vld [vmem:[%s320 + $0x548] sm:$0xf]
      %v690 = vld [vmem:[%s320 + $0x54c] sm:$0xf]
      %v691 = vld [vmem:[%s320 + $0x550] sm:$0xf]
      %v692 = vld [vmem:[%s320 + $0x554] sm:$0xf]
      %v693 = vld [vmem:[%s320 + $0x558] sm:$0xf]
      %v694 = vld [vmem:[%s320 + $0x55c] sm:$0xf]
      %v695 = vld [vmem:[%s320 + $0x560] sm:$0xf]
      %v696 = vld [vmem:[%s320 + $0x564] sm:$0xf]
      %v697 = vld [vmem:[%s320 + $0x568] sm:$0xf]
      %v698 = vld [vmem:[%s320 + $0x56c] sm:$0xf]
      %v699 = vld [vmem:[%s320 + $0x570] sm:$0xf]
      %v700 = vld [vmem:[%s320 + $0x574] sm:$0xf]
      %v701 = vld [vmem:[%s320 + $0x578] sm:$0xf]
      %v702 = vld [vmem:[%s320 + $0x57c] sm:$0xf]
      %v703 = vld [vmem:[%s320 + $0x580] sm:$0xf]
      %v704 = vld [vmem:[%s320 + $0x584] sm:$0xf]
      %v705 = vld [vmem:[%s320 + $0x588] sm:$0xf]
      %v706 = vld [vmem:[%s320 + $0x58c] sm:$0xf]
      %v707 = vld [vmem:[%s320 + $0x590] sm:$0xf]
      %v708 = vld [vmem:[%s320 + $0x594] sm:$0xf]
      %v709 = vld [vmem:[%s320 + $0x598] sm:$0xf]
      %v710 = vld [vmem:[%s320 + $0x59c] sm:$0xf]
      %v711 = vld [vmem:[%s320 + $0x5a0] sm:$0xf]
      %v712 = vld [vmem:[%s320 + $0x5a4] sm:$0xf]
      %v713 = vld [vmem:[%s320 + $0x5a8] sm:$0xf]
      %v714 = vld [vmem:[%s320 + $0x5ac] sm:$0xf]
      %v715 = vld [vmem:[%s320 + $0x5b0] sm:$0xf]
      %v716 = vld [vmem:[%s320 + $0x5b4] sm:$0xf]
      %v717 = vld [vmem:[%s320 + $0x5b8] sm:$0xf]
      %v718 = vld [vmem:[%s320 + $0x5bc] sm:$0xf]
      %v719 = vld [vmem:[%s320 + $0x5c0] sm:$0xf]
      %v720 = vld [vmem:[%s320 + $0x5c4] sm:$0xf]
      %v721 = vld [vmem:[%s320 + $0x5c8] sm:$0xf]
      %v722 = vld [vmem:[%s320 + $0x5cc] sm:$0xf]
      %v723 = vld [vmem:[%s320 + $0x5d0] sm:$0xf]
      %v724 = vld [vmem:[%s320 + $0x5d4] sm:$0xf]
      %v725 = vld [vmem:[%s320 + $0x5d8] sm:$0xf]
      %v726 = vld [vmem:[%s320 + $0x5dc] sm:$0xf]
      %v727 = vld [vmem:[%s320 + $0x5e0] sm:$0xf]
      %v728 = vld [vmem:[%s320 + $0x5e4] sm:$0xf]
      %v729 = vld [vmem:[%s320 + $0x5e8] sm:$0xf]
      %v730 = vld [vmem:[%s320 + $0x5ec] sm:$0xf]
      %v731 = vld [vmem:[%s320 + $0x5f0] sm:$0xf]
      %v732 = vld [vmem:[%s320 + $0x5f4] sm:$0xf]
      %v733 = vld [vmem:[%s320 + $0x5f8] sm:$0xf]
      %v734 = vld [vmem:[%s320 + $0x5fc] sm:$0xf]
      %v735 = vld [vmem:[%s320 + $0x600] sm:$0xf]
      %v736 = vld [vmem:[%s320 + $0x604] sm:$0xf]
      %v737 = vld [vmem:[%s320 + $0x608] sm:$0xf]
      %v738 = vld [vmem:[%s320 + $0x60c] sm:$0xf]
      %v739 = vld [vmem:[%s320 + $0x610] sm:$0xf]
      %v740 = vld [vmem:[%s320 + $0x614] sm:$0xf]
      %v741 = vld [vmem:[%s320 + $0x618] sm:$0xf]
      %v742 = vld [vmem:[%s320 + $0x61c] sm:$0xf]
      %v743 = vld [vmem:[%s320 + $0x620] sm:$0xf]
      %v744 = vld [vmem:[%s320 + $0x624] sm:$0xf]
      %v745 = vld [vmem:[%s320 + $0x628] sm:$0xf]
      %v746 = vld [vmem:[%s320 + $0x62c] sm:$0xf]
      %v747 = vld [vmem:[%s320 + $0x630] sm:$0xf]
      %v748 = vld [vmem:[%s320 + $0x634] sm:$0xf]
      %v749 = vld [vmem:[%s320 + $0x638] sm:$0xf]
      %v750 = vld [vmem:[%s320 + $0x63c] sm:$0xf]
      %v751 = vld [vmem:[%s320 + $0x640] sm:$0xf]
      %v752 = vld [vmem:[%s320 + $0x644] sm:$0xf]
      %v753 = vld [vmem:[%s320 + $0x648] sm:$0xf]
      %v754 = vld [vmem:[%s320 + $0x64c] sm:$0xf]
      %v755 = vld [vmem:[%s320 + $0x650] sm:$0xf]
      %v756 = vld [vmem:[%s320 + $0x654] sm:$0xf]
      %v757 = vld [vmem:[%s320 + $0x658] sm:$0xf]
      %v758 = vld [vmem:[%s320 + $0x65c] sm:$0xf]
      %v759 = vld [vmem:[%s320 + $0x660] sm:$0xf]
      %v760 = vld [vmem:[%s320 + $0x664] sm:$0xf]
      %v761 = vld [vmem:[%s320 + $0x668] sm:$0xf]
      %v762 = vld [vmem:[%s320 + $0x66c] sm:$0xf]
      %v763 = vld [vmem:[%s320 + $0x670] sm:$0xf]
      %v764 = vld [vmem:[%s320 + $0x674] sm:$0xf]
      %v765 = vld [vmem:[%s320 + $0x678] sm:$0xf]
      %v766 = vld [vmem:[%s320 + $0x67c] sm:$0xf]
      %v767 = vld [vmem:[%s320 + $0x680] sm:$0xf]
      %v768 = vld [vmem:[%s320 + $0x684] sm:$0xf]
      %v769 = vld [vmem:[%s320 + $0x688] sm:$0xf]
      %v770 = vld [vmem:[%s320 + $0x68c] sm:$0xf]
      %v771 = vld [vmem:[%s320 + $0x690] sm:$0xf]
      %v772 = vld [vmem:[%s320 + $0x694] sm:$0xf]
      %v773 = vld [vmem:[%s320 + $0x698] sm:$0xf]
      %v774 = vld [vmem:[%s320 + $0x69c] sm:$0xf]
      %v775 = vld [vmem:[%s320 + $0x6a0] sm:$0xf]
      %v776 = vld [vmem:[%s320 + $0x6a4] sm:$0xf]
      %v777 = vld [vmem:[%s320 + $0x6a8] sm:$0xf]
      %v778 = vld [vmem:[%s320 + $0x6ac] sm:$0xf]
      %v779 = vld [vmem:[%s320 + $0x6b0] sm:$0xf]
      %v780 = vld [vmem:[%s320 + $0x6b4] sm:$0xf]
      %v781 = vld [vmem:[%s320 + $0x6b8] sm:$0xf]
      %v782 = vld [vmem:[%s320 + $0x6bc] sm:$0xf]
      %v783 = vld [vmem:[%s320 + $0x6c0] sm:$0xf]
      %v784 = vld [vmem:[%s320 + $0x6c4] sm:$0xf]
      %v785 = vld [vmem:[%s320 + $0x6c8] sm:$0xf]
      %v786 = vld [vmem:[%s320 + $0x6cc] sm:$0xf]
      %v787 = vld [vmem:[%s320 + $0x6d0] sm:$0xf]
      %v788 = vld [vmem:[%s320 + $0x6d4] sm:$0xf]
      %v789 = vld [vmem:[%s320 + $0x6d8] sm:$0xf]
      %v790 = vld [vmem:[%s320 + $0x6dc] sm:$0xf]
      %v791 = vld [vmem:[%s320 + $0x6e0] sm:$0xf]
      %v792 = vld [vmem:[%s320 + $0x6e4] sm:$0xf]
      %v793 = vld [vmem:[%s320 + $0x6e8] sm:$0xf]
      %v794 = vld [vmem:[%s320 + $0x6ec] sm:$0xf]
      %v795 = vld [vmem:[%s320 + $0x6f0] sm:$0xf]
      %v796 = vld [vmem:[%s320 + $0x6f4] sm:$0xf]
      %v797 = vld [vmem:[%s320 + $0x6f8] sm:$0xf]
      %v798 = vld [vmem:[%s320 + $0x6fc] sm:$0xf]
      %v799 = vld [vmem:[%s320 + $0x700] sm:$0xf]
      %v800 = vld [vmem:[%s320 + $0x704] sm:$0xf]
      %v801 = vld [vmem:[%s320 + $0x708] sm:$0xf]
      %v802 = vld [vmem:[%s320 + $0x70c] sm:$0xf]
      %v803 = vld [vmem:[%s320 + $0x710] sm:$0xf]
      %v804 = vld [vmem:[%s320 + $0x714] sm:$0xf]
      %v805 = vld [vmem:[%s320 + $0x718] sm:$0xf]
      %v806 = vld [vmem:[%s320 + $0x71c] sm:$0xf]
      %v807 = vld [vmem:[%s320 + $0x720] sm:$0xf]
      %v808 = vld [vmem:[%s320 + $0x724] sm:$0xf]
      %v809 = vld [vmem:[%s320 + $0x728] sm:$0xf]
      %v810 = vld [vmem:[%s320 + $0x72c] sm:$0xf]
      %v811 = vld [vmem:[%s320 + $0x730] sm:$0xf]
      %v812 = vld [vmem:[%s320 + $0x734] sm:$0xf]
      %v813 = vld [vmem:[%s320 + $0x738] sm:$0xf]
      %v814 = vld [vmem:[%s320 + $0x73c] sm:$0xf]
      %v815 = vld [vmem:[%s320 + $0x740] sm:$0xf]
      %v816 = vld [vmem:[%s320 + $0x744] sm:$0xf]
      %v817 = vld [vmem:[%s320 + $0x748] sm:$0xf]
      %v818 = vld [vmem:[%s320 + $0x74c] sm:$0xf]
      %v819 = vld [vmem:[%s320 + $0x750] sm:$0xf]
      %v820 = vld [vmem:[%s320 + $0x754] sm:$0xf]
      %v821 = vld [vmem:[%s320 + $0x758] sm:$0xf]
      %v822 = vld [vmem:[%s320 + $0x75c] sm:$0xf]
      %v823 = vld [vmem:[%s320 + $0x760] sm:$0xf]
      %v824 = vld [vmem:[%s320 + $0x764] sm:$0xf]
      %v825 = vld [vmem:[%s320 + $0x768] sm:$0xf]
      %v826 = vld [vmem:[%s320 + $0x76c] sm:$0xf]
      %v827 = vld [vmem:[%s320 + $0x770] sm:$0xf]
      %v828 = vld [vmem:[%s320 + $0x774] sm:$0xf]
      %v829 = vld [vmem:[%s320 + $0x778] sm:$0xf]
      %v830 = vld [vmem:[%s320 + $0x77c] sm:$0xf]
      %v831 = vld [vmem:[%s320 + $0x780] sm:$0xf]
      %v832 = vld [vmem:[%s320 + $0x784] sm:$0xf]
      %v833 = vld [vmem:[%s320 + $0x788] sm:$0xf]
      %v834 = vld [vmem:[%s320 + $0x78c] sm:$0xf]
      %v835 = vld [vmem:[%s320 + $0x790] sm:$0xf]
      %v836 = vld [vmem:[%s320 + $0x794] sm:$0xf]
      %v837 = vld [vmem:[%s320 + $0x798] sm:$0xf]
      %v838 = vld [vmem:[%s320 + $0x79c] sm:$0xf]
      %v839 = vld [vmem:[%s320 + $0x7a0] sm:$0xf]
      %v840 = vld [vmem:[%s320 + $0x7a4] sm:$0xf]
      %v841 = vld [vmem:[%s320 + $0x7a8] sm:$0xf]
      %v842 = vld [vmem:[%s320 + $0x7ac] sm:$0xf]
      %v843 = vld [vmem:[%s320 + $0x7b0] sm:$0xf]
      %v844 = vld [vmem:[%s320 + $0x7b4] sm:$0xf]
      %v845 = vld [vmem:[%s320 + $0x7b8] sm:$0xf]
      %v846 = vld [vmem:[%s320 + $0x7bc] sm:$0xf]
      %v847 = vld [vmem:[%s320 + $0x7c0] sm:$0xf]
      %v848 = vld [vmem:[%s320 + $0x7c4] sm:$0xf]
      %v849 = vld [vmem:[%s320 + $0x7c8] sm:$0xf]
      %v850 = vld [vmem:[%s320 + $0x7cc] sm:$0xf]
      %v851 = vld [vmem:[%s320 + $0x7d0] sm:$0xf]
      %v852 = vld [vmem:[%s320 + $0x7d4] sm:$0xf]
      %v853 = vld [vmem:[%s320 + $0x7d8] sm:$0xf]
      %v854 = vld [vmem:[%s320 + $0x7dc] sm:$0xf]
      %v855 = vld [vmem:[%s320 + $0x7e0] sm:$0xf]
      %v856 = vld [vmem:[%s320 + $0x7e4] sm:$0xf]
      %v857 = vld [vmem:[%s320 + $0x7e8] sm:$0xf]
      %v858 = vld [vmem:[%s320 + $0x7ec] sm:$0xf]
      %v859 = vld [vmem:[%s320 + $0x7f0] sm:$0xf]
      %v860 = vld [vmem:[%s320 + $0x7f4] sm:$0xf]
      %v861 = vld [vmem:[%s320 + $0x7f8] sm:$0xf]
      %v862 = vld [vmem:[%s320 + $0x7fc] sm:$0xf]
      %v863 = vld [vmem:[%s320 + $0x800] sm:$0xf]
      %v864 = vld [vmem:[%s320 + $0x804] sm:$0xf]
      %v865 = vld [vmem:[%s320 + $0x808] sm:$0xf]
      %v866 = vld [vmem:[%s320 + $0x80c] sm:$0xf]
      %v867 = vld [vmem:[%s320 + $0x810] sm:$0xf]
      %v868 = vld [vmem:[%s320 + $0x814] sm:$0xf]
      %v869 = vld [vmem:[%s320 + $0x818] sm:$0xf]
      %v870 = vld [vmem:[%s320 + $0x81c] sm:$0xf]
      %v871 = vld [vmem:[%s320 + $0x820] sm:$0xf]
      %v872 = vld [vmem:[%s320 + $0x824] sm:$0xf]
      %v873 = vld [vmem:[%s320 + $0x828] sm:$0xf]
      %v874 = vld [vmem:[%s320 + $0x82c] sm:$0xf]
      %v875 = vld [vmem:[%s320 + $0x830] sm:$0xf]
      %v876 = vld [vmem:[%s320 + $0x834] sm:$0xf]
      %v877 = vld [vmem:[%s320 + $0x838] sm:$0xf]
      %v878 = vld [vmem:[%s320 + $0x83c] sm:$0xf]
      %v879 = vld [vmem:[%s320 + $0x840] sm:$0xf]
      %v880 = vld [vmem:[%s320 + $0x844] sm:$0xf]
      %v881 = vld [vmem:[%s320 + $0x848] sm:$0xf]
      %v882 = vld [vmem:[%s320 + $0x84c] sm:$0xf]
      %v883 = vld [vmem:[%s320 + $0x850] sm:$0xf]
      %v884 = vld [vmem:[%s320 + $0x854] sm:$0xf]
      %v885 = vld [vmem:[%s320 + $0x858] sm:$0xf]
      %v886 = vld [vmem:[%s320 + $0x85c] sm:$0xf]
      %v887 = vld [vmem:[%s320 + $0x860] sm:$0xf]
      %v888 = vld [vmem:[%s320 + $0x864] sm:$0xf]
      %v889 = vld [vmem:[%s320 + $0x868] sm:$0xf]
      %v890 = vld [vmem:[%s320 + $0x86c] sm:$0xf]
      %v891 = vld [vmem:[%s320 + $0x870] sm:$0xf]
      %v892 = vld [vmem:[%s320 + $0x874] sm:$0xf]
      %v893 = vld [vmem:[%s320 + $0x878] sm:$0xf]
      %v894 = vld [vmem:[%s320 + $0x87c] sm:$0xf]
      %v895 = vld [vmem:[%s320 + $0x880] sm:$0xf]
      %v896 = vld [vmem:[%s320 + $0x884] sm:$0xf]
      %v897 = vld [vmem:[%s320 + $0x888] sm:$0xf]
      %v898 = vld [vmem:[%s320 + $0x88c] sm:$0xf]
      %v899 = vld [vmem:[%s320 + $0x890] sm:$0xf]
      %v900 = vld [vmem:[%s320 + $0x894] sm:$0xf]
      %v901 = vld [vmem:[%s320 + $0x898] sm:$0xf]
      %v902 = vld [vmem:[%s320 + $0x89c] sm:$0xf]
      %v903 = vld [vmem:[%s320 + $0x8a0] sm:$0xf]
      %v904 = vld [vmem:[%s320 + $0x8a4] sm:$0xf]
      %v905 = vld [vmem:[%s320 + $0x8a8] sm:$0xf]
      %v906 = vld [vmem:[%s320 + $0x8ac] sm:$0xf]
      %v907 = vld [vmem:[%s320 + $0x8b0] sm:$0xf]
      %v908 = vld [vmem:[%s320 + $0x8b4] sm:$0xf]
      %v909 = vld [vmem:[%s320 + $0x8b8] sm:$0xf]
      %v910 = vld [vmem:[%s320 + $0x8bc] sm:$0xf]
      %v911 = vld [vmem:[%s320 + $0x8c0] sm:$0xf]
      %v912 = vld [vmem:[%s320 + $0x8c4] sm:$0xf]
      %v913 = vld [vmem:[%s320 + $0x8c8] sm:$0xf]
      %v914 = vld [vmem:[%s320 + $0x8cc] sm:$0xf]
      %v915 = vld [vmem:[%s320 + $0x8d0] sm:$0xf]
      %v916 = vld [vmem:[%s320 + $0x8d4] sm:$0xf]
      %v917 = vld [vmem:[%s320 + $0x8d8] sm:$0xf]
      %v918 = vld [vmem:[%s320 + $0x8dc] sm:$0xf]
      %v919 = vld [vmem:[%s320 + $0x8e0] sm:$0xf]
      %v920 = vld [vmem:[%s320 + $0x8e4] sm:$0xf]
      %v921 = vld [vmem:[%s320 + $0x8e8] sm:$0xf]
      %v922 = vld [vmem:[%s320 + $0x8ec] sm:$0xf]
      %v923 = vld [vmem:[%s320 + $0x8f0] sm:$0xf]
      %v924 = vld [vmem:[%s320 + $0x8f4] sm:$0xf]
      %v925 = vld [vmem:[%s320 + $0x8f8] sm:$0xf]
      %v926 = vld [vmem:[%s320 + $0x8fc] sm:$0xf]
      %v927 = vld [vmem:[%s320 + $0x900] sm:$0xf]
      %v928 = vld [vmem:[%s320 + $0x904] sm:$0xf]
      %v929 = vld [vmem:[%s320 + $0x908] sm:$0xf]
      %v930 = vld [vmem:[%s320 + $0x90c] sm:$0xf]
      %v931 = vld [vmem:[%s320 + $0x910] sm:$0xf]
      %v932 = vld [vmem:[%s320 + $0x914] sm:$0xf]
      %v933 = vld [vmem:[%s320 + $0x918] sm:$0xf]
      %v934 = vld [vmem:[%s320 + $0x91c] sm:$0xf]
      %v935 = vld [vmem:[%s320 + $0x920] sm:$0xf]
      %v936 = vld [vmem:[%s320 + $0x924] sm:$0xf]
      %v937 = vld [vmem:[%s320 + $0x928] sm:$0xf]
      %v938 = vld [vmem:[%s320 + $0x92c] sm:$0xf]
      %v939 = vld [vmem:[%s320 + $0x930] sm:$0xf]
      %v940 = vld [vmem:[%s320 + $0x934] sm:$0xf]
      %v941 = vld [vmem:[%s320 + $0x938] sm:$0xf]
      %v942 = vld [vmem:[%s320 + $0x93c] sm:$0xf]
      %v943 = vld [vmem:[%s320 + $0x940] sm:$0xf]
      %v944 = vld [vmem:[%s320 + $0x944] sm:$0xf]
      %v945 = vld [vmem:[%s320 + $0x948] sm:$0xf]
      %v946 = vld [vmem:[%s320 + $0x94c] sm:$0xf]
      %v947 = vld [vmem:[%s320 + $0x950] sm:$0xf]
      %v948 = vld [vmem:[%s320 + $0x954] sm:$0xf]
      %v949 = vld [vmem:[%s320 + $0x958] sm:$0xf]
      %v950 = vld [vmem:[%s320 + $0x95c] sm:$0xf]
      %v951 = vld [vmem:[%s320 + $0x960] sm:$0xf]
      %v952 = vld [vmem:[%s320 + $0x964] sm:$0xf]
      %v953 = vld [vmem:[%s320 + $0x968] sm:$0xf]
      %v954 = vld [vmem:[%s320 + $0x96c] sm:$0xf]
      %v955 = vld [vmem:[%s320 + $0x970] sm:$0xf]
      %v956 = vld [vmem:[%s320 + $0x974] sm:$0xf]
      %v957 = vld [vmem:[%s320 + $0x978] sm:$0xf]
      %v958 = vld [vmem:[%s320 + $0x97c] sm:$0xf]
      %v959 = vld [vmem:[%s320 + $0x980] sm:$0xf]
      %v960 = vld [vmem:[%s320 + $0x984] sm:$0xf]
      %v961 = vld [vmem:[%s320 + $0x988] sm:$0xf]
      %v962 = vld [vmem:[%s320 + $0x98c] sm:$0xf]
      %v963 = vld [vmem:[%s320 + $0x990] sm:$0xf]
      %v964 = vld [vmem:[%s320 + $0x994] sm:$0xf]
      %v965 = vld [vmem:[%s320 + $0x998] sm:$0xf]
      %v966 = vld [vmem:[%s320 + $0x99c] sm:$0xf]
      %v967 = vld [vmem:[%s320 + $0x9a0] sm:$0xf]
      %v968 = vld [vmem:[%s320 + $0x9a4] sm:$0xf]
      %v969 = vld [vmem:[%s320 + $0x9a8] sm:$0xf]
      %v970 = vld [vmem:[%s320 + $0x9ac] sm:$0xf]
      %v971 = vld [vmem:[%s320 + $0x9b0] sm:$0xf]
      %v972 = vld [vmem:[%s320 + $0x9b4] sm:$0xf]
      %v973 = vld [vmem:[%s320 + $0x9b8] sm:$0xf]
      %v974 = vld [vmem:[%s320 + $0x9bc] sm:$0xf]
      %v975 = vld [vmem:[%s320 + $0x9c0] sm:$0xf]
      %v976 = vld [vmem:[%s320 + $0x9c4] sm:$0xf]
      %v977 = vld [vmem:[%s320 + $0x9c8] sm:$0xf]
      %v978 = vld [vmem:[%s320 + $0x9cc] sm:$0xf]
      %v979 = vld [vmem:[%s320 + $0x9d0] sm:$0xf]
      %v980 = vld [vmem:[%s320 + $0x9d4] sm:$0xf]
      %v981 = vld [vmem:[%s320 + $0x9d8] sm:$0xf]
      %v982 = vld [vmem:[%s320 + $0x9dc] sm:$0xf]
      %v983 = vld [vmem:[%s320 + $0x9e0] sm:$0xf]
      %v984 = vld [vmem:[%s320 + $0x9e4] sm:$0xf]
      %v985 = vld [vmem:[%s320 + $0x9e8] sm:$0xf]
      %v986 = vld [vmem:[%s320 + $0x9ec] sm:$0xf]
      %v987 = vld [vmem:[%s320 + $0x9f0] sm:$0xf]
      %v988 = vld [vmem:[%s320 + $0x9f4] sm:$0xf]
      %v989 = vld [vmem:[%s320 + $0x9f8] sm:$0xf]
      %v990 = vld [vmem:[%s320 + $0x9fc] sm:$0xf]
      %v991 = vld [vmem:[%s320 + $0xa00] sm:$0xf]
      %v992 = vld [vmem:[%s320 + $0xa04] sm:$0xf]
      %v993 = vld [vmem:[%s320 + $0xa08] sm:$0xf]
      %v994 = vld [vmem:[%s320 + $0xa0c] sm:$0xf]
      %v995 = vld [vmem:[%s320 + $0xa10] sm:$0xf]
      %v996 = vld [vmem:[%s320 + $0xa14] sm:$0xf]
      %v997 = vld [vmem:[%s320 + $0xa18] sm:$0xf]
      %v998 = vld [vmem:[%s320 + $0xa1c] sm:$0xf]
      %v999 = vld [vmem:[%s320 + $0xa20] sm:$0xf]
      %v1000 = vld [vmem:[%s320 + $0xa24] sm:$0xf]
      %v1001 = vld [vmem:[%s320 + $0xa28] sm:$0xf]
      %v1002 = vld [vmem:[%s320 + $0xa2c] sm:$0xf]
      %v1003 = vld [vmem:[%s320 + $0xa30] sm:$0xf]
      %v1004 = vld [vmem:[%s320 + $0xa34] sm:$0xf]
      %v1005 = vld [vmem:[%s320 + $0xa38] sm:$0xf]
      %v1006 = vld [vmem:[%s320 + $0xa3c] sm:$0xf]
      %v1007 = vld [vmem:[%s320 + $0xa40] sm:$0xf]
      %v1008 = vld [vmem:[%s320 + $0xa44] sm:$0xf]
      %v1009 = vld [vmem:[%s320 + $0xa48] sm:$0xf]
      %v1010 = vld [vmem:[%s320 + $0xa4c] sm:$0xf]
      %v1011 = vld [vmem:[%s320 + $0xa50] sm:$0xf]
      %v1012 = vld [vmem:[%s320 + $0xa54] sm:$0xf]
      %v1013 = vld [vmem:[%s320 + $0xa58] sm:$0xf]
      %v1014 = vld [vmem:[%s320 + $0xa5c] sm:$0xf]
      %v1015 = vld [vmem:[%s320 + $0xa60] sm:$0xf]
      %v1016 = vld [vmem:[%s320 + $0xa64] sm:$0xf]
      %v1017 = vld [vmem:[%s320 + $0xa68] sm:$0xf]
      %v1018 = vld [vmem:[%s320 + $0xa6c] sm:$0xf]
      %v1019 = vld [vmem:[%s320 + $0xa70] sm:$0xf]
      %v1020 = vld [vmem:[%s320 + $0xa74] sm:$0xf]
      %v1021 = vld [vmem:[%s320 + $0xa78] sm:$0xf]
      %v1022 = vld [vmem:[%s320 + $0xa7c] sm:$0xf]
      %v1023 = vld [vmem:[%s320 + $0xa80] sm:$0xf]
      %v1024 = vld [vmem:[%s320 + $0xa84] sm:$0xf]
      %v1025 = vld [vmem:[%s320 + $0xa88] sm:$0xf]
      %v1026 = vld [vmem:[%s320 + $0xa8c] sm:$0xf]
      %v1027 = vld [vmem:[%s320 + $0xa90] sm:$0xf]
      %v1028 = vld [vmem:[%s320 + $0xa94] sm:$0xf]
      %v1029 = vld [vmem:[%s320 + $0xa98] sm:$0xf]
      %v1030 = vld [vmem:[%s320 + $0xa9c] sm:$0xf]
      %v1031 = vld [vmem:[%s320 + $0xaa0] sm:$0xf]
      %v1032 = vld [vmem:[%s320 + $0xaa4] sm:$0xf]
      %v1033 = vld [vmem:[%s320 + $0xaa8] sm:$0xf]
      %v1034 = vld [vmem:[%s320 + $0xaac] sm:$0xf]
      %v1035 = vld [vmem:[%s320 + $0xab0] sm:$0xf]
      %v1036 = vld [vmem:[%s320 + $0xab4] sm:$0xf]
      %v1037 = vld [vmem:[%s320 + $0xab8] sm:$0xf]
      %v1038 = vld [vmem:[%s320 + $0xabc] sm:$0xf]
      %v1039 = vld [vmem:[%s320 + $0xac0] sm:$0xf]
      %v1040 = vld [vmem:[%s320 + $0xac4] sm:$0xf]
      %v1041 = vld [vmem:[%s320 + $0xac8] sm:$0xf]
      %v1042 = vld [vmem:[%s320 + $0xacc] sm:$0xf]
      %v1043 = vld [vmem:[%s320 + $0xad0] sm:$0xf]
      %v1044 = vld [vmem:[%s320 + $0xad4] sm:$0xf]
      %v1045 = vld [vmem:[%s320 + $0xad8] sm:$0xf]
      %v1046 = vld [vmem:[%s320 + $0xadc] sm:$0xf]
      %v1047 = vld [vmem:[%s320 + $0xae0] sm:$0xf]
      %v1048 = vld [vmem:[%s320 + $0xae4] sm:$0xf]
      %v1049 = vld [vmem:[%s320 + $0xae8] sm:$0xf]
      %v1050 = vld [vmem:[%s320 + $0xaec] sm:$0xf]
      %v1051 = vld [vmem:[%s320 + $0xaf0] sm:$0xf]
      %v1052 = vld [vmem:[%s320 + $0xaf4] sm:$0xf]
      %v1053 = vld [vmem:[%s320 + $0xaf8] sm:$0xf]
      %v1054 = vld [vmem:[%s320 + $0xafc] sm:$0xf]
      %v1055 = vld [vmem:[%s320 + $0xb00] sm:$0xf]
      %v1056 = vld [vmem:[%s320 + $0xb04] sm:$0xf]
      %v1057 = vld [vmem:[%s320 + $0xb08] sm:$0xf]
      %v1058 = vld [vmem:[%s320 + $0xb0c] sm:$0xf]
      %v1059 = vld [vmem:[%s320 + $0xb10] sm:$0xf]
      %v1060 = vld [vmem:[%s320 + $0xb14] sm:$0xf]
      %v1061 = vld [vmem:[%s320 + $0xb18] sm:$0xf]
      %v1062 = vld [vmem:[%s320 + $0xb1c] sm:$0xf]
      %v1063 = vld [vmem:[%s320 + $0xb20] sm:$0xf]
      %v1064 = vld [vmem:[%s320 + $0xb24] sm:$0xf]
      %v1065 = vld [vmem:[%s320 + $0xb28] sm:$0xf]
      %v1066 = vld [vmem:[%s320 + $0xb2c] sm:$0xf]
      %v1067 = vld [vmem:[%s320 + $0xb30] sm:$0xf]
      %v1068 = vld [vmem:[%s320 + $0xb34] sm:$0xf]
      %v1069 = vld [vmem:[%s320 + $0xb38] sm:$0xf]
      %v1070 = vld [vmem:[%s320 + $0xb3c] sm:$0xf]
      %v1071 = vld [vmem:[%s320 + $0xb40] sm:$0xf]
      %v1072 = vld [vmem:[%s320 + $0xb44] sm:$0xf]
      %v1073 = vld [vmem:[%s320 + $0xb48] sm:$0xf]
      %v1074 = vld [vmem:[%s320 + $0xb4c] sm:$0xf]
      %v1075 = vld [vmem:[%s320 + $0xb50] sm:$0xf]
      %v1076 = vld [vmem:[%s320 + $0xb54] sm:$0xf]
      %v1077 = vld [vmem:[%s320 + $0xb58] sm:$0xf]
      %v1078 = vld [vmem:[%s320 + $0xb5c] sm:$0xf]
      %v1079 = vld [vmem:[%s320 + $0xb60] sm:$0xf]
      %v1080 = vld [vmem:[%s320 + $0xb64] sm:$0xf]
      %v1081 = vld [vmem:[%s320 + $0xb68] sm:$0xf]
      %v1082 = vld [vmem:[%s320 + $0xb6c] sm:$0xf]
      %v1083 = vld [vmem:[%s320 + $0xb70] sm:$0xf]
      %v1084 = vld [vmem:[%s320 + $0xb74] sm:$0xf]
      %v1085 = vld [vmem:[%s320 + $0xb78] sm:$0xf]
      %v1086 = vld [vmem:[%s320 + $0xb7c] sm:$0xf]
      %v1087 = vld [vmem:[%s320 + $0xb80] sm:$0xf]
      %v1088 = vld [vmem:[%s320 + $0xb84] sm:$0xf]
      %v1089 = vld [vmem:[%s320 + $0xb88] sm:$0xf]
      %v1090 = vld [vmem:[%s320 + $0xb8c] sm:$0xf]
      %v1091 = vld [vmem:[%s320 + $0xb90] sm:$0xf]
      %v1092 = vld [vmem:[%s320 + $0xb94] sm:$0xf]
      %v1093 = vld [vmem:[%s320 + $0xb98] sm:$0xf]
      %v1094 = vld [vmem:[%s320 + $0xb9c] sm:$0xf]
      %v1095 = vld [vmem:[%s320 + $0xba0] sm:$0xf]
      %v1096 = vld [vmem:[%s320 + $0xba4] sm:$0xf]
      %v1097 = vld [vmem:[%s320 + $0xba8] sm:$0xf]
      %v1098 = vld [vmem:[%s320 + $0xbac] sm:$0xf]
      %v1099 = vld [vmem:[%s320 + $0xbb0] sm:$0xf]
      %v1100 = vld [vmem:[%s320 + $0xbb4] sm:$0xf]
      %v1101 = vld [vmem:[%s320 + $0xbb8] sm:$0xf]
      %v1102 = vld [vmem:[%s320 + $0xbbc] sm:$0xf]
      %v1103 = vld [vmem:[%s320 + $0xbc0] sm:$0xf]
      %v1104 = vld [vmem:[%s320 + $0xbc4] sm:$0xf]
      %v1105 = vld [vmem:[%s320 + $0xbc8] sm:$0xf]
      %v1106 = vld [vmem:[%s320 + $0xbcc] sm:$0xf]
      %v1107 = vld [vmem:[%s320 + $0xbd0] sm:$0xf]
      %v1108 = vld [vmem:[%s320 + $0xbd4] sm:$0xf]
      %v1109 = vld [vmem:[%s320 + $0xbd8] sm:$0xf]
      %v1110 = vld [vmem:[%s320 + $0xbdc] sm:$0xf]
      %v1111 = vld [vmem:[%s320 + $0xbe0] sm:$0xf]
      %v1112 = vld [vmem:[%s320 + $0xbe4] sm:$0xf]
      %v1113 = vld [vmem:[%s320 + $0xbe8] sm:$0xf]
      %v1114 = vld [vmem:[%s320 + $0xbec] sm:$0xf]
      %v1115 = vld [vmem:[%s320 + $0xbf0] sm:$0xf]
      %v1116 = vld [vmem:[%s320 + $0xbf4] sm:$0xf]
      %v1117 = vld [vmem:[%s320 + $0xbf8] sm:$0xf]
      %v1118 = vld [vmem:[%s320 + $0xbfc] sm:$0xf]
      %v1119 = vld [vmem:[%s320 + $0xc00] sm:$0xf]
      %v1120 = vld [vmem:[%s320 + $0xc04] sm:$0xf]
      %v1121 = vld [vmem:[%s320 + $0xc08] sm:$0xf]
      %v1122 = vld [vmem:[%s320 + $0xc0c] sm:$0xf]
      %v1123 = vld [vmem:[%s320 + $0xc10] sm:$0xf]
      %v1124 = vld [vmem:[%s320 + $0xc14] sm:$0xf]
      %v1125 = vld [vmem:[%s320 + $0xc18] sm:$0xf]
      %v1126 = vld [vmem:[%s320 + $0xc1c] sm:$0xf]
      %v1127 = vld [vmem:[%s320 + $0xc20] sm:$0xf]
      %v1128 = vld [vmem:[%s320 + $0xc24] sm:$0xf]
      %v1129 = vld [vmem:[%s320 + $0xc28] sm:$0xf]
      %v1130 = vld [vmem:[%s320 + $0xc2c] sm:$0xf]
      %v1131 = vld [vmem:[%s320 + $0xc30] sm:$0xf]
      %v1132 = vld [vmem:[%s320 + $0xc34] sm:$0xf]
      %v1133 = vld [vmem:[%s320 + $0xc38] sm:$0xf]
      %v1134 = vld [vmem:[%s320 + $0xc3c] sm:$0xf]
      %v1135 = vld [vmem:[%s320 + $0xc40] sm:$0xf]
      %v1136 = vld [vmem:[%s320 + $0xc44] sm:$0xf]
      %v1137 = vld [vmem:[%s320 + $0xc48] sm:$0xf]
      %v1138 = vld [vmem:[%s320 + $0xc4c] sm:$0xf]
      %v1139 = vld [vmem:[%s320 + $0xc50] sm:$0xf]
      %v1140 = vld [vmem:[%s320 + $0xc54] sm:$0xf]
      %v1141 = vld [vmem:[%s320 + $0xc58] sm:$0xf]
      %v1142 = vld [vmem:[%s320 + $0xc5c] sm:$0xf]
      %v1143 = vld [vmem:[%s320 + $0xc60] sm:$0xf]
      %v1144 = vld [vmem:[%s320 + $0xc64] sm:$0xf]
      %v1145 = vld [vmem:[%s320 + $0xc68] sm:$0xf]
      %v1146 = vld [vmem:[%s320 + $0xc6c] sm:$0xf]
      %v1147 = vld [vmem:[%s320 + $0xc70] sm:$0xf]
      %v1148 = vld [vmem:[%s320 + $0xc74] sm:$0xf]
      %v1149 = vld [vmem:[%s320 + $0xc78] sm:$0xf]
      %v1150 = vld [vmem:[%s320 + $0xc7c] sm:$0xf]
      %v1151 = vld [vmem:[%s320 + $0xc80] sm:$0xf]
      %v1152 = vld [vmem:[%s320 + $0xc84] sm:$0xf]
      %v1153 = vld [vmem:[%s320 + $0xc88] sm:$0xf]
      %v1154 = vld [vmem:[%s320 + $0xc8c] sm:$0xf]
      %v1155 = vld [vmem:[%s320 + $0xc90] sm:$0xf]
      %v1156 = vld [vmem:[%s320 + $0xc94] sm:$0xf]
      %v1157 = vld [vmem:[%s320 + $0xc98] sm:$0xf]
      %v1158 = vld [vmem:[%s320 + $0xc9c] sm:$0xf]
      %v1159 = vld [vmem:[%s320 + $0xca0] sm:$0xf]
      %v1160 = vld [vmem:[%s320 + $0xca4] sm:$0xf]
      %v1161 = vld [vmem:[%s320 + $0xca8] sm:$0xf]
      %v1162 = vld [vmem:[%s320 + $0xcac] sm:$0xf]
      %v1163 = vld [vmem:[%s320 + $0xcb0] sm:$0xf]
      %v1164 = vld [vmem:[%s320 + $0xcb4] sm:$0xf]
      %v1165 = vld [vmem:[%s320 + $0xcb8] sm:$0xf]
      %v1166 = vld [vmem:[%s320 + $0xcbc] sm:$0xf]
      %v1167 = vld [vmem:[%s320 + $0xcc0] sm:$0xf]
      %v1168 = vld [vmem:[%s320 + $0xcc4] sm:$0xf]
      %v1169 = vld [vmem:[%s320 + $0xcc8] sm:$0xf]
      %v1170 = vld [vmem:[%s320 + $0xccc] sm:$0xf]
      %v1171 = vld [vmem:[%s320 + $0xcd0] sm:$0xf]
      %v1172 = vld [vmem:[%s320 + $0xcd4] sm:$0xf]
      %v1173 = vld [vmem:[%s320 + $0xcd8] sm:$0xf]
      %v1174 = vld [vmem:[%s320 + $0xcdc] sm:$0xf]
      %v1175 = vld [vmem:[%s320 + $0xce0] sm:$0xf]
      %v1176 = vld [vmem:[%s320 + $0xce4] sm:$0xf]
      %v1177 = vld [vmem:[%s320 + $0xce8] sm:$0xf]
      %v1178 = vld [vmem:[%s320 + $0xcec] sm:$0xf]
      %v1179 = vld [vmem:[%s320 + $0xcf0] sm:$0xf]
      %v1180 = vld [vmem:[%s320 + $0xcf4] sm:$0xf]
      %v1181 = vld [vmem:[%s320 + $0xcf8] sm:$0xf]
      %v1182 = vld [vmem:[%s320 + $0xcfc] sm:$0xf]
      %v1183 = vld [vmem:[%s320 + $0xd00] sm:$0xf]
      %v1184 = vld [vmem:[%s320 + $0xd04] sm:$0xf]
      %v1185 = vld [vmem:[%s320 + $0xd08] sm:$0xf]
      %v1186 = vld [vmem:[%s320 + $0xd0c] sm:$0xf]
      %v1187 = vld [vmem:[%s320 + $0xd10] sm:$0xf]
      %v1188 = vld [vmem:[%s320 + $0xd14] sm:$0xf]
      %v1189 = vld [vmem:[%s320 + $0xd18] sm:$0xf]
      %v1190 = vld [vmem:[%s320 + $0xd1c] sm:$0xf]
      %v1191 = vld [vmem:[%s320 + $0xd20] sm:$0xf]
      %v1192 = vld [vmem:[%s320 + $0xd24] sm:$0xf]
      %v1193 = vld [vmem:[%s320 + $0xd28] sm:$0xf]
      %v1194 = vld [vmem:[%s320 + $0xd2c] sm:$0xf]
      %v1195 = vld [vmem:[%s320 + $0xd30] sm:$0xf]
      %v1196 = vld [vmem:[%s320 + $0xd34] sm:$0xf]
      %v1197 = vld [vmem:[%s320 + $0xd38] sm:$0xf]
      %v1198 = vld [vmem:[%s320 + $0xd3c] sm:$0xf]
      %v1199 = vld [vmem:[%s320 + $0xd40] sm:$0xf]
      %v1200 = vld [vmem:[%s320 + $0xd44] sm:$0xf]
      %v1201 = vld [vmem:[%s320 + $0xd48] sm:$0xf]
      %v1202 = vld [vmem:[%s320 + $0xd4c] sm:$0xf]
      %v1203 = vld [vmem:[%s320 + $0xd50] sm:$0xf]
      %v1204 = vld [vmem:[%s320 + $0xd54] sm:$0xf]
      %v1205 = vld [vmem:[%s320 + $0xd58] sm:$0xf]
      %v1206 = vld [vmem:[%s320 + $0xd5c] sm:$0xf]
      %v1207 = vld [vmem:[%s320 + $0xd60] sm:$0xf]
      %v1208 = vld [vmem:[%s320 + $0xd64] sm:$0xf]
      %v1209 = vld [vmem:[%s320 + $0xd68] sm:$0xf]
      %v1210 = vld [vmem:[%s320 + $0xd6c] sm:$0xf]
      %v1211 = vld [vmem:[%s320 + $0xd70] sm:$0xf]
      %v1212 = vld [vmem:[%s320 + $0xd74] sm:$0xf]
      %v1213 = vld [vmem:[%s320 + $0xd78] sm:$0xf]
      %v1214 = vld [vmem:[%s320 + $0xd7c] sm:$0xf]
      %v1215 = vld [vmem:[%s320 + $0xd80] sm:$0xf]
      %v1216 = vld [vmem:[%s320 + $0xd84] sm:$0xf]
      %v1217 = vld [vmem:[%s320 + $0xd88] sm:$0xf]
      %v1218 = vld [vmem:[%s320 + $0xd8c] sm:$0xf]
      %v1219 = vld [vmem:[%s320 + $0xd90] sm:$0xf]
      %v1220 = vld [vmem:[%s320 + $0xd94] sm:$0xf]
      %v1221 = vld [vmem:[%s320 + $0xd98] sm:$0xf]
      %v1222 = vld [vmem:[%s320 + $0xd9c] sm:$0xf]
      %v1223 = vld [vmem:[%s320 + $0xda0] sm:$0xf]
      %v1224 = vld [vmem:[%s320 + $0xda4] sm:$0xf]
      %v1225 = vld [vmem:[%s320 + $0xda8] sm:$0xf]
      %v1226 = vld [vmem:[%s320 + $0xdac] sm:$0xf]
      %v1227 = vld [vmem:[%s320 + $0xdb0] sm:$0xf]
      %v1228 = vld [vmem:[%s320 + $0xdb4] sm:$0xf]
      %v1229 = vld [vmem:[%s320 + $0xdb8] sm:$0xf]
      %v1230 = vld [vmem:[%s320 + $0xdbc] sm:$0xf]
      %v1231 = vld [vmem:[%s320 + $0xdc0] sm:$0xf]
      %v1232 = vld [vmem:[%s320 + $0xdc4] sm:$0xf]
      %v1233 = vld [vmem:[%s320 + $0xdc8] sm:$0xf]
      %v1234 = vld [vmem:[%s320 + $0xdcc] sm:$0xf]
      %v1235 = vld [vmem:[%s320 + $0xdd0] sm:$0xf]
      %v1236 = vld [vmem:[%s320 + $0xdd4] sm:$0xf]
      %v1237 = vld [vmem:[%s320 + $0xdd8] sm:$0xf]
      %v1238 = vld [vmem:[%s320 + $0xddc] sm:$0xf]
      %v1239 = vld [vmem:[%s320 + $0xde0] sm:$0xf]
      %v1240 = vld [vmem:[%s320 + $0xde4] sm:$0xf]
      %v1241 = vld [vmem:[%s320 + $0xde8] sm:$0xf]
      %v1242 = vld [vmem:[%s320 + $0xdec] sm:$0xf]
      %v1243 = vld [vmem:[%s320 + $0xdf0] sm:$0xf]
      %v1244 = vld [vmem:[%s320 + $0xdf4] sm:$0xf]
      %v1245 = vld [vmem:[%s320 + $0xdf8] sm:$0xf]
      %v1246 = vld [vmem:[%s320 + $0xdfc] sm:$0xf]
      %v1247 = vld [vmem:[%s320 + $0xe00] sm:$0xf]
      %v1248 = vld [vmem:[%s320 + $0xe04] sm:$0xf]
      %v1249 = vld [vmem:[%s320 + $0xe08] sm:$0xf]
      %v1250 = vld [vmem:[%s320 + $0xe0c] sm:$0xf]
      %v1251 = vld [vmem:[%s320 + $0xe10] sm:$0xf]
      %v1252 = vld [vmem:[%s320 + $0xe14] sm:$0xf]
      %v1253 = vld [vmem:[%s320 + $0xe18] sm:$0xf]
      %v1254 = vld [vmem:[%s320 + $0xe1c] sm:$0xf]
      %v1255 = vld [vmem:[%s320 + $0xe20] sm:$0xf]
      %v1256 = vld [vmem:[%s320 + $0xe24] sm:$0xf]
      %v1257 = vld [vmem:[%s320 + $0xe28] sm:$0xf]
      %v1258 = vld [vmem:[%s320 + $0xe2c] sm:$0xf]
      %v1259 = vld [vmem:[%s320 + $0xe30] sm:$0xf]
      %v1260 = vld [vmem:[%s320 + $0xe34] sm:$0xf]
      %v1261 = vld [vmem:[%s320 + $0xe38] sm:$0xf]
      %v1262 = vld [vmem:[%s320 + $0xe3c] sm:$0xf]
      %v1263 = vld [vmem:[%s320 + $0xe40] sm:$0xf]
      %v1264 = vld [vmem:[%s320 + $0xe44] sm:$0xf]
      %v1265 = vld [vmem:[%s320 + $0xe48] sm:$0xf]
      %v1266 = vld [vmem:[%s320 + $0xe4c] sm:$0xf]
      %v1267 = vld [vmem:[%s320 + $0xe50] sm:$0xf]
      %v1268 = vld [vmem:[%s320 + $0xe54] sm:$0xf]
      %v1269 = vld [vmem:[%s320 + $0xe58] sm:$0xf]
      %v1270 = vld [vmem:[%s320 + $0xe5c] sm:$0xf]
      %v1271 = vld [vmem:[%s320 + $0xe60] sm:$0xf]
      %v1272 = vld [vmem:[%s320 + $0xe64] sm:$0xf]
      %v1273 = vld [vmem:[%s320 + $0xe68] sm:$0xf]
      %v1274 = vld [vmem:[%s320 + $0xe6c] sm:$0xf]
      %v1275 = vld [vmem:[%s320 + $0xe70] sm:$0xf]
      %v1276 = vld [vmem:[%s320 + $0xe74] sm:$0xf]
      %v1277 = vld [vmem:[%s320 + $0xe78] sm:$0xf]
      %v1278 = vld [vmem:[%s320 + $0xe7c] sm:$0xf]
      %v1279 = vld [vmem:[%s320 + $0xe80] sm:$0xf]
      %v1280 = vld [vmem:[%s320 + $0xe84] sm:$0xf]
      %v1281 = vld [vmem:[%s320 + $0xe88] sm:$0xf]
      %v1282 = vld [vmem:[%s320 + $0xe8c] sm:$0xf]
      %v1283 = vld [vmem:[%s320 + $0xe90] sm:$0xf]
      %v1284 = vld [vmem:[%s320 + $0xe94] sm:$0xf]
      %v1285 = vld [vmem:[%s320 + $0xe98] sm:$0xf]
      %v1286 = vld [vmem:[%s320 + $0xe9c] sm:$0xf]
      %v1287 = vld [vmem:[%s320 + $0xea0] sm:$0xf]
      %v1288 = vld [vmem:[%s320 + $0xea4] sm:$0xf]
      %v1289 = vld [vmem:[%s320 + $0xea8] sm:$0xf]
      %v1290 = vld [vmem:[%s320 + $0xeac] sm:$0xf]
      %v1291 = vld [vmem:[%s320 + $0xeb0] sm:$0xf]
      %v1292 = vld [vmem:[%s320 + $0xeb4] sm:$0xf]
      %v1293 = vld [vmem:[%s320 + $0xeb8] sm:$0xf]
      %v1294 = vld [vmem:[%s320 + $0xebc] sm:$0xf]
      %v1295 = vld [vmem:[%s320 + $0xec0] sm:$0xf]
      %v1296 = vld [vmem:[%s320 + $0xec4] sm:$0xf]
      %v1297 = vld [vmem:[%s320 + $0xec8] sm:$0xf]
      %v1298 = vld [vmem:[%s320 + $0xecc] sm:$0xf]
      %v1299 = vld [vmem:[%s320 + $0xed0] sm:$0xf]
      %v1300 = vld [vmem:[%s320 + $0xed4] sm:$0xf]
      %v1301 = vld [vmem:[%s320 + $0xed8] sm:$0xf]
      %v1302 = vld [vmem:[%s320 + $0xedc] sm:$0xf]
      %v1303 = vld [vmem:[%s320 + $0xee0] sm:$0xf]
      %v1304 = vld [vmem:[%s320 + $0xee4] sm:$0xf]
      %v1305 = vld [vmem:[%s320 + $0xee8] sm:$0xf]
      %v1306 = vld [vmem:[%s320 + $0xeec] sm:$0xf]
      %v1307 = vld [vmem:[%s320 + $0xef0] sm:$0xf]
      %v1308 = vld [vmem:[%s320 + $0xef4] sm:$0xf]
      %v1309 = vld [vmem:[%s320 + $0xef8] sm:$0xf]
      %v1310 = vld [vmem:[%s320 + $0xefc] sm:$0xf]
      %v1311 = vld [vmem:[%s320 + $0xf00] sm:$0xf]
      %v1312 = vld [vmem:[%s320 + $0xf04] sm:$0xf]
      %v1313 = vld [vmem:[%s320 + $0xf08] sm:$0xf]
      %v1314 = vld [vmem:[%s320 + $0xf0c] sm:$0xf]
      %v1315 = vld [vmem:[%s320 + $0xf10] sm:$0xf]
      %v1316 = vld [vmem:[%s320 + $0xf14] sm:$0xf]
      %v1317 = vld [vmem:[%s320 + $0xf18] sm:$0xf]
      %v1318 = vld [vmem:[%s320 + $0xf1c] sm:$0xf]
      %v1319 = vld [vmem:[%s320 + $0xf20] sm:$0xf]
      %v1320 = vld [vmem:[%s320 + $0xf24] sm:$0xf]
      %v1321 = vld [vmem:[%s320 + $0xf28] sm:$0xf]
      %v1322 = vld [vmem:[%s320 + $0xf2c] sm:$0xf]
      %v1323 = vld [vmem:[%s320 + $0xf30] sm:$0xf]
      %v1324 = vld [vmem:[%s320 + $0xf34] sm:$0xf]
      %v1325 = vld [vmem:[%s320 + $0xf38] sm:$0xf]
      %v1326 = vld [vmem:[%s320 + $0xf3c] sm:$0xf]
      %v1327 = vld [vmem:[%s320 + $0xf40] sm:$0xf]
      %v1328 = vld [vmem:[%s320 + $0xf44] sm:$0xf]
      %v1329 = vld [vmem:[%s320 + $0xf48] sm:$0xf]
      %v1330 = vld [vmem:[%s320 + $0xf4c] sm:$0xf]
      %v1331 = vld [vmem:[%s320 + $0xf50] sm:$0xf]
      %v1332 = vld [vmem:[%s320 + $0xf54] sm:$0xf]
      %v1333 = vld [vmem:[%s320 + $0xf58] sm:$0xf]
      %v1334 = vld [vmem:[%s320 + $0xf5c] sm:$0xf]
      %v1335 = vld [vmem:[%s320 + $0xf60] sm:$0xf]
      %v1336 = vld [vmem:[%s320 + $0xf64] sm:$0xf]
      %v1337 = vld [vmem:[%s320 + $0xf68] sm:$0xf]
      %v1338 = vld [vmem:[%s320 + $0xf6c] sm:$0xf]
      %v1339 = vld [vmem:[%s320 + $0xf70] sm:$0xf]
      %v1340 = vld [vmem:[%s320 + $0xf74] sm:$0xf]
      %v1341 = vld [vmem:[%s320 + $0xf78] sm:$0xf]
      %v1342 = vld [vmem:[%s320 + $0xf7c] sm:$0xf]
      %v1343 = vld [vmem:[%s320 + $0xf80] sm:$0xf]
      %v1344 = vld [vmem:[%s320 + $0xf84] sm:$0xf]
      %v1345 = vld [vmem:[%s320 + $0xf88] sm:$0xf]
      %v1346 = vld [vmem:[%s320 + $0xf8c] sm:$0xf]
      %v1347 = vld [vmem:[%s320 + $0xf90] sm:$0xf]
      %v1348 = vld [vmem:[%s320 + $0xf94] sm:$0xf]
      %v1349 = vld [vmem:[%s320 + $0xf98] sm:$0xf]
      %v1350 = vld [vmem:[%s320 + $0xf9c] sm:$0xf]
      %v1351 = vld [vmem:[%s320 + $0xfa0] sm:$0xf]
      %v1352 = vld [vmem:[%s320 + $0xfa4] sm:$0xf]
      %v1353 = vld [vmem:[%s320 + $0xfa8] sm:$0xf]
      %v1354 = vld [vmem:[%s320 + $0xfac] sm:$0xf]
      %v1355 = vld [vmem:[%s320 + $0xfb0] sm:$0xf]
      %v1356 = vld [vmem:[%s320 + $0xfb4] sm:$0xf]
      %v1357 = vld [vmem:[%s320 + $0xfb8] sm:$0xf]
      %v1358 = vld [vmem:[%s320 + $0xfbc] sm:$0xf]
      %v1359 = vld [vmem:[%s320 + $0xfc0] sm:$0xf]
      %v1360 = vld [vmem:[%s320 + $0xfc4] sm:$0xf]
      %v1361 = vld [vmem:[%s320 + $0xfc8] sm:$0xf]
      %v1362 = vld [vmem:[%s320 + $0xfcc] sm:$0xf]
      %v1363 = vld [vmem:[%s320 + $0xfd0] sm:$0xf]
      %v1364 = vld [vmem:[%s320 + $0xfd4] sm:$0xf]
      %v1365 = vld [vmem:[%s320 + $0xfd8] sm:$0xf]
      %v1366 = vld [vmem:[%s320 + $0xfdc] sm:$0xf]
      %v1367 = vld [vmem:[%s320 + $0xfe0] sm:$0xf]
      %v1368 = vld [vmem:[%s320 + $0xfe4] sm:$0xf]
      %v1369 = vld [vmem:[%s320 + $0xfe8] sm:$0xf]
      %v1370 = vld [vmem:[%s320 + $0xfec] sm:$0xf]
      %v1371 = vld [vmem:[%s320 + $0xff0] sm:$0xf]
      %v1372 = vld [vmem:[%s320 + $0xff4] sm:$0xf]
      %v1373 = vld [vmem:[%s320 + $0xff8] sm:$0xf]
      %v1374 = vld [vmem:[%s320 + $0xffc] sm:$0xf]
      %v1375 = vld [vmem:[%s320 + $0x1000] sm:$0xf]
      %v1376 = vld [vmem:[%s320 + $0x1004] sm:$0xf]
      %v1377 = vld [vmem:[%s320 + $0x1008] sm:$0xf]
      %v1378 = vld [vmem:[%s320 + $0x100c] sm:$0xf]
      %v1379 = vld [vmem:[%s320 + $0x1010] sm:$0xf]
      %v1380 = vld [vmem:[%s320 + $0x1014] sm:$0xf]
      %v1381 = vld [vmem:[%s320 + $0x1018] sm:$0xf]
      %v1382 = vld [vmem:[%s320 + $0x101c] sm:$0xf]
      %v1383 = vld [vmem:[%s320 + $0x1020] sm:$0xf]
      %v1384 = vld [vmem:[%s320 + $0x1024] sm:$0xf]
      %v1385 = vld [vmem:[%s320 + $0x1028] sm:$0xf]
      %v1386 = vld [vmem:[%s320 + $0x102c] sm:$0xf]
      %v1387 = vld [vmem:[%s320 + $0x1030] sm:$0xf]
      %v1388 = vld [vmem:[%s320 + $0x1034] sm:$0xf]
      %v1389 = vld [vmem:[%s320 + $0x1038] sm:$0xf]
      %v1390 = vld [vmem:[%s320 + $0x103c] sm:$0xf]
      %v1391 = vld [vmem:[%s320 + $0x1040] sm:$0xf]
      %v1392 = vld [vmem:[%s320 + $0x1044] sm:$0xf]
      %v1393 = vld [vmem:[%s320 + $0x1048] sm:$0xf]
      %v1394 = vld [vmem:[%s320 + $0x104c] sm:$0xf]
      %v1395 = vld [vmem:[%s320 + $0x1050] sm:$0xf]
      %v1396 = vld [vmem:[%s320 + $0x1054] sm:$0xf]
      %v1397 = vld [vmem:[%s320 + $0x1058] sm:$0xf]
      %v1398 = vld [vmem:[%s320 + $0x105c] sm:$0xf]
      %v1399 = vld [vmem:[%s320 + $0x1060] sm:$0xf]
      %v1400 = vld [vmem:[%s320 + $0x1064] sm:$0xf]
      %v1401 = vld [vmem:[%s320 + $0x1068] sm:$0xf]
      %v1402 = vld [vmem:[%s320 + $0x106c] sm:$0xf]
      %v1403 = vld [vmem:[%s320 + $0x1070] sm:$0xf]
      %v1404 = vld [vmem:[%s320 + $0x1074] sm:$0xf]
      %v1405 = vld [vmem:[%s320 + $0x1078] sm:$0xf]
      %v1406 = vld [vmem:[%s320 + $0x107c] sm:$0xf]
      %v1407 = vld [vmem:[%s320 + $0x1080] sm:$0xf]
      %v1408 = vld [vmem:[%s320 + $0x1084] sm:$0xf]
      %v1409 = vld [vmem:[%s320 + $0x1088] sm:$0xf]
      %v1410 = vld [vmem:[%s320 + $0x108c] sm:$0xf]
      %v1411 = vld [vmem:[%s320 + $0x1090] sm:$0xf]
      %v1412 = vld [vmem:[%s320 + $0x1094] sm:$0xf]
      %v1413 = vld [vmem:[%s320 + $0x1098] sm:$0xf]
      %v1414 = vld [vmem:[%s320 + $0x109c] sm:$0xf]
      %v1415 = vld [vmem:[%s320 + $0x10a0] sm:$0xf]
      %v1416 = vld [vmem:[%s320 + $0x10a4] sm:$0xf]
      %v1417 = vld [vmem:[%s320 + $0x10a8] sm:$0xf]
      %v1418 = vld [vmem:[%s320 + $0x10ac] sm:$0xf]
      %v1419 = vld [vmem:[%s320 + $0x10b0] sm:$0xf]
      %v1420 = vld [vmem:[%s320 + $0x10b4] sm:$0xf]
      %v1421 = vld [vmem:[%s320 + $0x10b8] sm:$0xf]
      %v1422 = vld [vmem:[%s320 + $0x10bc] sm:$0xf]
      %v1423 = vld [vmem:[%s320 + $0x10c0] sm:$0xf]
      %v1424 = vld [vmem:[%s320 + $0x10c4] sm:$0xf]
      %v1425 = vld [vmem:[%s320 + $0x10c8] sm:$0xf]
      %v1426 = vld [vmem:[%s320 + $0x10cc] sm:$0xf]
      %v1427 = vld [vmem:[%s320 + $0x10d0] sm:$0xf]
      %v1428 = vld [vmem:[%s320 + $0x10d4] sm:$0xf]
      %v1429 = vld [vmem:[%s320 + $0x10d8] sm:$0xf]
      %v1430 = vld [vmem:[%s320 + $0x10dc] sm:$0xf]
      %v1431 = vld [vmem:[%s320 + $0x10e0] sm:$0xf]
      %v1432 = vld [vmem:[%s320 + $0x10e4] sm:$0xf]
      %v1433 = vld [vmem:[%s320 + $0x10e8] sm:$0xf]
      %v1434 = vld [vmem:[%s320 + $0x10ec] sm:$0xf]
      %v1435 = vld [vmem:[%s320 + $0x10f0] sm:$0xf]
      %v1436 = vld [vmem:[%s320 + $0x10f4] sm:$0xf]
      %v1437 = vld [vmem:[%s320 + $0x10f8] sm:$0xf]
      %v1438 = vld [vmem:[%s320 + $0x10fc] sm:$0xf]
      %v1439 = vld [vmem:[%s320 + $0x1100] sm:$0xf]
      %v1440 = vld [vmem:[%s320 + $0x1104] sm:$0xf]
      %v1441 = vld [vmem:[%s320 + $0x1108] sm:$0xf]
      %v1442 = vld [vmem:[%s320 + $0x110c] sm:$0xf]
      %v1443 = vld [vmem:[%s320 + $0x1110] sm:$0xf]
      %v1444 = vld [vmem:[%s320 + $0x1114] sm:$0xf]
      %v1445 = vld [vmem:[%s320 + $0x1118] sm:$0xf]
      %v1446 = vld [vmem:[%s320 + $0x111c] sm:$0xf]
      %v1447 = vld [vmem:[%s320 + $0x1120] sm:$0xf]
      %v1448 = vld [vmem:[%s320 + $0x1124] sm:$0xf]
      %v1449 = vld [vmem:[%s320 + $0x1128] sm:$0xf]
      %v1450 = vld [vmem:[%s320 + $0x112c] sm:$0xf]
      %v1451 = vld [vmem:[%s320 + $0x1130] sm:$0xf]
      %v1452 = vld [vmem:[%s320 + $0x1134] sm:$0xf]
      %v1453 = vld [vmem:[%s320 + $0x1138] sm:$0xf]
      %v1454 = vld [vmem:[%s320 + $0x113c] sm:$0xf]
      %v1455 = vld [vmem:[%s320 + $0x1140] sm:$0xf]
      %v1456 = vld [vmem:[%s320 + $0x1144] sm:$0xf]
      %v1457 = vld [vmem:[%s320 + $0x1148] sm:$0xf]
      %v1458 = vld [vmem:[%s320 + $0x114c] sm:$0xf]
      %v1459 = vld [vmem:[%s320 + $0x1150] sm:$0xf]
      %v1460 = vld [vmem:[%s320 + $0x1154] sm:$0xf]
      %v1461 = vld [vmem:[%s320 + $0x1158] sm:$0xf]
      %v1462 = vld [vmem:[%s320 + $0x115c] sm:$0xf]
      %v1463 = vld [vmem:[%s320 + $0x1160] sm:$0xf]
      %v1464 = vld [vmem:[%s320 + $0x1164] sm:$0xf]
      %v1465 = vld [vmem:[%s320 + $0x1168] sm:$0xf]
      %v1466 = vld [vmem:[%s320 + $0x116c] sm:$0xf]
      %v1467 = vld [vmem:[%s320 + $0x1170] sm:$0xf]
      %v1468 = vld [vmem:[%s320 + $0x1174] sm:$0xf]
      %v1469 = vld [vmem:[%s320 + $0x1178] sm:$0xf]
      %v1470 = vld [vmem:[%s320 + $0x117c] sm:$0xf]
      %v1471 = vld [vmem:[%s320 + $0x1180] sm:$0xf]
      %v1472 = vld [vmem:[%s320 + $0x1184] sm:$0xf]
      %v1473 = vld [vmem:[%s320 + $0x1188] sm:$0xf]
      %v1474 = vld [vmem:[%s320 + $0x118c] sm:$0xf]
      %v1475 = vld [vmem:[%s320 + $0x1190] sm:$0xf]
      %v1476 = vld [vmem:[%s320 + $0x1194] sm:$0xf]
      %v1477 = vld [vmem:[%s320 + $0x1198] sm:$0xf]
      %v1478 = vld [vmem:[%s320 + $0x119c] sm:$0xf]
      %v1479 = vld [vmem:[%s320 + $0x11a0] sm:$0xf]
      %v1480 = vld [vmem:[%s320 + $0x11a4] sm:$0xf]
      %v1481 = vld [vmem:[%s320 + $0x11a8] sm:$0xf]
      %v1482 = vld [vmem:[%s320 + $0x11ac] sm:$0xf]
      %v1483 = vld [vmem:[%s320 + $0x11b0] sm:$0xf]
      %v1484 = vld [vmem:[%s320 + $0x11b4] sm:$0xf]
      %v1485 = vld [vmem:[%s320 + $0x11b8] sm:$0xf]
      %v1486 = vld [vmem:[%s320 + $0x11bc] sm:$0xf]
      %v1487 = vld [vmem:[%s320 + $0x11c0] sm:$0xf]
      %v1488 = vld [vmem:[%s320 + $0x11c4] sm:$0xf]
      %v1489 = vld [vmem:[%s320 + $0x11c8] sm:$0xf]
      %v1490 = vld [vmem:[%s320 + $0x11cc] sm:$0xf]
      %v1491 = vld [vmem:[%s320 + $0x11d0] sm:$0xf]
      %v1492 = vld [vmem:[%s320 + $0x11d4] sm:$0xf]
      %v1493 = vld [vmem:[%s320 + $0x11d8] sm:$0xf]
      %v1494 = vld [vmem:[%s320 + $0x11dc] sm:$0xf]
      %v1495 = vld [vmem:[%s320 + $0x11e0] sm:$0xf]
      %v1496 = vld [vmem:[%s320 + $0x11e4] sm:$0xf]
      %v1497 = vld [vmem:[%s320 + $0x11e8] sm:$0xf]
      %v1498 = vld [vmem:[%s320 + $0x11ec] sm:$0xf]
      %v1499 = vld [vmem:[%s320 + $0x11f0] sm:$0xf]
      %v1500 = vld [vmem:[%s320 + $0x11f4] sm:$0xf]
      %v1501 = vld [vmem:[%s320 + $0x11f8] sm:$0xf]
      %v1502 = vld [vmem:[%s320 + $0x11fc] sm:$0xf]
      %v1503 = vld [vmem:[%s320 + $0x1200] sm:$0xf]
      %v1504 = vld [vmem:[%s320 + $0x1204] sm:$0xf]
      %v1505 = vld [vmem:[%s320 + $0x1208] sm:$0xf]
      %v1506 = vld [vmem:[%s320 + $0x120c] sm:$0xf]
      %v1507 = vld [vmem:[%s320 + $0x1210] sm:$0xf]
      %v1508 = vld [vmem:[%s320 + $0x1214] sm:$0xf]
      %v1509 = vld [vmem:[%s320 + $0x1218] sm:$0xf]
      %v1510 = vld [vmem:[%s320 + $0x121c] sm:$0xf]
      %v1511 = vld [vmem:[%s320 + $0x1220] sm:$0xf]
      %v1512 = vld [vmem:[%s320 + $0x1224] sm:$0xf]
      %v1513 = vld [vmem:[%s320 + $0x1228] sm:$0xf]
      %v1514 = vld [vmem:[%s320 + $0x122c] sm:$0xf]
      %v1515 = vld [vmem:[%s320 + $0x1230] sm:$0xf]
      %v1516 = vld [vmem:[%s320 + $0x1234] sm:$0xf]
      %v1517 = vld [vmem:[%s320 + $0x1238] sm:$0xf]
      %v1518 = vld [vmem:[%s320 + $0x123c] sm:$0xf]
      %v1519 = vld [vmem:[%s320 + $0x1240] sm:$0xf]
      %v1520 = vld [vmem:[%s320 + $0x1244] sm:$0xf]
      %v1521 = vld [vmem:[%s320 + $0x1248] sm:$0xf]
      %v1522 = vld [vmem:[%s320 + $0x124c] sm:$0xf]
      %v1523 = vld [vmem:[%s320 + $0x1250] sm:$0xf]
      %v1524 = vld [vmem:[%s320 + $0x1254] sm:$0xf]
      %v1525 = vld [vmem:[%s320 + $0x1258] sm:$0xf]
      %v1526 = vld [vmem:[%s320 + $0x125c] sm:$0xf]
      %v1527 = vld [vmem:[%s320 + $0x1260] sm:$0xf]
      %v1528 = vld [vmem:[%s320 + $0x1264] sm:$0xf]
      %v1529 = vld [vmem:[%s320 + $0x1268] sm:$0xf]
      %v1530 = vld [vmem:[%s320 + $0x126c] sm:$0xf]
      %v1531 = vld [vmem:[%s320 + $0x1270] sm:$0xf]
      %v1532 = vld [vmem:[%s320 + $0x1274] sm:$0xf]
      %v1533 = vld [vmem:[%s320 + $0x1278] sm:$0xf]
      %v1534 = vld [vmem:[%s320 + $0x127c] sm:$0xf]
      %v1535 = vld [vmem:[%s320 + $0x1280] sm:$0xf]
      %v1536 = vld [vmem:[%s320 + $0x1284] sm:$0xf]
      %v1537 = vld [vmem:[%s320 + $0x1288] sm:$0xf]
      %v1538 = vld [vmem:[%s320 + $0x128c] sm:$0xf]
      %v1539 = vld [vmem:[%s320 + $0x1290] sm:$0xf]
      %v1540 = vld [vmem:[%s320 + $0x1294] sm:$0xf]
      %v1541 = vld [vmem:[%s320 + $0x1298] sm:$0xf]
      %v1542 = vld [vmem:[%s320 + $0x129c] sm:$0xf]
      %v1543 = vld [vmem:[%s320 + $0x12a0] sm:$0xf]
      %v1544 = vld [vmem:[%s320 + $0x12a4] sm:$0xf]
      %v1545 = vld [vmem:[%s320 + $0x12a8] sm:$0xf]
      %v1546 = vld [vmem:[%s320 + $0x12ac] sm:$0xf]
      %v1547 = vld [vmem:[%s320 + $0x12b0] sm:$0xf]
      %v1548 = vld [vmem:[%s320 + $0x12b4] sm:$0xf]
      %v1549 = vld [vmem:[%s320 + $0x12b8] sm:$0xf]
      %v1550 = vld [vmem:[%s320 + $0x12bc] sm:$0xf]
      %v1551 = vld [vmem:[%s320 + $0x12c0] sm:$0xf]
      %v1552 = vld [vmem:[%s320 + $0x12c4] sm:$0xf]
      %v1553 = vld [vmem:[%s320 + $0x12c8] sm:$0xf]
      %v1554 = vld [vmem:[%s320 + $0x12cc] sm:$0xf]
      %v1555 = vld [vmem:[%s320 + $0x12d0] sm:$0xf]
      %v1556 = vld [vmem:[%s320 + $0x12d4] sm:$0xf]
      %v1557 = vld [vmem:[%s320 + $0x12d8] sm:$0xf]
      %v1558 = vld [vmem:[%s320 + $0x12dc] sm:$0xf]
      %v1559 = vld [vmem:[%s320 + $0x12e0] sm:$0xf]
      %v1560 = vld [vmem:[%s320 + $0x12e4] sm:$0xf]
      %v1561 = vld [vmem:[%s320 + $0x12e8] sm:$0xf]
      %v1562 = vld [vmem:[%s320 + $0x12ec] sm:$0xf]
      %v1563 = vld [vmem:[%s320 + $0x12f0] sm:$0xf]
      %v1564 = vld [vmem:[%s320 + $0x12f4] sm:$0xf]
      %v1565 = vld [vmem:[%s320 + $0x12f8] sm:$0xf]
      %v1566 = vld [vmem:[%s320 + $0x12fc] sm:$0xf]
      %v1567 = vld [vmem:[%s320 + $0x1300] sm:$0xf]
      %v1568 = vld [vmem:[%s320 + $0x1304] sm:$0xf]
      %v1569 = vld [vmem:[%s320 + $0x1308] sm:$0xf]
      %v1570 = vld [vmem:[%s320 + $0x130c] sm:$0xf]
      %v1571 = vld [vmem:[%s320 + $0x1310] sm:$0xf]
      %v1572 = vld [vmem:[%s320 + $0x1314] sm:$0xf]
      %v1573 = vld [vmem:[%s320 + $0x1318] sm:$0xf]
      %v1574 = vld [vmem:[%s320 + $0x131c] sm:$0xf]
      %v1575 = vld [vmem:[%s320 + $0x1320] sm:$0xf]
      %v1576 = vld [vmem:[%s320 + $0x1324] sm:$0xf]
      %v1577 = vld [vmem:[%s320 + $0x1328] sm:$0xf]
      %v1578 = vld [vmem:[%s320 + $0x132c] sm:$0xf]
      %v1579 = vld [vmem:[%s320 + $0x1330] sm:$0xf]
      %v1580 = vld [vmem:[%s320 + $0x1334] sm:$0xf]
      %v1581 = vld [vmem:[%s320 + $0x1338] sm:$0xf]
      %v1582 = vld [vmem:[%s320 + $0x133c] sm:$0xf]
      %v1583 = vld [vmem:[%s320 + $0x1340] sm:$0xf]
      %v1584 = vld [vmem:[%s320 + $0x1344] sm:$0xf]
      %v1585 = vld [vmem:[%s320 + $0x1348] sm:$0xf]
      %v1586 = vld [vmem:[%s320 + $0x134c] sm:$0xf]
      %v1587 = vld [vmem:[%s320 + $0x1350] sm:$0xf]
      %v1588 = vld [vmem:[%s320 + $0x1354] sm:$0xf]
      %v1589 = vld [vmem:[%s320 + $0x1358] sm:$0xf]
      %v1590 = vld [vmem:[%s320 + $0x135c] sm:$0xf]
      %v1591 = vld [vmem:[%s320 + $0x1360] sm:$0xf]
      %v1592 = vld [vmem:[%s320 + $0x1364] sm:$0xf]
      %v1593 = vld [vmem:[%s320 + $0x1368] sm:$0xf]
      %v1594 = vld [vmem:[%s320 + $0x136c] sm:$0xf]
      %v1595 = vld [vmem:[%s320 + $0x1370] sm:$0xf]
      %v1596 = vld [vmem:[%s320 + $0x1374] sm:$0xf]
      %v1597 = vld [vmem:[%s320 + $0x1378] sm:$0xf]
      %v1598 = vld [vmem:[%s320 + $0x137c] sm:$0xf]
      %v1599 = vld [vmem:[%s320 + $0x1380] sm:$0xf]
      %v1600 = vld [vmem:[%s320 + $0x1384] sm:$0xf]
      %v1601 = vld [vmem:[%s320 + $0x1388] sm:$0xf]
      %v1602 = vld [vmem:[%s320 + $0x138c] sm:$0xf]
      %v1603 = vld [vmem:[%s320 + $0x1390] sm:$0xf]
      %v1604 = vld [vmem:[%s320 + $0x1394] sm:$0xf]
      %v1605 = vld [vmem:[%s320 + $0x1398] sm:$0xf]
      %v1606 = vld [vmem:[%s320 + $0x139c] sm:$0xf]
      %v1607 = vld [vmem:[%s320 + $0x13a0] sm:$0xf]
      %v1608 = vld [vmem:[%s320 + $0x13a4] sm:$0xf]
      %v1609 = vld [vmem:[%s320 + $0x13a8] sm:$0xf]
      %v1610 = vld [vmem:[%s320 + $0x13ac] sm:$0xf]
      %v1611 = vld [vmem:[%s320 + $0x13b0] sm:$0xf]
      %v1612 = vld [vmem:[%s320 + $0x13b4] sm:$0xf]
      %v1613 = vld [vmem:[%s320 + $0x13b8] sm:$0xf]
      %v1614 = vld [vmem:[%s320 + $0x13bc] sm:$0xf]
      %v1615 = vld [vmem:[%s320 + $0x13c0] sm:$0xf]
      %v1616 = vld [vmem:[%s320 + $0x13c4] sm:$0xf]
      %v1617 = vld [vmem:[%s320 + $0x13c8] sm:$0xf]
      %v1618 = vld [vmem:[%s320 + $0x13cc] sm:$0xf]
      %v1619 = vld [vmem:[%s320 + $0x13d0] sm:$0xf]
      %v1620 = vld [vmem:[%s320 + $0x13d4] sm:$0xf]
      %v1621 = vld [vmem:[%s320 + $0x13d8] sm:$0xf]
      %v1622 = vld [vmem:[%s320 + $0x13dc] sm:$0xf]
      %v1623 = vld [vmem:[%s320 + $0x13e0] sm:$0xf]
      %v1624 = vld [vmem:[%s320 + $0x13e4] sm:$0xf]
      %v1625 = vld [vmem:[%s320 + $0x13e8] sm:$0xf]
      %v1626 = vld [vmem:[%s320 + $0x13ec] sm:$0xf]
      %v1627 = vld [vmem:[%s320 + $0x13f0] sm:$0xf]
      %v1628 = vld [vmem:[%s320 + $0x13f4] sm:$0xf]
      %v1629 = vld [vmem:[%s320 + $0x13f8] sm:$0xf]
      %v1630 = vld [vmem:[%s320 + $0x13fc] sm:$0xf]
      %v1631 = vld [vmem:[%s320 + $0x1400] sm:$0xf]
      %v1632 = vld [vmem:[%s320 + $0x1404] sm:$0xf]
      %v1633 = vld [vmem:[%s320 + $0x1408] sm:$0xf]
      %v1634 = vld [vmem:[%s320 + $0x140c] sm:$0xf]
      %v1635 = vld [vmem:[%s320 + $0x1410] sm:$0xf]
      %v1636 = vld [vmem:[%s320 + $0x1414] sm:$0xf]
      %v1637 = vld [vmem:[%s320 + $0x1418] sm:$0xf]
      %v1638 = vld [vmem:[%s320 + $0x141c] sm:$0xf]
      %v1639 = vld [vmem:[%s320 + $0x1420] sm:$0xf]
      %v1640 = vld [vmem:[%s320 + $0x1424] sm:$0xf]
      %v1641 = vld [vmem:[%s320 + $0x1428] sm:$0xf]
      %v1642 = vld [vmem:[%s320 + $0x142c] sm:$0xf]
      %v1643 = vld [vmem:[%s320 + $0x1430] sm:$0xf]
      %v1644 = vld [vmem:[%s320 + $0x1434] sm:$0xf]
      %v1645 = vld [vmem:[%s320 + $0x1438] sm:$0xf]
      %v1646 = vld [vmem:[%s320 + $0x143c] sm:$0xf]
      %v1647 = vld [vmem:[%s320 + $0x1440] sm:$0xf]
      %v1648 = vld [vmem:[%s320 + $0x1444] sm:$0xf]
      %v1649 = vld [vmem:[%s320 + $0x1448] sm:$0xf]
      %v1650 = vld [vmem:[%s320 + $0x144c] sm:$0xf]
      %v1651 = vld [vmem:[%s320 + $0x1450] sm:$0xf]
      %v1652 = vld [vmem:[%s320 + $0x1454] sm:$0xf]
      %v1653 = vld [vmem:[%s320 + $0x1458] sm:$0xf]
      %v1654 = vld [vmem:[%s320 + $0x145c] sm:$0xf]
      %v1655 = vld [vmem:[%s320 + $0x1460] sm:$0xf]
      %v1656 = vld [vmem:[%s320 + $0x1464] sm:$0xf]
      %v1657 = vld [vmem:[%s320 + $0x1468] sm:$0xf]
      %v1658 = vld [vmem:[%s320 + $0x146c] sm:$0xf]
      %v1659 = vld [vmem:[%s320 + $0x1470] sm:$0xf]
      %v1660 = vld [vmem:[%s320 + $0x1474] sm:$0xf]
      %v1661 = vld [vmem:[%s320 + $0x1478] sm:$0xf]
      %v1662 = vld [vmem:[%s320 + $0x147c] sm:$0xf]
      %v1663 = vld [vmem:[%s320 + $0x1480] sm:$0xf]
      %v1664 = vld [vmem:[%s320 + $0x1484] sm:$0xf]
      %v1665 = vld [vmem:[%s320 + $0x1488] sm:$0xf]
      %v1666 = vld [vmem:[%s320 + $0x148c] sm:$0xf]
      %v1667 = vld [vmem:[%s320 + $0x1490] sm:$0xf]
      %v1668 = vld [vmem:[%s320 + $0x1494] sm:$0xf]
      %v1669 = vld [vmem:[%s320 + $0x1498] sm:$0xf]
      %v1670 = vld [vmem:[%s320 + $0x149c] sm:$0xf]
      %v1671 = vld [vmem:[%s320 + $0x14a0] sm:$0xf]
      %v1672 = vld [vmem:[%s320 + $0x14a4] sm:$0xf]
      %v1673 = vld [vmem:[%s320 + $0x14a8] sm:$0xf]
      %v1674 = vld [vmem:[%s320 + $0x14ac] sm:$0xf]
      %v1675 = vld [vmem:[%s320 + $0x14b0] sm:$0xf]
      %v1676 = vld [vmem:[%s320 + $0x14b4] sm:$0xf]
      %v1677 = vld [vmem:[%s320 + $0x14b8] sm:$0xf]
      %v1678 = vld [vmem:[%s320 + $0x14bc] sm:$0xf]
      %v1679 = vld [vmem:[%s320 + $0x14c0] sm:$0xf]
      %v1680 = vld [vmem:[%s320 + $0x14c4] sm:$0xf]
      %v1681 = vld [vmem:[%s320 + $0x14c8] sm:$0xf]
      %v1682 = vld [vmem:[%s320 + $0x14cc] sm:$0xf]
      %v1683 = vld [vmem:[%s320 + $0x14d0] sm:$0xf]
      %v1684 = vld [vmem:[%s320 + $0x14d4] sm:$0xf]
      %v1685 = vld [vmem:[%s320 + $0x14d8] sm:$0xf]
      %v1686 = vld [vmem:[%s320 + $0x14dc] sm:$0xf]
      %v1687 = vld [vmem:[%s320 + $0x14e0] sm:$0xf]
      %v1688 = vld [vmem:[%s320 + $0x14e4] sm:$0xf]
      %v1689 = vld [vmem:[%s320 + $0x14e8] sm:$0xf]
      %v1690 = vld [vmem:[%s320 + $0x14ec] sm:$0xf]
      %v1691 = vld [vmem:[%s320 + $0x14f0] sm:$0xf]
      %v1692 = vld [vmem:[%s320 + $0x14f4] sm:$0xf]
      %v1693 = vld [vmem:[%s320 + $0x14f8] sm:$0xf]
      %v1694 = vld [vmem:[%s320 + $0x14fc] sm:$0xf]
      %v1695 = vld [vmem:[%s320 + $0x1500] sm:$0xf]
      %v1696 = vld [vmem:[%s320 + $0x1504] sm:$0xf]
      %v1697 = vld [vmem:[%s320 + $0x1508] sm:$0xf]
      %v1698 = vld [vmem:[%s320 + $0x150c] sm:$0xf]
      %v1699 = vld [vmem:[%s320 + $0x1510] sm:$0xf]
      %v1700 = vld [vmem:[%s320 + $0x1514] sm:$0xf]
      %v1701 = vld [vmem:[%s320 + $0x1518] sm:$0xf]
      %v1702 = vld [vmem:[%s320 + $0x151c] sm:$0xf]
      %v1703 = vld [vmem:[%s320 + $0x1520] sm:$0xf]
      %v1704 = vld [vmem:[%s320 + $0x1524] sm:$0xf]
      %v1705 = vld [vmem:[%s320 + $0x1528] sm:$0xf]
      %v1706 = vld [vmem:[%s320 + $0x152c] sm:$0xf]
      %v1707 = vld [vmem:[%s320 + $0x1530] sm:$0xf]
      %v1708 = vld [vmem:[%s320 + $0x1534] sm:$0xf]
      %v1709 = vld [vmem:[%s320 + $0x1538] sm:$0xf]
      %v1710 = vld [vmem:[%s320 + $0x153c] sm:$0xf]
      %v1711 = vld [vmem:[%s320 + $0x1540] sm:$0xf]
      %v1712 = vld [vmem:[%s320 + $0x1544] sm:$0xf]
      %v1713 = vld [vmem:[%s320 + $0x1548] sm:$0xf]
      %v1714 = vld [vmem:[%s320 + $0x154c] sm:$0xf]
      %v1715 = vld [vmem:[%s320 + $0x1550] sm:$0xf]
      %v1716 = vld [vmem:[%s320 + $0x1554] sm:$0xf]
      %v1717 = vld [vmem:[%s320 + $0x1558] sm:$0xf]
      %v1718 = vld [vmem:[%s320 + $0x155c] sm:$0xf]
      %v1719 = vld [vmem:[%s320 + $0x1560] sm:$0xf]
      %v1720 = vld [vmem:[%s320 + $0x1564] sm:$0xf]
      %v1721 = vld [vmem:[%s320 + $0x1568] sm:$0xf]
      %v1722 = vld [vmem:[%s320 + $0x156c] sm:$0xf]
      %v1723 = vld [vmem:[%s320 + $0x1570] sm:$0xf]
      %v1724 = vld [vmem:[%s320 + $0x1574] sm:$0xf]
      %v1725 = vld [vmem:[%s320 + $0x1578] sm:$0xf]
      %v1726 = vld [vmem:[%s320 + $0x157c] sm:$0xf]
      %v1727 = vld [vmem:[%s320 + $0x1580] sm:$0xf]
      %v1728 = vld [vmem:[%s320 + $0x1584] sm:$0xf]
      %v1729 = vld [vmem:[%s320 + $0x1588] sm:$0xf]
      %v1730 = vld [vmem:[%s320 + $0x158c] sm:$0xf]
      %v1731 = vld [vmem:[%s320 + $0x1590] sm:$0xf]
      %v1732 = vld [vmem:[%s320 + $0x1594] sm:$0xf]
      %v1733 = vld [vmem:[%s320 + $0x1598] sm:$0xf]
      %v1734 = vld [vmem:[%s320 + $0x159c] sm:$0xf]
      %v1735 = vld [vmem:[%s320 + $0x15a0] sm:$0xf]
      %v1736 = vld [vmem:[%s320 + $0x15a4] sm:$0xf]
      %v1737 = vld [vmem:[%s320 + $0x15a8] sm:$0xf]
      %v1738 = vld [vmem:[%s320 + $0x15ac] sm:$0xf]
      %v1739 = vld [vmem:[%s320 + $0x15b0] sm:$0xf]
      %v1740 = vld [vmem:[%s320 + $0x15b4] sm:$0xf]
      %v1741 = vld [vmem:[%s320 + $0x15b8] sm:$0xf]
      %v1742 = vld [vmem:[%s320 + $0x15bc] sm:$0xf]
      %v1743 = vld [vmem:[%s320 + $0x15c0] sm:$0xf]
      %v1744 = vld [vmem:[%s320 + $0x15c4] sm:$0xf]
      %v1745 = vld [vmem:[%s320 + $0x15c8] sm:$0xf]
      %v1746 = vld [vmem:[%s320 + $0x15cc] sm:$0xf]
      %v1747 = vld [vmem:[%s320 + $0x15d0] sm:$0xf]
      %v1748 = vld [vmem:[%s320 + $0x15d4] sm:$0xf]
      %v1749 = vld [vmem:[%s320 + $0x15d8] sm:$0xf]
      %v1750 = vld [vmem:[%s320 + $0x15dc] sm:$0xf]
      %v1751 = vld [vmem:[%s320 + $0x15e0] sm:$0xf]
      %v1752 = vld [vmem:[%s320 + $0x15e4] sm:$0xf]
      %v1753 = vld [vmem:[%s320 + $0x15e8] sm:$0xf]
      %v1754 = vld [vmem:[%s320 + $0x15ec] sm:$0xf]
      %v1755 = vld [vmem:[%s320 + $0x15f0] sm:$0xf]
      %v1756 = vld [vmem:[%s320 + $0x15f4] sm:$0xf]
      %v1757 = vld [vmem:[%s320 + $0x15f8] sm:$0xf]
      %v1758 = vld [vmem:[%s320 + $0x15fc] sm:$0xf]
      %v1759 = vld [vmem:[%s320 + $0x1600] sm:$0xf]
      %v1760 = vld [vmem:[%s320 + $0x1604] sm:$0xf]
      %v1761 = vld [vmem:[%s320 + $0x1608] sm:$0xf]
      %v1762 = vld [vmem:[%s320 + $0x160c] sm:$0xf]
      %v1763 = vld [vmem:[%s320 + $0x1610] sm:$0xf]
      %v1764 = vld [vmem:[%s320 + $0x1614] sm:$0xf]
      %v1765 = vld [vmem:[%s320 + $0x1618] sm:$0xf]
      %v1766 = vld [vmem:[%s320 + $0x161c] sm:$0xf]
      %v1767 = vld [vmem:[%s320 + $0x1620] sm:$0xf]
      %v1768 = vld [vmem:[%s320 + $0x1624] sm:$0xf]
      %v1769 = vld [vmem:[%s320 + $0x1628] sm:$0xf]
      %v1770 = vld [vmem:[%s320 + $0x162c] sm:$0xf]
      %v1771 = vld [vmem:[%s320 + $0x1630] sm:$0xf]
      %v1772 = vld [vmem:[%s320 + $0x1634] sm:$0xf]
      %v1773 = vld [vmem:[%s320 + $0x1638] sm:$0xf]
      %v1774 = vld [vmem:[%s320 + $0x163c] sm:$0xf]
      %v1775 = vld [vmem:[%s320 + $0x1640] sm:$0xf]
      %v1776 = vld [vmem:[%s320 + $0x1644] sm:$0xf]
      %v1777 = vld [vmem:[%s320 + $0x1648] sm:$0xf]
      %v1778 = vld [vmem:[%s320 + $0x164c] sm:$0xf]
      %v1779 = vld [vmem:[%s320 + $0x1650] sm:$0xf]
      %v1780 = vld [vmem:[%s320 + $0x1654] sm:$0xf]
      %v1781 = vld [vmem:[%s320 + $0x1658] sm:$0xf]
      %v1782 = vld [vmem:[%s320 + $0x165c] sm:$0xf]
      %v1783 = vld [vmem:[%s320 + $0x1660] sm:$0xf]
      %v1784 = vld [vmem:[%s320 + $0x1664] sm:$0xf]
      %v1785 = vld [vmem:[%s320 + $0x1668] sm:$0xf]
      %v1786 = vld [vmem:[%s320 + $0x166c] sm:$0xf]
      %v1787 = vld [vmem:[%s320 + $0x1670] sm:$0xf]
      %v1788 = vld [vmem:[%s320 + $0x1674] sm:$0xf]
      %v1789 = vld [vmem:[%s320 + $0x1678] sm:$0xf]
      %v1790 = vld [vmem:[%s320 + $0x167c] sm:$0xf]
      %v1791 = vld [vmem:[%s320 + $0x1680] sm:$0xf]
      %v1792 = vld [vmem:[%s320 + $0x1684] sm:$0xf]
      %v1793 = vld [vmem:[%s320 + $0x1688] sm:$0xf]
      %v1794 = vld [vmem:[%s320 + $0x168c] sm:$0xf]
      %v1795 = vld [vmem:[%s320 + $0x1690] sm:$0xf]
      %v1796 = vld [vmem:[%s320 + $0x1694] sm:$0xf]
      %v1797 = vld [vmem:[%s320 + $0x1698] sm:$0xf]
      %v1798 = vld [vmem:[%s320 + $0x169c] sm:$0xf]
      %v1799 = vld [vmem:[%s320 + $0x16a0] sm:$0xf]
      %v1800 = vld [vmem:[%s320 + $0x16a4] sm:$0xf]
      %v1801 = vld [vmem:[%s320 + $0x16a8] sm:$0xf]
      %v1802 = vld [vmem:[%s320 + $0x16ac] sm:$0xf]
      %v1803 = vld [vmem:[%s320 + $0x16b0] sm:$0xf]
      %v1804 = vld [vmem:[%s320 + $0x16b4] sm:$0xf]
      %v1805 = vld [vmem:[%s320 + $0x16b8] sm:$0xf]
      %v1806 = vld [vmem:[%s320 + $0x16bc] sm:$0xf]
      %v1807 = vld [vmem:[%s320 + $0x16c0] sm:$0xf]
      %v1808 = vld [vmem:[%s320 + $0x16c4] sm:$0xf]
      %v1809 = vld [vmem:[%s320 + $0x16c8] sm:$0xf]
      %v1810 = vld [vmem:[%s320 + $0x16cc] sm:$0xf]
      %v1811 = vld [vmem:[%s320 + $0x16d0] sm:$0xf]
      %v1812 = vld [vmem:[%s320 + $0x16d4] sm:$0xf]
      %v1813 = vld [vmem:[%s320 + $0x16d8] sm:$0xf]
      %v1814 = vld [vmem:[%s320 + $0x16dc] sm:$0xf]
      %v1815 = vld [vmem:[%s320 + $0x16e0] sm:$0xf]
      %v1816 = vld [vmem:[%s320 + $0x16e4] sm:$0xf]
      %v1817 = vld [vmem:[%s320 + $0x16e8] sm:$0xf]
      %v1818 = vld [vmem:[%s320 + $0x16ec] sm:$0xf]
      %v1819 = vld [vmem:[%s320 + $0x16f0] sm:$0xf]
      %v1820 = vld [vmem:[%s320 + $0x16f4] sm:$0xf]
      %v1821 = vld [vmem:[%s320 + $0x16f8] sm:$0xf]
      %v1822 = vld [vmem:[%s320 + $0x16fc] sm:$0xf]
      %v1823 = vld [vmem:[%s320 + $0x1700] sm:$0xf]
      %v1824 = vld [vmem:[%s320 + $0x1704] sm:$0xf]
      %v1825 = vld [vmem:[%s320 + $0x1708] sm:$0xf]
      %v1826 = vld [vmem:[%s320 + $0x170c] sm:$0xf]
      %v1827 = vld [vmem:[%s320 + $0x1710] sm:$0xf]
      %v1828 = vld [vmem:[%s320 + $0x1714] sm:$0xf]
      %v1829 = vld [vmem:[%s320 + $0x1718] sm:$0xf]
      %v1830 = vld [vmem:[%s320 + $0x171c] sm:$0xf]
      %v1831 = vld [vmem:[%s320 + $0x1720] sm:$0xf]
      %v1832 = vld [vmem:[%s320 + $0x1724] sm:$0xf]
      %v1833 = vld [vmem:[%s320 + $0x1728] sm:$0xf]
      %v1834 = vld [vmem:[%s320 + $0x172c] sm:$0xf]
      %v1835 = vld [vmem:[%s320 + $0x1730] sm:$0xf]
      %v1836 = vld [vmem:[%s320 + $0x1734] sm:$0xf]
      %v1837 = vld [vmem:[%s320 + $0x1738] sm:$0xf]
      %v1838 = vld [vmem:[%s320 + $0x173c] sm:$0xf]
      %v1839 = vld [vmem:[%s320 + $0x1740] sm:$0xf]
      %v1840 = vld [vmem:[%s320 + $0x1744] sm:$0xf]
      %v1841 = vld [vmem:[%s320 + $0x1748] sm:$0xf]
      %v1842 = vld [vmem:[%s320 + $0x174c] sm:$0xf]
      %v1843 = vld [vmem:[%s320 + $0x1750] sm:$0xf]
      %v1844 = vld [vmem:[%s320 + $0x1754] sm:$0xf]
      %v1845 = vld [vmem:[%s320 + $0x1758] sm:$0xf]
      %v1846 = vld [vmem:[%s320 + $0x175c] sm:$0xf]
      %v1847 = vld [vmem:[%s320 + $0x1760] sm:$0xf]
      %v1848 = vld [vmem:[%s320 + $0x1764] sm:$0xf]
      %v1849 = vld [vmem:[%s320 + $0x1768] sm:$0xf]
      %v1850 = vld [vmem:[%s320 + $0x176c] sm:$0xf]
      %v1851 = vld [vmem:[%s320 + $0x1770] sm:$0xf]
      %v1852 = vld [vmem:[%s320 + $0x1774] sm:$0xf]
      %v1853 = vld [vmem:[%s320 + $0x1778] sm:$0xf]
      %v1854 = vld [vmem:[%s320 + $0x177c] sm:$0xf]
      %v1855 = vld [vmem:[%s320 + $0x1780] sm:$0xf]
      %v1856 = vld [vmem:[%s320 + $0x1784] sm:$0xf]
      %v1857 = vld [vmem:[%s320 + $0x1788] sm:$0xf]
      %v1858 = vld [vmem:[%s320 + $0x178c] sm:$0xf]
      %v1859 = vld [vmem:[%s320 + $0x1790] sm:$0xf]
      %v1860 = vld [vmem:[%s320 + $0x1794] sm:$0xf]
      %v1861 = vld [vmem:[%s320 + $0x1798] sm:$0xf]
      %v1862 = vld [vmem:[%s320 + $0x179c] sm:$0xf]
      %v1863 = vld [vmem:[%s320 + $0x17a0] sm:$0xf]
      %v1864 = vld [vmem:[%s320 + $0x17a4] sm:$0xf]
      %v1865 = vld [vmem:[%s320 + $0x17a8] sm:$0xf]
      %v1866 = vld [vmem:[%s320 + $0x17ac] sm:$0xf]
      %v1867 = vld [vmem:[%s320 + $0x17b0] sm:$0xf]
      %v1868 = vld [vmem:[%s320 + $0x17b4] sm:$0xf]
      %v1869 = vld [vmem:[%s320 + $0x17b8] sm:$0xf]
      %v1870 = vld [vmem:[%s320 + $0x17bc] sm:$0xf]
      %v1871 = vld [vmem:[%s320 + $0x17c0] sm:$0xf]
      %v1872 = vld [vmem:[%s320 + $0x17c4] sm:$0xf]
      %v1873 = vld [vmem:[%s320 + $0x17c8] sm:$0xf]
      %v1874 = vld [vmem:[%s320 + $0x17cc] sm:$0xf]
      %v1875 = vld [vmem:[%s320 + $0x17d0] sm:$0xf]
      %v1876 = vld [vmem:[%s320 + $0x17d4] sm:$0xf]
      %v1877 = vld [vmem:[%s320 + $0x17d8] sm:$0xf]
      %v1878 = vld [vmem:[%s320 + $0x17dc] sm:$0xf]
      %v1879 = vld [vmem:[%s320 + $0x17e0] sm:$0xf]
      %v1880 = vld [vmem:[%s320 + $0x17e4] sm:$0xf]
      %v1881 = vld [vmem:[%s320 + $0x17e8] sm:$0xf]
      %v1882 = vld [vmem:[%s320 + $0x17ec] sm:$0xf]
      %v1883 = vld [vmem:[%s320 + $0x17f0] sm:$0xf]
      %v1884 = vld [vmem:[%s320 + $0x17f4] sm:$0xf]
      %v1885 = vld [vmem:[%s320 + $0x17f8] sm:$0xf]
      %v1886 = vld [vmem:[%s320 + $0x17fc] sm:$0xf]
      %v1887 = vld [vmem:[%s320 + $0x1800] sm:$0xf]
      %v1888 = vld [vmem:[%s320 + $0x1804] sm:$0xf]
      %v1889 = vld [vmem:[%s320 + $0x1808] sm:$0xf]
      %v1890 = vld [vmem:[%s320 + $0x180c] sm:$0xf]
      %v1891 = vld [vmem:[%s320 + $0x1810] sm:$0xf]
      %v1892 = vld [vmem:[%s320 + $0x1814] sm:$0xf]
      %v1893 = vld [vmem:[%s320 + $0x1818] sm:$0xf]
      %v1894 = vld [vmem:[%s320 + $0x181c] sm:$0xf]
      %v1895 = vld [vmem:[%s320 + $0x1820] sm:$0xf]
      %v1896 = vld [vmem:[%s320 + $0x1824] sm:$0xf]
      %v1897 = vld [vmem:[%s320 + $0x1828] sm:$0xf]
      %v1898 = vld [vmem:[%s320 + $0x182c] sm:$0xf]
      %v1899 = vld [vmem:[%s320 + $0x1830] sm:$0xf]
      %v1900 = vld [vmem:[%s320 + $0x1834] sm:$0xf]
      %v1901 = vld [vmem:[%s320 + $0x1838] sm:$0xf]
      %v1902 = vld [vmem:[%s320 + $0x183c] sm:$0xf]
      %v1903 = vld [vmem:[%s320 + $0x1840] sm:$0xf]
      %v1904 = vld [vmem:[%s320 + $0x1844] sm:$0xf]
      %v1905 = vld [vmem:[%s320 + $0x1848] sm:$0xf]
      %v1906 = vld [vmem:[%s320 + $0x184c] sm:$0xf]
      %v1907 = vld [vmem:[%s320 + $0x1850] sm:$0xf]
      %v1908 = vld [vmem:[%s320 + $0x1854] sm:$0xf]
      %v1909 = vld [vmem:[%s320 + $0x1858] sm:$0xf]
      %v1910 = vld [vmem:[%s320 + $0x185c] sm:$0xf]
      %v1911 = vld [vmem:[%s320 + $0x1860] sm:$0xf]
      %v1912 = vld [vmem:[%s320 + $0x1864] sm:$0xf]
      %v1913 = vld [vmem:[%s320 + $0x1868] sm:$0xf]
      %v1914 = vld [vmem:[%s320 + $0x186c] sm:$0xf]
      %v1915 = vld [vmem:[%s320 + $0x1870] sm:$0xf]
      %v1916 = vld [vmem:[%s320 + $0x1874] sm:$0xf]
      %v1917 = vld [vmem:[%s320 + $0x1878] sm:$0xf]
      %v1918 = vld [vmem:[%s320 + $0x187c] sm:$0xf]
      %v1919 = vld [vmem:[%s320 + $0x1880] sm:$0xf]
      %v1920 = vld [vmem:[%s320 + $0x1884] sm:$0xf]
      %v1921 = vld [vmem:[%s320 + $0x1888] sm:$0xf]
      %v1922 = vld [vmem:[%s320 + $0x188c] sm:$0xf]
      %v1923 = vld [vmem:[%s320 + $0x1890] sm:$0xf]
      %v1924 = vld [vmem:[%s320 + $0x1894] sm:$0xf]
      %v1925 = vld [vmem:[%s320 + $0x1898] sm:$0xf]
      %v1926 = vld [vmem:[%s320 + $0x189c] sm:$0xf]
      %v1927 = vld [vmem:[%s320 + $0x18a0] sm:$0xf]
      %v1928 = vld [vmem:[%s320 + $0x18a4] sm:$0xf]
      %v1929 = vld [vmem:[%s320 + $0x18a8] sm:$0xf]
      %v1930 = vld [vmem:[%s320 + $0x18ac] sm:$0xf]
      %v1931 = vld [vmem:[%s320 + $0x18b0] sm:$0xf]
      %v1932 = vld [vmem:[%s320 + $0x18b4] sm:$0xf]
      %v1933 = vld [vmem:[%s320 + $0x18b8] sm:$0xf]
      %v1934 = vld [vmem:[%s320 + $0x18bc] sm:$0xf]
      %v1935 = vld [vmem:[%s320 + $0x18c0] sm:$0xf]
      %v1936 = vld [vmem:[%s320 + $0x18c4] sm:$0xf]
      %v1937 = vld [vmem:[%s320 + $0x18c8] sm:$0xf]
      %v1938 = vld [vmem:[%s320 + $0x18cc] sm:$0xf]
      %v1939 = vld [vmem:[%s320 + $0x18d0] sm:$0xf]
      %v1940 = vld [vmem:[%s320 + $0x18d4] sm:$0xf]
      %v1941 = vld [vmem:[%s320 + $0x18d8] sm:$0xf]
      %v1942 = vld [vmem:[%s320 + $0x18dc] sm:$0xf]
      %v1943 = vld [vmem:[%s320 + $0x18e0] sm:$0xf]
      %v1944 = vld [vmem:[%s320 + $0x18e4] sm:$0xf]
      %v1945 = vld [vmem:[%s320 + $0x18e8] sm:$0xf]
      %v1946 = vld [vmem:[%s320 + $0x18ec] sm:$0xf]
      %v1947 = vld [vmem:[%s320 + $0x18f0] sm:$0xf]
      %v1948 = vld [vmem:[%s320 + $0x18f4] sm:$0xf]
      %v1949 = vld [vmem:[%s320 + $0x18f8] sm:$0xf]
      %v1950 = vld [vmem:[%s320 + $0x18fc] sm:$0xf]
      %v1951 = vld [vmem:[%s320 + $0x1900] sm:$0xf]
      %v1952 = vld [vmem:[%s320 + $0x1904] sm:$0xf]
      %v1953 = vld [vmem:[%s320 + $0x1908] sm:$0xf]
      %v1954 = vld [vmem:[%s320 + $0x190c] sm:$0xf]
      %v1955 = vld [vmem:[%s320 + $0x1910] sm:$0xf]
      %v1956 = vld [vmem:[%s320 + $0x1914] sm:$0xf]
      %v1957 = vld [vmem:[%s320 + $0x1918] sm:$0xf]
      %v1958 = vld [vmem:[%s320 + $0x191c] sm:$0xf]
      %v1959 = vld [vmem:[%s320 + $0x1920] sm:$0xf]
      %v1960 = vld [vmem:[%s320 + $0x1924] sm:$0xf]
      %v1961 = vld [vmem:[%s320 + $0x1928] sm:$0xf]
      %v1962 = vld [vmem:[%s320 + $0x192c] sm:$0xf]
      %v1963 = vld [vmem:[%s320 + $0x1930] sm:$0xf]
      %v1964 = vld [vmem:[%s320 + $0x1934] sm:$0xf]
      %v1965 = vld [vmem:[%s320 + $0x1938] sm:$0xf]
      %v1966 = vld [vmem:[%s320 + $0x193c] sm:$0xf]
      %v1967 = vld [vmem:[%s320 + $0x1940] sm:$0xf]
      %v1968 = vld [vmem:[%s320 + $0x1944] sm:$0xf]
      %v1969 = vld [vmem:[%s320 + $0x1948] sm:$0xf]
      %v1970 = vld [vmem:[%s320 + $0x194c] sm:$0xf]
      %v1971 = vld [vmem:[%s320 + $0x1950] sm:$0xf]
      %v1972 = vld [vmem:[%s320 + $0x1954] sm:$0xf]
      %v1973 = vld [vmem:[%s320 + $0x1958] sm:$0xf]
      %v1974 = vld [vmem:[%s320 + $0x195c] sm:$0xf]
      %v1975 = vld [vmem:[%s320 + $0x1960] sm:$0xf]
      %v1976 = vld [vmem:[%s320 + $0x1964] sm:$0xf]
      %v1977 = vld [vmem:[%s320 + $0x1968] sm:$0xf]
      %v1978 = vld [vmem:[%s320 + $0x196c] sm:$0xf]
      %v1979 = vld [vmem:[%s320 + $0x1970] sm:$0xf]
      %v1980 = vld [vmem:[%s320 + $0x1974] sm:$0xf]
      %v1981 = vld [vmem:[%s320 + $0x1978] sm:$0xf]
      %v1982 = vld [vmem:[%s320 + $0x197c] sm:$0xf]
      %v1983 = vld [vmem:[%s320 + $0x1980] sm:$0xf]
      %v1984 = vld [vmem:[%s320 + $0x1984] sm:$0xf]
      %v1985 = vld [vmem:[%s320 + $0x1988] sm:$0xf]
      %v1986 = vld [vmem:[%s320 + $0x198c] sm:$0xf]
      %v1987 = vld [vmem:[%s320 + $0x1990] sm:$0xf]
      %v1988 = vld [vmem:[%s320 + $0x1994] sm:$0xf]
      %v1989 = vld [vmem:[%s320 + $0x1998] sm:$0xf]
      %v1990 = vld [vmem:[%s320 + $0x199c] sm:$0xf]
      %v1991 = vld [vmem:[%s320 + $0x19a0] sm:$0xf]
      %v1992 = vld [vmem:[%s320 + $0x19a4] sm:$0xf]
      %v1993 = vld [vmem:[%s320 + $0x19a8] sm:$0xf]
      %v1994 = vld [vmem:[%s320 + $0x19ac] sm:$0xf]
      %v1995 = vld [vmem:[%s320 + $0x19b0] sm:$0xf]
      %v1996 = vld [vmem:[%s320 + $0x19b4] sm:$0xf]
      %v1997 = vld [vmem:[%s320 + $0x19b8] sm:$0xf]
      %v1998 = vld [vmem:[%s320 + $0x19bc] sm:$0xf]
      %v1999 = vld [vmem:[%s320 + $0x19c0] sm:$0xf]
      %v2000 = vld [vmem:[%s320 + $0x19c4] sm:$0xf]
      %v2001 = vld [vmem:[%s320 + $0x19c8] sm:$0xf]
      %v2002 = vld [vmem:[%s320 + $0x19cc] sm:$0xf]
      %v2003 = vld [vmem:[%s320 + $0x19d0] sm:$0xf]
      %v2004 = vld [vmem:[%s320 + $0x19d4] sm:$0xf]
      %v2005 = vld [vmem:[%s320 + $0x19d8] sm:$0xf]
      %v2006 = vld [vmem:[%s320 + $0x19dc] sm:$0xf]
      %v2007 = vld [vmem:[%s320 + $0x19e0] sm:$0xf]
      %v2008 = vld [vmem:[%s320 + $0x19e4] sm:$0xf]
      %v2009 = vld [vmem:[%s320 + $0x19e8] sm:$0xf]
      %v2010 = vld [vmem:[%s320 + $0x19ec] sm:$0xf]
      %v2011 = vld [vmem:[%s320 + $0x19f0] sm:$0xf]
      %v2012 = vld [vmem:[%s320 + $0x19f4] sm:$0xf]
      %v2013 = vld [vmem:[%s320 + $0x19f8] sm:$0xf]
      %v2014 = vld [vmem:[%s320 + $0x19fc] sm:$0xf]
      %v2015 = vld [vmem:[%s320 + $0x1a00] sm:$0xf]
      %v2016 = vld [vmem:[%s320 + $0x1a04] sm:$0xf]
      %v2017 = vld [vmem:[%s320 + $0x1a08] sm:$0xf]
      %v2018 = vld [vmem:[%s320 + $0x1a0c] sm:$0xf]
      %v2019 = vld [vmem:[%s320 + $0x1a10] sm:$0xf]
      %v2020 = vld [vmem:[%s320 + $0x1a14] sm:$0xf]
      %v2021 = vld [vmem:[%s320 + $0x1a18] sm:$0xf]
      %v2022 = vld [vmem:[%s320 + $0x1a1c] sm:$0xf]
      %v2023 = vld [vmem:[%s320 + $0x1a20] sm:$0xf]
      %v2024 = vld [vmem:[%s320 + $0x1a24] sm:$0xf]
      %v2025 = vld [vmem:[%s320 + $0x1a28] sm:$0xf]
      %v2026 = vld [vmem:[%s320 + $0x1a2c] sm:$0xf]
      %v2027 = vld [vmem:[%s320 + $0x1a30] sm:$0xf]
      %v2028 = vld [vmem:[%s320 + $0x1a34] sm:$0xf]
      %v2029 = vld [vmem:[%s320 + $0x1a38] sm:$0xf]
      %v2030 = vld [vmem:[%s320 + $0x1a3c] sm:$0xf]
      %v2031 = vld [vmem:[%s320 + $0x1a40] sm:$0xf]
      %v2032 = vld [vmem:[%s320 + $0x1a44] sm:$0xf]
      %v2033 = vld [vmem:[%s320 + $0x1a48] sm:$0xf]
      %v2034 = vld [vmem:[%s320 + $0x1a4c] sm:$0xf]
      %v2035 = vld [vmem:[%s320 + $0x1a50] sm:$0xf]
      %v2036 = vld [vmem:[%s320 + $0x1a54] sm:$0xf]
      %v2037 = vld [vmem:[%s320 + $0x1a58] sm:$0xf]
      %v2038 = vld [vmem:[%s320 + $0x1a5c] sm:$0xf]
      %v2039 = vld [vmem:[%s320 + $0x1a60] sm:$0xf]
      %v2040 = vld [vmem:[%s320 + $0x1a64] sm:$0xf]
      %v2041 = vld [vmem:[%s320 + $0x1a68] sm:$0xf]
      %v2042 = vld [vmem:[%s320 + $0x1a6c] sm:$0xf]
      %v2043 = vld [vmem:[%s320 + $0x1a70] sm:$0xf]
      %v2044 = vld [vmem:[%s320 + $0x1a74] sm:$0xf]
      %v2045 = vld [vmem:[%s320 + $0x1a78] sm:$0xf]
      %v2046 = vld [vmem:[%s320 + $0x1a7c] sm:$0xf]
      %v2047 = vld [vmem:[%s320 + $0x1a80] sm:$0xf]
      %v2048 = vld [vmem:[%s320 + $0x1a84] sm:$0xf]
      %v2049 = vld [vmem:[%s320 + $0x1a88] sm:$0xf]
      %v2050 = vld [vmem:[%s320 + $0x1a8c] sm:$0xf]
      %v2051 = vld [vmem:[%s320 + $0x1a90] sm:$0xf]
      %v2052 = vld [vmem:[%s320 + $0x1a94] sm:$0xf]
      %v2053 = vld [vmem:[%s320 + $0x1a98] sm:$0xf]
      %v2054 = vld [vmem:[%s320 + $0x1a9c] sm:$0xf]
      %v2055 = vld [vmem:[%s320 + $0x1aa0] sm:$0xf]
      %v2056 = vld [vmem:[%s320 + $0x1aa4] sm:$0xf]
      %v2057 = vld [vmem:[%s320 + $0x1aa8] sm:$0xf]
      %v2058 = vld [vmem:[%s320 + $0x1aac] sm:$0xf]
      %v2059 = vld [vmem:[%s320 + $0x1ab0] sm:$0xf]
      %v2060 = vld [vmem:[%s320 + $0x1ab4] sm:$0xf]
      %v2061 = vld [vmem:[%s320 + $0x1ab8] sm:$0xf]
      %v2062 = vld [vmem:[%s320 + $0x1abc] sm:$0xf]
      %v2063 = vld [vmem:[%s320 + $0x1ac0] sm:$0xf]
      %v2064 = vld [vmem:[%s320 + $0x1ac4] sm:$0xf]
      %v2065 = vld [vmem:[%s320 + $0x1ac8] sm:$0xf]
      %v2066 = vld [vmem:[%s320 + $0x1acc] sm:$0xf]
      %v2067 = vld [vmem:[%s320 + $0x1ad0] sm:$0xf]
      %v2068 = vld [vmem:[%s320 + $0x1ad4] sm:$0xf]
      %v2069 = vld [vmem:[%s320 + $0x1ad8] sm:$0xf]
      %v2070 = vld [vmem:[%s320 + $0x1adc] sm:$0xf]
      %v2071 = vld [vmem:[%s320 + $0x1ae0] sm:$0xf]
      %v2072 = vld [vmem:[%s320 + $0x1ae4] sm:$0xf]
      %v2073 = vld [vmem:[%s320 + $0x1ae8] sm:$0xf]
      %v2074 = vld [vmem:[%s320 + $0x1aec] sm:$0xf]
      %v2075 = vld [vmem:[%s320 + $0x1af0] sm:$0xf]
      %v2076 = vld [vmem:[%s320 + $0x1af4] sm:$0xf]
      %v2077 = vld [vmem:[%s320 + $0x1af8] sm:$0xf]
      %v2078 = vld [vmem:[%s320 + $0x1afc] sm:$0xf]
      %v2079 = vld [vmem:[%s320 + $0x1b00] sm:$0xf]
      %v2080 = vld [vmem:[%s320 + $0x1b04] sm:$0xf]
      %v2081 = vld [vmem:[%s320 + $0x1b08] sm:$0xf]
      %v2082 = vld [vmem:[%s320 + $0x1b0c] sm:$0xf]
      %v2083 = vld [vmem:[%s320 + $0x1b10] sm:$0xf]
      %v2084 = vld [vmem:[%s320 + $0x1b14] sm:$0xf]
      %v2085 = vld [vmem:[%s320 + $0x1b18] sm:$0xf]
      %v2086 = vld [vmem:[%s320 + $0x1b1c] sm:$0xf]
      %v2087 = vld [vmem:[%s320 + $0x1b20] sm:$0xf]
      %v2088 = vld [vmem:[%s320 + $0x1b24] sm:$0xf]
      %v2089 = vld [vmem:[%s320 + $0x1b28] sm:$0xf]
      %v2090 = vld [vmem:[%s320 + $0x1b2c] sm:$0xf]
      %v2091 = vld [vmem:[%s320 + $0x1b30] sm:$0xf]
      %v2092 = vld [vmem:[%s320 + $0x1b34] sm:$0xf]
      %v2093 = vld [vmem:[%s320 + $0x1b38] sm:$0xf]
      %v2094 = vld [vmem:[%s320 + $0x1b3c] sm:$0xf]
      %v2095 = vld [vmem:[%s320 + $0x1b40] sm:$0xf]
      %v2096 = vld [vmem:[%s320 + $0x1b44] sm:$0xf]
      %v2097 = vld [vmem:[%s320 + $0x1b48] sm:$0xf]
      %v2098 = vld [vmem:[%s320 + $0x1b4c] sm:$0xf]
      %v2099 = vld [vmem:[%s320 + $0x1b50] sm:$0xf]
      %v2100 = vld [vmem:[%s320 + $0x1b54] sm:$0xf]
      %v2101 = vld [vmem:[%s320 + $0x1b58] sm:$0xf]
      %v2102 = vld [vmem:[%s320 + $0x1b5c] sm:$0xf]
      %v2103 = vld [vmem:[%s320 + $0x1b60] sm:$0xf]
      %v2104 = vld [vmem:[%s320 + $0x1b64] sm:$0xf]
      %v2105 = vld [vmem:[%s320 + $0x1b68] sm:$0xf]
      %v2106 = vld [vmem:[%s320 + $0x1b6c] sm:$0xf]
      %v2107 = vld [vmem:[%s320 + $0x1b70] sm:$0xf]
      %v2108 = vld [vmem:[%s320 + $0x1b74] sm:$0xf]
      %v2109 = vld [vmem:[%s320 + $0x1b78] sm:$0xf]
      %v2110 = vld [vmem:[%s320 + $0x1b7c] sm:$0xf]
      %v2111 = vld [vmem:[%s320 + $0x1b80] sm:$0xf]
      %v2112 = vld [vmem:[%s320 + $0x1b84] sm:$0xf]
      %v2113 = vld [vmem:[%s320 + $0x1b88] sm:$0xf]
      %v2114 = vld [vmem:[%s320 + $0x1b8c] sm:$0xf]
      %v2115 = vld [vmem:[%s320 + $0x1b90] sm:$0xf]
      %v2116 = vld [vmem:[%s320 + $0x1b94] sm:$0xf]
      %v2117 = vld [vmem:[%s320 + $0x1b98] sm:$0xf]
      %v2118 = vld [vmem:[%s320 + $0x1b9c] sm:$0xf]
      %v2119 = vld [vmem:[%s320 + $0x1ba0] sm:$0xf]
      %v2120 = vld [vmem:[%s320 + $0x1ba4] sm:$0xf]
      %v2121 = vld [vmem:[%s320 + $0x1ba8] sm:$0xf]
      %v2122 = vld [vmem:[%s320 + $0x1bac] sm:$0xf]
      %v2123 = vld [vmem:[%s320 + $0x1bb0] sm:$0xf]
      %v2124 = vld [vmem:[%s320 + $0x1bb4] sm:$0xf]
      %v2125 = vld [vmem:[%s320 + $0x1bb8] sm:$0xf]
      %v2126 = vld [vmem:[%s320 + $0x1bbc] sm:$0xf]
      %v2127 = vld [vmem:[%s320 + $0x1bc0] sm:$0xf]
      %v2128 = vld [vmem:[%s320 + $0x1bc4] sm:$0xf]
      %v2129 = vld [vmem:[%s320 + $0x1bc8] sm:$0xf]
      %v2130 = vld [vmem:[%s320 + $0x1bcc] sm:$0xf]
      %v2131 = vld [vmem:[%s320 + $0x1bd0] sm:$0xf]
      %v2132 = vld [vmem:[%s320 + $0x1bd4] sm:$0xf]
      %v2133 = vld [vmem:[%s320 + $0x1bd8] sm:$0xf]
      %v2134 = vld [vmem:[%s320 + $0x1bdc] sm:$0xf]
      %v2135 = vld [vmem:[%s320 + $0x1be0] sm:$0xf]
      %v2136 = vld [vmem:[%s320 + $0x1be4] sm:$0xf]
      %v2137 = vld [vmem:[%s320 + $0x1be8] sm:$0xf]
      %v2138 = vld [vmem:[%s320 + $0x1bec] sm:$0xf]
      %v2139 = vld [vmem:[%s320 + $0x1bf0] sm:$0xf]
      %v2140 = vld [vmem:[%s320 + $0x1bf4] sm:$0xf]
      %v2141 = vld [vmem:[%s320 + $0x1bf8] sm:$0xf]
      %v2142 = vld [vmem:[%s320 + $0x1bfc] sm:$0xf]
      %v2143 = vld [vmem:[%s320 + $0x1c00] sm:$0xf]
      %v2144 = vld [vmem:[%s320 + $0x1c04] sm:$0xf]
      %v2145 = vld [vmem:[%s320 + $0x1c08] sm:$0xf]
      %v2146 = vld [vmem:[%s320 + $0x1c0c] sm:$0xf]
      %v2147 = vld [vmem:[%s320 + $0x1c10] sm:$0xf]
      %v2148 = vld [vmem:[%s320 + $0x1c14] sm:$0xf]
      %v2149 = vld [vmem:[%s320 + $0x1c18] sm:$0xf]
      %v2150 = vld [vmem:[%s320 + $0x1c1c] sm:$0xf]
      %v2151 = vld [vmem:[%s320 + $0x1c20] sm:$0xf]
      %v2152 = vld [vmem:[%s320 + $0x1c24] sm:$0xf]
      %v2153 = vld [vmem:[%s320 + $0x1c28] sm:$0xf]
      %v2154 = vld [vmem:[%s320 + $0x1c2c] sm:$0xf]
      %v2155 = vld [vmem:[%s320 + $0x1c30] sm:$0xf]
      %v2156 = vld [vmem:[%s320 + $0x1c34] sm:$0xf]
      %v2157 = vld [vmem:[%s320 + $0x1c38] sm:$0xf]
      %v2158 = vld [vmem:[%s320 + $0x1c3c] sm:$0xf]
      %v2159 = vld [vmem:[%s320 + $0x1c40] sm:$0xf]
      %v2160 = vld [vmem:[%s320 + $0x1c44] sm:$0xf]
      %v2161 = vld [vmem:[%s320 + $0x1c48] sm:$0xf]
      %v2162 = vld [vmem:[%s320 + $0x1c4c] sm:$0xf]
      %v2163 = vld [vmem:[%s320 + $0x1c50] sm:$0xf]
      %v2164 = vld [vmem:[%s320 + $0x1c54] sm:$0xf]
      %v2165 = vld [vmem:[%s320 + $0x1c58] sm:$0xf]
      %v2166 = vld [vmem:[%s320 + $0x1c5c] sm:$0xf]
      %v2167 = vld [vmem:[%s320 + $0x1c60] sm:$0xf]
      %v2168 = vld [vmem:[%s320 + $0x1c64] sm:$0xf]
      %v2169 = vld [vmem:[%s320 + $0x1c68] sm:$0xf]
      %v2170 = vld [vmem:[%s320 + $0x1c6c] sm:$0xf]
      %v2171 = vld [vmem:[%s320 + $0x1c70] sm:$0xf]
      %v2172 = vld [vmem:[%s320 + $0x1c74] sm:$0xf]
      %v2173 = vld [vmem:[%s320 + $0x1c78] sm:$0xf]
      %v2174 = vld [vmem:[%s320 + $0x1c7c] sm:$0xf]
      %v2175 = vld [vmem:[%s320 + $0x1c80] sm:$0xf]
      %v2176 = vld [vmem:[%s320 + $0x1c84] sm:$0xf]
      %v2177 = vld [vmem:[%s320 + $0x1c88] sm:$0xf]
      %v2178 = vld [vmem:[%s320 + $0x1c8c] sm:$0xf]
      %v2179 = vld [vmem:[%s320 + $0x1c90] sm:$0xf]
      %v2180 = vld [vmem:[%s320 + $0x1c94] sm:$0xf]
      %v2181 = vld [vmem:[%s320 + $0x1c98] sm:$0xf]
      %v2182 = vld [vmem:[%s320 + $0x1c9c] sm:$0xf]
      %v2183 = vld [vmem:[%s320 + $0x1ca0] sm:$0xf]
      %v2184 = vld [vmem:[%s320 + $0x1ca4] sm:$0xf]
      %v2185 = vld [vmem:[%s320 + $0x1ca8] sm:$0xf]
      %v2186 = vld [vmem:[%s320 + $0x1cac] sm:$0xf]
      %v2187 = vld [vmem:[%s320 + $0x1cb0] sm:$0xf]
      %v2188 = vld [vmem:[%s320 + $0x1cb4] sm:$0xf]
      %v2189 = vld [vmem:[%s320 + $0x1cb8] sm:$0xf]
      %v2190 = vld [vmem:[%s320 + $0x1cbc] sm:$0xf]
      %v2191 = vld [vmem:[%s320 + $0x1cc0] sm:$0xf]
      %v2192 = vld [vmem:[%s320 + $0x1cc4] sm:$0xf]
      %v2193 = vld [vmem:[%s320 + $0x1cc8] sm:$0xf]
      %v2194 = vld [vmem:[%s320 + $0x1ccc] sm:$0xf]
      %v2195 = vld [vmem:[%s320 + $0x1cd0] sm:$0xf]
      %v2196 = vld [vmem:[%s320 + $0x1cd4] sm:$0xf]
      %v2197 = vld [vmem:[%s320 + $0x1cd8] sm:$0xf]
      %v2198 = vld [vmem:[%s320 + $0x1cdc] sm:$0xf]
      %v2199 = vld [vmem:[%s320 + $0x1ce0] sm:$0xf]
      %v2200 = vld [vmem:[%s320 + $0x1ce4] sm:$0xf]
      %v2201 = vld [vmem:[%s320 + $0x1ce8] sm:$0xf]
      %v2202 = vld [vmem:[%s320 + $0x1cec] sm:$0xf]
      %v2203 = vld [vmem:[%s320 + $0x1cf0] sm:$0xf]
      %v2204 = vld [vmem:[%s320 + $0x1cf4] sm:$0xf]
      %v2205 = vld [vmem:[%s320 + $0x1cf8] sm:$0xf]
      %v2206 = vld [vmem:[%s320 + $0x1cfc] sm:$0xf]
      %v2207 = vld [vmem:[%s320 + $0x1d00] sm:$0xf]
      %v2208 = vld [vmem:[%s320 + $0x1d04] sm:$0xf]
      %v2209 = vld [vmem:[%s320 + $0x1d08] sm:$0xf]
      %v2210 = vld [vmem:[%s320 + $0x1d0c] sm:$0xf]
      %v2211 = vld [vmem:[%s320 + $0x1d10] sm:$0xf]
      %v2212 = vld [vmem:[%s320 + $0x1d14] sm:$0xf]
      %v2213 = vld [vmem:[%s320 + $0x1d18] sm:$0xf]
      %v2214 = vld [vmem:[%s320 + $0x1d1c] sm:$0xf]
      %v2215 = vld [vmem:[%s320 + $0x1d20] sm:$0xf]
      %v2216 = vld [vmem:[%s320 + $0x1d24] sm:$0xf]
      %v2217 = vld [vmem:[%s320 + $0x1d28] sm:$0xf]
      %v2218 = vld [vmem:[%s320 + $0x1d2c] sm:$0xf]
      %v2219 = vld [vmem:[%s320 + $0x1d30] sm:$0xf]
      %v2220 = vld [vmem:[%s320 + $0x1d34] sm:$0xf]
      %v2221 = vld [vmem:[%s320 + $0x1d38] sm:$0xf]
      %v2222 = vld [vmem:[%s320 + $0x1d3c] sm:$0xf]
      %v2223 = vld [vmem:[%s320 + $0x1d40] sm:$0xf]
      %v2224 = vld [vmem:[%s320 + $0x1d44] sm:$0xf]
      %v2225 = vld [vmem:[%s320 + $0x1d48] sm:$0xf]
      %v2226 = vld [vmem:[%s320 + $0x1d4c] sm:$0xf]
      %v2227 = vld [vmem:[%s320 + $0x1d50] sm:$0xf]
      %v2228 = vld [vmem:[%s320 + $0x1d54] sm:$0xf]
      %v2229 = vld [vmem:[%s320 + $0x1d58] sm:$0xf]
      %v2230 = vld [vmem:[%s320 + $0x1d5c] sm:$0xf]
      %v2231 = vld [vmem:[%s320 + $0x1d60] sm:$0xf]
      %v2232 = vld [vmem:[%s320 + $0x1d64] sm:$0xf]
      %v2233 = vld [vmem:[%s320 + $0x1d68] sm:$0xf]
      %v2234 = vld [vmem:[%s320 + $0x1d6c] sm:$0xf]
      %v2235 = vld [vmem:[%s320 + $0x1d70] sm:$0xf]
      %v2236 = vld [vmem:[%s320 + $0x1d74] sm:$0xf]
      %v2237 = vld [vmem:[%s320 + $0x1d78] sm:$0xf]
      %v2238 = vld [vmem:[%s320 + $0x1d7c] sm:$0xf]
      %v2239 = vld [vmem:[%s320 + $0x1d80] sm:$0xf]
      %v2240 = vld [vmem:[%s320 + $0x1d84] sm:$0xf]
      %v2241 = vld [vmem:[%s320 + $0x1d88] sm:$0xf]
      %v2242 = vld [vmem:[%s320 + $0x1d8c] sm:$0xf]
      %v2243 = vld [vmem:[%s320 + $0x1d90] sm:$0xf]
      %v2244 = vld [vmem:[%s320 + $0x1d94] sm:$0xf]
      %v2245 = vld [vmem:[%s320 + $0x1d98] sm:$0xf]
      %v2246 = vld [vmem:[%s320 + $0x1d9c] sm:$0xf]
      %v2247 = vld [vmem:[%s320 + $0x1da0] sm:$0xf]
      %v2248 = vld [vmem:[%s320 + $0x1da4] sm:$0xf]
      %v2249 = vld [vmem:[%s320 + $0x1da8] sm:$0xf]
      %v2250 = vld [vmem:[%s320 + $0x1dac] sm:$0xf]
      %v2251 = vld [vmem:[%s320 + $0x1db0] sm:$0xf]
      %v2252 = vld [vmem:[%s320 + $0x1db4] sm:$0xf]
      %v2253 = vld [vmem:[%s320 + $0x1db8] sm:$0xf]
      %v2254 = vld [vmem:[%s320 + $0x1dbc] sm:$0xf]
      %v2255 = vld [vmem:[%s320 + $0x1dc0] sm:$0xf]
      %v2256 = vld [vmem:[%s320 + $0x1dc4] sm:$0xf]
      %v2257 = vld [vmem:[%s320 + $0x1dc8] sm:$0xf]
      %v2258 = vld [vmem:[%s320 + $0x1dcc] sm:$0xf]
      %v2259 = vld [vmem:[%s320 + $0x1dd0] sm:$0xf]
      %v2260 = vld [vmem:[%s320 + $0x1dd4] sm:$0xf]
      %v2261 = vld [vmem:[%s320 + $0x1dd8] sm:$0xf]
      %v2262 = vld [vmem:[%s320 + $0x1ddc] sm:$0xf]
      %v2263 = vld [vmem:[%s320 + $0x1de0] sm:$0xf]
      %v2264 = vld [vmem:[%s320 + $0x1de4] sm:$0xf]
      %v2265 = vld [vmem:[%s320 + $0x1de8] sm:$0xf]
      %v2266 = vld [vmem:[%s320 + $0x1dec] sm:$0xf]
      %v2267 = vld [vmem:[%s320 + $0x1df0] sm:$0xf]
      %v2268 = vld [vmem:[%s320 + $0x1df4] sm:$0xf]
      %v2269 = vld [vmem:[%s320 + $0x1df8] sm:$0xf]
      %v2270 = vld [vmem:[%s320 + $0x1dfc] sm:$0xf]
      %v2271 = vld [vmem:[%s320 + $0x1e00] sm:$0xf]
      %v2272 = vld [vmem:[%s320 + $0x1e04] sm:$0xf]
      %v2273 = vld [vmem:[%s320 + $0x1e08] sm:$0xf]
      %v2274 = vld [vmem:[%s320 + $0x1e0c] sm:$0xf]
      %v2275 = vld [vmem:[%s320 + $0x1e10] sm:$0xf]
      %v2276 = vld [vmem:[%s320 + $0x1e14] sm:$0xf]
      %v2277 = vld [vmem:[%s320 + $0x1e18] sm:$0xf]
      %v2278 = vld [vmem:[%s320 + $0x1e1c] sm:$0xf]
      %v2279 = vld [vmem:[%s320 + $0x1e20] sm:$0xf]
      %v2280 = vld [vmem:[%s320 + $0x1e24] sm:$0xf]
      %v2281 = vld [vmem:[%s320 + $0x1e28] sm:$0xf]
      %v2282 = vld [vmem:[%s320 + $0x1e2c] sm:$0xf]
      %v2283 = vld [vmem:[%s320 + $0x1e30] sm:$0xf]
      %v2284 = vld [vmem:[%s320 + $0x1e34] sm:$0xf]
      %v2285 = vld [vmem:[%s320 + $0x1e38] sm:$0xf]
      %v2286 = vld [vmem:[%s320 + $0x1e3c] sm:$0xf]
      %v2287 = vld [vmem:[%s320 + $0x1e40] sm:$0xf]
      %v2288 = vld [vmem:[%s320 + $0x1e44] sm:$0xf]
      %v2289 = vld [vmem:[%s320 + $0x1e48] sm:$0xf]
      %v2290 = vld [vmem:[%s320 + $0x1e4c] sm:$0xf]
      %v2291 = vld [vmem:[%s320 + $0x1e50] sm:$0xf]
      %v2292 = vld [vmem:[%s320 + $0x1e54] sm:$0xf]
      %v2293 = vld [vmem:[%s320 + $0x1e58] sm:$0xf]
      %v2294 = vld [vmem:[%s320 + $0x1e5c] sm:$0xf]
      %v2295 = vld [vmem:[%s320 + $0x1e60] sm:$0xf]
      %v2296 = vld [vmem:[%s320 + $0x1e64] sm:$0xf]
      %v2297 = vld [vmem:[%s320 + $0x1e68] sm:$0xf]
      %v2298 = vld [vmem:[%s320 + $0x1e6c] sm:$0xf]
      %v2299 = vld [vmem:[%s320 + $0x1e70] sm:$0xf]
      %v2300 = vld [vmem:[%s320 + $0x1e74] sm:$0xf]
      %v2301 = vld [vmem:[%s320 + $0x1e78] sm:$0xf]
      %v2302 = vld [vmem:[%s320 + $0x1e7c] sm:$0xf]
      %v2303 = vld [vmem:[%s320 + $0x1e80] sm:$0xf]
      %v2304 = vld [vmem:[%s320 + $0x1e84] sm:$0xf]
      %v2305 = vld [vmem:[%s320 + $0x1e88] sm:$0xf]
      %v2306 = vld [vmem:[%s320 + $0x1e8c] sm:$0xf]
      %v2307 = vld [vmem:[%s320 + $0x1e90] sm:$0xf]
      %v2308 = vld [vmem:[%s320 + $0x1e94] sm:$0xf]
      %v2309 = vld [vmem:[%s320 + $0x1e98] sm:$0xf]
      %v2310 = vld [vmem:[%s320 + $0x1e9c] sm:$0xf]
      %v2311 = vld [vmem:[%s320 + $0x1ea0] sm:$0xf]
      %v2312 = vld [vmem:[%s320 + $0x1ea4] sm:$0xf]
      %v2313 = vld [vmem:[%s320 + $0x1ea8] sm:$0xf]
      %v2314 = vld [vmem:[%s320 + $0x1eac] sm:$0xf]
      %v2315 = vld [vmem:[%s320 + $0x1eb0] sm:$0xf]
      %v2316 = vld [vmem:[%s320 + $0x1eb4] sm:$0xf]
      %v2317 = vld [vmem:[%s320 + $0x1eb8] sm:$0xf]
      %v2318 = vld [vmem:[%s320 + $0x1ebc] sm:$0xf]
      %v2319 = vld [vmem:[%s320 + $0x1ec0] sm:$0xf]
      %v2320 = vld [vmem:[%s320 + $0x1ec4] sm:$0xf]
      %v2321 = vld [vmem:[%s320 + $0x1ec8] sm:$0xf]
      %v2322 = vld [vmem:[%s320 + $0x1ecc] sm:$0xf]
      %v2323 = vld [vmem:[%s320 + $0x1ed0] sm:$0xf]
      %v2324 = vld [vmem:[%s320 + $0x1ed4] sm:$0xf]
      %v2325 = vld [vmem:[%s320 + $0x1ed8] sm:$0xf]
      %v2326 = vld [vmem:[%s320 + $0x1edc] sm:$0xf]
      %v2327 = vld [vmem:[%s320 + $0x1ee0] sm:$0xf]
      %v2328 = vld [vmem:[%s320 + $0x1ee4] sm:$0xf]
      %v2329 = vld [vmem:[%s320 + $0x1ee8] sm:$0xf]
      %v2330 = vld [vmem:[%s320 + $0x1eec] sm:$0xf]
      %v2331 = vld [vmem:[%s320 + $0x1ef0] sm:$0xf]
      %v2332 = vld [vmem:[%s320 + $0x1ef4] sm:$0xf]
      %v2333 = vld [vmem:[%s320 + $0x1ef8] sm:$0xf]
      %v2334 = vld [vmem:[%s320 + $0x1efc] sm:$0xf]
      %v2335 = vld [vmem:[%s320 + $0x1f00] sm:$0xf]
      %v2336 = vld [vmem:[%s320 + $0x1f04] sm:$0xf]
      %v2337 = vld [vmem:[%s320 + $0x1f08] sm:$0xf]
      %v2338 = vld [vmem:[%s320 + $0x1f0c] sm:$0xf]
      %v2339 = vld [vmem:[%s320 + $0x1f10] sm:$0xf]
      %v2340 = vld [vmem:[%s320 + $0x1f14] sm:$0xf]
      %v2341 = vld [vmem:[%s320 + $0x1f18] sm:$0xf]
      %v2342 = vld [vmem:[%s320 + $0x1f1c] sm:$0xf]
      %v2343 = vld [vmem:[%s320 + $0x1f20] sm:$0xf]
      %v2344 = vld [vmem:[%s320 + $0x1f24] sm:$0xf]
      %v2345 = vld [vmem:[%s320 + $0x1f28] sm:$0xf]
      %v2346 = vld [vmem:[%s320 + $0x1f2c] sm:$0xf]
      %v2347 = vld [vmem:[%s320 + $0x1f30] sm:$0xf]
      %v2348 = vld [vmem:[%s320 + $0x1f34] sm:$0xf]
      %v2349 = vld [vmem:[%s320 + $0x1f38] sm:$0xf]
      %v2350 = vld [vmem:[%s320 + $0x1f3c] sm:$0xf]
      %v2351 = vld [vmem:[%s320 + $0x1f40] sm:$0xf]
      %v2352 = vld [vmem:[%s320 + $0x1f44] sm:$0xf]
      %v2353 = vld [vmem:[%s320 + $0x1f48] sm:$0xf]
      %v2354 = vld [vmem:[%s320 + $0x1f4c] sm:$0xf]
      %v2355 = vld [vmem:[%s320 + $0x1f50] sm:$0xf]
      %v2356 = vld [vmem:[%s320 + $0x1f54] sm:$0xf]
      %v2357 = vld [vmem:[%s320 + $0x1f58] sm:$0xf]
      %v2358 = vld [vmem:[%s320 + $0x1f5c] sm:$0xf]
      %v2359 = vld [vmem:[%s320 + $0x1f60] sm:$0xf]
      %v2360 = vld [vmem:[%s320 + $0x1f64] sm:$0xf]
      %v2361 = vld [vmem:[%s320 + $0x1f68] sm:$0xf]
      %v2362 = vld [vmem:[%s320 + $0x1f6c] sm:$0xf]
      %v2363 = vld [vmem:[%s320 + $0x1f70] sm:$0xf]
      %v2364 = vld [vmem:[%s320 + $0x1f74] sm:$0xf]
      %v2365 = vld [vmem:[%s320 + $0x1f78] sm:$0xf]
      %v2366 = vld [vmem:[%s320 + $0x1f7c] sm:$0xf]
      %v2367 = vld [vmem:[%s320 + $0x1f80] sm:$0xf]
      %v2368 = vld [vmem:[%s320 + $0x1f84] sm:$0xf]
      %v2369 = vld [vmem:[%s320 + $0x1f88] sm:$0xf]
      %v2370 = vld [vmem:[%s320 + $0x1f8c] sm:$0xf]
      %v2371 = vld [vmem:[%s320 + $0x1f90] sm:$0xf]
      %v2372 = vld [vmem:[%s320 + $0x1f94] sm:$0xf]
      %v2373 = vld [vmem:[%s320 + $0x1f98] sm:$0xf]
      %v2374 = vld [vmem:[%s320 + $0x1f9c] sm:$0xf]
      %v2375 = vld [vmem:[%s320 + $0x1fa0] sm:$0xf]
      %v2376 = vld [vmem:[%s320 + $0x1fa4] sm:$0xf]
      %v2377 = vld [vmem:[%s320 + $0x1fa8] sm:$0xf]
      %v2378 = vld [vmem:[%s320 + $0x1fac] sm:$0xf]
      %v2379 = vld [vmem:[%s320 + $0x1fb0] sm:$0xf]
      %v2380 = vld [vmem:[%s320 + $0x1fb4] sm:$0xf]
      %v2381 = vld [vmem:[%s320 + $0x1fb8] sm:$0xf]
      %v2382 = vld [vmem:[%s320 + $0x1fbc] sm:$0xf]
      %v2383 = vld [vmem:[%s320 + $0x1fc0] sm:$0xf]
      %v2384 = vld [vmem:[%s320 + $0x1fc4] sm:$0xf]
      %v2385 = vld [vmem:[%s320 + $0x1fc8] sm:$0xf]
      %v2386 = vld [vmem:[%s320 + $0x1fcc] sm:$0xf]
      %v2387 = vld [vmem:[%s320 + $0x1fd0] sm:$0xf]
      %v2388 = vld [vmem:[%s320 + $0x1fd4] sm:$0xf]
      %v2389 = vld [vmem:[%s320 + $0x1fd8] sm:$0xf]
      %v2390 = vld [vmem:[%s320 + $0x1fdc] sm:$0xf]
      %v2391 = vld [vmem:[%s320 + $0x1fe0] sm:$0xf]
      %v2392 = vld [vmem:[%s320 + $0x1fe4] sm:$0xf]
      %v2393 = vld [vmem:[%s320 + $0x1fe8] sm:$0xf]
      %v2394 = vld [vmem:[%s320 + $0x1fec] sm:$0xf]
      %v2395 = vld [vmem:[%s320 + $0x1ff0] sm:$0xf]
      %v2396 = vld [vmem:[%s320 + $0x1ff4] sm:$0xf]
      %v2397 = vld [vmem:[%s320 + $0x1ff8] sm:$0xf]
      %v2398 = vld [vmem:[%s320 + $0x1ffc] sm:$0xf]
      %v2399 = vld [vmem:[%s320 + $0x2000] sm:$0xf]
      %v2400 = vld [vmem:[%s320 + $0x2004] sm:$0xf]
      %v2401 = vld [vmem:[%s320 + $0x2008] sm:$0xf]
      %v2402 = vld [vmem:[%s320 + $0x200c] sm:$0xf]
      %v2403 = vld [vmem:[%s320 + $0x2010] sm:$0xf]
      %v2404 = vld [vmem:[%s320 + $0x2014] sm:$0xf]
      %v2405 = vld [vmem:[%s320 + $0x2018] sm:$0xf]
      %v2406 = vld [vmem:[%s320 + $0x201c] sm:$0xf]
      %v2407 = vld [vmem:[%s320 + $0x2020] sm:$0xf]
      %v2408 = vld [vmem:[%s320 + $0x2024] sm:$0xf]
      %v2409 = vld [vmem:[%s320 + $0x2028] sm:$0xf]
      %v2410 = vld [vmem:[%s320 + $0x202c] sm:$0xf]
      %v2411 = vld [vmem:[%s320 + $0x2030] sm:$0xf]
      %v2412 = vld [vmem:[%s320 + $0x2034] sm:$0xf]
      %v2413 = vld [vmem:[%s320 + $0x2038] sm:$0xf]
      %v2414 = vld [vmem:[%s320 + $0x203c] sm:$0xf]
      %v2415 = vld [vmem:[%s320 + $0x2040] sm:$0xf]
      %v2416 = vld [vmem:[%s320 + $0x2044] sm:$0xf]
      %v2417 = vld [vmem:[%s320 + $0x2048] sm:$0xf]
      %v2418 = vld [vmem:[%s320 + $0x204c] sm:$0xf]
      %v2419 = vld [vmem:[%s320 + $0x2050] sm:$0xf]
      %v2420 = vld [vmem:[%s320 + $0x2054] sm:$0xf]
      %v2421 = vld [vmem:[%s320 + $0x2058] sm:$0xf]
      %v2422 = vld [vmem:[%s320 + $0x205c] sm:$0xf]
      %v2423 = vld [vmem:[%s320 + $0x2060] sm:$0xf]
      %v2424 = vld [vmem:[%s320 + $0x2064] sm:$0xf]
      %v2425 = vld [vmem:[%s320 + $0x2068] sm:$0xf]
      %v2426 = vld [vmem:[%s320 + $0x206c] sm:$0xf]
      %v2427 = vld [vmem:[%s320 + $0x2070] sm:$0xf]
      %v2428 = vld [vmem:[%s320 + $0x2074] sm:$0xf]
      %v2429 = vld [vmem:[%s320 + $0x2078] sm:$0xf]
      %v2430 = vld [vmem:[%s320 + $0x207c] sm:$0xf]
      %v2431 = vld [vmem:[%s320 + $0x2080] sm:$0xf]
      %v2432 = vld [vmem:[%s320 + $0x2084] sm:$0xf]
      %v2433 = vld [vmem:[%s320 + $0x2088] sm:$0xf]
      %v2434 = vld [vmem:[%s320 + $0x208c] sm:$0xf]
      %v2435 = vld [vmem:[%s320 + $0x2090] sm:$0xf]
      %v2436 = vld [vmem:[%s320 + $0x2094] sm:$0xf]
      %v2437 = vld [vmem:[%s320 + $0x2098] sm:$0xf]
      %v2438 = vld [vmem:[%s320 + $0x209c] sm:$0xf]
      %v2439 = vld [vmem:[%s320 + $0x20a0] sm:$0xf]
      %v2440 = vld [vmem:[%s320 + $0x20a4] sm:$0xf]
      %v2441 = vld [vmem:[%s320 + $0x20a8] sm:$0xf]
      %v2442 = vld [vmem:[%s320 + $0x20ac] sm:$0xf]
      %v2443 = vld [vmem:[%s320 + $0x20b0] sm:$0xf]
      %v2444 = vld [vmem:[%s320 + $0x20b4] sm:$0xf]
      %v2445 = vld [vmem:[%s320 + $0x20b8] sm:$0xf]
      %v2446 = vld [vmem:[%s320 + $0x20bc] sm:$0xf]
      %v2447 = vld [vmem:[%s320 + $0x20c0] sm:$0xf]
      %v2448 = vld [vmem:[%s320 + $0x20c4] sm:$0xf]
      %v2449 = vld [vmem:[%s320 + $0x20c8] sm:$0xf]
      %v2450 = vld [vmem:[%s320 + $0x20cc] sm:$0xf]
      %v2451 = vld [vmem:[%s320 + $0x20d0] sm:$0xf]
      %v2452 = vld [vmem:[%s320 + $0x20d4] sm:$0xf]
      %v2453 = vld [vmem:[%s320 + $0x20d8] sm:$0xf]
      %v2454 = vld [vmem:[%s320 + $0x20dc] sm:$0xf]
      %v2455 = vld [vmem:[%s320 + $0x20e0] sm:$0xf]
      %v2456 = vld [vmem:[%s320 + $0x20e4] sm:$0xf]
      %v2457 = vld [vmem:[%s320 + $0x20e8] sm:$0xf]
      %v2458 = vld [vmem:[%s320 + $0x20ec] sm:$0xf]
      %v2459 = vld [vmem:[%s320 + $0x20f0] sm:$0xf]
      %v2460 = vld [vmem:[%s320 + $0x20f4] sm:$0xf]
      %v2461 = vld [vmem:[%s320 + $0x20f8] sm:$0xf]
      %v2462 = vld [vmem:[%s320 + $0x20fc] sm:$0xf]
      %v2480 = vcombine.high %v334, %v334
      %v2482 = vunpack.c.l.s4 1966171168
      %v2483 = vunpack.c.0.s8 %v2482
      %v2484 = vlaneseq
      %v2485 = vshrl.u32 %v2484, 7
      %v2486 = vsub.s32 %v2483, %v2485
      %v2487 = vrot.slane %v334, %v2486
      %v2489 = vunpack.c.l.s4 1966171168
      %v2490 = vunpack.c.0.s8 %v2489
      %v2491 = vlaneseq
      %v2492 = vshrl.u32 %v2491, 7
      %v2493 = vsub.s32 %v2490, %v2492
      %v2494 = vrot.slane %v2480, %v2493
      %v2495 = vcombine.high %v2487, %v2487
      %v2496 = vcombine.high %v2494, %v2494
      %v2498 = vunpack.c.l.s4 1966171168
      %v2499 = vunpack.c.0.s8 %v2498
      %v2500 = vlaneseq
      %v2501 = vshrl.u32 %v2500, 7
      %v2502 = vsub.s32 %v2499, %v2501
      %v2503 = vrot.slane %v2487, %v2502
      %v2505 = vunpack.c.l.s4 1966171168
      %v2506 = vunpack.c.0.s8 %v2505
      %v2507 = vlaneseq
      %v2508 = vshrl.u32 %v2507, 7
      %v2509 = vsub.s32 %v2506, %v2508
      %v2510 = vrot.slane %v2494, %v2509
      %v2512 = vunpack.c.l.s4 1966171168
      %v2513 = vunpack.c.0.s8 %v2512
      %v2514 = vlaneseq
      %v2515 = vshrl.u32 %v2514, 7
      %v2516 = vsub.s32 %v2513, %v2515
      %v2517 = vrot.slane %v2495, %v2516
      %v2519 = vunpack.c.l.s4 1966171168
      %v2520 = vunpack.c.0.s8 %v2519
      %v2521 = vlaneseq
      %v2522 = vshrl.u32 %v2521, 7
      %v2523 = vsub.s32 %v2520, %v2522
      %v2524 = vrot.slane %v2496, %v2523
      %v2525 = vcombine.high %v2503, %v2503
      %v2526 = vcombine.high %v2510, %v2510
      %v2527 = vcombine.high %v2517, %v2517
      %v2528 = vcombine.high %v2524, %v2524
      %v2529 = vcombine.high %v335, %v335
      %v2531 = vunpack.c.l.s4 1966171168
      %v2532 = vunpack.c.0.s8 %v2531
      %v2533 = vlaneseq
      %v2534 = vshrl.u32 %v2533, 7
      %v2535 = vsub.s32 %v2532, %v2534
      %v2536 = vrot.slane %v335, %v2535
      %v2538 = vunpack.c.l.s4 1966171168
      %v2539 = vunpack.c.0.s8 %v2538
      %v2540 = vlaneseq
      %v2541 = vshrl.u32 %v2540, 7
      %v2542 = vsub.s32 %v2539, %v2541
      %v2543 = vrot.slane %v2529, %v2542
      %v2544 = vcombine.high %v2536, %v2536
      %v2545 = vcombine.high %v2543, %v2543
      %v2547 = vunpack.c.l.s4 1966171168
      %v2548 = vunpack.c.0.s8 %v2547
      %v2549 = vlaneseq
      %v2550 = vshrl.u32 %v2549, 7
      %v2551 = vsub.s32 %v2548, %v2550
      %v2552 = vrot.slane %v2536, %v2551
      %v2554 = vunpack.c.l.s4 1966171168
      %v2555 = vunpack.c.0.s8 %v2554
      %v2556 = vlaneseq
      %v2557 = vshrl.u32 %v2556, 7
      %v2558 = vsub.s32 %v2555, %v2557
      %v2559 = vrot.slane %v2543, %v2558
      %v2561 = vunpack.c.l.s4 1966171168
      %v2562 = vunpack.c.0.s8 %v2561
      %v2563 = vlaneseq
      %v2564 = vshrl.u32 %v2563, 7
      %v2565 = vsub.s32 %v2562, %v2564
      %v2566 = vrot.slane %v2544, %v2565
      %v2568 = vunpack.c.l.s4 1966171168
      %v2569 = vunpack.c.0.s8 %v2568
      %v2570 = vlaneseq
      %v2571 = vshrl.u32 %v2570, 7
      %v2572 = vsub.s32 %v2569, %v2571
      %v2573 = vrot.slane %v2545, %v2572
      %v2574 = vcombine.high %v2552, %v2552
      %v2575 = vcombine.high %v2559, %v2559
      %v2576 = vcombine.high %v2566, %v2566
      %v2577 = vcombine.high %v2573, %v2573
      %v2578 = vcombine.high %v336, %v336
      %v2580 = vunpack.c.l.s4 1966171168
      %v2581 = vunpack.c.0.s8 %v2580
      %v2582 = vlaneseq
      %v2583 = vshrl.u32 %v2582, 7
      %v2584 = vsub.s32 %v2581, %v2583
      %v2585 = vrot.slane %v336, %v2584
      %v2587 = vunpack.c.l.s4 1966171168
      %v2588 = vunpack.c.0.s8 %v2587
      %v2589 = vlaneseq
      %v2590 = vshrl.u32 %v2589, 7
      %v2591 = vsub.s32 %v2588, %v2590
      %v2592 = vrot.slane %v2578, %v2591
      %v2593 = vcombine.high %v2585, %v2585
      %v2594 = vcombine.high %v2592, %v2592
      %v2596 = vunpack.c.l.s4 1966171168
      %v2597 = vunpack.c.0.s8 %v2596
      %v2598 = vlaneseq
      %v2599 = vshrl.u32 %v2598, 7
      %v2600 = vsub.s32 %v2597, %v2599
      %v2601 = vrot.slane %v2585, %v2600
      %v2603 = vunpack.c.l.s4 1966171168
      %v2604 = vunpack.c.0.s8 %v2603
      %v2605 = vlaneseq
      %v2606 = vshrl.u32 %v2605, 7
      %v2607 = vsub.s32 %v2604, %v2606
      %v2608 = vrot.slane %v2592, %v2607
      %v2610 = vunpack.c.l.s4 1966171168
      %v2611 = vunpack.c.0.s8 %v2610
      %v2612 = vlaneseq
      %v2613 = vshrl.u32 %v2612, 7
      %v2614 = vsub.s32 %v2611, %v2613
      %v2615 = vrot.slane %v2593, %v2614
      %v2617 = vunpack.c.l.s4 1966171168
      %v2618 = vunpack.c.0.s8 %v2617
      %v2619 = vlaneseq
      %v2620 = vshrl.u32 %v2619, 7
      %v2621 = vsub.s32 %v2618, %v2620
      %v2622 = vrot.slane %v2594, %v2621
      %v2623 = vcombine.high %v2601, %v2601
      %v2624 = vcombine.high %v2608, %v2608
      %v2625 = vcombine.high %v2615, %v2615
      %v2626 = vcombine.high %v2622, %v2622
      %v2627 = vcombine.high %v337, %v337
      %v2629 = vunpack.c.l.s4 1966171168
      %v2630 = vunpack.c.0.s8 %v2629
      %v2631 = vlaneseq
      %v2632 = vshrl.u32 %v2631, 7
      %v2633 = vsub.s32 %v2630, %v2632
      %v2634 = vrot.slane %v337, %v2633
      %v2636 = vunpack.c.l.s4 1966171168
      %v2637 = vunpack.c.0.s8 %v2636
      %v2638 = vlaneseq
      %v2639 = vshrl.u32 %v2638, 7
      %v2640 = vsub.s32 %v2637, %v2639
      %v2641 = vrot.slane %v2627, %v2640
      %v2642 = vcombine.high %v2634, %v2634
      %v2643 = vcombine.high %v2641, %v2641
      %v2645 = vunpack.c.l.s4 1966171168
      %v2646 = vunpack.c.0.s8 %v2645
      %v2647 = vlaneseq
      %v2648 = vshrl.u32 %v2647, 7
      %v2649 = vsub.s32 %v2646, %v2648
      %v2650 = vrot.slane %v2634, %v2649
      %v2652 = vunpack.c.l.s4 1966171168
      %v2653 = vunpack.c.0.s8 %v2652
      %v2654 = vlaneseq
      %v2655 = vshrl.u32 %v2654, 7
      %v2656 = vsub.s32 %v2653, %v2655
      %v2657 = vrot.slane %v2641, %v2656
      %v2659 = vunpack.c.l.s4 1966171168
      %v2660 = vunpack.c.0.s8 %v2659
      %v2661 = vlaneseq
      %v2662 = vshrl.u32 %v2661, 7
      %v2663 = vsub.s32 %v2660, %v2662
      %v2664 = vrot.slane %v2642, %v2663
      %v2666 = vunpack.c.l.s4 1966171168
      %v2667 = vunpack.c.0.s8 %v2666
      %v2668 = vlaneseq
      %v2669 = vshrl.u32 %v2668, 7
      %v2670 = vsub.s32 %v2667, %v2669
      %v2671 = vrot.slane %v2643, %v2670
      %v2672 = vcombine.high %v2650, %v2650
      %v2673 = vcombine.high %v2657, %v2657
      %v2674 = vcombine.high %v2664, %v2664
      %v2675 = vcombine.high %v2671, %v2671
      %v2676 = vcombine.high %v338, %v338
      %v2678 = vunpack.c.l.s4 1966171168
      %v2679 = vunpack.c.0.s8 %v2678
      %v2680 = vlaneseq
      %v2681 = vshrl.u32 %v2680, 7
      %v2682 = vsub.s32 %v2679, %v2681
      %v2683 = vrot.slane %v338, %v2682
      %v2685 = vunpack.c.l.s4 1966171168
      %v2686 = vunpack.c.0.s8 %v2685
      %v2687 = vlaneseq
      %v2688 = vshrl.u32 %v2687, 7
      %v2689 = vsub.s32 %v2686, %v2688
      %v2690 = vrot.slane %v2676, %v2689
      %v2691 = vcombine.high %v2683, %v2683
      %v2692 = vcombine.high %v2690, %v2690
      %v2694 = vunpack.c.l.s4 1966171168
      %v2695 = vunpack.c.0.s8 %v2694
      %v2696 = vlaneseq
      %v2697 = vshrl.u32 %v2696, 7
      %v2698 = vsub.s32 %v2695, %v2697
      %v2699 = vrot.slane %v2683, %v2698
      %v2701 = vunpack.c.l.s4 1966171168
      %v2702 = vunpack.c.0.s8 %v2701
      %v2703 = vlaneseq
      %v2704 = vshrl.u32 %v2703, 7
      %v2705 = vsub.s32 %v2702, %v2704
      %v2706 = vrot.slane %v2690, %v2705
      %v2708 = vunpack.c.l.s4 1966171168
      %v2709 = vunpack.c.0.s8 %v2708
      %v2710 = vlaneseq
      %v2711 = vshrl.u32 %v2710, 7
      %v2712 = vsub.s32 %v2709, %v2711
      %v2713 = vrot.slane %v2691, %v2712
      %v2715 = vunpack.c.l.s4 1966171168
      %v2716 = vunpack.c.0.s8 %v2715
      %v2717 = vlaneseq
      %v2718 = vshrl.u32 %v2717, 7
      %v2719 = vsub.s32 %v2716, %v2718
      %v2720 = vrot.slane %v2692, %v2719
      %v2721 = vcombine.high %v2699, %v2699
      %v2722 = vcombine.high %v2706, %v2706
      %v2723 = vcombine.high %v2713, %v2713
      %v2724 = vcombine.high %v2720, %v2720
      %v2725 = vcombine.high %v339, %v339
      %v2727 = vunpack.c.l.s4 1966171168
      %v2728 = vunpack.c.0.s8 %v2727
      %v2729 = vlaneseq
      %v2730 = vshrl.u32 %v2729, 7
      %v2731 = vsub.s32 %v2728, %v2730
      %v2732 = vrot.slane %v339, %v2731
      %v2734 = vunpack.c.l.s4 1966171168
      %v2735 = vunpack.c.0.s8 %v2734
      %v2736 = vlaneseq
      %v2737 = vshrl.u32 %v2736, 7
      %v2738 = vsub.s32 %v2735, %v2737
      %v2739 = vrot.slane %v2725, %v2738
      %v2740 = vcombine.high %v2732, %v2732
      %v2741 = vcombine.high %v2739, %v2739
      %v2743 = vunpack.c.l.s4 1966171168
      %v2744 = vunpack.c.0.s8 %v2743
      %v2745 = vlaneseq
      %v2746 = vshrl.u32 %v2745, 7
      %v2747 = vsub.s32 %v2744, %v2746
      %v2748 = vrot.slane %v2732, %v2747
      %v2750 = vunpack.c.l.s4 1966171168
      %v2751 = vunpack.c.0.s8 %v2750
      %v2752 = vlaneseq
      %v2753 = vshrl.u32 %v2752, 7
      %v2754 = vsub.s32 %v2751, %v2753
      %v2755 = vrot.slane %v2739, %v2754
      %v2757 = vunpack.c.l.s4 1966171168
      %v2758 = vunpack.c.0.s8 %v2757
      %v2759 = vlaneseq
      %v2760 = vshrl.u32 %v2759, 7
      %v2761 = vsub.s32 %v2758, %v2760
      %v2762 = vrot.slane %v2740, %v2761
      %v2764 = vunpack.c.l.s4 1966171168
      %v2765 = vunpack.c.0.s8 %v2764
      %v2766 = vlaneseq
      %v2767 = vshrl.u32 %v2766, 7
      %v2768 = vsub.s32 %v2765, %v2767
      %v2769 = vrot.slane %v2741, %v2768
      %v2770 = vcombine.high %v2748, %v2748
      %v2771 = vcombine.high %v2755, %v2755
      %v2772 = vcombine.high %v2762, %v2762
      %v2773 = vcombine.high %v2769, %v2769
      %v2774 = vcombine.high %v340, %v340
      %v2776 = vunpack.c.l.s4 1966171168
      %v2777 = vunpack.c.0.s8 %v2776
      %v2778 = vlaneseq
      %v2779 = vshrl.u32 %v2778, 7
      %v2780 = vsub.s32 %v2777, %v2779
      %v2781 = vrot.slane %v340, %v2780
      %v2783 = vunpack.c.l.s4 1966171168
      %v2784 = vunpack.c.0.s8 %v2783
      %v2785 = vlaneseq
      %v2786 = vshrl.u32 %v2785, 7
      %v2787 = vsub.s32 %v2784, %v2786
      %v2788 = vrot.slane %v2774, %v2787
      %v2789 = vcombine.high %v2781, %v2781
      %v2790 = vcombine.high %v2788, %v2788
      %v2792 = vunpack.c.l.s4 1966171168
      %v2793 = vunpack.c.0.s8 %v2792
      %v2794 = vlaneseq
      %v2795 = vshrl.u32 %v2794, 7
      %v2796 = vsub.s32 %v2793, %v2795
      %v2797 = vrot.slane %v2781, %v2796
      %v2799 = vunpack.c.l.s4 1966171168
      %v2800 = vunpack.c.0.s8 %v2799
      %v2801 = vlaneseq
      %v2802 = vshrl.u32 %v2801, 7
      %v2803 = vsub.s32 %v2800, %v2802
      %v2804 = vrot.slane %v2788, %v2803
      %v2806 = vunpack.c.l.s4 1966171168
      %v2807 = vunpack.c.0.s8 %v2806
      %v2808 = vlaneseq
      %v2809 = vshrl.u32 %v2808, 7
      %v2810 = vsub.s32 %v2807, %v2809
      %v2811 = vrot.slane %v2789, %v2810
      %v2813 = vunpack.c.l.s4 1966171168
      %v2814 = vunpack.c.0.s8 %v2813
      %v2815 = vlaneseq
      %v2816 = vshrl.u32 %v2815, 7
      %v2817 = vsub.s32 %v2814, %v2816
      %v2818 = vrot.slane %v2790, %v2817
      %v2819 = vcombine.high %v2797, %v2797
      %v2820 = vcombine.high %v2804, %v2804
      %v2821 = vcombine.high %v2811, %v2811
      %v2822 = vcombine.high %v2818, %v2818
      %v2823 = vcombine.high %v341, %v341
      %v2825 = vunpack.c.l.s4 1966171168
      %v2826 = vunpack.c.0.s8 %v2825
      %v2827 = vlaneseq
      %v2828 = vshrl.u32 %v2827, 7
      %v2829 = vsub.s32 %v2826, %v2828
      %v2830 = vrot.slane %v341, %v2829
      %v2832 = vunpack.c.l.s4 1966171168
      %v2833 = vunpack.c.0.s8 %v2832
      %v2834 = vlaneseq
      %v2835 = vshrl.u32 %v2834, 7
      %v2836 = vsub.s32 %v2833, %v2835
      %v2837 = vrot.slane %v2823, %v2836
      %v2838 = vcombine.high %v2830, %v2830
      %v2839 = vcombine.high %v2837, %v2837
      %v2841 = vunpack.c.l.s4 1966171168
      %v2842 = vunpack.c.0.s8 %v2841
      %v2843 = vlaneseq
      %v2844 = vshrl.u32 %v2843, 7
      %v2845 = vsub.s32 %v2842, %v2844
      %v2846 = vrot.slane %v2830, %v2845
      %v2848 = vunpack.c.l.s4 1966171168
      %v2849 = vunpack.c.0.s8 %v2848
      %v2850 = vlaneseq
      %v2851 = vshrl.u32 %v2850, 7
      %v2852 = vsub.s32 %v2849, %v2851
      %v2853 = vrot.slane %v2837, %v2852
      %v2855 = vunpack.c.l.s4 1966171168
      %v2856 = vunpack.c.0.s8 %v2855
      %v2857 = vlaneseq
      %v2858 = vshrl.u32 %v2857, 7
      %v2859 = vsub.s32 %v2856, %v2858
      %v2860 = vrot.slane %v2838, %v2859
      %v2862 = vunpack.c.l.s4 1966171168
      %v2863 = vunpack.c.0.s8 %v2862
      %v2864 = vlaneseq
      %v2865 = vshrl.u32 %v2864, 7
      %v2866 = vsub.s32 %v2863, %v2865
      %v2867 = vrot.slane %v2839, %v2866
      %v2868 = vcombine.high %v2846, %v2846
      %v2869 = vcombine.high %v2853, %v2853
      %v2870 = vcombine.high %v2860, %v2860
      %v2871 = vcombine.high %v2867, %v2867
      %v2872 = vcombine.high %v342, %v342
      %v2874 = vunpack.c.l.s4 1966171168
      %v2875 = vunpack.c.0.s8 %v2874
      %v2876 = vlaneseq
      %v2877 = vshrl.u32 %v2876, 7
      %v2878 = vsub.s32 %v2875, %v2877
      %v2879 = vrot.slane %v342, %v2878
      %v2881 = vunpack.c.l.s4 1966171168
      %v2882 = vunpack.c.0.s8 %v2881
      %v2883 = vlaneseq
      %v2884 = vshrl.u32 %v2883, 7
      %v2885 = vsub.s32 %v2882, %v2884
      %v2886 = vrot.slane %v2872, %v2885
      %v2887 = vcombine.high %v2879, %v2879
      %v2888 = vcombine.high %v2886, %v2886
      %v2890 = vunpack.c.l.s4 1966171168
      %v2891 = vunpack.c.0.s8 %v2890
      %v2892 = vlaneseq
      %v2893 = vshrl.u32 %v2892, 7
      %v2894 = vsub.s32 %v2891, %v2893
      %v2895 = vrot.slane %v2879, %v2894
      %v2897 = vunpack.c.l.s4 1966171168
      %v2898 = vunpack.c.0.s8 %v2897
      %v2899 = vlaneseq
      %v2900 = vshrl.u32 %v2899, 7
      %v2901 = vsub.s32 %v2898, %v2900
      %v2902 = vrot.slane %v2886, %v2901
      %v2904 = vunpack.c.l.s4 1966171168
      %v2905 = vunpack.c.0.s8 %v2904
      %v2906 = vlaneseq
      %v2907 = vshrl.u32 %v2906, 7
      %v2908 = vsub.s32 %v2905, %v2907
      %v2909 = vrot.slane %v2887, %v2908
      %v2911 = vunpack.c.l.s4 1966171168
      %v2912 = vunpack.c.0.s8 %v2911
      %v2913 = vlaneseq
      %v2914 = vshrl.u32 %v2913, 7
      %v2915 = vsub.s32 %v2912, %v2914
      %v2916 = vrot.slane %v2888, %v2915
      %v2917 = vcombine.high %v2895, %v2895
      %v2918 = vcombine.high %v2902, %v2902
      %v2919 = vcombine.high %v2909, %v2909
      %v2920 = vcombine.high %v2916, %v2916
      %v2921 = vcombine.high %v343, %v343
      %v2923 = vunpack.c.l.s4 1966171168
      %v2924 = vunpack.c.0.s8 %v2923
      %v2925 = vlaneseq
      %v2926 = vshrl.u32 %v2925, 7
      %v2927 = vsub.s32 %v2924, %v2926
      %v2928 = vrot.slane %v343, %v2927
      %v2930 = vunpack.c.l.s4 1966171168
      %v2931 = vunpack.c.0.s8 %v2930
      %v2932 = vlaneseq
      %v2933 = vshrl.u32 %v2932, 7
      %v2934 = vsub.s32 %v2931, %v2933
      %v2935 = vrot.slane %v2921, %v2934
      %v2936 = vcombine.high %v2928, %v2928
      %v2937 = vcombine.high %v2935, %v2935
      %v2939 = vunpack.c.l.s4 1966171168
      %v2940 = vunpack.c.0.s8 %v2939
      %v2941 = vlaneseq
      %v2942 = vshrl.u32 %v2941, 7
      %v2943 = vsub.s32 %v2940, %v2942
      %v2944 = vrot.slane %v2928, %v2943
      %v2946 = vunpack.c.l.s4 1966171168
      %v2947 = vunpack.c.0.s8 %v2946
      %v2948 = vlaneseq
      %v2949 = vshrl.u32 %v2948, 7
      %v2950 = vsub.s32 %v2947, %v2949
      %v2951 = vrot.slane %v2935, %v2950
      %v2953 = vunpack.c.l.s4 1966171168
      %v2954 = vunpack.c.0.s8 %v2953
      %v2955 = vlaneseq
      %v2956 = vshrl.u32 %v2955, 7
      %v2957 = vsub.s32 %v2954, %v2956
      %v2958 = vrot.slane %v2936, %v2957
      %v2960 = vunpack.c.l.s4 1966171168
      %v2961 = vunpack.c.0.s8 %v2960
      %v2962 = vlaneseq
      %v2963 = vshrl.u32 %v2962, 7
      %v2964 = vsub.s32 %v2961, %v2963
      %v2965 = vrot.slane %v2937, %v2964
      %v2966 = vcombine.high %v2944, %v2944
      %v2967 = vcombine.high %v2951, %v2951
      %v2968 = vcombine.high %v2958, %v2958
      %v2969 = vcombine.high %v2965, %v2965
      %v2970 = vcombine.high %v344, %v344
      %v2972 = vunpack.c.l.s4 1966171168
      %v2973 = vunpack.c.0.s8 %v2972
      %v2974 = vlaneseq
      %v2975 = vshrl.u32 %v2974, 7
      %v2976 = vsub.s32 %v2973, %v2975
      %v2977 = vrot.slane %v344, %v2976
      %v2979 = vunpack.c.l.s4 1966171168
      %v2980 = vunpack.c.0.s8 %v2979
      %v2981 = vlaneseq
      %v2982 = vshrl.u32 %v2981, 7
      %v2983 = vsub.s32 %v2980, %v2982
      %v2984 = vrot.slane %v2970, %v2983
      %v2985 = vcombine.high %v2977, %v2977
      %v2986 = vcombine.high %v2984, %v2984
      %v2988 = vunpack.c.l.s4 1966171168
      %v2989 = vunpack.c.0.s8 %v2988
      %v2990 = vlaneseq
      %v2991 = vshrl.u32 %v2990, 7
      %v2992 = vsub.s32 %v2989, %v2991
      %v2993 = vrot.slane %v2977, %v2992
      %v2995 = vunpack.c.l.s4 1966171168
      %v2996 = vunpack.c.0.s8 %v2995
      %v2997 = vlaneseq
      %v2998 = vshrl.u32 %v2997, 7
      %v2999 = vsub.s32 %v2996, %v2998
      %v3000 = vrot.slane %v2984, %v2999
      %v3002 = vunpack.c.l.s4 1966171168
      %v3003 = vunpack.c.0.s8 %v3002
      %v3004 = vlaneseq
      %v3005 = vshrl.u32 %v3004, 7
      %v3006 = vsub.s32 %v3003, %v3005
      %v3007 = vrot.slane %v2985, %v3006
      %v3009 = vunpack.c.l.s4 1966171168
      %v3010 = vunpack.c.0.s8 %v3009
      %v3011 = vlaneseq
      %v3012 = vshrl.u32 %v3011, 7
      %v3013 = vsub.s32 %v3010, %v3012
      %v3014 = vrot.slane %v2986, %v3013
      %v3015 = vcombine.high %v2993, %v2993
      %v3016 = vcombine.high %v3000, %v3000
      %v3017 = vcombine.high %v3007, %v3007
      %v3018 = vcombine.high %v3014, %v3014
      %v3019 = vcombine.high %v345, %v345
      %v3021 = vunpack.c.l.s4 1966171168
      %v3022 = vunpack.c.0.s8 %v3021
      %v3023 = vlaneseq
      %v3024 = vshrl.u32 %v3023, 7
      %v3025 = vsub.s32 %v3022, %v3024
      %v3026 = vrot.slane %v345, %v3025
      %v3028 = vunpack.c.l.s4 1966171168
      %v3029 = vunpack.c.0.s8 %v3028
      %v3030 = vlaneseq
      %v3031 = vshrl.u32 %v3030, 7
      %v3032 = vsub.s32 %v3029, %v3031
      %v3033 = vrot.slane %v3019, %v3032
      %v3034 = vcombine.high %v3026, %v3026
      %v3035 = vcombine.high %v3033, %v3033
      %v3037 = vunpack.c.l.s4 1966171168
      %v3038 = vunpack.c.0.s8 %v3037
      %v3039 = vlaneseq
      %v3040 = vshrl.u32 %v3039, 7
      %v3041 = vsub.s32 %v3038, %v3040
      %v3042 = vrot.slane %v3026, %v3041
      %v3044 = vunpack.c.l.s4 1966171168
      %v3045 = vunpack.c.0.s8 %v3044
      %v3046 = vlaneseq
      %v3047 = vshrl.u32 %v3046, 7
      %v3048 = vsub.s32 %v3045, %v3047
      %v3049 = vrot.slane %v3033, %v3048
      %v3051 = vunpack.c.l.s4 1966171168
      %v3052 = vunpack.c.0.s8 %v3051
      %v3053 = vlaneseq
      %v3054 = vshrl.u32 %v3053, 7
      %v3055 = vsub.s32 %v3052, %v3054
      %v3056 = vrot.slane %v3034, %v3055
      %v3058 = vunpack.c.l.s4 1966171168
      %v3059 = vunpack.c.0.s8 %v3058
      %v3060 = vlaneseq
      %v3061 = vshrl.u32 %v3060, 7
      %v3062 = vsub.s32 %v3059, %v3061
      %v3063 = vrot.slane %v3035, %v3062
      %v3064 = vcombine.high %v3042, %v3042
      %v3065 = vcombine.high %v3049, %v3049
      %v3066 = vcombine.high %v3056, %v3056
      %v3067 = vcombine.high %v3063, %v3063
      %v3068 = vcombine.high %v346, %v346
      %v3070 = vunpack.c.l.s4 1966171168
      %v3071 = vunpack.c.0.s8 %v3070
      %v3072 = vlaneseq
      %v3073 = vshrl.u32 %v3072, 7
      %v3074 = vsub.s32 %v3071, %v3073
      %v3075 = vrot.slane %v346, %v3074
      %v3077 = vunpack.c.l.s4 1966171168
      %v3078 = vunpack.c.0.s8 %v3077
      %v3079 = vlaneseq
      %v3080 = vshrl.u32 %v3079, 7
      %v3081 = vsub.s32 %v3078, %v3080
      %v3082 = vrot.slane %v3068, %v3081
      %v3083 = vcombine.high %v3075, %v3075
      %v3084 = vcombine.high %v3082, %v3082
      %v3086 = vunpack.c.l.s4 1966171168
      %v3087 = vunpack.c.0.s8 %v3086
      %v3088 = vlaneseq
      %v3089 = vshrl.u32 %v3088, 7
      %v3090 = vsub.s32 %v3087, %v3089
      %v3091 = vrot.slane %v3075, %v3090
      %v3093 = vunpack.c.l.s4 1966171168
      %v3094 = vunpack.c.0.s8 %v3093
      %v3095 = vlaneseq
      %v3096 = vshrl.u32 %v3095, 7
      %v3097 = vsub.s32 %v3094, %v3096
      %v3098 = vrot.slane %v3082, %v3097
      %v3100 = vunpack.c.l.s4 1966171168
      %v3101 = vunpack.c.0.s8 %v3100
      %v3102 = vlaneseq
      %v3103 = vshrl.u32 %v3102, 7
      %v3104 = vsub.s32 %v3101, %v3103
      %v3105 = vrot.slane %v3083, %v3104
      %v3107 = vunpack.c.l.s4 1966171168
      %v3108 = vunpack.c.0.s8 %v3107
      %v3109 = vlaneseq
      %v3110 = vshrl.u32 %v3109, 7
      %v3111 = vsub.s32 %v3108, %v3110
      %v3112 = vrot.slane %v3084, %v3111
      %v3113 = vcombine.high %v3091, %v3091
      %v3114 = vcombine.high %v3098, %v3098
      %v3115 = vcombine.high %v3105, %v3105
      %v3116 = vcombine.high %v3112, %v3112
      %v3117 = vcombine.high %v347, %v347
      %v3119 = vunpack.c.l.s4 1966171168
      %v3120 = vunpack.c.0.s8 %v3119
      %v3121 = vlaneseq
      %v3122 = vshrl.u32 %v3121, 7
      %v3123 = vsub.s32 %v3120, %v3122
      %v3124 = vrot.slane %v347, %v3123
      %v3126 = vunpack.c.l.s4 1966171168
      %v3127 = vunpack.c.0.s8 %v3126
      %v3128 = vlaneseq
      %v3129 = vshrl.u32 %v3128, 7
      %v3130 = vsub.s32 %v3127, %v3129
      %v3131 = vrot.slane %v3117, %v3130
      %v3132 = vcombine.high %v3124, %v3124
      %v3133 = vcombine.high %v3131, %v3131
      %v3135 = vunpack.c.l.s4 1966171168
      %v3136 = vunpack.c.0.s8 %v3135
      %v3137 = vlaneseq
      %v3138 = vshrl.u32 %v3137, 7
      %v3139 = vsub.s32 %v3136, %v3138
      %v3140 = vrot.slane %v3124, %v3139
      %v3142 = vunpack.c.l.s4 1966171168
      %v3143 = vunpack.c.0.s8 %v3142
      %v3144 = vlaneseq
      %v3145 = vshrl.u32 %v3144, 7
      %v3146 = vsub.s32 %v3143, %v3145
      %v3147 = vrot.slane %v3131, %v3146
      %v3149 = vunpack.c.l.s4 1966171168
      %v3150 = vunpack.c.0.s8 %v3149
      %v3151 = vlaneseq
      %v3152 = vshrl.u32 %v3151, 7
      %v3153 = vsub.s32 %v3150, %v3152
      %v3154 = vrot.slane %v3132, %v3153
      %v3156 = vunpack.c.l.s4 1966171168
      %v3157 = vunpack.c.0.s8 %v3156
      %v3158 = vlaneseq
      %v3159 = vshrl.u32 %v3158, 7
      %v3160 = vsub.s32 %v3157, %v3159
      %v3161 = vrot.slane %v3133, %v3160
      %v3162 = vcombine.high %v3140, %v3140
      %v3163 = vcombine.high %v3147, %v3147
      %v3164 = vcombine.high %v3154, %v3154
      %v3165 = vcombine.high %v3161, %v3161
      %v3166 = vcombine.high %v348, %v348
      %v3168 = vunpack.c.l.s4 1966171168
      %v3169 = vunpack.c.0.s8 %v3168
      %v3170 = vlaneseq
      %v3171 = vshrl.u32 %v3170, 7
      %v3172 = vsub.s32 %v3169, %v3171
      %v3173 = vrot.slane %v348, %v3172
      %v3175 = vunpack.c.l.s4 1966171168
      %v3176 = vunpack.c.0.s8 %v3175
      %v3177 = vlaneseq
      %v3178 = vshrl.u32 %v3177, 7
      %v3179 = vsub.s32 %v3176, %v3178
      %v3180 = vrot.slane %v3166, %v3179
      %v3181 = vcombine.high %v3173, %v3173
      %v3182 = vcombine.high %v3180, %v3180
      %v3184 = vunpack.c.l.s4 1966171168
      %v3185 = vunpack.c.0.s8 %v3184
      %v3186 = vlaneseq
      %v3187 = vshrl.u32 %v3186, 7
      %v3188 = vsub.s32 %v3185, %v3187
      %v3189 = vrot.slane %v3173, %v3188
      %v3191 = vunpack.c.l.s4 1966171168
      %v3192 = vunpack.c.0.s8 %v3191
      %v3193 = vlaneseq
      %v3194 = vshrl.u32 %v3193, 7
      %v3195 = vsub.s32 %v3192, %v3194
      %v3196 = vrot.slane %v3180, %v3195
      %v3198 = vunpack.c.l.s4 1966171168
      %v3199 = vunpack.c.0.s8 %v3198
      %v3200 = vlaneseq
      %v3201 = vshrl.u32 %v3200, 7
      %v3202 = vsub.s32 %v3199, %v3201
      %v3203 = vrot.slane %v3181, %v3202
      %v3205 = vunpack.c.l.s4 1966171168
      %v3206 = vunpack.c.0.s8 %v3205
      %v3207 = vlaneseq
      %v3208 = vshrl.u32 %v3207, 7
      %v3209 = vsub.s32 %v3206, %v3208
      %v3210 = vrot.slane %v3182, %v3209
      %v3211 = vcombine.high %v3189, %v3189
      %v3212 = vcombine.high %v3196, %v3196
      %v3213 = vcombine.high %v3203, %v3203
      %v3214 = vcombine.high %v3210, %v3210
      %v3215 = vcombine.high %v349, %v349
      %v3217 = vunpack.c.l.s4 1966171168
      %v3218 = vunpack.c.0.s8 %v3217
      %v3219 = vlaneseq
      %v3220 = vshrl.u32 %v3219, 7
      %v3221 = vsub.s32 %v3218, %v3220
      %v3222 = vrot.slane %v349, %v3221
      %v3224 = vunpack.c.l.s4 1966171168
      %v3225 = vunpack.c.0.s8 %v3224
      %v3226 = vlaneseq
      %v3227 = vshrl.u32 %v3226, 7
      %v3228 = vsub.s32 %v3225, %v3227
      %v3229 = vrot.slane %v3215, %v3228
      %v3230 = vcombine.high %v3222, %v3222
      %v3231 = vcombine.high %v3229, %v3229
      %v3233 = vunpack.c.l.s4 1966171168
      %v3234 = vunpack.c.0.s8 %v3233
      %v3235 = vlaneseq
      %v3236 = vshrl.u32 %v3235, 7
      %v3237 = vsub.s32 %v3234, %v3236
      %v3238 = vrot.slane %v3222, %v3237
      %v3240 = vunpack.c.l.s4 1966171168
      %v3241 = vunpack.c.0.s8 %v3240
      %v3242 = vlaneseq
      %v3243 = vshrl.u32 %v3242, 7
      %v3244 = vsub.s32 %v3241, %v3243
      %v3245 = vrot.slane %v3229, %v3244
      %v3247 = vunpack.c.l.s4 1966171168
      %v3248 = vunpack.c.0.s8 %v3247
      %v3249 = vlaneseq
      %v3250 = vshrl.u32 %v3249, 7
      %v3251 = vsub.s32 %v3248, %v3250
      %v3252 = vrot.slane %v3230, %v3251
      %v3254 = vunpack.c.l.s4 1966171168
      %v3255 = vunpack.c.0.s8 %v3254
      %v3256 = vlaneseq
      %v3257 = vshrl.u32 %v3256, 7
      %v3258 = vsub.s32 %v3255, %v3257
      %v3259 = vrot.slane %v3231, %v3258
      %v3260 = vcombine.high %v3238, %v3238
      %v3261 = vcombine.high %v3245, %v3245
      %v3262 = vcombine.high %v3252, %v3252
      %v3263 = vcombine.high %v3259, %v3259
      %v3265 = vunpack.c.l.s4 1966171168
      %v3266 = vunpack.c.0.s8 %v3265
      %v3267 = vlaneseq
      %v3268 = vshrl.u32 %v3267, 7
      %v3269 = vsub.s32 %v3266, %v3268
      %v3270 = vrot.slane %v350, %v3269
      %v3271 = vcombine.high %v3270, %v3270
      %v3273 = vunpack.c.l.s4 1966171168
      %v3274 = vunpack.c.0.s8 %v3273
      %v3275 = vlaneseq
      %v3276 = vshrl.u32 %v3275, 7
      %v3277 = vsub.s32 %v3274, %v3276
      %v3278 = vrot.slane %v3270, %v3277
      %v3280 = vunpack.c.l.s4 1966171168
      %v3281 = vunpack.c.0.s8 %v3280
      %v3282 = vlaneseq
      %v3283 = vshrl.u32 %v3282, 7
      %v3284 = vsub.s32 %v3281, %v3283
      %v3285 = vrot.slane %v3271, %v3284
      %v3286 = vcombine.high %v3278, %v3278
      %v3287 = vcombine.high %v3285, %v3285
      %v5532 = vunpack.c.l.b16 %v351
      %v5533 = vunpack.c.l.b16 %v352
      %v5534 = vunpack.c.l.b16 %v353
      %v5535 = vunpack.c.l.b16 %v354
      %v5536 = vunpack.c.l.b16 %v355
      %v5537 = vunpack.c.l.b16 %v356
      %v5538 = vunpack.c.l.b16 %v357
      %v5539 = vunpack.c.l.b16 %v358
      %v5540 = vunpack.c.l.b16 %v359
      %v5541 = vunpack.c.l.b16 %v360
      %v5542 = vunpack.c.l.b16 %v361
      %v5543 = vunpack.c.l.b16 %v362
      %v5544 = vunpack.c.l.b16 %v363
      %v5545 = vunpack.c.l.b16 %v364
      %v5546 = vunpack.c.l.b16 %v365
      %v5547 = vunpack.c.l.b16 %v366
      %v5548 = vunpack.c.l.b16 %v367
      %v5549 = vunpack.c.l.b16 %v368
      %v5550 = vunpack.c.l.b16 %v369
      %v5551 = vunpack.c.l.b16 %v370
      %v5552 = vunpack.c.l.b16 %v371
      %v5553 = vunpack.c.l.b16 %v372
      %v5554 = vunpack.c.l.b16 %v373
      %v5555 = vunpack.c.l.b16 %v374
      %v5556 = vunpack.c.l.b16 %v375
      %v5557 = vunpack.c.l.b16 %v376
      %v5558 = vunpack.c.l.b16 %v377
      %v5559 = vunpack.c.l.b16 %v378
      %v5560 = vunpack.c.l.b16 %v379
      %v5561 = vunpack.c.l.b16 %v380
      %v5562 = vunpack.c.l.b16 %v381
      %v5563 = vunpack.c.l.b16 %v382
      %v5564 = vunpack.c.l.b16 %v383
      %v5565 = vunpack.c.l.b16 %v384
      %v5566 = vunpack.c.l.b16 %v385
      %v5567 = vunpack.c.l.b16 %v386
      %v5568 = vunpack.c.l.b16 %v387
      %v5569 = vunpack.c.l.b16 %v388
      %v5570 = vunpack.c.l.b16 %v389
      %v5571 = vunpack.c.l.b16 %v390
      %v5572 = vunpack.c.l.b16 %v391
      %v5573 = vunpack.c.l.b16 %v392
      %v5574 = vunpack.c.l.b16 %v393
      %v5575 = vunpack.c.l.b16 %v394
      %v5576 = vunpack.c.l.b16 %v395
      %v5577 = vunpack.c.l.b16 %v396
      %v5578 = vunpack.c.l.b16 %v397
      %v5579 = vunpack.c.l.b16 %v398
      %v5580 = vunpack.c.l.b16 %v399
      %v5581 = vunpack.c.l.b16 %v400
      %v5582 = vunpack.c.l.b16 %v401
      %v5583 = vunpack.c.l.b16 %v402
      %v5584 = vunpack.c.l.b16 %v403
      %v5585 = vunpack.c.l.b16 %v404
      %v5586 = vunpack.c.l.b16 %v405
      %v5587 = vunpack.c.l.b16 %v406
      %v5588 = vunpack.c.l.b16 %v407
      %v5589 = vunpack.c.l.b16 %v408
      %v5590 = vunpack.c.l.b16 %v409
      %v5591 = vunpack.c.l.b16 %v410
      %v5592 = vunpack.c.l.b16 %v411
      %v5593 = vunpack.c.l.b16 %v412
      %v5594 = vunpack.c.l.b16 %v413
      %v5595 = vunpack.c.l.b16 %v414
      %v5596 = vunpack.c.l.b16 %v415
      %v5597 = vunpack.c.l.b16 %v416
      %v5598 = vunpack.c.l.b16 %v417
      %v5599 = vunpack.c.l.b16 %v418
      %v5600 = vunpack.c.l.b16 %v419
      %v5601 = vunpack.c.l.b16 %v420
      %v5602 = vunpack.c.l.b16 %v421
      %v5603 = vunpack.c.l.b16 %v422
      %v5604 = vunpack.c.l.b16 %v423
      %v5605 = vunpack.c.l.b16 %v424
      %v5606 = vunpack.c.l.b16 %v425
      %v5607 = vunpack.c.l.b16 %v426
      %v5608 = vunpack.c.l.b16 %v427
      %v5609 = vunpack.c.l.b16 %v428
      %v5610 = vunpack.c.l.b16 %v429
      %v5611 = vunpack.c.l.b16 %v430
      %v5612 = vunpack.c.l.b16 %v431
      %v5613 = vunpack.c.l.b16 %v432
      %v5614 = vunpack.c.l.b16 %v433
      %v5615 = vunpack.c.l.b16 %v434
      %v5616 = vunpack.c.l.b16 %v435
      %v5617 = vunpack.c.l.b16 %v436
      %v5618 = vunpack.c.l.b16 %v437
      %v5619 = vunpack.c.l.b16 %v438
      %v5620 = vunpack.c.l.b16 %v439
      %v5621 = vunpack.c.l.b16 %v440
      %v5622 = vunpack.c.l.b16 %v441
      %v5623 = vunpack.c.l.b16 %v442
      %v5624 = vunpack.c.l.b16 %v443
      %v5625 = vunpack.c.l.b16 %v444
      %v5626 = vunpack.c.l.b16 %v445
      %v5627 = vunpack.c.l.b16 %v446
      %v5628 = vunpack.c.l.b16 %v447
      %v5629 = vunpack.c.l.b16 %v448
      %v5630 = vunpack.c.l.b16 %v449
      %v5631 = vunpack.c.l.b16 %v450
      %v5632 = vunpack.c.l.b16 %v451
      %v5633 = vunpack.c.l.b16 %v452
      %v5634 = vunpack.c.l.b16 %v453
      %v5635 = vunpack.c.l.b16 %v454
      %v5636 = vunpack.c.l.b16 %v455
      %v5637 = vunpack.c.l.b16 %v456
      %v5638 = vunpack.c.l.b16 %v457
      %v5639 = vunpack.c.l.b16 %v458
      %v5640 = vunpack.c.l.b16 %v459
      %v5641 = vunpack.c.l.b16 %v460
      %v5642 = vunpack.c.l.b16 %v461
      %v5643 = vunpack.c.l.b16 %v462
      %v5644 = vunpack.c.l.b16 %v463
      %v5645 = vunpack.c.l.b16 %v464
      %v5646 = vunpack.c.l.b16 %v465
      %v5647 = vunpack.c.l.b16 %v466
      %v5648 = vunpack.c.l.b16 %v467
      %v5649 = vunpack.c.l.b16 %v468
      %v5650 = vunpack.c.l.b16 %v469
      %v5651 = vunpack.c.l.b16 %v470
      %v5652 = vunpack.c.l.b16 %v471
      %v5653 = vunpack.c.l.b16 %v472
      %v5654 = vunpack.c.l.b16 %v473
      %v5655 = vunpack.c.l.b16 %v474
      %v5656 = vunpack.c.l.b16 %v475
      %v5657 = vunpack.c.l.b16 %v476
      %v5658 = vunpack.c.l.b16 %v477
      %v5659 = vunpack.c.l.b16 %v478
      %v5660 = vunpack.c.l.b16 %v479
      %v5661 = vunpack.c.l.b16 %v480
      %v5662 = vunpack.c.l.b16 %v481
      %v5663 = vunpack.c.l.b16 %v482
      %v5664 = vunpack.c.l.b16 %v483
      %v5665 = vunpack.c.l.b16 %v484
      %v5666 = vunpack.c.l.b16 %v485
      %v5667 = vunpack.c.l.b16 %v486
      %v5668 = vunpack.c.l.b16 %v487
      %v5669 = vunpack.c.l.b16 %v488
      %v5670 = vunpack.c.l.b16 %v489
      %v5671 = vunpack.c.l.b16 %v490
      %v5672 = vunpack.c.l.b16 %v491
      %v5673 = vunpack.c.l.b16 %v492
      %v5674 = vunpack.c.l.b16 %v493
      %v5675 = vunpack.c.l.b16 %v494
      %v5676 = vunpack.c.l.b16 %v495
      %v5677 = vunpack.c.l.b16 %v496
      %v5678 = vunpack.c.l.b16 %v497
      %v5679 = vunpack.c.l.b16 %v498
      %v5680 = vunpack.c.l.b16 %v499
      %v5681 = vunpack.c.l.b16 %v500
      %v5682 = vunpack.c.l.b16 %v501
      %v5683 = vunpack.c.l.b16 %v502
      %v5684 = vunpack.c.l.b16 %v503
      %v5685 = vunpack.c.l.b16 %v504
      %v5686 = vunpack.c.l.b16 %v505
      %v5687 = vunpack.c.l.b16 %v506
      %v5688 = vunpack.c.l.b16 %v507
      %v5689 = vunpack.c.l.b16 %v508
      %v5690 = vunpack.c.l.b16 %v509
      %v5691 = vunpack.c.l.b16 %v510
      %v5692 = vunpack.c.l.b16 %v511
      %v5693 = vunpack.c.l.b16 %v512
      %v5694 = vunpack.c.l.b16 %v513
      %v5695 = vunpack.c.l.b16 %v514
      %v5696 = vunpack.c.l.b16 %v515
      %v5697 = vunpack.c.l.b16 %v516
      %v5698 = vunpack.c.l.b16 %v517
      %v5699 = vunpack.c.l.b16 %v518
      %v5700 = vunpack.c.l.b16 %v519
      %v5701 = vunpack.c.l.b16 %v520
      %v5702 = vunpack.c.l.b16 %v521
      %v5703 = vunpack.c.l.b16 %v522
      %v5704 = vunpack.c.l.b16 %v523
      %v5705 = vunpack.c.l.b16 %v524
      %v5706 = vunpack.c.l.b16 %v525
      %v5707 = vunpack.c.l.b16 %v526
      %v5708 = vunpack.c.l.b16 %v527
      %v5709 = vunpack.c.l.b16 %v528
      %v5710 = vunpack.c.l.b16 %v529
      %v5711 = vunpack.c.l.b16 %v530
      %v5712 = vunpack.c.l.b16 %v531
      %v5713 = vunpack.c.l.b16 %v532
      %v5714 = vunpack.c.l.b16 %v533
      %v5715 = vunpack.c.l.b16 %v534
      %v5716 = vunpack.c.l.b16 %v535
      %v5717 = vunpack.c.l.b16 %v536
      %v5718 = vunpack.c.l.b16 %v537
      %v5719 = vunpack.c.l.b16 %v538
      %v5720 = vunpack.c.l.b16 %v539
      %v5721 = vunpack.c.l.b16 %v540
      %v5722 = vunpack.c.l.b16 %v541
      %v5723 = vunpack.c.l.b16 %v542
      %v5724 = vunpack.c.l.b16 %v543
      %v5725 = vunpack.c.l.b16 %v544
      %v5726 = vunpack.c.l.b16 %v545
      %v5727 = vunpack.c.l.b16 %v546
      %v5728 = vunpack.c.l.b16 %v547
      %v5729 = vunpack.c.l.b16 %v548
      %v5730 = vunpack.c.l.b16 %v549
      %v5731 = vunpack.c.l.b16 %v550
      %v5732 = vunpack.c.l.b16 %v551
      %v5733 = vunpack.c.l.b16 %v552
      %v5734 = vunpack.c.l.b16 %v553
      %v5735 = vunpack.c.l.b16 %v554
      %v5736 = vunpack.c.l.b16 %v555
      %v5737 = vunpack.c.l.b16 %v556
      %v5738 = vunpack.c.l.b16 %v557
      %v5739 = vunpack.c.l.b16 %v558
      %v5740 = vunpack.c.l.b16 %v559
      %v5741 = vunpack.c.l.b16 %v560
      %v5742 = vunpack.c.l.b16 %v561
      %v5743 = vunpack.c.l.b16 %v562
      %v5744 = vunpack.c.l.b16 %v563
      %v5745 = vunpack.c.l.b16 %v564
      %v5746 = vunpack.c.l.b16 %v565
      %v5747 = vunpack.c.l.b16 %v566
      %v5748 = vunpack.c.l.b16 %v567
      %v5749 = vunpack.c.l.b16 %v568
      %v5750 = vunpack.c.l.b16 %v569
      %v5751 = vunpack.c.l.b16 %v570
      %v5752 = vunpack.c.l.b16 %v571
      %v5753 = vunpack.c.l.b16 %v572
      %v5754 = vunpack.c.l.b16 %v573
      %v5755 = vunpack.c.l.b16 %v574
      %v5756 = vunpack.c.l.b16 %v575
      %v5757 = vunpack.c.l.b16 %v576
      %v5758 = vunpack.c.l.b16 %v577
      %v5759 = vunpack.c.l.b16 %v578
      %v5760 = vunpack.c.l.b16 %v579
      %v5761 = vunpack.c.l.b16 %v580
      %v5762 = vunpack.c.l.b16 %v581
      %v5763 = vunpack.c.l.b16 %v582
      %v5764 = vunpack.c.l.b16 %v583
      %v5765 = vunpack.c.l.b16 %v584
      %v5766 = vunpack.c.l.b16 %v585
      %v5767 = vunpack.c.l.b16 %v586
      %v5768 = vunpack.c.l.b16 %v587
      %v5769 = vunpack.c.l.b16 %v588
      %v5770 = vunpack.c.l.b16 %v589
      %v5771 = vunpack.c.l.b16 %v590
      %v5772 = vunpack.c.l.b16 %v591
      %v5773 = vunpack.c.l.b16 %v592
      %v5774 = vunpack.c.l.b16 %v593
      %v5775 = vunpack.c.l.b16 %v594
      %v5776 = vunpack.c.l.b16 %v595
      %v5777 = vunpack.c.l.b16 %v596
      %v5778 = vunpack.c.l.b16 %v597
      %v5779 = vunpack.c.l.b16 %v598
      %v5780 = vunpack.c.l.b16 %v599
      %v5781 = vunpack.c.l.b16 %v600
      %v5782 = vunpack.c.l.b16 %v601
      %v5783 = vunpack.c.l.b16 %v602
      %v5784 = vunpack.c.l.b16 %v603
      %v5785 = vunpack.c.l.b16 %v604
      %v5786 = vunpack.c.l.b16 %v605
      %v5787 = vunpack.c.l.b16 %v606
      %v5788 = vunpack.c.l.b16 %v607
      %v5789 = vunpack.c.l.b16 %v608
      %v5790 = vunpack.c.l.b16 %v609
      %v5791 = vunpack.c.l.b16 %v610
      %v5792 = vunpack.c.l.b16 %v611
      %v5793 = vunpack.c.l.b16 %v612
      %v5794 = vunpack.c.l.b16 %v613
      %v5795 = vunpack.c.l.b16 %v614
      %v5796 = vunpack.c.l.b16 %v615
      %v5797 = vunpack.c.l.b16 %v616
      %v5798 = vunpack.c.l.b16 %v617
      %v5799 = vunpack.c.l.b16 %v618
      %v5800 = vunpack.c.l.b16 %v619
      %v5801 = vunpack.c.l.b16 %v620
      %v5802 = vunpack.c.l.b16 %v621
      %v5803 = vunpack.c.l.b16 %v622
      %v5804 = vunpack.c.l.b16 %v623
      %v5805 = vunpack.c.l.b16 %v624
      %v5806 = vunpack.c.l.b16 %v625
      %v5807 = vunpack.c.l.b16 %v626
      %v5808 = vunpack.c.l.b16 %v627
      %v5809 = vunpack.c.l.b16 %v628
      %v5810 = vunpack.c.l.b16 %v629
      %v5811 = vunpack.c.l.b16 %v630
      %v5812 = vunpack.c.l.b16 %v631
      %v5813 = vunpack.c.l.b16 %v632
      %v5814 = vunpack.c.l.b16 %v633
      %v5815 = vunpack.c.l.b16 %v634
      %v5816 = vunpack.c.l.b16 %v635
      %v5817 = vunpack.c.l.b16 %v636
      %v5818 = vunpack.c.l.b16 %v637
      %v5819 = vunpack.c.l.b16 %v638
      %v5820 = vunpack.c.l.b16 %v639
      %v5821 = vunpack.c.l.b16 %v640
      %v5822 = vunpack.c.l.b16 %v641
      %v5823 = vunpack.c.l.b16 %v642
      %v5824 = vunpack.c.l.b16 %v643
      %v5825 = vunpack.c.l.b16 %v644
      %v5826 = vunpack.c.l.b16 %v645
      %v5827 = vunpack.c.l.b16 %v646
      %v5828 = vunpack.c.l.b16 %v647
      %v5829 = vunpack.c.l.b16 %v648
      %v5830 = vunpack.c.l.b16 %v649
      %v5831 = vunpack.c.l.b16 %v650
      %v5832 = vunpack.c.l.b16 %v651
      %v5833 = vunpack.c.l.b16 %v652
      %v5834 = vunpack.c.l.b16 %v653
      %v5835 = vunpack.c.l.b16 %v654
      %v5836 = vunpack.c.l.b16 %v655
      %v5837 = vunpack.c.l.b16 %v656
      %v5838 = vunpack.c.l.b16 %v657
      %v5839 = vunpack.c.l.b16 %v658
      %v5840 = vunpack.c.l.b16 %v659
      %v5841 = vunpack.c.l.b16 %v660
      %v5842 = vunpack.c.l.b16 %v661
      %v5843 = vunpack.c.l.b16 %v662
      %v5844 = vunpack.c.l.b16 %v663
      %v5845 = vunpack.c.l.b16 %v664
      %v5846 = vunpack.c.l.b16 %v665
      %v5847 = vunpack.c.l.b16 %v666
      %v5848 = vunpack.c.l.b16 %v667
      %v5849 = vunpack.c.l.b16 %v668
      %v5850 = vunpack.c.l.b16 %v669
      %v5851 = vunpack.c.l.b16 %v670
      %v5852 = vunpack.c.l.b16 %v671
      %v5853 = vunpack.c.l.b16 %v672
      %v5854 = vunpack.c.l.b16 %v673
      %v5855 = vunpack.c.l.b16 %v674
      %v5856 = vunpack.c.l.b16 %v675
      %v5857 = vunpack.c.l.b16 %v676
      %v5858 = vunpack.c.l.b16 %v677
      %v5859 = vunpack.c.l.b16 %v678
      %v5860 = vunpack.c.l.b16 %v679
      %v5861 = vunpack.c.l.b16 %v680
      %v5862 = vunpack.c.l.b16 %v681
      %v5863 = vunpack.c.l.b16 %v682
      %v5864 = vunpack.c.l.b16 %v683
      %v5865 = vunpack.c.l.b16 %v684
      %v5866 = vunpack.c.l.b16 %v685
      %v5867 = vunpack.c.l.b16 %v686
      %v5868 = vunpack.c.l.b16 %v687
      %v5869 = vunpack.c.l.b16 %v688
      %v5870 = vunpack.c.l.b16 %v689
      %v5871 = vunpack.c.l.b16 %v690
      %v5872 = vunpack.c.l.b16 %v691
      %v5873 = vunpack.c.l.b16 %v692
      %v5874 = vunpack.c.l.b16 %v693
      %v5875 = vunpack.c.l.b16 %v694
      %v5876 = vunpack.c.l.b16 %v695
      %v5877 = vunpack.c.l.b16 %v696
      %v5878 = vunpack.c.l.b16 %v697
      %v5879 = vunpack.c.l.b16 %v698
      %v5880 = vunpack.c.l.b16 %v699
      %v5881 = vunpack.c.l.b16 %v700
      %v5882 = vunpack.c.l.b16 %v701
      %v5883 = vunpack.c.l.b16 %v702
      %v5884 = vunpack.c.l.b16 %v703
      %v5885 = vunpack.c.l.b16 %v704
      %v5886 = vunpack.c.l.b16 %v705
      %v5887 = vunpack.c.l.b16 %v706
      %v5888 = vunpack.c.l.b16 %v707
      %v5889 = vunpack.c.l.b16 %v708
      %v5890 = vunpack.c.l.b16 %v709
      %v5891 = vunpack.c.l.b16 %v710
      %v5892 = vunpack.c.l.b16 %v711
      %v5893 = vunpack.c.l.b16 %v712
      %v5894 = vunpack.c.l.b16 %v713
      %v5895 = vunpack.c.l.b16 %v714
      %v5896 = vunpack.c.l.b16 %v715
      %v5897 = vunpack.c.l.b16 %v716
      %v5898 = vunpack.c.l.b16 %v717
      %v5899 = vunpack.c.l.b16 %v718
      %v5900 = vunpack.c.l.b16 %v719
      %v5901 = vunpack.c.l.b16 %v720
      %v5902 = vunpack.c.l.b16 %v721
      %v5903 = vunpack.c.l.b16 %v722
      %v5904 = vunpack.c.l.b16 %v723
      %v5905 = vunpack.c.l.b16 %v724
      %v5906 = vunpack.c.l.b16 %v725
      %v5907 = vunpack.c.l.b16 %v726
      %v5908 = vunpack.c.l.b16 %v727
      %v5909 = vunpack.c.l.b16 %v728
      %v5910 = vunpack.c.l.b16 %v729
      %v5911 = vunpack.c.l.b16 %v730
      %v5912 = vunpack.c.l.b16 %v731
      %v5913 = vunpack.c.l.b16 %v732
      %v5914 = vunpack.c.l.b16 %v733
      %v5915 = vunpack.c.l.b16 %v734
      %v5916 = vunpack.c.l.b16 %v735
      %v5917 = vunpack.c.l.b16 %v736
      %v5918 = vunpack.c.l.b16 %v737
      %v5919 = vunpack.c.l.b16 %v738
      %v5920 = vunpack.c.l.b16 %v739
      %v5921 = vunpack.c.l.b16 %v740
      %v5922 = vunpack.c.l.b16 %v741
      %v5923 = vunpack.c.l.b16 %v742
      %v5924 = vunpack.c.l.b16 %v743
      %v5925 = vunpack.c.l.b16 %v744
      %v5926 = vunpack.c.l.b16 %v745
      %v5927 = vunpack.c.l.b16 %v746
      %v5928 = vunpack.c.l.b16 %v747
      %v5929 = vunpack.c.l.b16 %v748
      %v5930 = vunpack.c.l.b16 %v749
      %v5931 = vunpack.c.l.b16 %v750
      %v5932 = vunpack.c.l.b16 %v751
      %v5933 = vunpack.c.l.b16 %v752
      %v5934 = vunpack.c.l.b16 %v753
      %v5935 = vunpack.c.l.b16 %v754
      %v5936 = vunpack.c.l.b16 %v755
      %v5937 = vunpack.c.l.b16 %v756
      %v5938 = vunpack.c.l.b16 %v757
      %v5939 = vunpack.c.l.b16 %v758
      %v5940 = vunpack.c.l.b16 %v759
      %v5941 = vunpack.c.l.b16 %v760
      %v5942 = vunpack.c.l.b16 %v761
      %v5943 = vunpack.c.l.b16 %v762
      %v5944 = vunpack.c.l.b16 %v763
      %v5945 = vunpack.c.l.b16 %v764
      %v5946 = vunpack.c.l.b16 %v765
      %v5947 = vunpack.c.l.b16 %v766
      %v5948 = vunpack.c.l.b16 %v767
      %v5949 = vunpack.c.l.b16 %v768
      %v5950 = vunpack.c.l.b16 %v769
      %v5951 = vunpack.c.l.b16 %v770
      %v5952 = vunpack.c.l.b16 %v771
      %v5953 = vunpack.c.l.b16 %v772
      %v5954 = vunpack.c.l.b16 %v773
      %v5955 = vunpack.c.l.b16 %v774
      %v5956 = vunpack.c.l.b16 %v775
      %v5957 = vunpack.c.l.b16 %v776
      %v5958 = vunpack.c.l.b16 %v777
      %v5959 = vunpack.c.l.b16 %v778
      %v5960 = vunpack.c.l.b16 %v779
      %v5961 = vunpack.c.l.b16 %v780
      %v5962 = vunpack.c.l.b16 %v781
      %v5963 = vunpack.c.l.b16 %v782
      %v5964 = vunpack.c.l.b16 %v783
      %v5965 = vunpack.c.l.b16 %v784
      %v5966 = vunpack.c.l.b16 %v785
      %v5967 = vunpack.c.l.b16 %v786
      %v5968 = vunpack.c.l.b16 %v787
      %v5969 = vunpack.c.l.b16 %v788
      %v5970 = vunpack.c.l.b16 %v789
      %v5971 = vunpack.c.l.b16 %v790
      %v5972 = vunpack.c.l.b16 %v791
      %v5973 = vunpack.c.l.b16 %v792
      %v5974 = vunpack.c.l.b16 %v793
      %v5975 = vunpack.c.l.b16 %v794
      %v5976 = vunpack.c.l.b16 %v795
      %v5977 = vunpack.c.l.b16 %v796
      %v5978 = vunpack.c.l.b16 %v797
      %v5979 = vunpack.c.l.b16 %v798
      %v5980 = vunpack.c.l.b16 %v799
      %v5981 = vunpack.c.l.b16 %v800
      %v5982 = vunpack.c.l.b16 %v801
      %v5983 = vunpack.c.l.b16 %v802
      %v5984 = vunpack.c.l.b16 %v803
      %v5985 = vunpack.c.l.b16 %v804
      %v5986 = vunpack.c.l.b16 %v805
      %v5987 = vunpack.c.l.b16 %v806
      %v5988 = vunpack.c.l.b16 %v807
      %v5989 = vunpack.c.l.b16 %v808
      %v5990 = vunpack.c.l.b16 %v809
      %v5991 = vunpack.c.l.b16 %v810
      %v5992 = vunpack.c.l.b16 %v811
      %v5993 = vunpack.c.l.b16 %v812
      %v5994 = vunpack.c.l.b16 %v813
      %v5995 = vunpack.c.l.b16 %v814
      %v5996 = vunpack.c.l.b16 %v815
      %v5997 = vunpack.c.l.b16 %v816
      %v5998 = vunpack.c.l.b16 %v817
      %v5999 = vunpack.c.l.b16 %v818
      %v6000 = vunpack.c.l.b16 %v819
      %v6001 = vunpack.c.l.b16 %v820
      %v6002 = vunpack.c.l.b16 %v821
      %v6003 = vunpack.c.l.b16 %v822
      %v6004 = vunpack.c.l.b16 %v823
      %v6005 = vunpack.c.l.b16 %v824
      %v6006 = vunpack.c.l.b16 %v825
      %v6007 = vunpack.c.l.b16 %v826
      %v6008 = vunpack.c.l.b16 %v827
      %v6009 = vunpack.c.l.b16 %v828
      %v6010 = vunpack.c.l.b16 %v829
      %v6011 = vunpack.c.l.b16 %v830
      %v6012 = vunpack.c.l.b16 %v831
      %v6013 = vunpack.c.l.b16 %v832
      %v6014 = vunpack.c.l.b16 %v833
      %v6015 = vunpack.c.l.b16 %v834
      %v6016 = vunpack.c.l.b16 %v835
      %v6017 = vunpack.c.l.b16 %v836
      %v6018 = vunpack.c.l.b16 %v837
      %v6019 = vunpack.c.l.b16 %v838
      %v6020 = vunpack.c.l.b16 %v839
      %v6021 = vunpack.c.l.b16 %v840
      %v6022 = vunpack.c.l.b16 %v841
      %v6023 = vunpack.c.l.b16 %v842
      %v6024 = vunpack.c.l.b16 %v843
      %v6025 = vunpack.c.l.b16 %v844
      %v6026 = vunpack.c.l.b16 %v845
      %v6027 = vunpack.c.l.b16 %v846
      %v6028 = vunpack.c.l.b16 %v847
      %v6029 = vunpack.c.l.b16 %v848
      %v6030 = vunpack.c.l.b16 %v849
      %v6031 = vunpack.c.l.b16 %v850
      %v6032 = vunpack.c.l.b16 %v851
      %v6033 = vunpack.c.l.b16 %v852
      %v6034 = vunpack.c.l.b16 %v853
      %v6035 = vunpack.c.l.b16 %v854
      %v6036 = vunpack.c.l.b16 %v855
      %v6037 = vunpack.c.l.b16 %v856
      %v6038 = vunpack.c.l.b16 %v857
      %v6039 = vunpack.c.l.b16 %v858
      %v6040 = vunpack.c.l.b16 %v859
      %v6041 = vunpack.c.l.b16 %v860
      %v6042 = vunpack.c.l.b16 %v861
      %v6043 = vunpack.c.l.b16 %v862
      %v6044 = vunpack.c.l.b16 %v863
      %v6045 = vunpack.c.l.b16 %v864
      %v6046 = vunpack.c.l.b16 %v865
      %v6047 = vunpack.c.l.b16 %v866
      %v6048 = vunpack.c.l.b16 %v867
      %v6049 = vunpack.c.l.b16 %v868
      %v6050 = vunpack.c.l.b16 %v869
      %v6051 = vunpack.c.l.b16 %v870
      %v6052 = vunpack.c.l.b16 %v871
      %v6053 = vunpack.c.l.b16 %v872
      %v6054 = vunpack.c.l.b16 %v873
      %v6055 = vunpack.c.l.b16 %v874
      %v6056 = vunpack.c.l.b16 %v875
      %v6057 = vunpack.c.l.b16 %v876
      %v6058 = vunpack.c.l.b16 %v877
      %v6059 = vunpack.c.l.b16 %v878
      %v6060 = vunpack.c.l.b16 %v879
      %v6061 = vunpack.c.l.b16 %v880
      %v6062 = vunpack.c.l.b16 %v881
      %v6063 = vunpack.c.l.b16 %v882
      %v6064 = vunpack.c.l.b16 %v883
      %v6065 = vunpack.c.l.b16 %v884
      %v6066 = vunpack.c.l.b16 %v885
      %v6067 = vunpack.c.l.b16 %v886
      %v6068 = vunpack.c.l.b16 %v887
      %v6069 = vunpack.c.l.b16 %v888
      %v6070 = vunpack.c.l.b16 %v889
      %v6071 = vunpack.c.l.b16 %v890
      %v6072 = vunpack.c.l.b16 %v891
      %v6073 = vunpack.c.l.b16 %v892
      %v6074 = vunpack.c.l.b16 %v893
      %v6075 = vunpack.c.l.b16 %v894
      %v6076 = vunpack.c.l.b16 %v895
      %v6077 = vunpack.c.l.b16 %v896
      %v6078 = vunpack.c.l.b16 %v897
      %v6079 = vunpack.c.l.b16 %v898
      %v6080 = vunpack.c.l.b16 %v899
      %v6081 = vunpack.c.l.b16 %v900
      %v6082 = vunpack.c.l.b16 %v901
      %v6083 = vunpack.c.l.b16 %v902
      %v6084 = vunpack.c.l.b16 %v903
      %v6085 = vunpack.c.l.b16 %v904
      %v6086 = vunpack.c.l.b16 %v905
      %v6087 = vunpack.c.l.b16 %v906
      %v6088 = vunpack.c.l.b16 %v907
      %v6089 = vunpack.c.l.b16 %v908
      %v6090 = vunpack.c.l.b16 %v909
      %v6091 = vunpack.c.l.b16 %v910
      %v6092 = vunpack.c.l.b16 %v911
      %v6093 = vunpack.c.l.b16 %v912
      %v6094 = vunpack.c.l.b16 %v913
      %v6095 = vunpack.c.l.b16 %v914
      %v6096 = vunpack.c.l.b16 %v915
      %v6097 = vunpack.c.l.b16 %v916
      %v6098 = vunpack.c.l.b16 %v917
      %v6099 = vunpack.c.l.b16 %v918
      %v6100 = vunpack.c.l.b16 %v919
      %v6101 = vunpack.c.l.b16 %v920
      %v6102 = vunpack.c.l.b16 %v921
      %v6103 = vunpack.c.l.b16 %v922
      %v6104 = vunpack.c.l.b16 %v923
      %v6105 = vunpack.c.l.b16 %v924
      %v6106 = vunpack.c.l.b16 %v925
      %v6107 = vunpack.c.l.b16 %v926
      %v6108 = vunpack.c.l.b16 %v927
      %v6109 = vunpack.c.l.b16 %v928
      %v6110 = vunpack.c.l.b16 %v929
      %v6111 = vunpack.c.l.b16 %v930
      %v6112 = vunpack.c.l.b16 %v931
      %v6113 = vunpack.c.l.b16 %v932
      %v6114 = vunpack.c.l.b16 %v933
      %v6115 = vunpack.c.l.b16 %v934
      %v6116 = vunpack.c.l.b16 %v935
      %v6117 = vunpack.c.l.b16 %v936
      %v6118 = vunpack.c.l.b16 %v937
      %v6119 = vunpack.c.l.b16 %v938
      %v6120 = vunpack.c.l.b16 %v939
      %v6121 = vunpack.c.l.b16 %v940
      %v6122 = vunpack.c.l.b16 %v941
      %v6123 = vunpack.c.l.b16 %v942
      %v6124 = vunpack.c.l.b16 %v943
      %v6125 = vunpack.c.l.b16 %v944
      %v6126 = vunpack.c.l.b16 %v945
      %v6127 = vunpack.c.l.b16 %v946
      %v6128 = vunpack.c.l.b16 %v947
      %v6129 = vunpack.c.l.b16 %v948
      %v6130 = vunpack.c.l.b16 %v949
      %v6131 = vunpack.c.l.b16 %v950
      %v6132 = vunpack.c.l.b16 %v951
      %v6133 = vunpack.c.l.b16 %v952
      %v6134 = vunpack.c.l.b16 %v953
      %v6135 = vunpack.c.l.b16 %v954
      %v6136 = vunpack.c.l.b16 %v955
      %v6137 = vunpack.c.l.b16 %v956
      %v6138 = vunpack.c.l.b16 %v957
      %v6139 = vunpack.c.l.b16 %v958
      %v6140 = vunpack.c.l.b16 %v959
      %v6141 = vunpack.c.l.b16 %v960
      %v6142 = vunpack.c.l.b16 %v961
      %v6143 = vunpack.c.l.b16 %v962
      %v6144 = vunpack.c.l.b16 %v963
      %v6145 = vunpack.c.l.b16 %v964
      %v6146 = vunpack.c.l.b16 %v965
      %v6147 = vunpack.c.l.b16 %v966
      %v6148 = vunpack.c.l.b16 %v967
      %v6149 = vunpack.c.l.b16 %v968
      %v6150 = vunpack.c.l.b16 %v969
      %v6151 = vunpack.c.l.b16 %v970
      %v6152 = vunpack.c.l.b16 %v971
      %v6153 = vunpack.c.l.b16 %v972
      %v6154 = vunpack.c.l.b16 %v973
      %v6155 = vunpack.c.l.b16 %v974
      %v6156 = vunpack.c.l.b16 %v975
      %v6157 = vunpack.c.l.b16 %v976
      %v6158 = vunpack.c.l.b16 %v977
      %v6159 = vunpack.c.l.b16 %v978
      %v6160 = vunpack.c.l.b16 %v979
      %v6161 = vunpack.c.l.b16 %v980
      %v6162 = vunpack.c.l.b16 %v981
      %v6163 = vunpack.c.l.b16 %v982
      %v6164 = vunpack.c.l.b16 %v983
      %v6165 = vunpack.c.l.b16 %v984
      %v6166 = vunpack.c.l.b16 %v985
      %v6167 = vunpack.c.l.b16 %v986
      %v6168 = vunpack.c.l.b16 %v987
      %v6169 = vunpack.c.l.b16 %v988
      %v6170 = vunpack.c.l.b16 %v989
      %v6171 = vunpack.c.l.b16 %v990
      %v6172 = vunpack.c.l.b16 %v991
      %v6173 = vunpack.c.l.b16 %v992
      %v6174 = vunpack.c.l.b16 %v993
      %v6175 = vunpack.c.l.b16 %v994
      %v6176 = vunpack.c.l.b16 %v995
      %v6177 = vunpack.c.l.b16 %v996
      %v6178 = vunpack.c.l.b16 %v997
      %v6179 = vunpack.c.l.b16 %v998
      %v6180 = vunpack.c.l.b16 %v999
      %v6181 = vunpack.c.l.b16 %v1000
      %v6182 = vunpack.c.l.b16 %v1001
      %v6183 = vunpack.c.l.b16 %v1002
      %v6184 = vunpack.c.l.b16 %v1003
      %v6185 = vunpack.c.l.b16 %v1004
      %v6186 = vunpack.c.l.b16 %v1005
      %v6187 = vunpack.c.l.b16 %v1006
      %v6188 = vunpack.c.l.b16 %v1007
      %v6189 = vunpack.c.l.b16 %v1008
      %v6190 = vunpack.c.l.b16 %v1009
      %v6191 = vunpack.c.l.b16 %v1010
      %v6192 = vunpack.c.l.b16 %v1011
      %v6193 = vunpack.c.l.b16 %v1012
      %v6194 = vunpack.c.l.b16 %v1013
      %v6195 = vunpack.c.l.b16 %v1014
      %v6196 = vunpack.c.l.b16 %v1015
      %v6197 = vunpack.c.l.b16 %v1016
      %v6198 = vunpack.c.l.b16 %v1017
      %v6199 = vunpack.c.l.b16 %v1018
      %v6200 = vunpack.c.l.b16 %v1019
      %v6201 = vunpack.c.l.b16 %v1020
      %v6202 = vunpack.c.l.b16 %v1021
      %v6203 = vunpack.c.l.b16 %v1022
      %v6204 = vunpack.c.l.b16 %v1023
      %v6205 = vunpack.c.l.b16 %v1024
      %v6206 = vunpack.c.l.b16 %v1025
      %v6207 = vunpack.c.l.b16 %v1026
      %v6208 = vunpack.c.l.b16 %v1027
      %v6209 = vunpack.c.l.b16 %v1028
      %v6210 = vunpack.c.l.b16 %v1029
      %v6211 = vunpack.c.l.b16 %v1030
      %v6212 = vunpack.c.l.b16 %v1031
      %v6213 = vunpack.c.l.b16 %v1032
      %v6214 = vunpack.c.l.b16 %v1033
      %v6215 = vunpack.c.l.b16 %v1034
      %v6216 = vunpack.c.l.b16 %v1035
      %v6217 = vunpack.c.l.b16 %v1036
      %v6218 = vunpack.c.l.b16 %v1037
      %v6219 = vunpack.c.l.b16 %v1038
      %v6220 = vunpack.c.l.b16 %v1039
      %v6221 = vunpack.c.l.b16 %v1040
      %v6222 = vunpack.c.l.b16 %v1041
      %v6223 = vunpack.c.l.b16 %v1042
      %v6224 = vunpack.c.l.b16 %v1043
      %v6225 = vunpack.c.l.b16 %v1044
      %v6226 = vunpack.c.l.b16 %v1045
      %v6227 = vunpack.c.l.b16 %v1046
      %v6228 = vunpack.c.l.b16 %v1047
      %v6229 = vunpack.c.l.b16 %v1048
      %v6230 = vunpack.c.l.b16 %v1049
      %v6231 = vunpack.c.l.b16 %v1050
      %v6232 = vunpack.c.l.b16 %v1051
      %v6233 = vunpack.c.l.b16 %v1052
      %v6234 = vunpack.c.l.b16 %v1053
      %v6235 = vunpack.c.l.b16 %v1054
      %v6236 = vunpack.c.l.b16 %v1055
      %v6237 = vunpack.c.l.b16 %v1056
      %v6238 = vunpack.c.l.b16 %v1057
      %v6239 = vunpack.c.l.b16 %v1058
      %v6240 = vunpack.c.l.b16 %v1059
      %v6241 = vunpack.c.l.b16 %v1060
      %v6242 = vunpack.c.l.b16 %v1061
      %v6243 = vunpack.c.l.b16 %v1062
      %v6244 = vunpack.c.l.b16 %v1063
      %v6245 = vunpack.c.l.b16 %v1064
      %v6246 = vunpack.c.l.b16 %v1065
      %v6247 = vunpack.c.l.b16 %v1066
      %v6248 = vunpack.c.l.b16 %v1067
      %v6249 = vunpack.c.l.b16 %v1068
      %v6250 = vunpack.c.l.b16 %v1069
      %v6251 = vunpack.c.l.b16 %v1070
      %v6252 = vunpack.c.l.b16 %v1071
      %v6253 = vunpack.c.l.b16 %v1072
      %v6254 = vunpack.c.l.b16 %v1073
      %v6255 = vunpack.c.l.b16 %v1074
      %v6256 = vunpack.c.l.b16 %v1075
      %v6257 = vunpack.c.l.b16 %v1076
      %v6258 = vunpack.c.l.b16 %v1077
      %v6259 = vunpack.c.l.b16 %v1078
      %v6260 = vunpack.c.l.b16 %v1079
      %v6261 = vunpack.c.l.b16 %v1080
      %v6262 = vunpack.c.l.b16 %v1081
      %v6263 = vunpack.c.l.b16 %v1082
      %v6264 = vunpack.c.l.b16 %v1083
      %v6265 = vunpack.c.l.b16 %v1084
      %v6266 = vunpack.c.l.b16 %v1085
      %v6267 = vunpack.c.l.b16 %v1086
      %v6268 = vunpack.c.l.b16 %v1087
      %v6269 = vunpack.c.l.b16 %v1088
      %v6270 = vunpack.c.l.b16 %v1089
      %v6271 = vunpack.c.l.b16 %v1090
      %v6272 = vunpack.c.l.b16 %v1091
      %v6273 = vunpack.c.l.b16 %v1092
      %v6274 = vunpack.c.l.b16 %v1093
      %v6275 = vunpack.c.l.b16 %v1094
      %v6276 = vunpack.c.l.b16 %v1095
      %v6277 = vunpack.c.l.b16 %v1096
      %v6278 = vunpack.c.l.b16 %v1097
      %v6279 = vunpack.c.l.b16 %v1098
      %v6280 = vunpack.c.l.b16 %v1099
      %v6281 = vunpack.c.l.b16 %v1100
      %v6282 = vunpack.c.l.b16 %v1101
      %v6283 = vunpack.c.l.b16 %v1102
      %v6284 = vunpack.c.l.b16 %v1103
      %v6285 = vunpack.c.l.b16 %v1104
      %v6286 = vunpack.c.l.b16 %v1105
      %v6287 = vunpack.c.l.b16 %v1106
      %v6288 = vunpack.c.l.b16 %v1107
      %v6289 = vunpack.c.l.b16 %v1108
      %v6290 = vunpack.c.l.b16 %v1109
      %v6291 = vunpack.c.l.b16 %v1110
      %v6292 = vunpack.c.l.b16 %v1111
      %v6293 = vunpack.c.l.b16 %v1112
      %v6294 = vunpack.c.l.b16 %v1113
      %v6295 = vunpack.c.l.b16 %v1114
      %v6296 = vunpack.c.l.b16 %v1115
      %v6297 = vunpack.c.l.b16 %v1116
      %v6298 = vunpack.c.l.b16 %v1117
      %v6299 = vunpack.c.l.b16 %v1118
      %v6300 = vunpack.c.l.b16 %v1119
      %v6301 = vunpack.c.l.b16 %v1120
      %v6302 = vunpack.c.l.b16 %v1121
      %v6303 = vunpack.c.l.b16 %v1122
      %v6304 = vunpack.c.l.b16 %v1123
      %v6305 = vunpack.c.l.b16 %v1124
      %v6306 = vunpack.c.l.b16 %v1125
      %v6307 = vunpack.c.l.b16 %v1126
      %v6308 = vunpack.c.l.b16 %v1127
      %v6309 = vunpack.c.l.b16 %v1128
      %v6310 = vunpack.c.l.b16 %v1129
      %v6311 = vunpack.c.l.b16 %v1130
      %v6312 = vunpack.c.l.b16 %v1131
      %v6313 = vunpack.c.l.b16 %v1132
      %v6314 = vunpack.c.l.b16 %v1133
      %v6315 = vunpack.c.l.b16 %v1134
      %v6316 = vunpack.c.l.b16 %v1135
      %v6317 = vunpack.c.l.b16 %v1136
      %v6318 = vunpack.c.l.b16 %v1137
      %v6319 = vunpack.c.l.b16 %v1138
      %v6320 = vunpack.c.l.b16 %v1139
      %v6321 = vunpack.c.l.b16 %v1140
      %v6322 = vunpack.c.l.b16 %v1141
      %v6323 = vunpack.c.l.b16 %v1142
      %v6324 = vunpack.c.l.b16 %v1143
      %v6325 = vunpack.c.l.b16 %v1144
      %v6326 = vunpack.c.l.b16 %v1145
      %v6327 = vunpack.c.l.b16 %v1146
      %v6328 = vunpack.c.l.b16 %v1147
      %v6329 = vunpack.c.l.b16 %v1148
      %v6330 = vunpack.c.l.b16 %v1149
      %v6331 = vunpack.c.l.b16 %v1150
      %v6332 = vunpack.c.l.b16 %v1151
      %v6333 = vunpack.c.l.b16 %v1152
      %v6334 = vunpack.c.l.b16 %v1153
      %v6335 = vunpack.c.l.b16 %v1154
      %v6336 = vunpack.c.l.b16 %v1155
      %v6337 = vunpack.c.l.b16 %v1156
      %v6338 = vunpack.c.l.b16 %v1157
      %v6339 = vunpack.c.l.b16 %v1158
      %v6340 = vunpack.c.l.b16 %v1159
      %v6341 = vunpack.c.l.b16 %v1160
      %v6342 = vunpack.c.l.b16 %v1161
      %v6343 = vunpack.c.l.b16 %v1162
      %v6344 = vunpack.c.l.b16 %v1163
      %v6345 = vunpack.c.l.b16 %v1164
      %v6346 = vunpack.c.l.b16 %v1165
      %v6347 = vunpack.c.l.b16 %v1166
      %v6348 = vunpack.c.l.b16 %v1167
      %v6349 = vunpack.c.l.b16 %v1168
      %v6350 = vunpack.c.l.b16 %v1169
      %v6351 = vunpack.c.l.b16 %v1170
      %v6352 = vunpack.c.l.b16 %v1171
      %v6353 = vunpack.c.l.b16 %v1172
      %v6354 = vunpack.c.l.b16 %v1173
      %v6355 = vunpack.c.l.b16 %v1174
      %v6356 = vunpack.c.l.b16 %v1175
      %v6357 = vunpack.c.l.b16 %v1176
      %v6358 = vunpack.c.l.b16 %v1177
      %v6359 = vunpack.c.l.b16 %v1178
      %v6360 = vunpack.c.l.b16 %v1179
      %v6361 = vunpack.c.l.b16 %v1180
      %v6362 = vunpack.c.l.b16 %v1181
      %v6363 = vunpack.c.l.b16 %v1182
      %v6364 = vunpack.c.l.b16 %v1183
      %v6365 = vunpack.c.l.b16 %v1184
      %v6366 = vunpack.c.l.b16 %v1185
      %v6367 = vunpack.c.l.b16 %v1186
      %v6368 = vunpack.c.l.b16 %v1187
      %v6369 = vunpack.c.l.b16 %v1188
      %v6370 = vunpack.c.l.b16 %v1189
      %v6371 = vunpack.c.l.b16 %v1190
      %v6372 = vunpack.c.l.b16 %v1191
      %v6373 = vunpack.c.l.b16 %v1192
      %v6374 = vunpack.c.l.b16 %v1193
      %v6375 = vunpack.c.l.b16 %v1194
      %v6376 = vunpack.c.l.b16 %v1195
      %v6377 = vunpack.c.l.b16 %v1196
      %v6378 = vunpack.c.l.b16 %v1197
      %v6379 = vunpack.c.l.b16 %v1198
      %v6380 = vunpack.c.l.b16 %v1199
      %v6381 = vunpack.c.l.b16 %v1200
      %v6382 = vunpack.c.l.b16 %v1201
      %v6383 = vunpack.c.l.b16 %v1202
      %v6384 = vunpack.c.l.b16 %v1203
      %v6385 = vunpack.c.l.b16 %v1204
      %v6386 = vunpack.c.l.b16 %v1205
      %v6387 = vunpack.c.l.b16 %v1206
      %v6388 = vunpack.c.l.b16 %v1207
      %v6389 = vunpack.c.l.b16 %v1208
      %v6390 = vunpack.c.l.b16 %v1209
      %v6391 = vunpack.c.l.b16 %v1210
      %v6392 = vunpack.c.l.b16 %v1211
      %v6393 = vunpack.c.l.b16 %v1212
      %v6394 = vunpack.c.l.b16 %v1213
      %v6395 = vunpack.c.l.b16 %v1214
      %v6396 = vunpack.c.l.b16 %v1215
      %v6397 = vunpack.c.l.b16 %v1216
      %v6398 = vunpack.c.l.b16 %v1217
      %v6399 = vunpack.c.l.b16 %v1218
      %v6400 = vunpack.c.l.b16 %v1219
      %v6401 = vunpack.c.l.b16 %v1220
      %v6402 = vunpack.c.l.b16 %v1221
      %v6403 = vunpack.c.l.b16 %v1222
      %v6404 = vunpack.c.l.b16 %v1223
      %v6405 = vunpack.c.l.b16 %v1224
      %v6406 = vunpack.c.l.b16 %v1225
      %v6407 = vunpack.c.l.b16 %v1226
      %v6408 = vunpack.c.l.b16 %v1227
      %v6409 = vunpack.c.l.b16 %v1228
      %v6410 = vunpack.c.l.b16 %v1229
      %v6411 = vunpack.c.l.b16 %v1230
      %v6412 = vunpack.c.l.b16 %v1231
      %v6413 = vunpack.c.l.b16 %v1232
      %v6414 = vunpack.c.l.b16 %v1233
      %v6415 = vunpack.c.l.b16 %v1234
      %v6416 = vunpack.c.l.b16 %v1235
      %v6417 = vunpack.c.l.b16 %v1236
      %v6418 = vunpack.c.l.b16 %v1237
      %v6419 = vunpack.c.l.b16 %v1238
      %v6420 = vunpack.c.l.b16 %v1239
      %v6421 = vunpack.c.l.b16 %v1240
      %v6422 = vunpack.c.l.b16 %v1241
      %v6423 = vunpack.c.l.b16 %v1242
      %v6424 = vunpack.c.l.b16 %v1243
      %v6425 = vunpack.c.l.b16 %v1244
      %v6426 = vunpack.c.l.b16 %v1245
      %v6427 = vunpack.c.l.b16 %v1246
      %v6428 = vunpack.c.l.b16 %v1247
      %v6429 = vunpack.c.l.b16 %v1248
      %v6430 = vunpack.c.l.b16 %v1249
      %v6431 = vunpack.c.l.b16 %v1250
      %v6432 = vunpack.c.l.b16 %v1251
      %v6433 = vunpack.c.l.b16 %v1252
      %v6434 = vunpack.c.l.b16 %v1253
      %v6435 = vunpack.c.l.b16 %v1254
      %v6436 = vunpack.c.l.b16 %v1255
      %v6437 = vunpack.c.l.b16 %v1256
      %v6438 = vunpack.c.l.b16 %v1257
      %v6439 = vunpack.c.l.b16 %v1258
      %v6440 = vunpack.c.l.b16 %v1259
      %v6441 = vunpack.c.l.b16 %v1260
      %v6442 = vunpack.c.l.b16 %v1261
      %v6443 = vunpack.c.l.b16 %v1262
      %v6444 = vunpack.c.l.b16 %v1263
      %v6445 = vunpack.c.l.b16 %v1264
      %v6446 = vunpack.c.l.b16 %v1265
      %v6447 = vunpack.c.l.b16 %v1266
      %v6448 = vunpack.c.l.b16 %v1267
      %v6449 = vunpack.c.l.b16 %v1268
      %v6450 = vunpack.c.l.b16 %v1269
      %v6451 = vunpack.c.l.b16 %v1270
      %v6452 = vunpack.c.l.b16 %v1271
      %v6453 = vunpack.c.l.b16 %v1272
      %v6454 = vunpack.c.l.b16 %v1273
      %v6455 = vunpack.c.l.b16 %v1274
      %v6456 = vunpack.c.l.b16 %v1275
      %v6457 = vunpack.c.l.b16 %v1276
      %v6458 = vunpack.c.l.b16 %v1277
      %v6459 = vunpack.c.l.b16 %v1278
      %v6460 = vunpack.c.l.b16 %v1279
      %v6461 = vunpack.c.l.b16 %v1280
      %v6462 = vunpack.c.l.b16 %v1281
      %v6463 = vunpack.c.l.b16 %v1282
      %v6464 = vunpack.c.l.b16 %v1283
      %v6465 = vunpack.c.l.b16 %v1284
      %v6466 = vunpack.c.l.b16 %v1285
      %v6467 = vunpack.c.l.b16 %v1286
      %v6468 = vunpack.c.l.b16 %v1287
      %v6469 = vunpack.c.l.b16 %v1288
      %v6470 = vunpack.c.l.b16 %v1289
      %v6471 = vunpack.c.l.b16 %v1290
      %v6472 = vunpack.c.l.b16 %v1291
      %v6473 = vunpack.c.l.b16 %v1292
      %v6474 = vunpack.c.l.b16 %v1293
      %v6475 = vunpack.c.l.b16 %v1294
      %v6476 = vunpack.c.l.b16 %v1295
      %v6477 = vunpack.c.l.b16 %v1296
      %v6478 = vunpack.c.l.b16 %v1297
      %v6479 = vunpack.c.l.b16 %v1298
      %v6480 = vunpack.c.l.b16 %v1299
      %v6481 = vunpack.c.l.b16 %v1300
      %v6482 = vunpack.c.l.b16 %v1301
      %v6483 = vunpack.c.l.b16 %v1302
      %v6484 = vunpack.c.l.b16 %v1303
      %v6485 = vunpack.c.l.b16 %v1304
      %v6486 = vunpack.c.l.b16 %v1305
      %v6487 = vunpack.c.l.b16 %v1306
      %v6488 = vunpack.c.l.b16 %v1307
      %v6489 = vunpack.c.l.b16 %v1308
      %v6490 = vunpack.c.l.b16 %v1309
      %v6491 = vunpack.c.l.b16 %v1310
      %v6492 = vunpack.c.l.b16 %v1311
      %v6493 = vunpack.c.l.b16 %v1312
      %v6494 = vunpack.c.l.b16 %v1313
      %v6495 = vunpack.c.l.b16 %v1314
      %v6496 = vunpack.c.l.b16 %v1315
      %v6497 = vunpack.c.l.b16 %v1316
      %v6498 = vunpack.c.l.b16 %v1317
      %v6499 = vunpack.c.l.b16 %v1318
      %v6500 = vunpack.c.l.b16 %v1319
      %v6501 = vunpack.c.l.b16 %v1320
      %v6502 = vunpack.c.l.b16 %v1321
      %v6503 = vunpack.c.l.b16 %v1322
      %v6504 = vunpack.c.l.b16 %v1323
      %v6505 = vunpack.c.l.b16 %v1324
      %v6506 = vunpack.c.l.b16 %v1325
      %v6507 = vunpack.c.l.b16 %v1326
      %v6508 = vunpack.c.l.b16 %v1327
      %v6509 = vunpack.c.l.b16 %v1328
      %v6510 = vunpack.c.l.b16 %v1329
      %v6511 = vunpack.c.l.b16 %v1330
      %v6512 = vunpack.c.l.b16 %v1331
      %v6513 = vunpack.c.l.b16 %v1332
      %v6514 = vunpack.c.l.b16 %v1333
      %v6515 = vunpack.c.l.b16 %v1334
      %v6516 = vunpack.c.l.b16 %v1335
      %v6517 = vunpack.c.l.b16 %v1336
      %v6518 = vunpack.c.l.b16 %v1337
      %v6519 = vunpack.c.l.b16 %v1338
      %v6520 = vunpack.c.l.b16 %v1339
      %v6521 = vunpack.c.l.b16 %v1340
      %v6522 = vunpack.c.l.b16 %v1341
      %v6523 = vunpack.c.l.b16 %v1342
      %v6524 = vunpack.c.l.b16 %v1343
      %v6525 = vunpack.c.l.b16 %v1344
      %v6526 = vunpack.c.l.b16 %v1345
      %v6527 = vunpack.c.l.b16 %v1346
      %v6528 = vunpack.c.l.b16 %v1347
      %v6529 = vunpack.c.l.b16 %v1348
      %v6530 = vunpack.c.l.b16 %v1349
      %v6531 = vunpack.c.l.b16 %v1350
      %v6532 = vunpack.c.l.b16 %v1351
      %v6533 = vunpack.c.l.b16 %v1352
      %v6534 = vunpack.c.l.b16 %v1353
      %v6535 = vunpack.c.l.b16 %v1354
      %v6536 = vunpack.c.l.b16 %v1355
      %v6537 = vunpack.c.l.b16 %v1356
      %v6538 = vunpack.c.l.b16 %v1357
      %v6539 = vunpack.c.l.b16 %v1358
      %v6540 = vunpack.c.l.b16 %v1359
      %v6541 = vunpack.c.l.b16 %v1360
      %v6542 = vunpack.c.l.b16 %v1361
      %v6543 = vunpack.c.l.b16 %v1362
      %v6544 = vunpack.c.l.b16 %v1363
      %v6545 = vunpack.c.l.b16 %v1364
      %v6546 = vunpack.c.l.b16 %v1365
      %v6547 = vunpack.c.l.b16 %v1366
      %v6548 = vunpack.c.l.b16 %v1367
      %v6549 = vunpack.c.l.b16 %v1368
      %v6550 = vunpack.c.l.b16 %v1369
      %v6551 = vunpack.c.l.b16 %v1370
      %v6552 = vunpack.c.l.b16 %v1371
      %v6553 = vunpack.c.l.b16 %v1372
      %v6554 = vunpack.c.l.b16 %v1373
      %v6555 = vunpack.c.l.b16 %v1374
      %v6556 = vunpack.c.l.b16 %v1375
      %v6557 = vunpack.c.l.b16 %v1376
      %v6558 = vunpack.c.l.b16 %v1377
      %v6559 = vunpack.c.l.b16 %v1378
      %v6560 = vunpack.c.l.b16 %v1379
      %v6561 = vunpack.c.l.b16 %v1380
      %v6562 = vunpack.c.l.b16 %v1381
      %v6563 = vunpack.c.l.b16 %v1382
      %v6564 = vunpack.c.l.b16 %v1383
      %v6565 = vunpack.c.l.b16 %v1384
      %v6566 = vunpack.c.l.b16 %v1385
      %v6567 = vunpack.c.l.b16 %v1386
      %v6568 = vunpack.c.l.b16 %v1387
      %v6569 = vunpack.c.l.b16 %v1388
      %v6570 = vunpack.c.l.b16 %v1389
      %v6571 = vunpack.c.l.b16 %v1390
      %v6572 = vunpack.c.l.b16 %v1391
      %v6573 = vunpack.c.l.b16 %v1392
      %v6574 = vunpack.c.l.b16 %v1393
      %v6575 = vunpack.c.l.b16 %v1394
      %v6576 = vunpack.c.l.b16 %v1395
      %v6577 = vunpack.c.l.b16 %v1396
      %v6578 = vunpack.c.l.b16 %v1397
      %v6579 = vunpack.c.l.b16 %v1398
      %v6580 = vunpack.c.l.b16 %v1399
      %v6581 = vunpack.c.l.b16 %v1400
      %v6582 = vunpack.c.l.b16 %v1401
      %v6583 = vunpack.c.l.b16 %v1402
      %v6584 = vunpack.c.l.b16 %v1403
      %v6585 = vunpack.c.l.b16 %v1404
      %v6586 = vunpack.c.l.b16 %v1405
      %v6587 = vunpack.c.l.b16 %v1406
      %v6588 = vunpack.c.l.b16 %v1407
      %v6589 = vunpack.c.l.b16 %v1408
      %v6590 = vunpack.c.l.b16 %v1409
      %v6591 = vunpack.c.l.b16 %v1410
      %v6592 = vunpack.c.l.b16 %v1411
      %v6593 = vunpack.c.l.b16 %v1412
      %v6594 = vunpack.c.l.b16 %v1413
      %v6595 = vunpack.c.l.b16 %v1414
      %v6596 = vunpack.c.l.b16 %v1415
      %v6597 = vunpack.c.l.b16 %v1416
      %v6598 = vunpack.c.l.b16 %v1417
      %v6599 = vunpack.c.l.b16 %v1418
      %v6600 = vunpack.c.l.b16 %v1419
      %v6601 = vunpack.c.l.b16 %v1420
      %v6602 = vunpack.c.l.b16 %v1421
      %v6603 = vunpack.c.l.b16 %v1422
      %v6604 = vunpack.c.l.b16 %v1423
      %v6605 = vunpack.c.l.b16 %v1424
      %v6606 = vunpack.c.l.b16 %v1425
      %v6607 = vunpack.c.l.b16 %v1426
      %v6608 = vunpack.c.l.b16 %v1427
      %v6609 = vunpack.c.l.b16 %v1428
      %v6610 = vunpack.c.l.b16 %v1429
      %v6611 = vunpack.c.l.b16 %v1430
      %v6612 = vunpack.c.l.b16 %v1431
      %v6613 = vunpack.c.l.b16 %v1432
      %v6614 = vunpack.c.l.b16 %v1433
      %v6615 = vunpack.c.l.b16 %v1434
      %v6616 = vunpack.c.l.b16 %v1435
      %v6617 = vunpack.c.l.b16 %v1436
      %v6618 = vunpack.c.l.b16 %v1437
      %v6619 = vunpack.c.l.b16 %v1438
      %v6620 = vunpack.c.l.b16 %v1439
      %v6621 = vunpack.c.l.b16 %v1440
      %v6622 = vunpack.c.l.b16 %v1441
      %v6623 = vunpack.c.l.b16 %v1442
      %v6624 = vunpack.c.l.b16 %v1443
      %v6625 = vunpack.c.l.b16 %v1444
      %v6626 = vunpack.c.l.b16 %v1445
      %v6627 = vunpack.c.l.b16 %v1446
      %v6628 = vunpack.c.l.b16 %v1447
      %v6629 = vunpack.c.l.b16 %v1448
      %v6630 = vunpack.c.l.b16 %v1449
      %v6631 = vunpack.c.l.b16 %v1450
      %v6632 = vunpack.c.l.b16 %v1451
      %v6633 = vunpack.c.l.b16 %v1452
      %v6634 = vunpack.c.l.b16 %v1453
      %v6635 = vunpack.c.l.b16 %v1454
      %v6636 = vunpack.c.l.b16 %v1455
      %v6637 = vunpack.c.l.b16 %v1456
      %v6638 = vunpack.c.l.b16 %v1457
      %v6639 = vunpack.c.l.b16 %v1458
      %v6640 = vunpack.c.l.b16 %v1459
      %v6641 = vunpack.c.l.b16 %v1460
      %v6642 = vunpack.c.l.b16 %v1461
      %v6643 = vunpack.c.l.b16 %v1462
      %v6644 = vunpack.c.l.b16 %v1463
      %v6645 = vunpack.c.l.b16 %v1464
      %v6646 = vunpack.c.l.b16 %v1465
      %v6647 = vunpack.c.l.b16 %v1466
      %v6648 = vunpack.c.l.b16 %v1467
      %v6649 = vunpack.c.l.b16 %v1468
      %v6650 = vunpack.c.l.b16 %v1469
      %v6651 = vunpack.c.l.b16 %v1470
      %v6652 = vunpack.c.l.b16 %v1471
      %v6653 = vunpack.c.l.b16 %v1472
      %v6654 = vunpack.c.l.b16 %v1473
      %v6655 = vunpack.c.l.b16 %v1474
      %v6656 = vunpack.c.l.b16 %v1475
      %v6657 = vunpack.c.l.b16 %v1476
      %v6658 = vunpack.c.l.b16 %v1477
      %v6659 = vunpack.c.l.b16 %v1478
      %v6660 = vunpack.c.l.b16 %v1479
      %v6661 = vunpack.c.l.b16 %v1480
      %v6662 = vunpack.c.l.b16 %v1481
      %v6663 = vunpack.c.l.b16 %v1482
      %v6664 = vunpack.c.l.b16 %v1483
      %v6665 = vunpack.c.l.b16 %v1484
      %v6666 = vunpack.c.l.b16 %v1485
      %v6667 = vunpack.c.l.b16 %v1486
      %v6668 = vunpack.c.l.b16 %v1487
      %v6669 = vunpack.c.l.b16 %v1488
      %v6670 = vunpack.c.l.b16 %v1489
      %v6671 = vunpack.c.l.b16 %v1490
      %v6672 = vunpack.c.l.b16 %v1491
      %v6673 = vunpack.c.l.b16 %v1492
      %v6674 = vunpack.c.l.b16 %v1493
      %v6675 = vunpack.c.l.b16 %v1494
      %v6676 = vunpack.c.l.b16 %v1495
      %v6677 = vunpack.c.l.b16 %v1496
      %v6678 = vunpack.c.l.b16 %v1497
      %v6679 = vunpack.c.l.b16 %v1498
      %v6680 = vunpack.c.l.b16 %v1499
      %v6681 = vunpack.c.l.b16 %v1500
      %v6682 = vunpack.c.l.b16 %v1501
      %v6683 = vunpack.c.l.b16 %v1502
      %v6684 = vunpack.c.l.b16 %v1503
      %v6685 = vunpack.c.l.b16 %v1504
      %v6686 = vunpack.c.l.b16 %v1505
      %v6687 = vunpack.c.l.b16 %v1506
      %v6688 = vunpack.c.l.b16 %v1507
      %v6689 = vunpack.c.l.b16 %v1508
      %v6690 = vunpack.c.l.b16 %v1509
      %v6691 = vunpack.c.l.b16 %v1510
      %v6692 = vunpack.c.l.b16 %v1511
      %v6693 = vunpack.c.l.b16 %v1512
      %v6694 = vunpack.c.l.b16 %v1513
      %v6695 = vunpack.c.l.b16 %v1514
      %v6696 = vunpack.c.l.b16 %v1515
      %v6697 = vunpack.c.l.b16 %v1516
      %v6698 = vunpack.c.l.b16 %v1517
      %v6699 = vunpack.c.l.b16 %v1518
      %v6700 = vunpack.c.l.b16 %v1519
      %v6701 = vunpack.c.l.b16 %v1520
      %v6702 = vunpack.c.l.b16 %v1521
      %v6703 = vunpack.c.l.b16 %v1522
      %v6704 = vunpack.c.l.b16 %v1523
      %v6705 = vunpack.c.l.b16 %v1524
      %v6706 = vunpack.c.l.b16 %v1525
      %v6707 = vunpack.c.l.b16 %v1526
      %v6708 = vunpack.c.l.b16 %v1527
      %v6709 = vunpack.c.l.b16 %v1528
      %v6710 = vunpack.c.l.b16 %v1529
      %v6711 = vunpack.c.l.b16 %v1530
      %v6712 = vunpack.c.l.b16 %v1531
      %v6713 = vunpack.c.l.b16 %v1532
      %v6714 = vunpack.c.l.b16 %v1533
      %v6715 = vunpack.c.l.b16 %v1534
      %v6716 = vunpack.c.l.b16 %v1535
      %v6717 = vunpack.c.l.b16 %v1536
      %v6718 = vunpack.c.l.b16 %v1537
      %v6719 = vunpack.c.l.b16 %v1538
      %v6720 = vunpack.c.l.b16 %v1539
      %v6721 = vunpack.c.l.b16 %v1540
      %v6722 = vunpack.c.l.b16 %v1541
      %v6723 = vunpack.c.l.b16 %v1542
      %v6724 = vunpack.c.l.b16 %v1543
      %v6725 = vunpack.c.l.b16 %v1544
      %v6726 = vunpack.c.l.b16 %v1545
      %v6727 = vunpack.c.l.b16 %v1546
      %v6728 = vunpack.c.l.b16 %v1547
      %v6729 = vunpack.c.l.b16 %v1548
      %v6730 = vunpack.c.l.b16 %v1549
      %v6731 = vunpack.c.l.b16 %v1550
      %v6732 = vunpack.c.l.b16 %v1551
      %v6733 = vunpack.c.l.b16 %v1552
      %v6734 = vunpack.c.l.b16 %v1553
      %v6735 = vunpack.c.l.b16 %v1554
      %v6736 = vunpack.c.l.b16 %v1555
      %v6737 = vunpack.c.l.b16 %v1556
      %v6738 = vunpack.c.l.b16 %v1557
      %v6739 = vunpack.c.l.b16 %v1558
      %v6740 = vunpack.c.l.b16 %v1559
      %v6741 = vunpack.c.l.b16 %v1560
      %v6742 = vunpack.c.l.b16 %v1561
      %v6743 = vunpack.c.l.b16 %v1562
      %v6744 = vunpack.c.l.b16 %v1563
      %v6745 = vunpack.c.l.b16 %v1564
      %v6746 = vunpack.c.l.b16 %v1565
      %v6747 = vunpack.c.l.b16 %v1566
      %v6748 = vunpack.c.l.b16 %v1567
      %v6749 = vunpack.c.l.b16 %v1568
      %v6750 = vunpack.c.l.b16 %v1569
      %v6751 = vunpack.c.l.b16 %v1570
      %v6752 = vunpack.c.l.b16 %v1571
      %v6753 = vunpack.c.l.b16 %v1572
      %v6754 = vunpack.c.l.b16 %v1573
      %v6755 = vunpack.c.l.b16 %v1574
      %v6756 = vunpack.c.l.b16 %v1575
      %v6757 = vunpack.c.l.b16 %v1576
      %v6758 = vunpack.c.l.b16 %v1577
      %v6759 = vunpack.c.l.b16 %v1578
      %v6760 = vunpack.c.l.b16 %v1579
      %v6761 = vunpack.c.l.b16 %v1580
      %v6762 = vunpack.c.l.b16 %v1581
      %v6763 = vunpack.c.l.b16 %v1582
      %v6764 = vunpack.c.l.b16 %v1583
      %v6765 = vunpack.c.l.b16 %v1584
      %v6766 = vunpack.c.l.b16 %v1585
      %v6767 = vunpack.c.l.b16 %v1586
      %v6768 = vunpack.c.l.b16 %v1587
      %v6769 = vunpack.c.l.b16 %v1588
      %v6770 = vunpack.c.l.b16 %v1589
      %v6771 = vunpack.c.l.b16 %v1590
      %v6772 = vunpack.c.l.b16 %v1591
      %v6773 = vunpack.c.l.b16 %v1592
      %v6774 = vunpack.c.l.b16 %v1593
      %v6775 = vunpack.c.l.b16 %v1594
      %v6776 = vunpack.c.l.b16 %v1595
      %v6777 = vunpack.c.l.b16 %v1596
      %v6778 = vunpack.c.l.b16 %v1597
      %v6779 = vunpack.c.l.b16 %v1598
      %v6780 = vunpack.c.l.b16 %v1599
      %v6781 = vunpack.c.l.b16 %v1600
      %v6782 = vunpack.c.l.b16 %v1601
      %v6783 = vunpack.c.l.b16 %v1602
      %v6784 = vunpack.c.l.b16 %v1603
      %v6785 = vunpack.c.l.b16 %v1604
      %v6786 = vunpack.c.l.b16 %v1605
      %v6787 = vunpack.c.l.b16 %v1606
      %v6788 = vunpack.c.l.b16 %v1607
      %v6789 = vunpack.c.l.b16 %v1608
      %v6790 = vunpack.c.l.b16 %v1609
      %v6791 = vunpack.c.l.b16 %v1610
      %v6792 = vunpack.c.l.b16 %v1611
      %v6793 = vunpack.c.l.b16 %v1612
      %v6794 = vunpack.c.l.b16 %v1613
      %v6795 = vunpack.c.l.b16 %v1614
      %v6796 = vunpack.c.l.b16 %v1615
      %v6797 = vunpack.c.l.b16 %v1616
      %v6798 = vunpack.c.l.b16 %v1617
      %v6799 = vunpack.c.l.b16 %v1618
      %v6800 = vunpack.c.l.b16 %v1619
      %v6801 = vunpack.c.l.b16 %v1620
      %v6802 = vunpack.c.l.b16 %v1621
      %v6803 = vunpack.c.l.b16 %v1622
      %v6804 = vunpack.c.l.b16 %v1623
      %v6805 = vunpack.c.l.b16 %v1624
      %v6806 = vunpack.c.l.b16 %v1625
      %v6807 = vunpack.c.l.b16 %v1626
      %v6808 = vunpack.c.l.b16 %v1627
      %v6809 = vunpack.c.l.b16 %v1628
      %v6810 = vunpack.c.l.b16 %v1629
      %v6811 = vunpack.c.l.b16 %v1630
      %v6812 = vunpack.c.l.b16 %v1631
      %v6813 = vunpack.c.l.b16 %v1632
      %v6814 = vunpack.c.l.b16 %v1633
      %v6815 = vunpack.c.l.b16 %v1634
      %v6816 = vunpack.c.l.b16 %v1635
      %v6817 = vunpack.c.l.b16 %v1636
      %v6818 = vunpack.c.l.b16 %v1637
      %v6819 = vunpack.c.l.b16 %v1638
      %v6820 = vunpack.c.l.b16 %v1639
      %v6821 = vunpack.c.l.b16 %v1640
      %v6822 = vunpack.c.l.b16 %v1641
      %v6823 = vunpack.c.l.b16 %v1642
      %v6824 = vunpack.c.l.b16 %v1643
      %v6825 = vunpack.c.l.b16 %v1644
      %v6826 = vunpack.c.l.b16 %v1645
      %v6827 = vunpack.c.l.b16 %v1646
      %v6828 = vunpack.c.l.b16 %v1647
      %v6829 = vunpack.c.l.b16 %v1648
      %v6830 = vunpack.c.l.b16 %v1649
      %v6831 = vunpack.c.l.b16 %v1650
      %v6832 = vunpack.c.l.b16 %v1651
      %v6833 = vunpack.c.l.b16 %v1652
      %v6834 = vunpack.c.l.b16 %v1653
      %v6835 = vunpack.c.l.b16 %v1654
      %v6836 = vunpack.c.l.b16 %v1655
      %v6837 = vunpack.c.l.b16 %v1656
      %v6838 = vunpack.c.l.b16 %v1657
      %v6839 = vunpack.c.l.b16 %v1658
      %v6840 = vunpack.c.l.b16 %v1659
      %v6841 = vunpack.c.l.b16 %v1660
      %v6842 = vunpack.c.l.b16 %v1661
      %v6843 = vunpack.c.l.b16 %v1662
      %v6844 = vunpack.c.l.b16 %v1663
      %v6845 = vunpack.c.l.b16 %v1664
      %v6846 = vunpack.c.l.b16 %v1665
      %v6847 = vunpack.c.l.b16 %v1666
      %v6848 = vunpack.c.l.b16 %v1667
      %v6849 = vunpack.c.l.b16 %v1668
      %v6850 = vunpack.c.l.b16 %v1669
      %v6851 = vunpack.c.l.b16 %v1670
      %v6852 = vunpack.c.l.b16 %v1671
      %v6853 = vunpack.c.l.b16 %v1672
      %v6854 = vunpack.c.l.b16 %v1673
      %v6855 = vunpack.c.l.b16 %v1674
      %v6856 = vunpack.c.l.b16 %v1675
      %v6857 = vunpack.c.l.b16 %v1676
      %v6858 = vunpack.c.l.b16 %v1677
      %v6859 = vunpack.c.l.b16 %v1678
      %v6860 = vunpack.c.l.b16 %v1679
      %v6861 = vunpack.c.l.b16 %v1680
      %v6862 = vunpack.c.l.b16 %v1681
      %v6863 = vunpack.c.l.b16 %v1682
      %v6864 = vunpack.c.l.b16 %v1683
      %v6865 = vunpack.c.l.b16 %v1684
      %v6866 = vunpack.c.l.b16 %v1685
      %v6867 = vunpack.c.l.b16 %v1686
      %v6868 = vunpack.c.l.b16 %v1687
      %v6869 = vunpack.c.l.b16 %v1688
      %v6870 = vunpack.c.l.b16 %v1689
      %v6871 = vunpack.c.l.b16 %v1690
      %v6872 = vunpack.c.l.b16 %v1691
      %v6873 = vunpack.c.l.b16 %v1692
      %v6874 = vunpack.c.l.b16 %v1693
      %v6875 = vunpack.c.l.b16 %v1694
      %v6876 = vunpack.c.l.b16 %v1695
      %v6877 = vunpack.c.l.b16 %v1696
      %v6878 = vunpack.c.l.b16 %v1697
      %v6879 = vunpack.c.l.b16 %v1698
      %v6880 = vunpack.c.l.b16 %v1699
      %v6881 = vunpack.c.l.b16 %v1700
      %v6882 = vunpack.c.l.b16 %v1701
      %v6883 = vunpack.c.l.b16 %v1702
      %v6884 = vunpack.c.l.b16 %v1703
      %v6885 = vunpack.c.l.b16 %v1704
      %v6886 = vunpack.c.l.b16 %v1705
      %v6887 = vunpack.c.l.b16 %v1706
      %v6888 = vunpack.c.l.b16 %v1707
      %v6889 = vunpack.c.l.b16 %v1708
      %v6890 = vunpack.c.l.b16 %v1709
      %v6891 = vunpack.c.l.b16 %v1710
      %v6892 = vunpack.c.l.b16 %v1711
      %v6893 = vunpack.c.l.b16 %v1712
      %v6894 = vunpack.c.l.b16 %v1713
      %v6895 = vunpack.c.l.b16 %v1714
      %v6896 = vunpack.c.l.b16 %v1715
      %v6897 = vunpack.c.l.b16 %v1716
      %v6898 = vunpack.c.l.b16 %v1717
      %v6899 = vunpack.c.l.b16 %v1718
      %v6900 = vunpack.c.l.b16 %v1719
      %v6901 = vunpack.c.l.b16 %v1720
      %v6902 = vunpack.c.l.b16 %v1721
      %v6903 = vunpack.c.l.b16 %v1722
      %v6904 = vunpack.c.l.b16 %v1723
      %v6905 = vunpack.c.l.b16 %v1724
      %v6906 = vunpack.c.l.b16 %v1725
      %v6907 = vunpack.c.l.b16 %v1726
      %v6908 = vunpack.c.l.b16 %v1727
      %v6909 = vunpack.c.l.b16 %v1728
      %v6910 = vunpack.c.l.b16 %v1729
      %v6911 = vunpack.c.l.b16 %v1730
      %v6912 = vunpack.c.l.b16 %v1731
      %v6913 = vunpack.c.l.b16 %v1732
      %v6914 = vunpack.c.l.b16 %v1733
      %v6915 = vunpack.c.l.b16 %v1734
      %v6916 = vunpack.c.l.b16 %v1735
      %v6917 = vunpack.c.l.b16 %v1736
      %v6918 = vunpack.c.l.b16 %v1737
      %v6919 = vunpack.c.l.b16 %v1738
      %v6920 = vunpack.c.l.b16 %v1739
      %v6921 = vunpack.c.l.b16 %v1740
      %v6922 = vunpack.c.l.b16 %v1741
      %v6923 = vunpack.c.l.b16 %v1742
      %v6924 = vunpack.c.l.b16 %v1743
      %v6925 = vunpack.c.l.b16 %v1744
      %v6926 = vunpack.c.l.b16 %v1745
      %v6927 = vunpack.c.l.b16 %v1746
      %v6928 = vunpack.c.l.b16 %v1747
      %v6929 = vunpack.c.l.b16 %v1748
      %v6930 = vunpack.c.l.b16 %v1749
      %v6931 = vunpack.c.l.b16 %v1750
      %v6932 = vunpack.c.l.b16 %v1751
      %v6933 = vunpack.c.l.b16 %v1752
      %v6934 = vunpack.c.l.b16 %v1753
      %v6935 = vunpack.c.l.b16 %v1754
      %v6936 = vunpack.c.l.b16 %v1755
      %v6937 = vunpack.c.l.b16 %v1756
      %v6938 = vunpack.c.l.b16 %v1757
      %v6939 = vunpack.c.l.b16 %v1758
      %v6940 = vunpack.c.l.b16 %v1759
      %v6941 = vunpack.c.l.b16 %v1760
      %v6942 = vunpack.c.l.b16 %v1761
      %v6943 = vunpack.c.l.b16 %v1762
      %v6944 = vunpack.c.l.b16 %v1763
      %v6945 = vunpack.c.l.b16 %v1764
      %v6946 = vunpack.c.l.b16 %v1765
      %v6947 = vunpack.c.l.b16 %v1766
      %v6948 = vunpack.c.l.b16 %v1767
      %v6949 = vunpack.c.l.b16 %v1768
      %v6950 = vunpack.c.l.b16 %v1769
      %v6951 = vunpack.c.l.b16 %v1770
      %v6952 = vunpack.c.l.b16 %v1771
      %v6953 = vunpack.c.l.b16 %v1772
      %v6954 = vunpack.c.l.b16 %v1773
      %v6955 = vunpack.c.l.b16 %v1774
      %v6956 = vunpack.c.l.b16 %v1775
      %v6957 = vunpack.c.l.b16 %v1776
      %v6958 = vunpack.c.l.b16 %v1777
      %v6959 = vunpack.c.l.b16 %v1778
      %v6960 = vunpack.c.l.b16 %v1779
      %v6961 = vunpack.c.l.b16 %v1780
      %v6962 = vunpack.c.l.b16 %v1781
      %v6963 = vunpack.c.l.b16 %v1782
      %v6964 = vunpack.c.l.b16 %v1783
      %v6965 = vunpack.c.l.b16 %v1784
      %v6966 = vunpack.c.l.b16 %v1785
      %v6967 = vunpack.c.l.b16 %v1786
      %v6968 = vunpack.c.l.b16 %v1787
      %v6969 = vunpack.c.l.b16 %v1788
      %v6970 = vunpack.c.l.b16 %v1789
      %v6971 = vunpack.c.l.b16 %v1790
      %v6972 = vunpack.c.l.b16 %v1791
      %v6973 = vunpack.c.l.b16 %v1792
      %v6974 = vunpack.c.l.b16 %v1793
      %v6975 = vunpack.c.l.b16 %v1794
      %v6976 = vunpack.c.l.b16 %v1795
      %v6977 = vunpack.c.l.b16 %v1796
      %v6978 = vunpack.c.l.b16 %v1797
      %v6979 = vunpack.c.l.b16 %v1798
      %v6980 = vunpack.c.l.b16 %v1799
      %v6981 = vunpack.c.l.b16 %v1800
      %v6982 = vunpack.c.l.b16 %v1801
      %v6983 = vunpack.c.l.b16 %v1802
      %v6984 = vunpack.c.l.b16 %v1803
      %v6985 = vunpack.c.l.b16 %v1804
      %v6986 = vunpack.c.l.b16 %v1805
      %v6987 = vunpack.c.l.b16 %v1806
      %v6988 = vunpack.c.l.b16 %v1807
      %v6989 = vunpack.c.l.b16 %v1808
      %v6990 = vunpack.c.l.b16 %v1809
      %v6991 = vunpack.c.l.b16 %v1810
      %v6992 = vunpack.c.l.b16 %v1811
      %v6993 = vunpack.c.l.b16 %v1812
      %v6994 = vunpack.c.l.b16 %v1813
      %v6995 = vunpack.c.l.b16 %v1814
      %v6996 = vunpack.c.l.b16 %v1815
      %v6997 = vunpack.c.l.b16 %v1816
      %v6998 = vunpack.c.l.b16 %v1817
      %v6999 = vunpack.c.l.b16 %v1818
      %v7000 = vunpack.c.l.b16 %v1819
      %v7001 = vunpack.c.l.b16 %v1820
      %v7002 = vunpack.c.l.b16 %v1821
      %v7003 = vunpack.c.l.b16 %v1822
      %v7004 = vunpack.c.l.b16 %v1823
      %v7005 = vunpack.c.l.b16 %v1824
      %v7006 = vunpack.c.l.b16 %v1825
      %v7007 = vunpack.c.l.b16 %v1826
      %v7008 = vunpack.c.l.b16 %v1827
      %v7009 = vunpack.c.l.b16 %v1828
      %v7010 = vunpack.c.l.b16 %v1829
      %v7011 = vunpack.c.l.b16 %v1830
      %v7012 = vunpack.c.l.b16 %v1831
      %v7013 = vunpack.c.l.b16 %v1832
      %v7014 = vunpack.c.l.b16 %v1833
      %v7015 = vunpack.c.l.b16 %v1834
      %v7016 = vunpack.c.l.b16 %v1835
      %v7017 = vunpack.c.l.b16 %v1836
      %v7018 = vunpack.c.l.b16 %v1837
      %v7019 = vunpack.c.l.b16 %v1838
      %v7020 = vunpack.c.l.b16 %v1839
      %v7021 = vunpack.c.l.b16 %v1840
      %v7022 = vunpack.c.l.b16 %v1841
      %v7023 = vunpack.c.l.b16 %v1842
      %v7024 = vunpack.c.l.b16 %v1843
      %v7025 = vunpack.c.l.b16 %v1844
      %v7026 = vunpack.c.l.b16 %v1845
      %v7027 = vunpack.c.l.b16 %v1846
      %v7028 = vunpack.c.l.b16 %v1847
      %v7029 = vunpack.c.l.b16 %v1848
      %v7030 = vunpack.c.l.b16 %v1849
      %v7031 = vunpack.c.l.b16 %v1850
      %v7032 = vunpack.c.l.b16 %v1851
      %v7033 = vunpack.c.l.b16 %v1852
      %v7034 = vunpack.c.l.b16 %v1853
      %v7035 = vunpack.c.l.b16 %v1854
      %v7036 = vunpack.c.l.b16 %v1855
      %v7037 = vunpack.c.l.b16 %v1856
      %v7038 = vunpack.c.l.b16 %v1857
      %v7039 = vunpack.c.l.b16 %v1858
      %v7040 = vunpack.c.l.b16 %v1859
      %v7041 = vunpack.c.l.b16 %v1860
      %v7042 = vunpack.c.l.b16 %v1861
      %v7043 = vunpack.c.l.b16 %v1862
      %v7044 = vunpack.c.l.b16 %v1863
      %v7045 = vunpack.c.l.b16 %v1864
      %v7046 = vunpack.c.l.b16 %v1865
      %v7047 = vunpack.c.l.b16 %v1866
      %v7048 = vunpack.c.l.b16 %v1867
      %v7049 = vunpack.c.l.b16 %v1868
      %v7050 = vunpack.c.l.b16 %v1869
      %v7051 = vunpack.c.l.b16 %v1870
      %v7052 = vunpack.c.l.b16 %v1871
      %v7053 = vunpack.c.l.b16 %v1872
      %v7054 = vunpack.c.l.b16 %v1873
      %v7055 = vunpack.c.l.b16 %v1874
      %v7056 = vunpack.c.l.b16 %v1875
      %v7057 = vunpack.c.l.b16 %v1876
      %v7058 = vunpack.c.l.b16 %v1877
      %v7059 = vunpack.c.l.b16 %v1878
      %v7060 = vunpack.c.l.b16 %v1879
      %v7061 = vunpack.c.l.b16 %v1880
      %v7062 = vunpack.c.l.b16 %v1881
      %v7063 = vunpack.c.l.b16 %v1882
      %v7064 = vunpack.c.l.b16 %v1883
      %v7065 = vunpack.c.l.b16 %v1884
      %v7066 = vunpack.c.l.b16 %v1885
      %v7067 = vunpack.c.l.b16 %v1886
      %v7068 = vunpack.c.l.b16 %v1887
      %v7069 = vunpack.c.l.b16 %v1888
      %v7070 = vunpack.c.l.b16 %v1889
      %v7071 = vunpack.c.l.b16 %v1890
      %v7072 = vunpack.c.l.b16 %v1891
      %v7073 = vunpack.c.l.b16 %v1892
      %v7074 = vunpack.c.l.b16 %v1893
      %v7075 = vunpack.c.l.b16 %v1894
      %v7076 = vunpack.c.l.b16 %v1895
      %v7077 = vunpack.c.l.b16 %v1896
      %v7078 = vunpack.c.l.b16 %v1897
      %v7079 = vunpack.c.l.b16 %v1898
      %v7080 = vunpack.c.l.b16 %v1899
      %v7081 = vunpack.c.l.b16 %v1900
      %v7082 = vunpack.c.l.b16 %v1901
      %v7083 = vunpack.c.l.b16 %v1902
      %v7084 = vunpack.c.l.b16 %v1903
      %v7085 = vunpack.c.l.b16 %v1904
      %v7086 = vunpack.c.l.b16 %v1905
      %v7087 = vunpack.c.l.b16 %v1906
      %v7088 = vunpack.c.l.b16 %v1907
      %v7089 = vunpack.c.l.b16 %v1908
      %v7090 = vunpack.c.l.b16 %v1909
      %v7091 = vunpack.c.l.b16 %v1910
      %v7092 = vunpack.c.l.b16 %v1911
      %v7093 = vunpack.c.l.b16 %v1912
      %v7094 = vunpack.c.l.b16 %v1913
      %v7095 = vunpack.c.l.b16 %v1914
      %v7096 = vunpack.c.l.b16 %v1915
      %v7097 = vunpack.c.l.b16 %v1916
      %v7098 = vunpack.c.l.b16 %v1917
      %v7099 = vunpack.c.l.b16 %v1918
      %v7100 = vunpack.c.l.b16 %v1919
      %v7101 = vunpack.c.l.b16 %v1920
      %v7102 = vunpack.c.l.b16 %v1921
      %v7103 = vunpack.c.l.b16 %v1922
      %v7104 = vunpack.c.l.b16 %v1923
      %v7105 = vunpack.c.l.b16 %v1924
      %v7106 = vunpack.c.l.b16 %v1925
      %v7107 = vunpack.c.l.b16 %v1926
      %v7108 = vunpack.c.l.b16 %v1927
      %v7109 = vunpack.c.l.b16 %v1928
      %v7110 = vunpack.c.l.b16 %v1929
      %v7111 = vunpack.c.l.b16 %v1930
      %v7112 = vunpack.c.l.b16 %v1931
      %v7113 = vunpack.c.l.b16 %v1932
      %v7114 = vunpack.c.l.b16 %v1933
      %v7115 = vunpack.c.l.b16 %v1934
      %v7116 = vunpack.c.l.b16 %v1935
      %v7117 = vunpack.c.l.b16 %v1936
      %v7118 = vunpack.c.l.b16 %v1937
      %v7119 = vunpack.c.l.b16 %v1938
      %v7120 = vunpack.c.l.b16 %v1939
      %v7121 = vunpack.c.l.b16 %v1940
      %v7122 = vunpack.c.l.b16 %v1941
      %v7123 = vunpack.c.l.b16 %v1942
      %v7124 = vunpack.c.l.b16 %v1943
      %v7125 = vunpack.c.l.b16 %v1944
      %v7126 = vunpack.c.l.b16 %v1945
      %v7127 = vunpack.c.l.b16 %v1946
      %v7128 = vunpack.c.l.b16 %v1947
      %v7129 = vunpack.c.l.b16 %v1948
      %v7130 = vunpack.c.l.b16 %v1949
      %v7131 = vunpack.c.l.b16 %v1950
      %v7132 = vunpack.c.l.b16 %v1951
      %v7133 = vunpack.c.l.b16 %v1952
      %v7134 = vunpack.c.l.b16 %v1953
      %v7135 = vunpack.c.l.b16 %v1954
      %v7136 = vunpack.c.l.b16 %v1955
      %v7137 = vunpack.c.l.b16 %v1956
      %v7138 = vunpack.c.l.b16 %v1957
      %v7139 = vunpack.c.l.b16 %v1958
      %v7140 = vunpack.c.l.b16 %v1959
      %v7141 = vunpack.c.l.b16 %v1960
      %v7142 = vunpack.c.l.b16 %v1961
      %v7143 = vunpack.c.l.b16 %v1962
      %v7144 = vunpack.c.l.b16 %v1963
      %v7145 = vunpack.c.l.b16 %v1964
      %v7146 = vunpack.c.l.b16 %v1965
      %v7147 = vunpack.c.l.b16 %v1966
      %v7148 = vunpack.c.l.b16 %v1967
      %v7149 = vunpack.c.l.b16 %v1968
      %v7150 = vunpack.c.l.b16 %v1969
      %v7151 = vunpack.c.l.b16 %v1970
      %v7152 = vunpack.c.l.b16 %v1971
      %v7153 = vunpack.c.l.b16 %v1972
      %v7154 = vunpack.c.l.b16 %v1973
      %v7155 = vunpack.c.l.b16 %v1974
      %v7156 = vunpack.c.l.b16 %v1975
      %v7157 = vunpack.c.l.b16 %v1976
      %v7158 = vunpack.c.l.b16 %v1977
      %v7159 = vunpack.c.l.b16 %v1978
      %v7160 = vunpack.c.l.b16 %v1979
      %v7161 = vunpack.c.l.b16 %v1980
      %v7162 = vunpack.c.l.b16 %v1981
      %v7163 = vunpack.c.l.b16 %v1982
      %v7164 = vunpack.c.l.b16 %v1983
      %v7165 = vunpack.c.l.b16 %v1984
      %v7166 = vunpack.c.l.b16 %v1985
      %v7167 = vunpack.c.l.b16 %v1986
      %v7168 = vunpack.c.l.b16 %v1987
      %v7169 = vunpack.c.l.b16 %v1988
      %v7170 = vunpack.c.l.b16 %v1989
      %v7171 = vunpack.c.l.b16 %v1990
      %v7172 = vunpack.c.l.b16 %v1991
      %v7173 = vunpack.c.l.b16 %v1992
      %v7174 = vunpack.c.l.b16 %v1993
      %v7175 = vunpack.c.l.b16 %v1994
      %v7176 = vunpack.c.l.b16 %v1995
      %v7177 = vunpack.c.l.b16 %v1996
      %v7178 = vunpack.c.l.b16 %v1997
      %v7179 = vunpack.c.l.b16 %v1998
      %v7180 = vunpack.c.l.b16 %v1999
      %v7181 = vunpack.c.l.b16 %v2000
      %v7182 = vunpack.c.l.b16 %v2001
      %v7183 = vunpack.c.l.b16 %v2002
      %v7184 = vunpack.c.l.b16 %v2003
      %v7185 = vunpack.c.l.b16 %v2004
      %v7186 = vunpack.c.l.b16 %v2005
      %v7187 = vunpack.c.l.b16 %v2006
      %v7188 = vunpack.c.l.b16 %v2007
      %v7189 = vunpack.c.l.b16 %v2008
      %v7190 = vunpack.c.l.b16 %v2009
      %v7191 = vunpack.c.l.b16 %v2010
      %v7192 = vunpack.c.l.b16 %v2011
      %v7193 = vunpack.c.l.b16 %v2012
      %v7194 = vunpack.c.l.b16 %v2013
      %v7195 = vunpack.c.l.b16 %v2014
      %v7196 = vunpack.c.l.b16 %v2015
      %v7197 = vunpack.c.l.b16 %v2016
      %v7198 = vunpack.c.l.b16 %v2017
      %v7199 = vunpack.c.l.b16 %v2018
      %v7200 = vunpack.c.l.b16 %v2019
      %v7201 = vunpack.c.l.b16 %v2020
      %v7202 = vunpack.c.l.b16 %v2021
      %v7203 = vunpack.c.l.b16 %v2022
      %v7204 = vunpack.c.l.b16 %v2023
      %v7205 = vunpack.c.l.b16 %v2024
      %v7206 = vunpack.c.l.b16 %v2025
      %v7207 = vunpack.c.l.b16 %v2026
      %v7208 = vunpack.c.l.b16 %v2027
      %v7209 = vunpack.c.l.b16 %v2028
      %v7210 = vunpack.c.l.b16 %v2029
      %v7211 = vunpack.c.l.b16 %v2030
      %v7212 = vunpack.c.l.b16 %v2031
      %v7213 = vunpack.c.l.b16 %v2032
      %v7214 = vunpack.c.l.b16 %v2033
      %v7215 = vunpack.c.l.b16 %v2034
      %v7216 = vunpack.c.l.b16 %v2035
      %v7217 = vunpack.c.l.b16 %v2036
      %v7218 = vunpack.c.l.b16 %v2037
      %v7219 = vunpack.c.l.b16 %v2038
      %v7220 = vunpack.c.l.b16 %v2039
      %v7221 = vunpack.c.l.b16 %v2040
      %v7222 = vunpack.c.l.b16 %v2041
      %v7223 = vunpack.c.l.b16 %v2042
      %v7224 = vunpack.c.l.b16 %v2043
      %v7225 = vunpack.c.l.b16 %v2044
      %v7226 = vunpack.c.l.b16 %v2045
      %v7227 = vunpack.c.l.b16 %v2046
      %v7228 = vunpack.c.l.b16 %v2047
      %v7229 = vunpack.c.l.b16 %v2048
      %v7230 = vunpack.c.l.b16 %v2049
      %v7231 = vunpack.c.l.b16 %v2050
      %v7232 = vunpack.c.l.b16 %v2051
      %v7233 = vunpack.c.l.b16 %v2052
      %v7234 = vunpack.c.l.b16 %v2053
      %v7235 = vunpack.c.l.b16 %v2054
      %v7236 = vunpack.c.l.b16 %v2055
      %v7237 = vunpack.c.l.b16 %v2056
      %v7238 = vunpack.c.l.b16 %v2057
      %v7239 = vunpack.c.l.b16 %v2058
      %v7240 = vunpack.c.l.b16 %v2059
      %v7241 = vunpack.c.l.b16 %v2060
      %v7242 = vunpack.c.l.b16 %v2061
      %v7243 = vunpack.c.l.b16 %v2062
      %v7244 = vunpack.c.l.b16 %v2063
      %v7245 = vunpack.c.l.b16 %v2064
      %v7246 = vunpack.c.l.b16 %v2065
      %v7247 = vunpack.c.l.b16 %v2066
      %v7248 = vunpack.c.l.b16 %v2067
      %v7249 = vunpack.c.l.b16 %v2068
      %v7250 = vunpack.c.l.b16 %v2069
      %v7251 = vunpack.c.l.b16 %v2070
      %v7252 = vunpack.c.l.b16 %v2071
      %v7253 = vunpack.c.l.b16 %v2072
      %v7254 = vunpack.c.l.b16 %v2073
      %v7255 = vunpack.c.l.b16 %v2074
      %v7256 = vunpack.c.l.b16 %v2075
      %v7257 = vunpack.c.l.b16 %v2076
      %v7258 = vunpack.c.l.b16 %v2077
      %v7259 = vunpack.c.l.b16 %v2078
      %v7260 = vunpack.c.l.b16 %v2079
      %v7261 = vunpack.c.l.b16 %v2080
      %v7262 = vunpack.c.l.b16 %v2081
      %v7263 = vunpack.c.l.b16 %v2082
      %v7264 = vunpack.c.l.b16 %v2083
      %v7265 = vunpack.c.l.b16 %v2084
      %v7266 = vunpack.c.l.b16 %v2085
      %v7267 = vunpack.c.l.b16 %v2086
      %v7268 = vunpack.c.l.b16 %v2087
      %v7269 = vunpack.c.l.b16 %v2088
      %v7270 = vunpack.c.l.b16 %v2089
      %v7271 = vunpack.c.l.b16 %v2090
      %v7272 = vunpack.c.l.b16 %v2091
      %v7273 = vunpack.c.l.b16 %v2092
      %v7274 = vunpack.c.l.b16 %v2093
      %v7275 = vunpack.c.l.b16 %v2094
      %v7276 = vunpack.c.l.b16 %v2095
      %v7277 = vunpack.c.l.b16 %v2096
      %v7278 = vunpack.c.l.b16 %v2097
      %v7279 = vunpack.c.l.b16 %v2098
      %v7280 = vunpack.c.l.b16 %v2099
      %v7281 = vunpack.c.l.b16 %v2100
      %v7282 = vunpack.c.l.b16 %v2101
      %v7283 = vunpack.c.l.b16 %v2102
      %v7284 = vunpack.c.l.b16 %v2103
      %v7285 = vunpack.c.l.b16 %v2104
      %v7286 = vunpack.c.l.b16 %v2105
      %v7287 = vunpack.c.l.b16 %v2106
      %v7288 = vunpack.c.l.b16 %v2107
      %v7289 = vunpack.c.l.b16 %v2108
      %v7290 = vunpack.c.l.b16 %v2109
      %v7291 = vunpack.c.l.b16 %v2110
      %v7292 = vunpack.c.l.b16 %v2111
      %v7293 = vunpack.c.l.b16 %v2112
      %v7294 = vunpack.c.l.b16 %v2113
      %v7295 = vunpack.c.l.b16 %v2114
      %v7296 = vunpack.c.l.b16 %v2115
      %v7297 = vunpack.c.l.b16 %v2116
      %v7298 = vunpack.c.l.b16 %v2117
      %v7299 = vunpack.c.l.b16 %v2118
      %v7300 = vunpack.c.l.b16 %v2119
      %v7301 = vunpack.c.l.b16 %v2120
      %v7302 = vunpack.c.l.b16 %v2121
      %v7303 = vunpack.c.l.b16 %v2122
      %v7304 = vunpack.c.l.b16 %v2123
      %v7305 = vunpack.c.l.b16 %v2124
      %v7306 = vunpack.c.l.b16 %v2125
      %v7307 = vunpack.c.l.b16 %v2126
      %v7308 = vunpack.c.l.b16 %v2127
      %v7309 = vunpack.c.l.b16 %v2128
      %v7310 = vunpack.c.l.b16 %v2129
      %v7311 = vunpack.c.l.b16 %v2130
      %v7312 = vunpack.c.l.b16 %v2131
      %v7313 = vunpack.c.l.b16 %v2132
      %v7314 = vunpack.c.l.b16 %v2133
      %v7315 = vunpack.c.l.b16 %v2134
      %v7316 = vunpack.c.l.b16 %v2135
      %v7317 = vunpack.c.l.b16 %v2136
      %v7318 = vunpack.c.l.b16 %v2137
      %v7319 = vunpack.c.l.b16 %v2138
      %v7320 = vunpack.c.l.b16 %v2139
      %v7321 = vunpack.c.l.b16 %v2140
      %v7322 = vunpack.c.l.b16 %v2141
      %v7323 = vunpack.c.l.b16 %v2142
      %v7324 = vunpack.c.l.b16 %v2143
      %v7325 = vunpack.c.l.b16 %v2144
      %v7326 = vunpack.c.l.b16 %v2145
      %v7327 = vunpack.c.l.b16 %v2146
      %v7328 = vunpack.c.l.b16 %v2147
      %v7329 = vunpack.c.l.b16 %v2148
      %v7330 = vunpack.c.l.b16 %v2149
      %v7331 = vunpack.c.l.b16 %v2150
      %v7332 = vunpack.c.l.b16 %v2151
      %v7333 = vunpack.c.l.b16 %v2152
      %v7334 = vunpack.c.l.b16 %v2153
      %v7335 = vunpack.c.l.b16 %v2154
      %v7336 = vunpack.c.l.b16 %v2155
      %v7337 = vunpack.c.l.b16 %v2156
      %v7338 = vunpack.c.l.b16 %v2157
      %v7339 = vunpack.c.l.b16 %v2158
      %v7340 = vunpack.c.l.b16 %v2159
      %v7341 = vunpack.c.l.b16 %v2160
      %v7342 = vunpack.c.l.b16 %v2161
      %v7343 = vunpack.c.l.b16 %v2162
      %v7344 = vunpack.c.l.b16 %v2163
      %v7345 = vunpack.c.l.b16 %v2164
      %v7346 = vunpack.c.l.b16 %v2165
      %v7347 = vunpack.c.l.b16 %v2166
      %v7348 = vunpack.c.l.b16 %v2167
      %v7349 = vunpack.c.l.b16 %v2168
      %v7350 = vunpack.c.l.b16 %v2169
      %v7351 = vunpack.c.l.b16 %v2170
      %v7352 = vunpack.c.l.b16 %v2171
      %v7353 = vunpack.c.l.b16 %v2172
      %v7354 = vunpack.c.l.b16 %v2173
      %v7355 = vunpack.c.l.b16 %v2174
      %v7356 = vunpack.c.l.b16 %v2175
      %v7357 = vunpack.c.l.b16 %v2176
      %v7358 = vunpack.c.l.b16 %v2177
      %v7359 = vunpack.c.l.b16 %v2178
      %v7360 = vunpack.c.l.b16 %v2179
      %v7361 = vunpack.c.l.b16 %v2180
      %v7362 = vunpack.c.l.b16 %v2181
      %v7363 = vunpack.c.l.b16 %v2182
      %v7364 = vunpack.c.l.b16 %v2183
      %v7365 = vunpack.c.l.b16 %v2184
      %v7366 = vunpack.c.l.b16 %v2185
      %v7367 = vunpack.c.l.b16 %v2186
      %v7368 = vunpack.c.l.b16 %v2187
      %v7369 = vunpack.c.l.b16 %v2188
      %v7370 = vunpack.c.l.b16 %v2189
      %v7371 = vunpack.c.l.b16 %v2190
      %v7372 = vunpack.c.l.b16 %v2191
      %v7373 = vunpack.c.l.b16 %v2192
      %v7374 = vunpack.c.l.b16 %v2193
      %v7375 = vunpack.c.l.b16 %v2194
      %v7376 = vunpack.c.l.b16 %v2195
      %v7377 = vunpack.c.l.b16 %v2196
      %v7378 = vunpack.c.l.b16 %v2197
      %v7379 = vunpack.c.l.b16 %v2198
      %v7380 = vunpack.c.l.b16 %v2199
      %v7381 = vunpack.c.l.b16 %v2200
      %v7382 = vunpack.c.l.b16 %v2201
      %v7383 = vunpack.c.l.b16 %v2202
      %v7384 = vunpack.c.l.b16 %v2203
      %v7385 = vunpack.c.l.b16 %v2204
      %v7386 = vunpack.c.l.b16 %v2205
      %v7387 = vunpack.c.l.b16 %v2206
      %v7388 = vunpack.c.l.b16 %v2207
      %v7389 = vunpack.c.l.b16 %v2208
      %v7390 = vunpack.c.l.b16 %v2209
      %v7391 = vunpack.c.l.b16 %v2210
      %v7392 = vunpack.c.l.b16 %v2211
      %v7393 = vunpack.c.l.b16 %v2212
      %v7394 = vunpack.c.l.b16 %v2213
      %v7395 = vunpack.c.l.b16 %v2214
      %v7396 = vunpack.c.l.b16 %v2215
      %v7397 = vunpack.c.l.b16 %v2216
      %v7398 = vunpack.c.l.b16 %v2217
      %v7399 = vunpack.c.l.b16 %v2218
      %v7400 = vunpack.c.l.b16 %v2219
      %v7401 = vunpack.c.l.b16 %v2220
      %v7402 = vunpack.c.l.b16 %v2221
      %v7403 = vunpack.c.l.b16 %v2222
      %v7404 = vunpack.c.l.b16 %v2223
      %v7405 = vunpack.c.l.b16 %v2224
      %v7406 = vunpack.c.l.b16 %v2225
      %v7407 = vunpack.c.l.b16 %v2226
      %v7408 = vunpack.c.l.b16 %v2227
      %v7409 = vunpack.c.l.b16 %v2228
      %v7410 = vunpack.c.l.b16 %v2229
      %v7411 = vunpack.c.l.b16 %v2230
      %v7412 = vunpack.c.l.b16 %v2231
      %v7413 = vunpack.c.l.b16 %v2232
      %v7414 = vunpack.c.l.b16 %v2233
      %v7415 = vunpack.c.l.b16 %v2234
      %v7416 = vunpack.c.l.b16 %v2235
      %v7417 = vunpack.c.l.b16 %v2236
      %v7418 = vunpack.c.l.b16 %v2237
      %v7419 = vunpack.c.l.b16 %v2238
      %v7420 = vunpack.c.l.b16 %v2239
      %v7421 = vunpack.c.l.b16 %v2240
      %v7422 = vunpack.c.l.b16 %v2241
      %v7423 = vunpack.c.l.b16 %v2242
      %v7424 = vunpack.c.l.b16 %v2243
      %v7425 = vunpack.c.l.b16 %v2244
      %v7426 = vunpack.c.l.b16 %v2245
      %v7427 = vunpack.c.l.b16 %v2246
      %v7428 = vunpack.c.l.b16 %v2247
      %v7429 = vunpack.c.l.b16 %v2248
      %v7430 = vunpack.c.l.b16 %v2249
      %v7431 = vunpack.c.l.b16 %v2250
      %v7432 = vunpack.c.l.b16 %v2251
      %v7433 = vunpack.c.l.b16 %v2252
      %v7434 = vunpack.c.l.b16 %v2253
      %v7435 = vunpack.c.l.b16 %v2254
      %v7436 = vunpack.c.l.b16 %v2255
      %v7437 = vunpack.c.l.b16 %v2256
      %v7438 = vunpack.c.l.b16 %v2257
      %v7439 = vunpack.c.l.b16 %v2258
      %v7440 = vunpack.c.l.b16 %v2259
      %v7441 = vunpack.c.l.b16 %v2260
      %v7442 = vunpack.c.l.b16 %v2261
      %v7443 = vunpack.c.l.b16 %v2262
      %v7444 = vunpack.c.l.b16 %v2263
      %v7445 = vunpack.c.l.b16 %v2264
      %v7446 = vunpack.c.l.b16 %v2265
      %v7447 = vunpack.c.l.b16 %v2266
      %v7448 = vunpack.c.l.b16 %v2267
      %v7449 = vunpack.c.l.b16 %v2268
      %v7450 = vunpack.c.l.b16 %v2269
      %v7451 = vunpack.c.l.b16 %v2270
      %v7452 = vunpack.c.l.b16 %v2271
      %v7453 = vunpack.c.l.b16 %v2272
      %v7454 = vunpack.c.l.b16 %v2273
      %v7455 = vunpack.c.l.b16 %v2274
      %v7456 = vunpack.c.l.b16 %v2275
      %v7457 = vunpack.c.l.b16 %v2276
      %v7458 = vunpack.c.l.b16 %v2277
      %v7459 = vunpack.c.l.b16 %v2278
      %v7460 = vunpack.c.l.b16 %v2279
      %v7461 = vunpack.c.l.b16 %v2280
      %v7462 = vunpack.c.l.b16 %v2281
      %v7463 = vunpack.c.l.b16 %v2282
      %v7464 = vunpack.c.l.b16 %v2283
      %v7465 = vunpack.c.l.b16 %v2284
      %v7466 = vunpack.c.l.b16 %v2285
      %v7467 = vunpack.c.l.b16 %v2286
      %v7468 = vunpack.c.l.b16 %v2287
      %v7469 = vunpack.c.l.b16 %v2288
      %v7470 = vunpack.c.l.b16 %v2289
      %v7471 = vunpack.c.l.b16 %v2290
      %v7472 = vunpack.c.l.b16 %v2291
      %v7473 = vunpack.c.l.b16 %v2292
      %v7474 = vunpack.c.l.b16 %v2293
      %v7475 = vunpack.c.l.b16 %v2294
      %v7476 = vunpack.c.l.b16 %v2295
      %v7477 = vunpack.c.l.b16 %v2296
      %v7478 = vunpack.c.l.b16 %v2297
      %v7479 = vunpack.c.l.b16 %v2298
      %v7480 = vunpack.c.l.b16 %v2299
      %v7481 = vunpack.c.l.b16 %v2300
      %v7482 = vunpack.c.l.b16 %v2301
      %v7483 = vunpack.c.l.b16 %v2302
      %v7484 = vunpack.c.l.b16 %v2303
      %v7485 = vunpack.c.l.b16 %v2304
      %v7486 = vunpack.c.l.b16 %v2305
      %v7487 = vunpack.c.l.b16 %v2306
      %v7488 = vunpack.c.l.b16 %v2307
      %v7489 = vunpack.c.l.b16 %v2308
      %v7490 = vunpack.c.l.b16 %v2309
      %v7491 = vunpack.c.l.b16 %v2310
      %v7492 = vunpack.c.l.b16 %v2311
      %v7493 = vunpack.c.l.b16 %v2312
      %v7494 = vunpack.c.l.b16 %v2313
      %v7495 = vunpack.c.l.b16 %v2314
      %v7496 = vunpack.c.l.b16 %v2315
      %v7497 = vunpack.c.l.b16 %v2316
      %v7498 = vunpack.c.l.b16 %v2317
      %v7499 = vunpack.c.l.b16 %v2318
      %v7500 = vunpack.c.l.b16 %v2319
      %v7501 = vunpack.c.l.b16 %v2320
      %v7502 = vunpack.c.l.b16 %v2321
      %v7503 = vunpack.c.l.b16 %v2322
      %v7504 = vunpack.c.l.b16 %v2323
      %v7505 = vunpack.c.l.b16 %v2324
      %v7506 = vunpack.c.l.b16 %v2325
      %v7507 = vunpack.c.l.b16 %v2326
      %v7508 = vunpack.c.l.b16 %v2327
      %v7509 = vunpack.c.l.b16 %v2328
      %v7510 = vunpack.c.l.b16 %v2329
      %v7511 = vunpack.c.l.b16 %v2330
      %v7512 = vunpack.c.l.b16 %v2331
      %v7513 = vunpack.c.l.b16 %v2332
      %v7514 = vunpack.c.l.b16 %v2333
      %v7515 = vunpack.c.l.b16 %v2334
      %v7516 = vunpack.c.l.b16 %v2335
      %v7517 = vunpack.c.l.b16 %v2336
      %v7518 = vunpack.c.l.b16 %v2337
      %v7519 = vunpack.c.l.b16 %v2338
      %v7520 = vunpack.c.l.b16 %v2339
      %v7521 = vunpack.c.l.b16 %v2340
      %v7522 = vunpack.c.l.b16 %v2341
      %v7523 = vunpack.c.l.b16 %v2342
      %v7524 = vunpack.c.l.b16 %v2343
      %v7525 = vunpack.c.l.b16 %v2344
      %v7526 = vunpack.c.l.b16 %v2345
      %v7527 = vunpack.c.l.b16 %v2346
      %v7528 = vunpack.c.l.b16 %v2347
      %v7529 = vunpack.c.l.b16 %v2348
      %v7530 = vunpack.c.l.b16 %v2349
      %v7531 = vunpack.c.l.b16 %v2350
      %v7532 = vunpack.c.l.b16 %v2351
      %v7533 = vunpack.c.l.b16 %v2352
      %v7534 = vunpack.c.l.b16 %v2353
      %v7535 = vunpack.c.l.b16 %v2354
      %v7536 = vunpack.c.l.b16 %v2355
      %v7537 = vunpack.c.l.b16 %v2356
      %v7538 = vunpack.c.l.b16 %v2357
      %v7539 = vunpack.c.l.b16 %v2358
      %v7540 = vunpack.c.l.b16 %v2359
      %v7541 = vunpack.c.l.b16 %v2360
      %v7542 = vunpack.c.l.b16 %v2361
      %v7543 = vunpack.c.l.b16 %v2362
      %v7544 = vunpack.c.l.b16 %v2363
      %v7545 = vunpack.c.l.b16 %v2364
      %v7546 = vunpack.c.l.b16 %v2365
      %v7547 = vunpack.c.l.b16 %v2366
      %v7548 = vunpack.c.l.b16 %v2367
      %v7549 = vunpack.c.l.b16 %v2368
      %v7550 = vunpack.c.l.b16 %v2369
      %v7551 = vunpack.c.l.b16 %v2370
      %v7552 = vunpack.c.l.b16 %v2371
      %v7553 = vunpack.c.l.b16 %v2372
      %v7554 = vunpack.c.l.b16 %v2373
      %v7555 = vunpack.c.l.b16 %v2374
      %v7556 = vunpack.c.l.b16 %v2375
      %v7557 = vunpack.c.l.b16 %v2376
      %v7558 = vunpack.c.l.b16 %v2377
      %v7559 = vunpack.c.l.b16 %v2378
      %v7560 = vunpack.c.l.b16 %v2379
      %v7561 = vunpack.c.l.b16 %v2380
      %v7562 = vunpack.c.l.b16 %v2381
      %v7563 = vunpack.c.l.b16 %v2382
      %v7564 = vunpack.c.l.b16 %v2383
      %v7565 = vunpack.c.l.b16 %v2384
      %v7566 = vunpack.c.l.b16 %v2385
      %v7567 = vunpack.c.l.b16 %v2386
      %v7568 = vunpack.c.l.b16 %v2387
      %v7569 = vunpack.c.l.b16 %v2388
      %v7570 = vunpack.c.l.b16 %v2389
      %v7571 = vunpack.c.l.b16 %v2390
      %v7572 = vunpack.c.l.b16 %v2391
      %v7573 = vunpack.c.l.b16 %v2392
      %v7574 = vunpack.c.l.b16 %v2393
      %v7575 = vunpack.c.l.b16 %v2394
      %v7576 = vunpack.c.l.b16 %v2395
      %v7577 = vunpack.c.l.b16 %v2396
      %v7578 = vunpack.c.l.b16 %v2397
      %v7579 = vunpack.c.l.b16 %v2398
      %v7580 = vunpack.c.l.b16 %v2399
      %v7581 = vunpack.c.l.b16 %v2400
      %v7582 = vunpack.c.l.b16 %v2401
      %v7583 = vunpack.c.l.b16 %v2402
      %v7584 = vunpack.c.l.b16 %v2403
      %v7585 = vunpack.c.l.b16 %v2404
      %v7586 = vunpack.c.l.b16 %v2405
      %v7587 = vunpack.c.l.b16 %v2406
      %v7588 = vunpack.c.l.b16 %v2407
      %v7589 = vunpack.c.l.b16 %v2408
      %v7590 = vunpack.c.l.b16 %v2409
      %v7591 = vunpack.c.l.b16 %v2410
      %v7592 = vunpack.c.l.b16 %v2411
      %v7593 = vunpack.c.l.b16 %v2412
      %v7594 = vunpack.c.l.b16 %v2413
      %v7595 = vunpack.c.l.b16 %v2414
      %v7596 = vunpack.c.l.b16 %v2415
      %v7597 = vunpack.c.l.b16 %v2416
      %v7598 = vunpack.c.l.b16 %v2417
      %v7599 = vunpack.c.l.b16 %v2418
      %v7600 = vunpack.c.l.b16 %v2419
      %v7601 = vunpack.c.l.b16 %v2420
      %v7602 = vunpack.c.l.b16 %v2421
      %v7603 = vunpack.c.l.b16 %v2422
      %v7604 = vunpack.c.l.b16 %v2423
      %v7605 = vunpack.c.l.b16 %v2424
      %v7606 = vunpack.c.l.b16 %v2425
      %v7607 = vunpack.c.l.b16 %v2426
      %v7608 = vunpack.c.l.b16 %v2427
      %v7609 = vunpack.c.l.b16 %v2428
      %v7610 = vunpack.c.l.b16 %v2429
      %v7611 = vunpack.c.l.b16 %v2430
      %v7612 = vunpack.c.l.b16 %v2431
      %v7613 = vunpack.c.l.b16 %v2432
      %v7614 = vunpack.c.l.b16 %v2433
      %v7615 = vunpack.c.l.b16 %v2434
      %v7616 = vunpack.c.l.b16 %v2435
      %v7617 = vunpack.c.l.b16 %v2436
      %v7618 = vunpack.c.l.b16 %v2437
      %v7619 = vunpack.c.l.b16 %v2438
      %v7620 = vunpack.c.l.b16 %v2439
      %v7621 = vunpack.c.l.b16 %v2440
      %v7622 = vunpack.c.l.b16 %v2441
      %v7623 = vunpack.c.l.b16 %v2442
      %v7624 = vunpack.c.l.b16 %v2443
      %v7625 = vunpack.c.l.b16 %v2444
      %v7626 = vunpack.c.l.b16 %v2445
      %v7627 = vunpack.c.l.b16 %v2446
      %v7628 = vunpack.c.l.b16 %v2447
      %v7629 = vunpack.c.l.b16 %v2448
      %v7630 = vunpack.c.l.b16 %v2449
      %v7631 = vunpack.c.l.b16 %v2450
      %v7632 = vunpack.c.l.b16 %v2451
      %v7633 = vunpack.c.l.b16 %v2452
      %v7634 = vunpack.c.l.b16 %v2453
      %v7635 = vunpack.c.l.b16 %v2454
      %v7636 = vunpack.c.l.b16 %v2455
      %v7637 = vunpack.c.l.b16 %v2456
      %v7638 = vunpack.c.l.b16 %v2457
      %v7639 = vunpack.c.l.b16 %v2458
      %v7640 = vunpack.c.l.b16 %v2459
      %v7641 = vunpack.c.l.b16 %v2460
      %v7642 = vunpack.c.l.b16 %v2461
      %v7643 = vunpack.c.l.b16 %v2462
      %v7644 = vpack.c.b16 %v5533, %v5532
      %v7645 = vpack.c.b16 %v5535, %v5534
      %v7646 = vpack.c.b16 %v5537, %v5536
      %v7647 = vpack.c.b16 %v5539, %v5538
      %v7648 = vpack.c.b16 %v5541, %v5540
      %v7649 = vpack.c.b16 %v5543, %v5542
      %v7650 = vpack.c.b16 %v5545, %v5544
      %v7651 = vpack.c.b16 %v5547, %v5546
      %v7652 = vpack.c.b16 %v5549, %v5548
      %v7653 = vpack.c.b16 %v5551, %v5550
      %v7654 = vpack.c.b16 %v5553, %v5552
      %v7655 = vpack.c.b16 %v5555, %v5554
      %v7656 = vpack.c.b16 %v5557, %v5556
      %v7657 = vpack.c.b16 %v5559, %v5558
      %v7658 = vpack.c.b16 %v5561, %v5560
      %v7659 = vpack.c.b16 %v5563, %v5562
      %v7660 = vpack.c.b16 %v5565, %v5564
      %v7661 = vpack.c.b16 %v5567, %v5566
      %v7662 = vpack.c.b16 %v5569, %v5568
      %v7663 = vpack.c.b16 %v5571, %v5570
      %v7664 = vpack.c.b16 %v5573, %v5572
      %v7665 = vpack.c.b16 %v5575, %v5574
      %v7666 = vpack.c.b16 %v5577, %v5576
      %v7667 = vpack.c.b16 %v5579, %v5578
      %v7668 = vpack.c.b16 %v5581, %v5580
      %v7669 = vpack.c.b16 %v5583, %v5582
      %v7670 = vpack.c.b16 %v5585, %v5584
      %v7671 = vpack.c.b16 %v5587, %v5586
      %v7672 = vpack.c.b16 %v5589, %v5588
      %v7673 = vpack.c.b16 %v5591, %v5590
      %v7674 = vpack.c.b16 %v5593, %v5592
      %v7675 = vpack.c.b16 %v5595, %v5594
      %v7676 = vpack.c.b16 %v5597, %v5596
      %v7677 = vpack.c.b16 %v5599, %v5598
      %v7678 = vpack.c.b16 %v5601, %v5600
      %v7679 = vpack.c.b16 %v5603, %v5602
      %v7680 = vpack.c.b16 %v5605, %v5604
      %v7681 = vpack.c.b16 %v5607, %v5606
      %v7682 = vpack.c.b16 %v5609, %v5608
      %v7683 = vpack.c.b16 %v5611, %v5610
      %v7684 = vpack.c.b16 %v5613, %v5612
      %v7685 = vpack.c.b16 %v5615, %v5614
      %v7686 = vpack.c.b16 %v5617, %v5616
      %v7687 = vpack.c.b16 %v5619, %v5618
      %v7688 = vpack.c.b16 %v5621, %v5620
      %v7689 = vpack.c.b16 %v5623, %v5622
      %v7690 = vpack.c.b16 %v5625, %v5624
      %v7691 = vpack.c.b16 %v5627, %v5626
      %v7692 = vpack.c.b16 %v5629, %v5628
      %v7693 = vpack.c.b16 %v5631, %v5630
      %v7694 = vpack.c.b16 %v5633, %v5632
      %v7695 = vpack.c.b16 %v5635, %v5634
      %v7696 = vpack.c.b16 %v5637, %v5636
      %v7697 = vpack.c.b16 %v5639, %v5638
      %v7698 = vpack.c.b16 %v5641, %v5640
      %v7699 = vpack.c.b16 %v5643, %v5642
      %v7700 = vpack.c.b16 %v5645, %v5644
      %v7701 = vpack.c.b16 %v5647, %v5646
      %v7702 = vpack.c.b16 %v5649, %v5648
      %v7703 = vpack.c.b16 %v5651, %v5650
      %v7704 = vpack.c.b16 %v5653, %v5652
      %v7705 = vpack.c.b16 %v5655, %v5654
      %v7706 = vpack.c.b16 %v5657, %v5656
      %v7707 = vpack.c.b16 %v5659, %v5658
      %v7708 = vpack.c.b16 %v5661, %v5660
      %v7709 = vpack.c.b16 %v5663, %v5662
      %v7710 = vpack.c.b16 %v5665, %v5664
      %v7711 = vpack.c.b16 %v5667, %v5666
      %v7712 = vpack.c.b16 %v5669, %v5668
      %v7713 = vpack.c.b16 %v5671, %v5670
      %v7714 = vpack.c.b16 %v5673, %v5672
      %v7715 = vpack.c.b16 %v5675, %v5674
      %v7716 = vpack.c.b16 %v5677, %v5676
      %v7717 = vpack.c.b16 %v5679, %v5678
      %v7718 = vpack.c.b16 %v5681, %v5680
      %v7719 = vpack.c.b16 %v5683, %v5682
      %v7720 = vpack.c.b16 %v5685, %v5684
      %v7721 = vpack.c.b16 %v5687, %v5686
      %v7722 = vpack.c.b16 %v5689, %v5688
      %v7723 = vpack.c.b16 %v5691, %v5690
      %v7724 = vpack.c.b16 %v5693, %v5692
      %v7725 = vpack.c.b16 %v5695, %v5694
      %v7726 = vpack.c.b16 %v5697, %v5696
      %v7727 = vpack.c.b16 %v5699, %v5698
      %v7728 = vpack.c.b16 %v5701, %v5700
      %v7729 = vpack.c.b16 %v5703, %v5702
      %v7730 = vpack.c.b16 %v5705, %v5704
      %v7731 = vpack.c.b16 %v5707, %v5706
      %v7732 = vpack.c.b16 %v5709, %v5708
      %v7733 = vpack.c.b16 %v5711, %v5710
      %v7734 = vpack.c.b16 %v5713, %v5712
      %v7735 = vpack.c.b16 %v5715, %v5714
      %v7736 = vpack.c.b16 %v5717, %v5716
      %v7737 = vpack.c.b16 %v5719, %v5718
      %v7738 = vpack.c.b16 %v5721, %v5720
      %v7739 = vpack.c.b16 %v5723, %v5722
      %v7740 = vpack.c.b16 %v5725, %v5724
      %v7741 = vpack.c.b16 %v5727, %v5726
      %v7742 = vpack.c.b16 %v5729, %v5728
      %v7743 = vpack.c.b16 %v5731, %v5730
      %v7744 = vpack.c.b16 %v5733, %v5732
      %v7745 = vpack.c.b16 %v5735, %v5734
      %v7746 = vpack.c.b16 %v5737, %v5736
      %v7747 = vpack.c.b16 %v5739, %v5738
      %v7748 = vpack.c.b16 %v5741, %v5740
      %v7749 = vpack.c.b16 %v5743, %v5742
      %v7750 = vpack.c.b16 %v5745, %v5744
      %v7751 = vpack.c.b16 %v5747, %v5746
      %v7752 = vpack.c.b16 %v5749, %v5748
      %v7753 = vpack.c.b16 %v5751, %v5750
      %v7754 = vpack.c.b16 %v5753, %v5752
      %v7755 = vpack.c.b16 %v5755, %v5754
      %v7756 = vpack.c.b16 %v5757, %v5756
      %v7757 = vpack.c.b16 %v5759, %v5758
      %v7758 = vpack.c.b16 %v5761, %v5760
      %v7759 = vpack.c.b16 %v5763, %v5762
      %v7760 = vpack.c.b16 %v5765, %v5764
      %v7761 = vpack.c.b16 %v5767, %v5766
      %v7762 = vpack.c.b16 %v5769, %v5768
      %v7763 = vpack.c.b16 %v5771, %v5770
      %v7764 = vpack.c.b16 %v5773, %v5772
      %v7765 = vpack.c.b16 %v5775, %v5774
      %v7766 = vpack.c.b16 %v5777, %v5776
      %v7767 = vpack.c.b16 %v5779, %v5778
      %v7768 = vpack.c.b16 %v5781, %v5780
      %v7769 = vpack.c.b16 %v5783, %v5782
      %v7770 = vpack.c.b16 %v5785, %v5784
      %v7771 = vpack.c.b16 %v5787, %v5786
      %v7772 = vpack.c.b16 %v5789, %v5788
      %v7773 = vpack.c.b16 %v5791, %v5790
      %v7774 = vpack.c.b16 %v5793, %v5792
      %v7775 = vpack.c.b16 %v5795, %v5794
      %v7776 = vpack.c.b16 %v5797, %v5796
      %v7777 = vpack.c.b16 %v5799, %v5798
      %v7778 = vpack.c.b16 %v5801, %v5800
      %v7779 = vpack.c.b16 %v5803, %v5802
      %v7780 = vpack.c.b16 %v5805, %v5804
      %v7781 = vpack.c.b16 %v5807, %v5806
      %v7782 = vpack.c.b16 %v5809, %v5808
      %v7783 = vpack.c.b16 %v5811, %v5810
      %v7784 = vpack.c.b16 %v5813, %v5812
      %v7785 = vpack.c.b16 %v5815, %v5814
      %v7786 = vpack.c.b16 %v5817, %v5816
      %v7787 = vpack.c.b16 %v5819, %v5818
      %v7788 = vpack.c.b16 %v5821, %v5820
      %v7789 = vpack.c.b16 %v5823, %v5822
      %v7790 = vpack.c.b16 %v5825, %v5824
      %v7791 = vpack.c.b16 %v5827, %v5826
      %v7792 = vpack.c.b16 %v5829, %v5828
      %v7793 = vpack.c.b16 %v5831, %v5830
      %v7794 = vpack.c.b16 %v5833, %v5832
      %v7795 = vpack.c.b16 %v5835, %v5834
      %v7796 = vpack.c.b16 %v5837, %v5836
      %v7797 = vpack.c.b16 %v5839, %v5838
      %v7798 = vpack.c.b16 %v5841, %v5840
      %v7799 = vpack.c.b16 %v5843, %v5842
      %v7800 = vpack.c.b16 %v5845, %v5844
      %v7801 = vpack.c.b16 %v5847, %v5846
      %v7802 = vpack.c.b16 %v5849, %v5848
      %v7803 = vpack.c.b16 %v5851, %v5850
      %v7804 = vpack.c.b16 %v5853, %v5852
      %v7805 = vpack.c.b16 %v5855, %v5854
      %v7806 = vpack.c.b16 %v5857, %v5856
      %v7807 = vpack.c.b16 %v5859, %v5858
      %v7808 = vpack.c.b16 %v5861, %v5860
      %v7809 = vpack.c.b16 %v5863, %v5862
      %v7810 = vpack.c.b16 %v5865, %v5864
      %v7811 = vpack.c.b16 %v5867, %v5866
      %v7812 = vpack.c.b16 %v5869, %v5868
      %v7813 = vpack.c.b16 %v5871, %v5870
      %v7814 = vpack.c.b16 %v5873, %v5872
      %v7815 = vpack.c.b16 %v5875, %v5874
      %v7816 = vpack.c.b16 %v5877, %v5876
      %v7817 = vpack.c.b16 %v5879, %v5878
      %v7818 = vpack.c.b16 %v5881, %v5880
      %v7819 = vpack.c.b16 %v5883, %v5882
      %v7820 = vpack.c.b16 %v5885, %v5884
      %v7821 = vpack.c.b16 %v5887, %v5886
      %v7822 = vpack.c.b16 %v5889, %v5888
      %v7823 = vpack.c.b16 %v5891, %v5890
      %v7824 = vpack.c.b16 %v5893, %v5892
      %v7825 = vpack.c.b16 %v5895, %v5894
      %v7826 = vpack.c.b16 %v5897, %v5896
      %v7827 = vpack.c.b16 %v5899, %v5898
      %v7828 = vpack.c.b16 %v5901, %v5900
      %v7829 = vpack.c.b16 %v5903, %v5902
      %v7830 = vpack.c.b16 %v5905, %v5904
      %v7831 = vpack.c.b16 %v5907, %v5906
      %v7832 = vpack.c.b16 %v5909, %v5908
      %v7833 = vpack.c.b16 %v5911, %v5910
      %v7834 = vpack.c.b16 %v5913, %v5912
      %v7835 = vpack.c.b16 %v5915, %v5914
      %v7836 = vpack.c.b16 %v5917, %v5916
      %v7837 = vpack.c.b16 %v5919, %v5918
      %v7838 = vpack.c.b16 %v5921, %v5920
      %v7839 = vpack.c.b16 %v5923, %v5922
      %v7840 = vpack.c.b16 %v5925, %v5924
      %v7841 = vpack.c.b16 %v5927, %v5926
      %v7842 = vpack.c.b16 %v5929, %v5928
      %v7843 = vpack.c.b16 %v5931, %v5930
      %v7844 = vpack.c.b16 %v5933, %v5932
      %v7845 = vpack.c.b16 %v5935, %v5934
      %v7846 = vpack.c.b16 %v5937, %v5936
      %v7847 = vpack.c.b16 %v5939, %v5938
      %v7848 = vpack.c.b16 %v5941, %v5940
      %v7849 = vpack.c.b16 %v5943, %v5942
      %v7850 = vpack.c.b16 %v5945, %v5944
      %v7851 = vpack.c.b16 %v5947, %v5946
      %v7852 = vpack.c.b16 %v5949, %v5948
      %v7853 = vpack.c.b16 %v5951, %v5950
      %v7854 = vpack.c.b16 %v5953, %v5952
      %v7855 = vpack.c.b16 %v5955, %v5954
      %v7856 = vpack.c.b16 %v5957, %v5956
      %v7857 = vpack.c.b16 %v5959, %v5958
      %v7858 = vpack.c.b16 %v5961, %v5960
      %v7859 = vpack.c.b16 %v5963, %v5962
      %v7860 = vpack.c.b16 %v5965, %v5964
      %v7861 = vpack.c.b16 %v5967, %v5966
      %v7862 = vpack.c.b16 %v5969, %v5968
      %v7863 = vpack.c.b16 %v5971, %v5970
      %v7864 = vpack.c.b16 %v5973, %v5972
      %v7865 = vpack.c.b16 %v5975, %v5974
      %v7866 = vpack.c.b16 %v5977, %v5976
      %v7867 = vpack.c.b16 %v5979, %v5978
      %v7868 = vpack.c.b16 %v5981, %v5980
      %v7869 = vpack.c.b16 %v5983, %v5982
      %v7870 = vpack.c.b16 %v5985, %v5984
      %v7871 = vpack.c.b16 %v5987, %v5986
      %v7872 = vpack.c.b16 %v5989, %v5988
      %v7873 = vpack.c.b16 %v5991, %v5990
      %v7874 = vpack.c.b16 %v5993, %v5992
      %v7875 = vpack.c.b16 %v5995, %v5994
      %v7876 = vpack.c.b16 %v5997, %v5996
      %v7877 = vpack.c.b16 %v5999, %v5998
      %v7878 = vpack.c.b16 %v6001, %v6000
      %v7879 = vpack.c.b16 %v6003, %v6002
      %v7880 = vpack.c.b16 %v6005, %v6004
      %v7881 = vpack.c.b16 %v6007, %v6006
      %v7882 = vpack.c.b16 %v6009, %v6008
      %v7883 = vpack.c.b16 %v6011, %v6010
      %v7884 = vpack.c.b16 %v6013, %v6012
      %v7885 = vpack.c.b16 %v6015, %v6014
      %v7886 = vpack.c.b16 %v6017, %v6016
      %v7887 = vpack.c.b16 %v6019, %v6018
      %v7888 = vpack.c.b16 %v6021, %v6020
      %v7889 = vpack.c.b16 %v6023, %v6022
      %v7890 = vpack.c.b16 %v6025, %v6024
      %v7891 = vpack.c.b16 %v6027, %v6026
      %v7892 = vpack.c.b16 %v6029, %v6028
      %v7893 = vpack.c.b16 %v6031, %v6030
      %v7894 = vpack.c.b16 %v6033, %v6032
      %v7895 = vpack.c.b16 %v6035, %v6034
      %v7896 = vpack.c.b16 %v6037, %v6036
      %v7897 = vpack.c.b16 %v6039, %v6038
      %v7898 = vpack.c.b16 %v6041, %v6040
      %v7899 = vpack.c.b16 %v6043, %v6042
      %v7900 = vpack.c.b16 %v6045, %v6044
      %v7901 = vpack.c.b16 %v6047, %v6046
      %v7902 = vpack.c.b16 %v6049, %v6048
      %v7903 = vpack.c.b16 %v6051, %v6050
      %v7904 = vpack.c.b16 %v6053, %v6052
      %v7905 = vpack.c.b16 %v6055, %v6054
      %v7906 = vpack.c.b16 %v6057, %v6056
      %v7907 = vpack.c.b16 %v6059, %v6058
      %v7908 = vpack.c.b16 %v6061, %v6060
      %v7909 = vpack.c.b16 %v6063, %v6062
      %v7910 = vpack.c.b16 %v6065, %v6064
      %v7911 = vpack.c.b16 %v6067, %v6066
      %v7912 = vpack.c.b16 %v6069, %v6068
      %v7913 = vpack.c.b16 %v6071, %v6070
      %v7914 = vpack.c.b16 %v6073, %v6072
      %v7915 = vpack.c.b16 %v6075, %v6074
      %v7916 = vpack.c.b16 %v6077, %v6076
      %v7917 = vpack.c.b16 %v6079, %v6078
      %v7918 = vpack.c.b16 %v6081, %v6080
      %v7919 = vpack.c.b16 %v6083, %v6082
      %v7920 = vpack.c.b16 %v6085, %v6084
      %v7921 = vpack.c.b16 %v6087, %v6086
      %v7922 = vpack.c.b16 %v6089, %v6088
      %v7923 = vpack.c.b16 %v6091, %v6090
      %v7924 = vpack.c.b16 %v6093, %v6092
      %v7925 = vpack.c.b16 %v6095, %v6094
      %v7926 = vpack.c.b16 %v6097, %v6096
      %v7927 = vpack.c.b16 %v6099, %v6098
      %v7928 = vpack.c.b16 %v6101, %v6100
      %v7929 = vpack.c.b16 %v6103, %v6102
      %v7930 = vpack.c.b16 %v6105, %v6104
      %v7931 = vpack.c.b16 %v6107, %v6106
      %v7932 = vpack.c.b16 %v6109, %v6108
      %v7933 = vpack.c.b16 %v6111, %v6110
      %v7934 = vpack.c.b16 %v6113, %v6112
      %v7935 = vpack.c.b16 %v6115, %v6114
      %v7936 = vpack.c.b16 %v6117, %v6116
      %v7937 = vpack.c.b16 %v6119, %v6118
      %v7938 = vpack.c.b16 %v6121, %v6120
      %v7939 = vpack.c.b16 %v6123, %v6122
      %v7940 = vpack.c.b16 %v6125, %v6124
      %v7941 = vpack.c.b16 %v6127, %v6126
      %v7942 = vpack.c.b16 %v6129, %v6128
      %v7943 = vpack.c.b16 %v6131, %v6130
      %v7944 = vpack.c.b16 %v6133, %v6132
      %v7945 = vpack.c.b16 %v6135, %v6134
      %v7946 = vpack.c.b16 %v6137, %v6136
      %v7947 = vpack.c.b16 %v6139, %v6138
      %v7948 = vpack.c.b16 %v6141, %v6140
      %v7949 = vpack.c.b16 %v6143, %v6142
      %v7950 = vpack.c.b16 %v6145, %v6144
      %v7951 = vpack.c.b16 %v6147, %v6146
      %v7952 = vpack.c.b16 %v6149, %v6148
      %v7953 = vpack.c.b16 %v6151, %v6150
      %v7954 = vpack.c.b16 %v6153, %v6152
      %v7955 = vpack.c.b16 %v6155, %v6154
      %v7956 = vpack.c.b16 %v6157, %v6156
      %v7957 = vpack.c.b16 %v6159, %v6158
      %v7958 = vpack.c.b16 %v6161, %v6160
      %v7959 = vpack.c.b16 %v6163, %v6162
      %v7960 = vpack.c.b16 %v6165, %v6164
      %v7961 = vpack.c.b16 %v6167, %v6166
      %v7962 = vpack.c.b16 %v6169, %v6168
      %v7963 = vpack.c.b16 %v6171, %v6170
      %v7964 = vpack.c.b16 %v6173, %v6172
      %v7965 = vpack.c.b16 %v6175, %v6174
      %v7966 = vpack.c.b16 %v6177, %v6176
      %v7967 = vpack.c.b16 %v6179, %v6178
      %v7968 = vpack.c.b16 %v6181, %v6180
      %v7969 = vpack.c.b16 %v6183, %v6182
      %v7970 = vpack.c.b16 %v6185, %v6184
      %v7971 = vpack.c.b16 %v6187, %v6186
      %v7972 = vpack.c.b16 %v6189, %v6188
      %v7973 = vpack.c.b16 %v6191, %v6190
      %v7974 = vpack.c.b16 %v6193, %v6192
      %v7975 = vpack.c.b16 %v6195, %v6194
      %v7976 = vpack.c.b16 %v6197, %v6196
      %v7977 = vpack.c.b16 %v6199, %v6198
      %v7978 = vpack.c.b16 %v6201, %v6200
      %v7979 = vpack.c.b16 %v6203, %v6202
      %v7980 = vpack.c.b16 %v6205, %v6204
      %v7981 = vpack.c.b16 %v6207, %v6206
      %v7982 = vpack.c.b16 %v6209, %v6208
      %v7983 = vpack.c.b16 %v6211, %v6210
      %v7984 = vpack.c.b16 %v6213, %v6212
      %v7985 = vpack.c.b16 %v6215, %v6214
      %v7986 = vpack.c.b16 %v6217, %v6216
      %v7987 = vpack.c.b16 %v6219, %v6218
      %v7988 = vpack.c.b16 %v6221, %v6220
      %v7989 = vpack.c.b16 %v6223, %v6222
      %v7990 = vpack.c.b16 %v6225, %v6224
      %v7991 = vpack.c.b16 %v6227, %v6226
      %v7992 = vpack.c.b16 %v6229, %v6228
      %v7993 = vpack.c.b16 %v6231, %v6230
      %v7994 = vpack.c.b16 %v6233, %v6232
      %v7995 = vpack.c.b16 %v6235, %v6234
      %v7996 = vpack.c.b16 %v6237, %v6236
      %v7997 = vpack.c.b16 %v6239, %v6238
      %v7998 = vpack.c.b16 %v6241, %v6240
      %v7999 = vpack.c.b16 %v6243, %v6242
      %v8000 = vpack.c.b16 %v6245, %v6244
      %v8001 = vpack.c.b16 %v6247, %v6246
      %v8002 = vpack.c.b16 %v6249, %v6248
      %v8003 = vpack.c.b16 %v6251, %v6250
      %v8004 = vpack.c.b16 %v6253, %v6252
      %v8005 = vpack.c.b16 %v6255, %v6254
      %v8006 = vpack.c.b16 %v6257, %v6256
      %v8007 = vpack.c.b16 %v6259, %v6258
      %v8008 = vpack.c.b16 %v6261, %v6260
      %v8009 = vpack.c.b16 %v6263, %v6262
      %v8010 = vpack.c.b16 %v6265, %v6264
      %v8011 = vpack.c.b16 %v6267, %v6266
      %v8012 = vpack.c.b16 %v6269, %v6268
      %v8013 = vpack.c.b16 %v6271, %v6270
      %v8014 = vpack.c.b16 %v6273, %v6272
      %v8015 = vpack.c.b16 %v6275, %v6274
      %v8016 = vpack.c.b16 %v6277, %v6276
      %v8017 = vpack.c.b16 %v6279, %v6278
      %v8018 = vpack.c.b16 %v6281, %v6280
      %v8019 = vpack.c.b16 %v6283, %v6282
      %v8020 = vpack.c.b16 %v6285, %v6284
      %v8021 = vpack.c.b16 %v6287, %v6286
      %v8022 = vpack.c.b16 %v6289, %v6288
      %v8023 = vpack.c.b16 %v6291, %v6290
      %v8024 = vpack.c.b16 %v6293, %v6292
      %v8025 = vpack.c.b16 %v6295, %v6294
      %v8026 = vpack.c.b16 %v6297, %v6296
      %v8027 = vpack.c.b16 %v6299, %v6298
      %v8028 = vpack.c.b16 %v6301, %v6300
      %v8029 = vpack.c.b16 %v6303, %v6302
      %v8030 = vpack.c.b16 %v6305, %v6304
      %v8031 = vpack.c.b16 %v6307, %v6306
      %v8032 = vpack.c.b16 %v6309, %v6308
      %v8033 = vpack.c.b16 %v6311, %v6310
      %v8034 = vpack.c.b16 %v6313, %v6312
      %v8035 = vpack.c.b16 %v6315, %v6314
      %v8036 = vpack.c.b16 %v6317, %v6316
      %v8037 = vpack.c.b16 %v6319, %v6318
      %v8038 = vpack.c.b16 %v6321, %v6320
      %v8039 = vpack.c.b16 %v6323, %v6322
      %v8040 = vpack.c.b16 %v6325, %v6324
      %v8041 = vpack.c.b16 %v6327, %v6326
      %v8042 = vpack.c.b16 %v6329, %v6328
      %v8043 = vpack.c.b16 %v6331, %v6330
      %v8044 = vpack.c.b16 %v6333, %v6332
      %v8045 = vpack.c.b16 %v6335, %v6334
      %v8046 = vpack.c.b16 %v6337, %v6336
      %v8047 = vpack.c.b16 %v6339, %v6338
      %v8048 = vpack.c.b16 %v6341, %v6340
      %v8049 = vpack.c.b16 %v6343, %v6342
      %v8050 = vpack.c.b16 %v6345, %v6344
      %v8051 = vpack.c.b16 %v6347, %v6346
      %v8052 = vpack.c.b16 %v6349, %v6348
      %v8053 = vpack.c.b16 %v6351, %v6350
      %v8054 = vpack.c.b16 %v6353, %v6352
      %v8055 = vpack.c.b16 %v6355, %v6354
      %v8056 = vpack.c.b16 %v6357, %v6356
      %v8057 = vpack.c.b16 %v6359, %v6358
      %v8058 = vpack.c.b16 %v6361, %v6360
      %v8059 = vpack.c.b16 %v6363, %v6362
      %v8060 = vpack.c.b16 %v6365, %v6364
      %v8061 = vpack.c.b16 %v6367, %v6366
      %v8062 = vpack.c.b16 %v6369, %v6368
      %v8063 = vpack.c.b16 %v6371, %v6370
      %v8064 = vpack.c.b16 %v6373, %v6372
      %v8065 = vpack.c.b16 %v6375, %v6374
      %v8066 = vpack.c.b16 %v6377, %v6376
      %v8067 = vpack.c.b16 %v6379, %v6378
      %v8068 = vpack.c.b16 %v6381, %v6380
      %v8069 = vpack.c.b16 %v6383, %v6382
      %v8070 = vpack.c.b16 %v6385, %v6384
      %v8071 = vpack.c.b16 %v6387, %v6386
      %v8072 = vpack.c.b16 %v6389, %v6388
      %v8073 = vpack.c.b16 %v6391, %v6390
      %v8074 = vpack.c.b16 %v6393, %v6392
      %v8075 = vpack.c.b16 %v6395, %v6394
      %v8076 = vpack.c.b16 %v6397, %v6396
      %v8077 = vpack.c.b16 %v6399, %v6398
      %v8078 = vpack.c.b16 %v6401, %v6400
      %v8079 = vpack.c.b16 %v6403, %v6402
      %v8080 = vpack.c.b16 %v6405, %v6404
      %v8081 = vpack.c.b16 %v6407, %v6406
      %v8082 = vpack.c.b16 %v6409, %v6408
      %v8083 = vpack.c.b16 %v6411, %v6410
      %v8084 = vpack.c.b16 %v6413, %v6412
      %v8085 = vpack.c.b16 %v6415, %v6414
      %v8086 = vpack.c.b16 %v6417, %v6416
      %v8087 = vpack.c.b16 %v6419, %v6418
      %v8088 = vpack.c.b16 %v6421, %v6420
      %v8089 = vpack.c.b16 %v6423, %v6422
      %v8090 = vpack.c.b16 %v6425, %v6424
      %v8091 = vpack.c.b16 %v6427, %v6426
      %v8092 = vpack.c.b16 %v6429, %v6428
      %v8093 = vpack.c.b16 %v6431, %v6430
      %v8094 = vpack.c.b16 %v6433, %v6432
      %v8095 = vpack.c.b16 %v6435, %v6434
      %v8096 = vpack.c.b16 %v6437, %v6436
      %v8097 = vpack.c.b16 %v6439, %v6438
      %v8098 = vpack.c.b16 %v6441, %v6440
      %v8099 = vpack.c.b16 %v6443, %v6442
      %v8100 = vpack.c.b16 %v6445, %v6444
      %v8101 = vpack.c.b16 %v6447, %v6446
      %v8102 = vpack.c.b16 %v6449, %v6448
      %v8103 = vpack.c.b16 %v6451, %v6450
      %v8104 = vpack.c.b16 %v6453, %v6452
      %v8105 = vpack.c.b16 %v6455, %v6454
      %v8106 = vpack.c.b16 %v6457, %v6456
      %v8107 = vpack.c.b16 %v6459, %v6458
      %v8108 = vpack.c.b16 %v6461, %v6460
      %v8109 = vpack.c.b16 %v6463, %v6462
      %v8110 = vpack.c.b16 %v6465, %v6464
      %v8111 = vpack.c.b16 %v6467, %v6466
      %v8112 = vpack.c.b16 %v6469, %v6468
      %v8113 = vpack.c.b16 %v6471, %v6470
      %v8114 = vpack.c.b16 %v6473, %v6472
      %v8115 = vpack.c.b16 %v6475, %v6474
      %v8116 = vpack.c.b16 %v6477, %v6476
      %v8117 = vpack.c.b16 %v6479, %v6478
      %v8118 = vpack.c.b16 %v6481, %v6480
      %v8119 = vpack.c.b16 %v6483, %v6482
      %v8120 = vpack.c.b16 %v6485, %v6484
      %v8121 = vpack.c.b16 %v6487, %v6486
      %v8122 = vpack.c.b16 %v6489, %v6488
      %v8123 = vpack.c.b16 %v6491, %v6490
      %v8124 = vpack.c.b16 %v6493, %v6492
      %v8125 = vpack.c.b16 %v6495, %v6494
      %v8126 = vpack.c.b16 %v6497, %v6496
      %v8127 = vpack.c.b16 %v6499, %v6498
      %v8128 = vpack.c.b16 %v6501, %v6500
      %v8129 = vpack.c.b16 %v6503, %v6502
      %v8130 = vpack.c.b16 %v6505, %v6504
      %v8131 = vpack.c.b16 %v6507, %v6506
      %v8132 = vpack.c.b16 %v6509, %v6508
      %v8133 = vpack.c.b16 %v6511, %v6510
      %v8134 = vpack.c.b16 %v6513, %v6512
      %v8135 = vpack.c.b16 %v6515, %v6514
      %v8136 = vpack.c.b16 %v6517, %v6516
      %v8137 = vpack.c.b16 %v6519, %v6518
      %v8138 = vpack.c.b16 %v6521, %v6520
      %v8139 = vpack.c.b16 %v6523, %v6522
      %v8140 = vpack.c.b16 %v6525, %v6524
      %v8141 = vpack.c.b16 %v6527, %v6526
      %v8142 = vpack.c.b16 %v6529, %v6528
      %v8143 = vpack.c.b16 %v6531, %v6530
      %v8144 = vpack.c.b16 %v6533, %v6532
      %v8145 = vpack.c.b16 %v6535, %v6534
      %v8146 = vpack.c.b16 %v6537, %v6536
      %v8147 = vpack.c.b16 %v6539, %v6538
      %v8148 = vpack.c.b16 %v6541, %v6540
      %v8149 = vpack.c.b16 %v6543, %v6542
      %v8150 = vpack.c.b16 %v6545, %v6544
      %v8151 = vpack.c.b16 %v6547, %v6546
      %v8152 = vpack.c.b16 %v6549, %v6548
      %v8153 = vpack.c.b16 %v6551, %v6550
      %v8154 = vpack.c.b16 %v6553, %v6552
      %v8155 = vpack.c.b16 %v6555, %v6554
      %v8156 = vpack.c.b16 %v6557, %v6556
      %v8157 = vpack.c.b16 %v6559, %v6558
      %v8158 = vpack.c.b16 %v6561, %v6560
      %v8159 = vpack.c.b16 %v6563, %v6562
      %v8160 = vpack.c.b16 %v6565, %v6564
      %v8161 = vpack.c.b16 %v6567, %v6566
      %v8162 = vpack.c.b16 %v6569, %v6568
      %v8163 = vpack.c.b16 %v6571, %v6570
      %v8164 = vpack.c.b16 %v6573, %v6572
      %v8165 = vpack.c.b16 %v6575, %v6574
      %v8166 = vpack.c.b16 %v6577, %v6576
      %v8167 = vpack.c.b16 %v6579, %v6578
      %v8168 = vpack.c.b16 %v6581, %v6580
      %v8169 = vpack.c.b16 %v6583, %v6582
      %v8170 = vpack.c.b16 %v6585, %v6584
      %v8171 = vpack.c.b16 %v6587, %v6586
      %v8172 = vpack.c.b16 %v6589, %v6588
      %v8173 = vpack.c.b16 %v6591, %v6590
      %v8174 = vpack.c.b16 %v6593, %v6592
      %v8175 = vpack.c.b16 %v6595, %v6594
      %v8176 = vpack.c.b16 %v6597, %v6596
      %v8177 = vpack.c.b16 %v6599, %v6598
      %v8178 = vpack.c.b16 %v6601, %v6600
      %v8179 = vpack.c.b16 %v6603, %v6602
      %v8180 = vpack.c.b16 %v6605, %v6604
      %v8181 = vpack.c.b16 %v6607, %v6606
      %v8182 = vpack.c.b16 %v6609, %v6608
      %v8183 = vpack.c.b16 %v6611, %v6610
      %v8184 = vpack.c.b16 %v6613, %v6612
      %v8185 = vpack.c.b16 %v6615, %v6614
      %v8186 = vpack.c.b16 %v6617, %v6616
      %v8187 = vpack.c.b16 %v6619, %v6618
      %v8188 = vpack.c.b16 %v6621, %v6620
      %v8189 = vpack.c.b16 %v6623, %v6622
      %v8190 = vpack.c.b16 %v6625, %v6624
      %v8191 = vpack.c.b16 %v6627, %v6626
      %v8192 = vpack.c.b16 %v6629, %v6628
      %v8193 = vpack.c.b16 %v6631, %v6630
      %v8194 = vpack.c.b16 %v6633, %v6632
      %v8195 = vpack.c.b16 %v6635, %v6634
      %v8196 = vpack.c.b16 %v6637, %v6636
      %v8197 = vpack.c.b16 %v6639, %v6638
      %v8198 = vpack.c.b16 %v6641, %v6640
      %v8199 = vpack.c.b16 %v6643, %v6642
      %v8200 = vpack.c.b16 %v6645, %v6644
      %v8201 = vpack.c.b16 %v6647, %v6646
      %v8202 = vpack.c.b16 %v6649, %v6648
      %v8203 = vpack.c.b16 %v6651, %v6650
      %v8204 = vpack.c.b16 %v6653, %v6652
      %v8205 = vpack.c.b16 %v6655, %v6654
      %v8206 = vpack.c.b16 %v6657, %v6656
      %v8207 = vpack.c.b16 %v6659, %v6658
      %v8208 = vpack.c.b16 %v6661, %v6660
      %v8209 = vpack.c.b16 %v6663, %v6662
      %v8210 = vpack.c.b16 %v6665, %v6664
      %v8211 = vpack.c.b16 %v6667, %v6666
      %v8212 = vpack.c.b16 %v6669, %v6668
      %v8213 = vpack.c.b16 %v6671, %v6670
      %v8214 = vpack.c.b16 %v6673, %v6672
      %v8215 = vpack.c.b16 %v6675, %v6674
      %v8216 = vpack.c.b16 %v6677, %v6676
      %v8217 = vpack.c.b16 %v6679, %v6678
      %v8218 = vpack.c.b16 %v6681, %v6680
      %v8219 = vpack.c.b16 %v6683, %v6682
      %v8220 = vpack.c.b16 %v6685, %v6684
      %v8221 = vpack.c.b16 %v6687, %v6686
      %v8222 = vpack.c.b16 %v6689, %v6688
      %v8223 = vpack.c.b16 %v6691, %v6690
      %v8224 = vpack.c.b16 %v6693, %v6692
      %v8225 = vpack.c.b16 %v6695, %v6694
      %v8226 = vpack.c.b16 %v6697, %v6696
      %v8227 = vpack.c.b16 %v6699, %v6698
      %v8228 = vpack.c.b16 %v6701, %v6700
      %v8229 = vpack.c.b16 %v6703, %v6702
      %v8230 = vpack.c.b16 %v6705, %v6704
      %v8231 = vpack.c.b16 %v6707, %v6706
      %v8232 = vpack.c.b16 %v6709, %v6708
      %v8233 = vpack.c.b16 %v6711, %v6710
      %v8234 = vpack.c.b16 %v6713, %v6712
      %v8235 = vpack.c.b16 %v6715, %v6714
      %v8236 = vpack.c.b16 %v6717, %v6716
      %v8237 = vpack.c.b16 %v6719, %v6718
      %v8238 = vpack.c.b16 %v6721, %v6720
      %v8239 = vpack.c.b16 %v6723, %v6722
      %v8240 = vpack.c.b16 %v6725, %v6724
      %v8241 = vpack.c.b16 %v6727, %v6726
      %v8242 = vpack.c.b16 %v6729, %v6728
      %v8243 = vpack.c.b16 %v6731, %v6730
      %v8244 = vpack.c.b16 %v6733, %v6732
      %v8245 = vpack.c.b16 %v6735, %v6734
      %v8246 = vpack.c.b16 %v6737, %v6736
      %v8247 = vpack.c.b16 %v6739, %v6738
      %v8248 = vpack.c.b16 %v6741, %v6740
      %v8249 = vpack.c.b16 %v6743, %v6742
      %v8250 = vpack.c.b16 %v6745, %v6744
      %v8251 = vpack.c.b16 %v6747, %v6746
      %v8252 = vpack.c.b16 %v6749, %v6748
      %v8253 = vpack.c.b16 %v6751, %v6750
      %v8254 = vpack.c.b16 %v6753, %v6752
      %v8255 = vpack.c.b16 %v6755, %v6754
      %v8256 = vpack.c.b16 %v6757, %v6756
      %v8257 = vpack.c.b16 %v6759, %v6758
      %v8258 = vpack.c.b16 %v6761, %v6760
      %v8259 = vpack.c.b16 %v6763, %v6762
      %v8260 = vpack.c.b16 %v6765, %v6764
      %v8261 = vpack.c.b16 %v6767, %v6766
      %v8262 = vpack.c.b16 %v6769, %v6768
      %v8263 = vpack.c.b16 %v6771, %v6770
      %v8264 = vpack.c.b16 %v6773, %v6772
      %v8265 = vpack.c.b16 %v6775, %v6774
      %v8266 = vpack.c.b16 %v6777, %v6776
      %v8267 = vpack.c.b16 %v6779, %v6778
      %v8268 = vpack.c.b16 %v6781, %v6780
      %v8269 = vpack.c.b16 %v6783, %v6782
      %v8270 = vpack.c.b16 %v6785, %v6784
      %v8271 = vpack.c.b16 %v6787, %v6786
      %v8272 = vpack.c.b16 %v6789, %v6788
      %v8273 = vpack.c.b16 %v6791, %v6790
      %v8274 = vpack.c.b16 %v6793, %v6792
      %v8275 = vpack.c.b16 %v6795, %v6794
      %v8276 = vpack.c.b16 %v6797, %v6796
      %v8277 = vpack.c.b16 %v6799, %v6798
      %v8278 = vpack.c.b16 %v6801, %v6800
      %v8279 = vpack.c.b16 %v6803, %v6802
      %v8280 = vpack.c.b16 %v6805, %v6804
      %v8281 = vpack.c.b16 %v6807, %v6806
      %v8282 = vpack.c.b16 %v6809, %v6808
      %v8283 = vpack.c.b16 %v6811, %v6810
      %v8284 = vpack.c.b16 %v6813, %v6812
      %v8285 = vpack.c.b16 %v6815, %v6814
      %v8286 = vpack.c.b16 %v6817, %v6816
      %v8287 = vpack.c.b16 %v6819, %v6818
      %v8288 = vpack.c.b16 %v6821, %v6820
      %v8289 = vpack.c.b16 %v6823, %v6822
      %v8290 = vpack.c.b16 %v6825, %v6824
      %v8291 = vpack.c.b16 %v6827, %v6826
      %v8292 = vpack.c.b16 %v6829, %v6828
      %v8293 = vpack.c.b16 %v6831, %v6830
      %v8294 = vpack.c.b16 %v6833, %v6832
      %v8295 = vpack.c.b16 %v6835, %v6834
      %v8296 = vpack.c.b16 %v6837, %v6836
      %v8297 = vpack.c.b16 %v6839, %v6838
      %v8298 = vpack.c.b16 %v6841, %v6840
      %v8299 = vpack.c.b16 %v6843, %v6842
      %v8300 = vpack.c.b16 %v6845, %v6844
      %v8301 = vpack.c.b16 %v6847, %v6846
      %v8302 = vpack.c.b16 %v6849, %v6848
      %v8303 = vpack.c.b16 %v6851, %v6850
      %v8304 = vpack.c.b16 %v6853, %v6852
      %v8305 = vpack.c.b16 %v6855, %v6854
      %v8306 = vpack.c.b16 %v6857, %v6856
      %v8307 = vpack.c.b16 %v6859, %v6858
      %v8308 = vpack.c.b16 %v6861, %v6860
      %v8309 = vpack.c.b16 %v6863, %v6862
      %v8310 = vpack.c.b16 %v6865, %v6864
      %v8311 = vpack.c.b16 %v6867, %v6866
      %v8312 = vpack.c.b16 %v6869, %v6868
      %v8313 = vpack.c.b16 %v6871, %v6870
      %v8314 = vpack.c.b16 %v6873, %v6872
      %v8315 = vpack.c.b16 %v6875, %v6874
      %v8316 = vpack.c.b16 %v6877, %v6876
      %v8317 = vpack.c.b16 %v6879, %v6878
      %v8318 = vpack.c.b16 %v6881, %v6880
      %v8319 = vpack.c.b16 %v6883, %v6882
      %v8320 = vpack.c.b16 %v6885, %v6884
      %v8321 = vpack.c.b16 %v6887, %v6886
      %v8322 = vpack.c.b16 %v6889, %v6888
      %v8323 = vpack.c.b16 %v6891, %v6890
      %v8324 = vpack.c.b16 %v6893, %v6892
      %v8325 = vpack.c.b16 %v6895, %v6894
      %v8326 = vpack.c.b16 %v6897, %v6896
      %v8327 = vpack.c.b16 %v6899, %v6898
      %v8328 = vpack.c.b16 %v6901, %v6900
      %v8329 = vpack.c.b16 %v6903, %v6902
      %v8330 = vpack.c.b16 %v6905, %v6904
      %v8331 = vpack.c.b16 %v6907, %v6906
      %v8332 = vpack.c.b16 %v6909, %v6908
      %v8333 = vpack.c.b16 %v6911, %v6910
      %v8334 = vpack.c.b16 %v6913, %v6912
      %v8335 = vpack.c.b16 %v6915, %v6914
      %v8336 = vpack.c.b16 %v6917, %v6916
      %v8337 = vpack.c.b16 %v6919, %v6918
      %v8338 = vpack.c.b16 %v6921, %v6920
      %v8339 = vpack.c.b16 %v6923, %v6922
      %v8340 = vpack.c.b16 %v6925, %v6924
      %v8341 = vpack.c.b16 %v6927, %v6926
      %v8342 = vpack.c.b16 %v6929, %v6928
      %v8343 = vpack.c.b16 %v6931, %v6930
      %v8344 = vpack.c.b16 %v6933, %v6932
      %v8345 = vpack.c.b16 %v6935, %v6934
      %v8346 = vpack.c.b16 %v6937, %v6936
      %v8347 = vpack.c.b16 %v6939, %v6938
      %v8348 = vpack.c.b16 %v6941, %v6940
      %v8349 = vpack.c.b16 %v6943, %v6942
      %v8350 = vpack.c.b16 %v6945, %v6944
      %v8351 = vpack.c.b16 %v6947, %v6946
      %v8352 = vpack.c.b16 %v6949, %v6948
      %v8353 = vpack.c.b16 %v6951, %v6950
      %v8354 = vpack.c.b16 %v6953, %v6952
      %v8355 = vpack.c.b16 %v6955, %v6954
      %v8356 = vpack.c.b16 %v6957, %v6956
      %v8357 = vpack.c.b16 %v6959, %v6958
      %v8358 = vpack.c.b16 %v6961, %v6960
      %v8359 = vpack.c.b16 %v6963, %v6962
      %v8360 = vpack.c.b16 %v6965, %v6964
      %v8361 = vpack.c.b16 %v6967, %v6966
      %v8362 = vpack.c.b16 %v6969, %v6968
      %v8363 = vpack.c.b16 %v6971, %v6970
      %v8364 = vpack.c.b16 %v6973, %v6972
      %v8365 = vpack.c.b16 %v6975, %v6974
      %v8366 = vpack.c.b16 %v6977, %v6976
      %v8367 = vpack.c.b16 %v6979, %v6978
      %v8368 = vpack.c.b16 %v6981, %v6980
      %v8369 = vpack.c.b16 %v6983, %v6982
      %v8370 = vpack.c.b16 %v6985, %v6984
      %v8371 = vpack.c.b16 %v6987, %v6986
      %v8372 = vpack.c.b16 %v6989, %v6988
      %v8373 = vpack.c.b16 %v6991, %v6990
      %v8374 = vpack.c.b16 %v6993, %v6992
      %v8375 = vpack.c.b16 %v6995, %v6994
      %v8376 = vpack.c.b16 %v6997, %v6996
      %v8377 = vpack.c.b16 %v6999, %v6998
      %v8378 = vpack.c.b16 %v7001, %v7000
      %v8379 = vpack.c.b16 %v7003, %v7002
      %v8380 = vpack.c.b16 %v7005, %v7004
      %v8381 = vpack.c.b16 %v7007, %v7006
      %v8382 = vpack.c.b16 %v7009, %v7008
      %v8383 = vpack.c.b16 %v7011, %v7010
      %v8384 = vpack.c.b16 %v7013, %v7012
      %v8385 = vpack.c.b16 %v7015, %v7014
      %v8386 = vpack.c.b16 %v7017, %v7016
      %v8387 = vpack.c.b16 %v7019, %v7018
      %v8388 = vpack.c.b16 %v7021, %v7020
      %v8389 = vpack.c.b16 %v7023, %v7022
      %v8390 = vpack.c.b16 %v7025, %v7024
      %v8391 = vpack.c.b16 %v7027, %v7026
      %v8392 = vpack.c.b16 %v7029, %v7028
      %v8393 = vpack.c.b16 %v7031, %v7030
      %v8394 = vpack.c.b16 %v7033, %v7032
      %v8395 = vpack.c.b16 %v7035, %v7034
      %v8396 = vpack.c.b16 %v7037, %v7036
      %v8397 = vpack.c.b16 %v7039, %v7038
      %v8398 = vpack.c.b16 %v7041, %v7040
      %v8399 = vpack.c.b16 %v7043, %v7042
      %v8400 = vpack.c.b16 %v7045, %v7044
      %v8401 = vpack.c.b16 %v7047, %v7046
      %v8402 = vpack.c.b16 %v7049, %v7048
      %v8403 = vpack.c.b16 %v7051, %v7050
      %v8404 = vpack.c.b16 %v7053, %v7052
      %v8405 = vpack.c.b16 %v7055, %v7054
      %v8406 = vpack.c.b16 %v7057, %v7056
      %v8407 = vpack.c.b16 %v7059, %v7058
      %v8408 = vpack.c.b16 %v7061, %v7060
      %v8409 = vpack.c.b16 %v7063, %v7062
      %v8410 = vpack.c.b16 %v7065, %v7064
      %v8411 = vpack.c.b16 %v7067, %v7066
      %v8412 = vpack.c.b16 %v7069, %v7068
      %v8413 = vpack.c.b16 %v7071, %v7070
      %v8414 = vpack.c.b16 %v7073, %v7072
      %v8415 = vpack.c.b16 %v7075, %v7074
      %v8416 = vpack.c.b16 %v7077, %v7076
      %v8417 = vpack.c.b16 %v7079, %v7078
      %v8418 = vpack.c.b16 %v7081, %v7080
      %v8419 = vpack.c.b16 %v7083, %v7082
      %v8420 = vpack.c.b16 %v7085, %v7084
      %v8421 = vpack.c.b16 %v7087, %v7086
      %v8422 = vpack.c.b16 %v7089, %v7088
      %v8423 = vpack.c.b16 %v7091, %v7090
      %v8424 = vpack.c.b16 %v7093, %v7092
      %v8425 = vpack.c.b16 %v7095, %v7094
      %v8426 = vpack.c.b16 %v7097, %v7096
      %v8427 = vpack.c.b16 %v7099, %v7098
      %v8428 = vpack.c.b16 %v7101, %v7100
      %v8429 = vpack.c.b16 %v7103, %v7102
      %v8430 = vpack.c.b16 %v7105, %v7104
      %v8431 = vpack.c.b16 %v7107, %v7106
      %v8432 = vpack.c.b16 %v7109, %v7108
      %v8433 = vpack.c.b16 %v7111, %v7110
      %v8434 = vpack.c.b16 %v7113, %v7112
      %v8435 = vpack.c.b16 %v7115, %v7114
      %v8436 = vpack.c.b16 %v7117, %v7116
      %v8437 = vpack.c.b16 %v7119, %v7118
      %v8438 = vpack.c.b16 %v7121, %v7120
      %v8439 = vpack.c.b16 %v7123, %v7122
      %v8440 = vpack.c.b16 %v7125, %v7124
      %v8441 = vpack.c.b16 %v7127, %v7126
      %v8442 = vpack.c.b16 %v7129, %v7128
      %v8443 = vpack.c.b16 %v7131, %v7130
      %v8444 = vpack.c.b16 %v7133, %v7132
      %v8445 = vpack.c.b16 %v7135, %v7134
      %v8446 = vpack.c.b16 %v7137, %v7136
      %v8447 = vpack.c.b16 %v7139, %v7138
      %v8448 = vpack.c.b16 %v7141, %v7140
      %v8449 = vpack.c.b16 %v7143, %v7142
      %v8450 = vpack.c.b16 %v7145, %v7144
      %v8451 = vpack.c.b16 %v7147, %v7146
      %v8452 = vpack.c.b16 %v7149, %v7148
      %v8453 = vpack.c.b16 %v7151, %v7150
      %v8454 = vpack.c.b16 %v7153, %v7152
      %v8455 = vpack.c.b16 %v7155, %v7154
      %v8456 = vpack.c.b16 %v7157, %v7156
      %v8457 = vpack.c.b16 %v7159, %v7158
      %v8458 = vpack.c.b16 %v7161, %v7160
      %v8459 = vpack.c.b16 %v7163, %v7162
      %v8460 = vpack.c.b16 %v7165, %v7164
      %v8461 = vpack.c.b16 %v7167, %v7166
      %v8462 = vpack.c.b16 %v7169, %v7168
      %v8463 = vpack.c.b16 %v7171, %v7170
      %v8464 = vpack.c.b16 %v7173, %v7172
      %v8465 = vpack.c.b16 %v7175, %v7174
      %v8466 = vpack.c.b16 %v7177, %v7176
      %v8467 = vpack.c.b16 %v7179, %v7178
      %v8468 = vpack.c.b16 %v7181, %v7180
      %v8469 = vpack.c.b16 %v7183, %v7182
      %v8470 = vpack.c.b16 %v7185, %v7184
      %v8471 = vpack.c.b16 %v7187, %v7186
      %v8472 = vpack.c.b16 %v7189, %v7188
      %v8473 = vpack.c.b16 %v7191, %v7190
      %v8474 = vpack.c.b16 %v7193, %v7192
      %v8475 = vpack.c.b16 %v7195, %v7194
      %v8476 = vpack.c.b16 %v7197, %v7196
      %v8477 = vpack.c.b16 %v7199, %v7198
      %v8478 = vpack.c.b16 %v7201, %v7200
      %v8479 = vpack.c.b16 %v7203, %v7202
      %v8480 = vpack.c.b16 %v7205, %v7204
      %v8481 = vpack.c.b16 %v7207, %v7206
      %v8482 = vpack.c.b16 %v7209, %v7208
      %v8483 = vpack.c.b16 %v7211, %v7210
      %v8484 = vpack.c.b16 %v7213, %v7212
      %v8485 = vpack.c.b16 %v7215, %v7214
      %v8486 = vpack.c.b16 %v7217, %v7216
      %v8487 = vpack.c.b16 %v7219, %v7218
      %v8488 = vpack.c.b16 %v7221, %v7220
      %v8489 = vpack.c.b16 %v7223, %v7222
      %v8490 = vpack.c.b16 %v7225, %v7224
      %v8491 = vpack.c.b16 %v7227, %v7226
      %v8492 = vpack.c.b16 %v7229, %v7228
      %v8493 = vpack.c.b16 %v7231, %v7230
      %v8494 = vpack.c.b16 %v7233, %v7232
      %v8495 = vpack.c.b16 %v7235, %v7234
      %v8496 = vpack.c.b16 %v7237, %v7236
      %v8497 = vpack.c.b16 %v7239, %v7238
      %v8498 = vpack.c.b16 %v7241, %v7240
      %v8499 = vpack.c.b16 %v7243, %v7242
      %v8500 = vpack.c.b16 %v7245, %v7244
      %v8501 = vpack.c.b16 %v7247, %v7246
      %v8502 = vpack.c.b16 %v7249, %v7248
      %v8503 = vpack.c.b16 %v7251, %v7250
      %v8504 = vpack.c.b16 %v7253, %v7252
      %v8505 = vpack.c.b16 %v7255, %v7254
      %v8506 = vpack.c.b16 %v7257, %v7256
      %v8507 = vpack.c.b16 %v7259, %v7258
      %v8508 = vpack.c.b16 %v7261, %v7260
      %v8509 = vpack.c.b16 %v7263, %v7262
      %v8510 = vpack.c.b16 %v7265, %v7264
      %v8511 = vpack.c.b16 %v7267, %v7266
      %v8512 = vpack.c.b16 %v7269, %v7268
      %v8513 = vpack.c.b16 %v7271, %v7270
      %v8514 = vpack.c.b16 %v7273, %v7272
      %v8515 = vpack.c.b16 %v7275, %v7274
      %v8516 = vpack.c.b16 %v7277, %v7276
      %v8517 = vpack.c.b16 %v7279, %v7278
      %v8518 = vpack.c.b16 %v7281, %v7280
      %v8519 = vpack.c.b16 %v7283, %v7282
      %v8520 = vpack.c.b16 %v7285, %v7284
      %v8521 = vpack.c.b16 %v7287, %v7286
      %v8522 = vpack.c.b16 %v7289, %v7288
      %v8523 = vpack.c.b16 %v7291, %v7290
      %v8524 = vpack.c.b16 %v7293, %v7292
      %v8525 = vpack.c.b16 %v7295, %v7294
      %v8526 = vpack.c.b16 %v7297, %v7296
      %v8527 = vpack.c.b16 %v7299, %v7298
      %v8528 = vpack.c.b16 %v7301, %v7300
      %v8529 = vpack.c.b16 %v7303, %v7302
      %v8530 = vpack.c.b16 %v7305, %v7304
      %v8531 = vpack.c.b16 %v7307, %v7306
      %v8532 = vpack.c.b16 %v7309, %v7308
      %v8533 = vpack.c.b16 %v7311, %v7310
      %v8534 = vpack.c.b16 %v7313, %v7312
      %v8535 = vpack.c.b16 %v7315, %v7314
      %v8536 = vpack.c.b16 %v7317, %v7316
      %v8537 = vpack.c.b16 %v7319, %v7318
      %v8538 = vpack.c.b16 %v7321, %v7320
      %v8539 = vpack.c.b16 %v7323, %v7322
      %v8540 = vpack.c.b16 %v7325, %v7324
      %v8541 = vpack.c.b16 %v7327, %v7326
      %v8542 = vpack.c.b16 %v7329, %v7328
      %v8543 = vpack.c.b16 %v7331, %v7330
      %v8544 = vpack.c.b16 %v7333, %v7332
      %v8545 = vpack.c.b16 %v7335, %v7334
      %v8546 = vpack.c.b16 %v7337, %v7336
      %v8547 = vpack.c.b16 %v7339, %v7338
      %v8548 = vpack.c.b16 %v7341, %v7340
      %v8549 = vpack.c.b16 %v7343, %v7342
      %v8550 = vpack.c.b16 %v7345, %v7344
      %v8551 = vpack.c.b16 %v7347, %v7346
      %v8552 = vpack.c.b16 %v7349, %v7348
      %v8553 = vpack.c.b16 %v7351, %v7350
      %v8554 = vpack.c.b16 %v7353, %v7352
      %v8555 = vpack.c.b16 %v7355, %v7354
      %v8556 = vpack.c.b16 %v7357, %v7356
      %v8557 = vpack.c.b16 %v7359, %v7358
      %v8558 = vpack.c.b16 %v7361, %v7360
      %v8559 = vpack.c.b16 %v7363, %v7362
      %v8560 = vpack.c.b16 %v7365, %v7364
      %v8561 = vpack.c.b16 %v7367, %v7366
      %v8562 = vpack.c.b16 %v7369, %v7368
      %v8563 = vpack.c.b16 %v7371, %v7370
      %v8564 = vpack.c.b16 %v7373, %v7372
      %v8565 = vpack.c.b16 %v7375, %v7374
      %v8566 = vpack.c.b16 %v7377, %v7376
      %v8567 = vpack.c.b16 %v7379, %v7378
      %v8568 = vpack.c.b16 %v7381, %v7380
      %v8569 = vpack.c.b16 %v7383, %v7382
      %v8570 = vpack.c.b16 %v7385, %v7384
      %v8571 = vpack.c.b16 %v7387, %v7386
      %v8572 = vpack.c.b16 %v7389, %v7388
      %v8573 = vpack.c.b16 %v7391, %v7390
      %v8574 = vpack.c.b16 %v7393, %v7392
      %v8575 = vpack.c.b16 %v7395, %v7394
      %v8576 = vpack.c.b16 %v7397, %v7396
      %v8577 = vpack.c.b16 %v7399, %v7398
      %v8578 = vpack.c.b16 %v7401, %v7400
      %v8579 = vpack.c.b16 %v7403, %v7402
      %v8580 = vpack.c.b16 %v7405, %v7404
      %v8581 = vpack.c.b16 %v7407, %v7406
      %v8582 = vpack.c.b16 %v7409, %v7408
      %v8583 = vpack.c.b16 %v7411, %v7410
      %v8584 = vpack.c.b16 %v7413, %v7412
      %v8585 = vpack.c.b16 %v7415, %v7414
      %v8586 = vpack.c.b16 %v7417, %v7416
      %v8587 = vpack.c.b16 %v7419, %v7418
      %v8588 = vpack.c.b16 %v7421, %v7420
      %v8589 = vpack.c.b16 %v7423, %v7422
      %v8590 = vpack.c.b16 %v7425, %v7424
      %v8591 = vpack.c.b16 %v7427, %v7426
      %v8592 = vpack.c.b16 %v7429, %v7428
      %v8593 = vpack.c.b16 %v7431, %v7430
      %v8594 = vpack.c.b16 %v7433, %v7432
      %v8595 = vpack.c.b16 %v7435, %v7434
      %v8596 = vpack.c.b16 %v7437, %v7436
      %v8597 = vpack.c.b16 %v7439, %v7438
      %v8598 = vpack.c.b16 %v7441, %v7440
      %v8599 = vpack.c.b16 %v7443, %v7442
      %v8600 = vpack.c.b16 %v7445, %v7444
      %v8601 = vpack.c.b16 %v7447, %v7446
      %v8602 = vpack.c.b16 %v7449, %v7448
      %v8603 = vpack.c.b16 %v7451, %v7450
      %v8604 = vpack.c.b16 %v7453, %v7452
      %v8605 = vpack.c.b16 %v7455, %v7454
      %v8606 = vpack.c.b16 %v7457, %v7456
      %v8607 = vpack.c.b16 %v7459, %v7458
      %v8608 = vpack.c.b16 %v7461, %v7460
      %v8609 = vpack.c.b16 %v7463, %v7462
      %v8610 = vpack.c.b16 %v7465, %v7464
      %v8611 = vpack.c.b16 %v7467, %v7466
      %v8612 = vpack.c.b16 %v7469, %v7468
      %v8613 = vpack.c.b16 %v7471, %v7470
      %v8614 = vpack.c.b16 %v7473, %v7472
      %v8615 = vpack.c.b16 %v7475, %v7474
      %v8616 = vpack.c.b16 %v7477, %v7476
      %v8617 = vpack.c.b16 %v7479, %v7478
      %v8618 = vpack.c.b16 %v7481, %v7480
      %v8619 = vpack.c.b16 %v7483, %v7482
      %v8620 = vpack.c.b16 %v7485, %v7484
      %v8621 = vpack.c.b16 %v7487, %v7486
      %v8622 = vpack.c.b16 %v7489, %v7488
      %v8623 = vpack.c.b16 %v7491, %v7490
      %v8624 = vpack.c.b16 %v7493, %v7492
      %v8625 = vpack.c.b16 %v7495, %v7494
      %v8626 = vpack.c.b16 %v7497, %v7496
      %v8627 = vpack.c.b16 %v7499, %v7498
      %v8628 = vpack.c.b16 %v7501, %v7500
      %v8629 = vpack.c.b16 %v7503, %v7502
      %v8630 = vpack.c.b16 %v7505, %v7504
      %v8631 = vpack.c.b16 %v7507, %v7506
      %v8632 = vpack.c.b16 %v7509, %v7508
      %v8633 = vpack.c.b16 %v7511, %v7510
      %v8634 = vpack.c.b16 %v7513, %v7512
      %v8635 = vpack.c.b16 %v7515, %v7514
      %v8636 = vpack.c.b16 %v7517, %v7516
      %v8637 = vpack.c.b16 %v7519, %v7518
      %v8638 = vpack.c.b16 %v7521, %v7520
      %v8639 = vpack.c.b16 %v7523, %v7522
      %v8640 = vpack.c.b16 %v7525, %v7524
      %v8641 = vpack.c.b16 %v7527, %v7526
      %v8642 = vpack.c.b16 %v7529, %v7528
      %v8643 = vpack.c.b16 %v7531, %v7530
      %v8644 = vpack.c.b16 %v7533, %v7532
      %v8645 = vpack.c.b16 %v7535, %v7534
      %v8646 = vpack.c.b16 %v7537, %v7536
      %v8647 = vpack.c.b16 %v7539, %v7538
      %v8648 = vpack.c.b16 %v7541, %v7540
      %v8649 = vpack.c.b16 %v7543, %v7542
      %v8650 = vpack.c.b16 %v7545, %v7544
      %v8651 = vpack.c.b16 %v7547, %v7546
      %v8652 = vpack.c.b16 %v7549, %v7548
      %v8653 = vpack.c.b16 %v7551, %v7550
      %v8654 = vpack.c.b16 %v7553, %v7552
      %v8655 = vpack.c.b16 %v7555, %v7554
      %v8656 = vpack.c.b16 %v7557, %v7556
      %v8657 = vpack.c.b16 %v7559, %v7558
      %v8658 = vpack.c.b16 %v7561, %v7560
      %v8659 = vpack.c.b16 %v7563, %v7562
      %v8660 = vpack.c.b16 %v7565, %v7564
      %v8661 = vpack.c.b16 %v7567, %v7566
      %v8662 = vpack.c.b16 %v7569, %v7568
      %v8663 = vpack.c.b16 %v7571, %v7570
      %v8664 = vpack.c.b16 %v7573, %v7572
      %v8665 = vpack.c.b16 %v7575, %v7574
      %v8666 = vpack.c.b16 %v7577, %v7576
      %v8667 = vpack.c.b16 %v7579, %v7578
      %v8668 = vpack.c.b16 %v7581, %v7580
      %v8669 = vpack.c.b16 %v7583, %v7582
      %v8670 = vpack.c.b16 %v7585, %v7584
      %v8671 = vpack.c.b16 %v7587, %v7586
      %v8672 = vpack.c.b16 %v7589, %v7588
      %v8673 = vpack.c.b16 %v7591, %v7590
      %v8674 = vpack.c.b16 %v7593, %v7592
      %v8675 = vpack.c.b16 %v7595, %v7594
      %v8676 = vpack.c.b16 %v7597, %v7596
      %v8677 = vpack.c.b16 %v7599, %v7598
      %v8678 = vpack.c.b16 %v7601, %v7600
      %v8679 = vpack.c.b16 %v7603, %v7602
      %v8680 = vpack.c.b16 %v7605, %v7604
      %v8681 = vpack.c.b16 %v7607, %v7606
      %v8682 = vpack.c.b16 %v7609, %v7608
      %v8683 = vpack.c.b16 %v7611, %v7610
      %v8684 = vpack.c.b16 %v7613, %v7612
      %v8685 = vpack.c.b16 %v7615, %v7614
      %v8686 = vpack.c.b16 %v7617, %v7616
      %v8687 = vpack.c.b16 %v7619, %v7618
      %v8688 = vpack.c.b16 %v7621, %v7620
      %v8689 = vpack.c.b16 %v7623, %v7622
      %v8690 = vpack.c.b16 %v7625, %v7624
      %v8691 = vpack.c.b16 %v7627, %v7626
      %v8692 = vpack.c.b16 %v7629, %v7628
      %v8693 = vpack.c.b16 %v7631, %v7630
      %v8694 = vpack.c.b16 %v7633, %v7632
      %v8695 = vpack.c.b16 %v7635, %v7634
      %v8696 = vpack.c.b16 %v7637, %v7636
      %v8697 = vpack.c.b16 %v7639, %v7638
      %v8698 = vpack.c.b16 %v7641, %v7640
      %v8699 = vpack.c.b16 %v7643, %v7642
      %9756 = vmatprep.subr.bf16.mxu0 0
      %9757 = vmatpush1.bf16.msra.mxu0 %v7644
      %9758 = vmatprep.subr.bf16.mxu0 0
      %9759 = vmatpush1.bf16.msra.mxu0 %v7645
      %9760 = vmatprep.subr.bf16.mxu0 0
      %9761 = vmatpush1.bf16.msra.mxu0 %v7646
      %9762 = vmatprep.subr.bf16.mxu0 0
      %9763 = vmatpush1.bf16.msra.mxu0 %v7647
      %9764 = vmatprep.subr.bf16.mxu0 0
      %9765 = vmatpush1.bf16.msra.mxu0 %v7648
      %9766 = vmatprep.subr.bf16.mxu0 0
      %9767 = vmatpush1.bf16.msra.mxu0 %v7649
      %9768 = vmatprep.subr.bf16.mxu0 0
      %9769 = vmatpush1.bf16.msra.mxu0 %v7650
      %9770 = vmatprep.subr.bf16.mxu0 0
      %9771 = vmatpush1.bf16.msra.mxu0 %v7651
      %9772 = vmatprep.subr.bf16.mxu0 0
      %9773 = vmatpush1.bf16.msra.mxu0 %v7652
      %9774 = vmatprep.subr.bf16.mxu0 0
      %9775 = vmatpush1.bf16.msra.mxu0 %v7653
      %9776 = vmatprep.subr.bf16.mxu0 0
      %9777 = vmatpush1.bf16.msra.mxu0 %v7654
      %9778 = vmatprep.subr.bf16.mxu0 0
      %9779 = vmatpush1.bf16.msra.mxu0 %v7655
      %9780 = vmatprep.subr.bf16.mxu0 0
      %9781 = vmatpush1.bf16.msra.mxu0 %v7656
      %9782 = vmatprep.subr.bf16.mxu0 0
      %9783 = vmatpush1.bf16.msra.mxu0 %v7657
      %9784 = vmatprep.subr.bf16.mxu0 0
      %9785 = vmatpush1.bf16.msra.mxu0 %v7658
      %9786 = vmatprep.subr.bf16.mxu0 0
      %9787 = vmatpush1.bf16.msra.mxu0 %v7659
      %9788 = vmatprep.mubr.bf16.mxu0 %v2517
      %9789 = vmatmul.mubr.bf16.gmra.mrb[0].mxu0 %v2503
      %v9790 = vpop.f32.mrb[0].mxu0
      %v9791 = vadd.f32 0.0, %v9790
      %v9792 = vpop.f32.mrb[0].mxu0
      %v9793 = vpop.f32.mrb[0].mxu0
      %v9794 = vpop.f32.mrb[0].mxu0
      %9795 = vdwg.mxu0
      %9796 = vmatprep.subr.bf16.mxu0 0
      %9797 = vmatpush1.bf16.msra.mxu0 %v7660
      %9798 = vmatprep.subr.bf16.mxu0 0
      %9799 = vmatpush1.bf16.msra.mxu0 %v7661
      %9800 = vmatprep.subr.bf16.mxu0 0
      %9801 = vmatpush1.bf16.msra.mxu0 %v7662
      %9802 = vmatprep.subr.bf16.mxu0 0
      %9803 = vmatpush1.bf16.msra.mxu0 %v7663
      %9804 = vmatprep.subr.bf16.mxu0 0
      %9805 = vmatpush1.bf16.msra.mxu0 %v7664
      %9806 = vmatprep.subr.bf16.mxu0 0
      %9807 = vmatpush1.bf16.msra.mxu0 %v7665
      %9808 = vmatprep.subr.bf16.mxu0 0
      %9809 = vmatpush1.bf16.msra.mxu0 %v7666
      %9810 = vmatprep.subr.bf16.mxu0 0
      %9811 = vmatpush1.bf16.msra.mxu0 %v7667
      %9812 = vmatprep.subr.bf16.mxu0 0
      %9813 = vmatpush1.bf16.msra.mxu0 %v7668
      %9814 = vmatprep.subr.bf16.mxu0 0
      %9815 = vmatpush1.bf16.msra.mxu0 %v7669
      %9816 = vmatprep.subr.bf16.mxu0 0
      %9817 = vmatpush1.bf16.msra.mxu0 %v7670
      %9818 = vmatprep.subr.bf16.mxu0 0
      %9819 = vmatpush1.bf16.msra.mxu0 %v7671
      %9820 = vmatprep.subr.bf16.mxu0 0
      %9821 = vmatpush1.bf16.msra.mxu0 %v7672
      %9822 = vmatprep.subr.bf16.mxu0 0
      %9823 = vmatpush1.bf16.msra.mxu0 %v7673
      %9824 = vmatprep.subr.bf16.mxu0 0
      %9825 = vmatpush1.bf16.msra.mxu0 %v7674
      %9826 = vmatprep.subr.bf16.mxu0 0
      %9827 = vmatpush1.bf16.msra.mxu0 %v7675
      %9828 = vmatprep.mubr.bf16.mxu0 %v2527
      %9829 = vmatmul.mubr.bf16.gmra.mrb[0].mxu0 %v2525
      %v9830 = vpop.f32.mrb[0].mxu0
      %v9831 = vadd.f32 %v9791, %v9830
      %v9832 = vpop.f32.mrb[0].mxu0
      %v9833 = vpop.f32.mrb[0].mxu0
      %v9834 = vpop.f32.mrb[0].mxu0
      %9835 = vdwg.mxu0
      %9836 = vmatprep.subr.bf16.mxu0 0
      %9837 = vmatpush1.bf16.msra.mxu0 %v7676
      %9838 = vmatprep.subr.bf16.mxu0 0
      %9839 = vmatpush1.bf16.msra.mxu0 %v7677
      %9840 = vmatprep.subr.bf16.mxu0 0
      %9841 = vmatpush1.bf16.msra.mxu0 %v7678
      %9842 = vmatprep.subr.bf16.mxu0 0
      %9843 = vmatpush1.bf16.msra.mxu0 %v7679
      %9844 = vmatprep.subr.bf16.mxu0 0
      %9845 = vmatpush1.bf16.msra.mxu0 %v7680
      %9846 = vmatprep.subr.bf16.mxu0 0
      %9847 = vmatpush1.bf16.msra.mxu0 %v7681
      %9848 = vmatprep.subr.bf16.mxu0 0
      %9849 = vmatpush1.bf16.msra.mxu0 %v7682
      %9850 = vmatprep.subr.bf16.mxu0 0
      %9851 = vmatpush1.bf16.msra.mxu0 %v7683
      %9852 = vmatprep.subr.bf16.mxu0 0
      %9853 = vmatpush1.bf16.msra.mxu0 %v7684
      %9854 = vmatprep.subr.bf16.mxu0 0
      %9855 = vmatpush1.bf16.msra.mxu0 %v7685
      %9856 = vmatprep.subr.bf16.mxu0 0
      %9857 = vmatpush1.bf16.msra.mxu0 %v7686
      %9858 = vmatprep.subr.bf16.mxu0 0
      %9859 = vmatpush1.bf16.msra.mxu0 %v7687
      %9860 = vmatprep.subr.bf16.mxu0 0
      %9861 = vmatpush1.bf16.msra.mxu0 %v7688
      %9862 = vmatprep.subr.bf16.mxu0 0
      %9863 = vmatpush1.bf16.msra.mxu0 %v7689
      %9864 = vmatprep.subr.bf16.mxu0 0
      %9865 = vmatpush1.bf16.msra.mxu0 %v7690
      %9866 = vmatprep.subr.bf16.mxu0 0
      %9867 = vmatpush1.bf16.msra.mxu0 %v7691
      %9868 = vmatprep.mubr.bf16.mxu0 %v2524
      %9869 = vmatmul.mubr.bf16.gmra.mrb[0].mxu0 %v2510
      %v9870 = vpop.f32.mrb[0].mxu0
      %v9871 = vadd.f32 %v9831, %v9870
      %v9872 = vpop.f32.mrb[0].mxu0
      %v9873 = vpop.f32.mrb[0].mxu0
      %v9874 = vpop.f32.mrb[0].mxu0
      %9875 = vdwg.mxu0
      %9876 = vmatprep.subr.bf16.mxu0 0
      %9877 = vmatpush1.bf16.msra.mxu0 %v7692
      %9878 = vmatprep.subr.bf16.mxu0 0
      %9879 = vmatpush1.bf16.msra.mxu0 %v7693
      %9880 = vmatprep.subr.bf16.mxu0 0
      %9881 = vmatpush1.bf16.msra.mxu0 %v7694
      %9882 = vmatprep.subr.bf16.mxu0 0
      %9883 = vmatpush1.bf16.msra.mxu0 %v7695
      %9884 = vmatprep.subr.bf16.mxu0 0
      %9885 = vmatpush1.bf16.msra.mxu0 %v7696
      %9886 = vmatprep.subr.bf16.mxu0 0
      %9887 = vmatpush1.bf16.msra.mxu0 %v7697
      %9888 = vmatprep.subr.bf16.mxu0 0
      %9889 = vmatpush1.bf16.msra.mxu0 %v7698
      %9890 = vmatprep.subr.bf16.mxu0 0
      %9891 = vmatpush1.bf16.msra.mxu0 %v7699
      %9892 = vmatprep.subr.bf16.mxu0 0
      %9893 = vmatpush1.bf16.msra.mxu0 %v7700
      %9894 = vmatprep.subr.bf16.mxu0 0
      %9895 = vmatpush1.bf16.msra.mxu0 %v7701
      %9896 = vmatprep.subr.bf16.mxu0 0
      %9897 = vmatpush1.bf16.msra.mxu0 %v7702
      %9898 = vmatprep.subr.bf16.mxu0 0
      %9899 = vmatpush1.bf16.msra.mxu0 %v7703
      %9900 = vmatprep.subr.bf16.mxu0 0
      %9901 = vmatpush1.bf16.msra.mxu0 %v7704
      %9902 = vmatprep.subr.bf16.mxu0 0
      %9903 = vmatpush1.bf16.msra.mxu0 %v7705
      %9904 = vmatprep.subr.bf16.mxu0 0
      %9905 = vmatpush1.bf16.msra.mxu0 %v7706
      %9906 = vmatprep.subr.bf16.mxu0 0
      %9907 = vmatpush1.bf16.msra.mxu0 %v7707
      %9908 = vmatprep.mubr.bf16.mxu0 %v2528
      %9909 = vmatmul.mubr.bf16.gmra.mrb[0].mxu0 %v2526
      %v9910 = vpop.f32.mrb[0].mxu0
      %v9911 = vadd.f32 %v9871, %v9910
      %v9912 = vpop.f32.mrb[0].mxu0
      %v9913 = vpop.f32.mrb[0].mxu0
      %v9914 = vpop.f32.mrb[0].mxu0
      %9915 = vdwg.mxu0
      %9916 = vmatprep.subr.bf16.mxu0 0
      %9917 = vmatpush1.bf16.msra.mxu0 %v7708
      %9918 = vmatprep.subr.bf16.mxu0 0
      %9919 = vmatpush1.bf16.msra.mxu0 %v7709
      %9920 = vmatprep.subr.bf16.mxu0 0
      %9921 = vmatpush1.bf16.msra.mxu0 %v7710
      %9922 = vmatprep.subr.bf16.mxu0 0
      %9923 = vmatpush1.bf16.msra.mxu0 %v7711
      %9924 = vmatprep.subr.bf16.mxu0 0
      %9925 = vmatpush1.bf16.msra.mxu0 %v7712
      %9926 = vmatprep.subr.bf16.mxu0 0
      %9927 = vmatpush1.bf16.msra.mxu0 %v7713
      %9928 = vmatprep.subr.bf16.mxu0 0
      %9929 = vmatpush1.bf16.msra.mxu0 %v7714
      %9930 = vmatprep.subr.bf16.mxu0 0
      %9931 = vmatpush1.bf16.msra.mxu0 %v7715
      %9932 = vmatprep.subr.bf16.mxu0 0
      %9933 = vmatpush1.bf16.msra.mxu0 %v7716
      %9934 = vmatprep.subr.bf16.mxu0 0
      %9935 = vmatpush1.bf16.msra.mxu0 %v7717
      %9936 = vmatprep.subr.bf16.mxu0 0
      %9937 = vmatpush1.bf16.msra.mxu0 %v7718
      %9938 = vmatprep.subr.bf16.mxu0 0
      %9939 = vmatpush1.bf16.msra.mxu0 %v7719
      %9940 = vmatprep.subr.bf16.mxu0 0
      %9941 = vmatpush1.bf16.msra.mxu0 %v7720
      %9942 = vmatprep.subr.bf16.mxu0 0
      %9943 = vmatpush1.bf16.msra.mxu0 %v7721
      %9944 = vmatprep.subr.bf16.mxu0 0
      %9945 = vmatpush1.bf16.msra.mxu0 %v7722
      %9946 = vmatprep.subr.bf16.mxu0 0
      %9947 = vmatpush1.bf16.msra.mxu0 %v7723
      %9948 = vmatprep.mubr.bf16.mxu0 %v2566
      %9949 = vmatmul.mubr.bf16.gmra.mrb[0].mxu0 %v2552
      %v9950 = vpop.f32.mrb[0].mxu0
      %v9951 = vadd.f32 %v9911, %v9950
      %v9952 = vpop.f32.mrb[0].mxu0
      %v9953 = vpop.f32.mrb[0].mxu0
      %v9954 = vpop.f32.mrb[0].mxu0
      %9955 = vdwg.mxu0
      %9956 = vmatprep.subr.bf16.mxu0 0
      %9957 = vmatpush1.bf16.msra.mxu0 %v7724
      %9958 = vmatprep.subr.bf16.mxu0 0
      %9959 = vmatpush1.bf16.msra.mxu0 %v7725
      %9960 = vmatprep.subr.bf16.mxu0 0
      %9961 = vmatpush1.bf16.msra.mxu0 %v7726
      %9962 = vmatprep.subr.bf16.mxu0 0
      %9963 = vmatpush1.bf16.msra.mxu0 %v7727
      %9964 = vmatprep.subr.bf16.mxu0 0
      %9965 = vmatpush1.bf16.msra.mxu0 %v7728
      %9966 = vmatprep.subr.bf16.mxu0 0
      %9967 = vmatpush1.bf16.msra.mxu0 %v7729
      %9968 = vmatprep.subr.bf16.mxu0 0
      %9969 = vmatpush1.bf16.msra.mxu0 %v7730
      %9970 = vmatprep.subr.bf16.mxu0 0
      %9971 = vmatpush1.bf16.msra.mxu0 %v7731
      %9972 = vmatprep.subr.bf16.mxu0 0
      %9973 = vmatpush1.bf16.msra.mxu0 %v7732
      %9974 = vmatprep.subr.bf16.mxu0 0
      %9975 = vmatpush1.bf16.msra.mxu0 %v7733
      %9976 = vmatprep.subr.bf16.mxu0 0
      %9977 = vmatpush1.bf16.msra.mxu0 %v7734
      %9978 = vmatprep.subr.bf16.mxu0 0
      %9979 = vmatpush1.bf16.msra.mxu0 %v7735
      %9980 = vmatprep.subr.bf16.mxu0 0
      %9981 = vmatpush1.bf16.msra.mxu0 %v7736
      %9982 = vmatprep.subr.bf16.mxu0 0
      %9983 = vmatpush1.bf16.msra.mxu0 %v7737
      %9984 = vmatprep.subr.bf16.mxu0 0
      %9985 = vmatpush1.bf16.msra.mxu0 %v7738
      %9986 = vmatprep.subr.bf16.mxu0 0
      %9987 = vmatpush1.bf16.msra.mxu0 %v7739
      %9988 = vmatprep.mubr.bf16.mxu0 %v2576
      %9989 = vmatmul.mubr.bf16.gmra.mrb[0].mxu0 %v2574
      %v9990 = vpop.f32.mrb[0].mxu0
      %v9991 = vadd.f32 %v9951, %v9990
      %v9992 = vpop.f32.mrb[0].mxu0
      %v9993 = vpop.f32.mrb[0].mxu0
      %v9994 = vpop.f32.mrb[0].mxu0
      %9995 = vdwg.mxu0
      %9996 = vmatprep.subr.bf16.mxu0 0
      %9997 = vmatpush1.bf16.msra.mxu0 %v7740
      %9998 = vmatprep.subr.bf16.mxu0 0
      %9999 = vmatpush1.bf16.msra.mxu0 %v7741
      %10000 = vmatprep.subr.bf16.mxu0 0
      %10001 = vmatpush1.bf16.msra.mxu0 %v7742
      %10002 = vmatprep.subr.bf16.mxu0 0
      %10003 = vmatpush1.bf16.msra.mxu0 %v7743
      %10004 = vmatprep.subr.bf16.mxu0 0
      %10005 = vmatpush1.bf16.msra.mxu0 %v7744
      %10006 = vmatprep.subr.bf16.mxu0 0
      %10007 = vmatpush1.bf16.msra.mxu0 %v7745
      %10008 = vmatprep.subr.bf16.mxu0 0
      %10009 = vmatpush1.bf16.msra.mxu0 %v7746
      %10010 = vmatprep.subr.bf16.mxu0 0
      %10011 = vmatpush1.bf16.msra.mxu0 %v7747
      %10012 = vmatprep.subr.bf16.mxu0 0
      %10013 = vmatpush1.bf16.msra.mxu0 %v7748
      %10014 = vmatprep.subr.bf16.mxu0 0
      %10015 = vmatpush1.bf16.msra.mxu0 %v7749
      %10016 = vmatprep.subr.bf16.mxu0 0
      %10017 = vmatpush1.bf16.msra.mxu0 %v7750
      %10018 = vmatprep.subr.bf16.mxu0 0
      %10019 = vmatpush1.bf16.msra.mxu0 %v7751
      %10020 = vmatprep.subr.bf16.mxu0 0
      %10021 = vmatpush1.bf16.msra.mxu0 %v7752
      %10022 = vmatprep.subr.bf16.mxu0 0
      %10023 = vmatpush1.bf16.msra.mxu0 %v7753
      %10024 = vmatprep.subr.bf16.mxu0 0
      %10025 = vmatpush1.bf16.msra.mxu0 %v7754
      %10026 = vmatprep.subr.bf16.mxu0 0
      %10027 = vmatpush1.bf16.msra.mxu0 %v7755
      %10028 = vmatprep.mubr.bf16.mxu0 %v2573
      %10029 = vmatmul.mubr.bf16.gmra.mrb[0].mxu0 %v2559
      %v10030 = vpop.f32.mrb[0].mxu0
      %v10031 = vadd.f32 %v9991, %v10030
      %v10032 = vpop.f32.mrb[0].mxu0
      %v10033 = vpop.f32.mrb[0].mxu0
      %v10034 = vpop.f32.mrb[0].mxu0
      %10035 = vdwg.mxu0
      %10036 = vmatprep.subr.bf16.mxu0 0
      %10037 = vmatpush1.bf16.msra.mxu0 %v7756
      %10038 = vmatprep.subr.bf16.mxu0 0
      %10039 = vmatpush1.bf16.msra.mxu0 %v7757
      %10040 = vmatprep.subr.bf16.mxu0 0
      %10041 = vmatpush1.bf16.msra.mxu0 %v7758
      %10042 = vmatprep.subr.bf16.mxu0 0
      %10043 = vmatpush1.bf16.msra.mxu0 %v7759
      %10044 = vmatprep.subr.bf16.mxu0 0
      %10045 = vmatpush1.bf16.msra.mxu0 %v7760
      %10046 = vmatprep.subr.bf16.mxu0 0
      %10047 = vmatpush1.bf16.msra.mxu0 %v7761
      %10048 = vmatprep.subr.bf16.mxu0 0
      %10049 = vmatpush1.bf16.msra.mxu0 %v7762
      %10050 = vmatprep.subr.bf16.mxu0 0
      %10051 = vmatpush1.bf16.msra.mxu0 %v7763
      %10052 = vmatprep.subr.bf16.mxu0 0
      %10053 = vmatpush1.bf16.msra.mxu0 %v7764
      %10054 = vmatprep.subr.bf16.mxu0 0
      %10055 = vmatpush1.bf16.msra.mxu0 %v7765
      %10056 = vmatprep.subr.bf16.mxu0 0
      %10057 = vmatpush1.bf16.msra.mxu0 %v7766
      %10058 = vmatprep.subr.bf16.mxu0 0
      %10059 = vmatpush1.bf16.msra.mxu0 %v7767
      %10060 = vmatprep.subr.bf16.mxu0 0
      %10061 = vmatpush1.bf16.msra.mxu0 %v7768
      %10062 = vmatprep.subr.bf16.mxu0 0
      %10063 = vmatpush1.bf16.msra.mxu0 %v7769
      %10064 = vmatprep.subr.bf16.mxu0 0
      %10065 = vmatpush1.bf16.msra.mxu0 %v7770
      %10066 = vmatprep.subr.bf16.mxu0 0
      %10067 = vmatpush1.bf16.msra.mxu0 %v7771
      %10068 = vmatprep.mubr.bf16.mxu0 %v2577
      %10069 = vmatmul.mubr.bf16.gmra.mrb[0].mxu0 %v2575
      %v10070 = vpop.f32.mrb[0].mxu0
      %v10071 = vadd.f32 %v10031, %v10070
      %v10072 = vpop.f32.mrb[0].mxu0
      %v10073 = vpop.f32.mrb[0].mxu0
      %v10074 = vpop.f32.mrb[0].mxu0
      %10075 = vdwg.mxu0
      %10076 = vmatprep.subr.bf16.mxu0 0
      %10077 = vmatpush1.bf16.msra.mxu0 %v7772
      %10078 = vmatprep.subr.bf16.mxu0 0
      %10079 = vmatpush1.bf16.msra.mxu0 %v7773
      %10080 = vmatprep.subr.bf16.mxu0 0
      %10081 = vmatpush1.bf16.msra.mxu0 %v7774
      %10082 = vmatprep.subr.bf16.mxu0 0
      %10083 = vmatpush1.bf16.msra.mxu0 %v7775
      %10084 = vmatprep.subr.bf16.mxu0 0
      %10085 = vmatpush1.bf16.msra.mxu0 %v7776
      %10086 = vmatprep.subr.bf16.mxu0 0
      %10087 = vmatpush1.bf16.msra.mxu0 %v7777
      %10088 = vmatprep.subr.bf16.mxu0 0
      %10089 = vmatpush1.bf16.msra.mxu0 %v7778
      %10090 = vmatprep.subr.bf16.mxu0 0
      %10091 = vmatpush1.bf16.msra.mxu0 %v7779
      %10092 = vmatprep.subr.bf16.mxu0 0
      %10093 = vmatpush1.bf16.msra.mxu0 %v7780
      %10094 = vmatprep.subr.bf16.mxu0 0
      %10095 = vmatpush1.bf16.msra.mxu0 %v7781
      %10096 = vmatprep.subr.bf16.mxu0 0
      %10097 = vmatpush1.bf16.msra.mxu0 %v7782
      %10098 = vmatprep.subr.bf16.mxu0 0
      %10099 = vmatpush1.bf16.msra.mxu0 %v7783
      %10100 = vmatprep.subr.bf16.mxu0 0
      %10101 = vmatpush1.bf16.msra.mxu0 %v7784
      %10102 = vmatprep.subr.bf16.mxu0 0
      %10103 = vmatpush1.bf16.msra.mxu0 %v7785
      %10104 = vmatprep.subr.bf16.mxu0 0
      %10105 = vmatpush1.bf16.msra.mxu0 %v7786
      %10106 = vmatprep.subr.bf16.mxu0 0
      %10107 = vmatpush1.bf16.msra.mxu0 %v7787
      %10108 = vmatprep.mubr.bf16.mxu0 %v2615
      %10109 = vmatmul.mubr.bf16.gmra.mrb[0].mxu0 %v2601
      %v10110 = vpop.f32.mrb[0].mxu0
      %v10111 = vadd.f32 %v10071, %v10110
      %v10112 = vpop.f32.mrb[0].mxu0
      %v10113 = vpop.f32.mrb[0].mxu0
      %v10114 = vpop.f32.mrb[0].mxu0
      %10115 = vdwg.mxu0
      %10116 = vmatprep.subr.bf16.mxu0 0
      %10117 = vmatpush1.bf16.msra.mxu0 %v7788
      %10118 = vmatprep.subr.bf16.mxu0 0
      %10119 = vmatpush1.bf16.msra.mxu0 %v7789
      %10120 = vmatprep.subr.bf16.mxu0 0
      %10121 = vmatpush1.bf16.msra.mxu0 %v7790
      %10122 = vmatprep.subr.bf16.mxu0 0
      %10123 = vmatpush1.bf16.msra.mxu0 %v7791
      %10124 = vmatprep.subr.bf16.mxu0 0
      %10125 = vmatpush1.bf16.msra.mxu0 %v7792
      %10126 = vmatprep.subr.bf16.mxu0 0
      %10127 = vmatpush1.bf16.msra.mxu0 %v7793
      %10128 = vmatprep.subr.bf16.mxu0 0
      %10129 = vmatpush1.bf16.msra.mxu0 %v7794
      %10130 = vmatprep.subr.bf16.mxu0 0
      %10131 = vmatpush1.bf16.msra.mxu0 %v7795
      %10132 = vmatprep.subr.bf16.mxu0 0
      %10133 = vmatpush1.bf16.msra.mxu0 %v7796
      %10134 = vmatprep.subr.bf16.mxu0 0
      %10135 = vmatpush1.bf16.msra.mxu0 %v7797
      %10136 = vmatprep.subr.bf16.mxu0 0
      %10137 = vmatpush1.bf16.msra.mxu0 %v7798
      %10138 = vmatprep.subr.bf16.mxu0 0
      %10139 = vmatpush1.bf16.msra.mxu0 %v7799
      %10140 = vmatprep.subr.bf16.mxu0 0
      %10141 = vmatpush1.bf16.msra.mxu0 %v7800
      %10142 = vmatprep.subr.bf16.mxu0 0
      %10143 = vmatpush1.bf16.msra.mxu0 %v7801
      %10144 = vmatprep.subr.bf16.mxu0 0
      %10145 = vmatpush1.bf16.msra.mxu0 %v7802
      %10146 = vmatprep.subr.bf16.mxu0 0
      %10147 = vmatpush1.bf16.msra.mxu0 %v7803
      %10148 = vmatprep.mubr.bf16.mxu0 %v2625
      %10149 = vmatmul.mubr.bf16.gmra.mrb[0].mxu0 %v2623
      %v10150 = vpop.f32.mrb[0].mxu0
      %v10151 = vadd.f32 %v10111, %v10150
      %v10152 = vpop.f32.mrb[0].mxu0
      %v10153 = vpop.f32.mrb[0].mxu0
      %v10154 = vpop.f32.mrb[0].mxu0
      %10155 = vdwg.mxu0
      %10156 = vmatprep.subr.bf16.mxu0 0
      %10157 = vmatpush1.bf16.msra.mxu0 %v7804
      %10158 = vmatprep.subr.bf16.mxu0 0
      %10159 = vmatpush1.bf16.msra.mxu0 %v7805
      %10160 = vmatprep.subr.bf16.mxu0 0
      %10161 = vmatpush1.bf16.msra.mxu0 %v7806
      %10162 = vmatprep.subr.bf16.mxu0 0
      %10163 = vmatpush1.bf16.msra.mxu0 %v7807
      %10164 = vmatprep.subr.bf16.mxu0 0
      %10165 = vmatpush1.bf16.msra.mxu0 %v7808
      %10166 = vmatprep.subr.bf16.mxu0 0
      %10167 = vmatpush1.bf16.msra.mxu0 %v7809
      %10168 = vmatprep.subr.bf16.mxu0 0
      %10169 = vmatpush1.bf16.msra.mxu0 %v7810
      %10170 = vmatprep.subr.bf16.mxu0 0
      %10171 = vmatpush1.bf16.msra.mxu0 %v7811
      %10172 = vmatprep.subr.bf16.mxu0 0
      %10173 = vmatpush1.bf16.msra.mxu0 %v7812
      %10174 = vmatprep.subr.bf16.mxu0 0
      %10175 = vmatpush1.bf16.msra.mxu0 %v7813
      %10176 = vmatprep.subr.bf16.mxu0 0
      %10177 = vmatpush1.bf16.msra.mxu0 %v7814
      %10178 = vmatprep.subr.bf16.mxu0 0
      %10179 = vmatpush1.bf16.msra.mxu0 %v7815
      %10180 = vmatprep.subr.bf16.mxu0 0
      %10181 = vmatpush1.bf16.msra.mxu0 %v7816
      %10182 = vmatprep.subr.bf16.mxu0 0
      %10183 = vmatpush1.bf16.msra.mxu0 %v7817
      %10184 = vmatprep.subr.bf16.mxu0 0
      %10185 = vmatpush1.bf16.msra.mxu0 %v7818
      %10186 = vmatprep.subr.bf16.mxu0 0
      %10187 = vmatpush1.bf16.msra.mxu0 %v7819
      %10188 = vmatprep.mubr.bf16.mxu0 %v2622
      %10189 = vmatmul.mubr.bf16.gmra.mrb[0].mxu0 %v2608
      %v10190 = vpop.f32.mrb[0].mxu0
      %v10191 = vadd.f32 %v10151, %v10190
      %v10192 = vpop.f32.mrb[0].mxu0
      %v10193 = vpop.f32.mrb[0].mxu0
      %v10194 = vpop.f32.mrb[0].mxu0
      %10195 = vdwg.mxu0
      %10196 = vmatprep.subr.bf16.mxu0 0
      %10197 = vmatpush1.bf16.msra.mxu0 %v7820
      %10198 = vmatprep.subr.bf16.mxu0 0
      %10199 = vmatpush1.bf16.msra.mxu0 %v7821
      %10200 = vmatprep.subr.bf16.mxu0 0
      %10201 = vmatpush1.bf16.msra.mxu0 %v7822
      %10202 = vmatprep.subr.bf16.mxu0 0
      %10203 = vmatpush1.bf16.msra.mxu0 %v7823
      %10204 = vmatprep.subr.bf16.mxu0 0
      %10205 = vmatpush1.bf16.msra.mxu0 %v7824
      %10206 = vmatprep.subr.bf16.mxu0 0
      %10207 = vmatpush1.bf16.msra.mxu0 %v7825
      %10208 = vmatprep.subr.bf16.mxu0 0
      %10209 = vmatpush1.bf16.msra.mxu0 %v7826
      %10210 = vmatprep.subr.bf16.mxu0 0
      %10211 = vmatpush1.bf16.msra.mxu0 %v7827
      %10212 = vmatprep.subr.bf16.mxu0 0
      %10213 = vmatpush1.bf16.msra.mxu0 %v7828
      %10214 = vmatprep.subr.bf16.mxu0 0
      %10215 = vmatpush1.bf16.msra.mxu0 %v7829
      %10216 = vmatprep.subr.bf16.mxu0 0
      %10217 = vmatpush1.bf16.msra.mxu0 %v7830
      %10218 = vmatprep.subr.bf16.mxu0 0
      %10219 = vmatpush1.bf16.msra.mxu0 %v7831
      %10220 = vmatprep.subr.bf16.mxu0 0
      %10221 = vmatpush1.bf16.msra.mxu0 %v7832
      %10222 = vmatprep.subr.bf16.mxu0 0
      %10223 = vmatpush1.bf16.msra.mxu0 %v7833
      %10224 = vmatprep.subr.bf16.mxu0 0
      %10225 = vmatpush1.bf16.msra.mxu0 %v7834
      %10226 = vmatprep.subr.bf16.mxu0 0
      %10227 = vmatpush1.bf16.msra.mxu0 %v7835
      %10228 = vmatprep.mubr.bf16.mxu0 %v2626
      %10229 = vmatmul.mubr.bf16.gmra.mrb[0].mxu0 %v2624
      %v10230 = vpop.f32.mrb[0].mxu0
      %v10231 = vadd.f32 %v10191, %v10230
      %v10232 = vpop.f32.mrb[0].mxu0
      %v10233 = vpop.f32.mrb[0].mxu0
      %v10234 = vpop.f32.mrb[0].mxu0
      %10235 = vdwg.mxu0
      %10236 = vmatprep.subr.bf16.mxu0 0
      %10237 = vmatpush1.bf16.msra.mxu0 %v7836
      %10238 = vmatprep.subr.bf16.mxu0 0
      %10239 = vmatpush1.bf16.msra.mxu0 %v7837
      %10240 = vmatprep.subr.bf16.mxu0 0
      %10241 = vmatpush1.bf16.msra.mxu0 %v7838
      %10242 = vmatprep.subr.bf16.mxu0 0
      %10243 = vmatpush1.bf16.msra.mxu0 %v7839
      %10244 = vmatprep.subr.bf16.mxu0 0
      %10245 = vmatpush1.bf16.msra.mxu0 %v7840
      %10246 = vmatprep.subr.bf16.mxu0 0
      %10247 = vmatpush1.bf16.msra.mxu0 %v7841
      %10248 = vmatprep.subr.bf16.mxu0 0
      %10249 = vmatpush1.bf16.msra.mxu0 %v7842
      %10250 = vmatprep.subr.bf16.mxu0 0
      %10251 = vmatpush1.bf16.msra.mxu0 %v7843
      %10252 = vmatprep.subr.bf16.mxu0 0
      %10253 = vmatpush1.bf16.msra.mxu0 %v7844
      %10254 = vmatprep.subr.bf16.mxu0 0
      %10255 = vmatpush1.bf16.msra.mxu0 %v7845
      %10256 = vmatprep.subr.bf16.mxu0 0
      %10257 = vmatpush1.bf16.msra.mxu0 %v7846
      %10258 = vmatprep.subr.bf16.mxu0 0
      %10259 = vmatpush1.bf16.msra.mxu0 %v7847
      %10260 = vmatprep.subr.bf16.mxu0 0
      %10261 = vmatpush1.bf16.msra.mxu0 %v7848
      %10262 = vmatprep.subr.bf16.mxu0 0
      %10263 = vmatpush1.bf16.msra.mxu0 %v7849
      %10264 = vmatprep.subr.bf16.mxu0 0
      %10265 = vmatpush1.bf16.msra.mxu0 %v7850
      %10266 = vmatprep.subr.bf16.mxu0 0
      %10267 = vmatpush1.bf16.msra.mxu0 %v7851
      %10268 = vmatprep.mubr.bf16.mxu0 %v2664
      %10269 = vmatmul.mubr.bf16.gmra.mrb[0].mxu0 %v2650
      %v10270 = vpop.f32.mrb[0].mxu0
      %v10271 = vadd.f32 %v10231, %v10270
      %v10272 = vpop.f32.mrb[0].mxu0
      %v10273 = vpop.f32.mrb[0].mxu0
      %v10274 = vpop.f32.mrb[0].mxu0
      %10275 = vdwg.mxu0
      %10276 = vmatprep.subr.bf16.mxu0 0
      %10277 = vmatpush1.bf16.msra.mxu0 %v7852
      %10278 = vmatprep.subr.bf16.mxu0 0
      %10279 = vmatpush1.bf16.msra.mxu0 %v7853
      %10280 = vmatprep.subr.bf16.mxu0 0
      %10281 = vmatpush1.bf16.msra.mxu0 %v7854
      %10282 = vmatprep.subr.bf16.mxu0 0
      %10283 = vmatpush1.bf16.msra.mxu0 %v7855
      %10284 = vmatprep.subr.bf16.mxu0 0
      %10285 = vmatpush1.bf16.msra.mxu0 %v7856
      %10286 = vmatprep.subr.bf16.mxu0 0
      %10287 = vmatpush1.bf16.msra.mxu0 %v7857
      %10288 = vmatprep.subr.bf16.mxu0 0
      %10289 = vmatpush1.bf16.msra.mxu0 %v7858
      %10290 = vmatprep.subr.bf16.mxu0 0
      %10291 = vmatpush1.bf16.msra.mxu0 %v7859
      %10292 = vmatprep.subr.bf16.mxu0 0
      %10293 = vmatpush1.bf16.msra.mxu0 %v7860
      %10294 = vmatprep.subr.bf16.mxu0 0
      %10295 = vmatpush1.bf16.msra.mxu0 %v7861
      %10296 = vmatprep.subr.bf16.mxu0 0
      %10297 = vmatpush1.bf16.msra.mxu0 %v7862
      %10298 = vmatprep.subr.bf16.mxu0 0
      %10299 = vmatpush1.bf16.msra.mxu0 %v7863
      %10300 = vmatprep.subr.bf16.mxu0 0
      %10301 = vmatpush1.bf16.msra.mxu0 %v7864
      %10302 = vmatprep.subr.bf16.mxu0 0
      %10303 = vmatpush1.bf16.msra.mxu0 %v7865
      %10304 = vmatprep.subr.bf16.mxu0 0
      %10305 = vmatpush1.bf16.msra.mxu0 %v7866
      %10306 = vmatprep.subr.bf16.mxu0 0
      %10307 = vmatpush1.bf16.msra.mxu0 %v7867
      %10308 = vmatprep.mubr.bf16.mxu0 %v2674
      %10309 = vmatmul.mubr.bf16.gmra.mrb[0].mxu0 %v2672
      %v10310 = vpop.f32.mrb[0].mxu0
      %v10311 = vadd.f32 %v10271, %v10310
      %v10312 = vpop.f32.mrb[0].mxu0
      %v10313 = vpop.f32.mrb[0].mxu0
      %v10314 = vpop.f32.mrb[0].mxu0
      %10315 = vdwg.mxu0
      %10316 = vmatprep.subr.bf16.mxu0 0
      %10317 = vmatpush1.bf16.msra.mxu0 %v7868
      %10318 = vmatprep.subr.bf16.mxu0 0
      %10319 = vmatpush1.bf16.msra.mxu0 %v7869
      %10320 = vmatprep.subr.bf16.mxu0 0
      %10321 = vmatpush1.bf16.msra.mxu0 %v7870
      %10322 = vmatprep.subr.bf16.mxu0 0
      %10323 = vmatpush1.bf16.msra.mxu0 %v7871
      %10324 = vmatprep.subr.bf16.mxu0 0
      %10325 = vmatpush1.bf16.msra.mxu0 %v7872
      %10326 = vmatprep.subr.bf16.mxu0 0
      %10327 = vmatpush1.bf16.msra.mxu0 %v7873
      %10328 = vmatprep.subr.bf16.mxu0 0
      %10329 = vmatpush1.bf16.msra.mxu0 %v7874
      %10330 = vmatprep.subr.bf16.mxu0 0
      %10331 = vmatpush1.bf16.msra.mxu0 %v7875
      %10332 = vmatprep.subr.bf16.mxu0 0
      %10333 = vmatpush1.bf16.msra.mxu0 %v7876
      %10334 = vmatprep.subr.bf16.mxu0 0
      %10335 = vmatpush1.bf16.msra.mxu0 %v7877
      %10336 = vmatprep.subr.bf16.mxu0 0
      %10337 = vmatpush1.bf16.msra.mxu0 %v7878
      %10338 = vmatprep.subr.bf16.mxu0 0
      %10339 = vmatpush1.bf16.msra.mxu0 %v7879
      %10340 = vmatprep.subr.bf16.mxu0 0
      %10341 = vmatpush1.bf16.msra.mxu0 %v7880
      %10342 = vmatprep.subr.bf16.mxu0 0
      %10343 = vmatpush1.bf16.msra.mxu0 %v7881
      %10344 = vmatprep.subr.bf16.mxu0 0
      %10345 = vmatpush1.bf16.msra.mxu0 %v7882
      %10346 = vmatprep.subr.bf16.mxu0 0
      %10347 = vmatpush1.bf16.msra.mxu0 %v7883
      %10348 = vmatprep.mubr.bf16.mxu0 %v2671
      %10349 = vmatmul.mubr.bf16.gmra.mrb[0].mxu0 %v2657
      %v10350 = vpop.f32.mrb[0].mxu0
      %v10351 = vadd.f32 %v10311, %v10350
      %v10352 = vpop.f32.mrb[0].mxu0
      %v10353 = vpop.f32.mrb[0].mxu0
      %v10354 = vpop.f32.mrb[0].mxu0
      %10355 = vdwg.mxu0
      %10356 = vmatprep.subr.bf16.mxu0 0
      %10357 = vmatpush1.bf16.msra.mxu0 %v7884
      %10358 = vmatprep.subr.bf16.mxu0 0
      %10359 = vmatpush1.bf16.msra.mxu0 %v7885
      %10360 = vmatprep.subr.bf16.mxu0 0
      %10361 = vmatpush1.bf16.msra.mxu0 %v7886
      %10362 = vmatprep.subr.bf16.mxu0 0
      %10363 = vmatpush1.bf16.msra.mxu0 %v7887
      %10364 = vmatprep.subr.bf16.mxu0 0
      %10365 = vmatpush1.bf16.msra.mxu0 %v7888
      %10366 = vmatprep.subr.bf16.mxu0 0
      %10367 = vmatpush1.bf16.msra.mxu0 %v7889
      %10368 = vmatprep.subr.bf16.mxu0 0
      %10369 = vmatpush1.bf16.msra.mxu0 %v7890
      %10370 = vmatprep.subr.bf16.mxu0 0
      %10371 = vmatpush1.bf16.msra.mxu0 %v7891
      %10372 = vmatprep.subr.bf16.mxu0 0
      %10373 = vmatpush1.bf16.msra.mxu0 %v7892
      %10374 = vmatprep.subr.bf16.mxu0 0
      %10375 = vmatpush1.bf16.msra.mxu0 %v7893
      %10376 = vmatprep.subr.bf16.mxu0 0
      %10377 = vmatpush1.bf16.msra.mxu0 %v7894
      %10378 = vmatprep.subr.bf16.mxu0 0
      %10379 = vmatpush1.bf16.msra.mxu0 %v7895
      %10380 = vmatprep.subr.bf16.mxu0 0
      %10381 = vmatpush1.bf16.msra.mxu0 %v7896
      %10382 = vmatprep.subr.bf16.mxu0 0
      %10383 = vmatpush1.bf16.msra.mxu0 %v7897
      %10384 = vmatprep.subr.bf16.mxu0 0
      %10385 = vmatpush1.bf16.msra.mxu0 %v7898
      %10386 = vmatprep.subr.bf16.mxu0 0
      %10387 = vmatpush1.bf16.msra.mxu0 %v7899
      %10388 = vmatprep.mubr.bf16.mxu0 %v2675
      %10389 = vmatmul.mubr.bf16.gmra.mrb[0].mxu0 %v2673
      %v10390 = vpop.f32.mrb[0].mxu0
      %v10391 = vadd.f32 %v10351, %v10390
      %v10392 = vpop.f32.mrb[0].mxu0
      %v10393 = vpop.f32.mrb[0].mxu0
      %v10394 = vpop.f32.mrb[0].mxu0
      %10395 = vdwg.mxu0
      %10396 = vmatprep.subr.bf16.mxu0 0
      %10397 = vmatpush1.bf16.msra.mxu0 %v7900
      %10398 = vmatprep.subr.bf16.mxu0 0
      %10399 = vmatpush1.bf16.msra.mxu0 %v7901
      %10400 = vmatprep.subr.bf16.mxu0 0
      %10401 = vmatpush1.bf16.msra.mxu0 %v7902
      %10402 = vmatprep.subr.bf16.mxu0 0
      %10403 = vmatpush1.bf16.msra.mxu0 %v7903
      %10404 = vmatprep.subr.bf16.mxu0 0
      %10405 = vmatpush1.bf16.msra.mxu0 %v7904
      %10406 = vmatprep.subr.bf16.mxu0 0
      %10407 = vmatpush1.bf16.msra.mxu0 %v7905
      %10408 = vmatprep.subr.bf16.mxu0 0
      %10409 = vmatpush1.bf16.msra.mxu0 %v7906
      %10410 = vmatprep.subr.bf16.mxu0 0
      %10411 = vmatpush1.bf16.msra.mxu0 %v7907
      %10412 = vmatprep.subr.bf16.mxu0 0
      %10413 = vmatpush1.bf16.msra.mxu0 %v7908
      %10414 = vmatprep.subr.bf16.mxu0 0
      %10415 = vmatpush1.bf16.msra.mxu0 %v7909
      %10416 = vmatprep.subr.bf16.mxu0 0
      %10417 = vmatpush1.bf16.msra.mxu0 %v7910
      %10418 = vmatprep.subr.bf16.mxu0 0
      %10419 = vmatpush1.bf16.msra.mxu0 %v7911
      %10420 = vmatprep.subr.bf16.mxu0 0
      %10421 = vmatpush1.bf16.msra.mxu0 %v7912
      %10422 = vmatprep.subr.bf16.mxu0 0
      %10423 = vmatpush1.bf16.msra.mxu0 %v7913
      %10424 = vmatprep.subr.bf16.mxu0 0
      %10425 = vmatpush1.bf16.msra.mxu0 %v7914
      %10426 = vmatprep.subr.bf16.mxu0 0
      %10427 = vmatpush1.bf16.msra.mxu0 %v7915
      %10428 = vmatprep.mubr.bf16.mxu0 %v2713
      %10429 = vmatmul.mubr.bf16.gmra.mrb[0].mxu0 %v2699
      %v10430 = vpop.f32.mrb[0].mxu0
      %v10431 = vadd.f32 %v10391, %v10430
      %v10432 = vpop.f32.mrb[0].mxu0
      %v10433 = vpop.f32.mrb[0].mxu0
      %v10434 = vpop.f32.mrb[0].mxu0
      %10435 = vdwg.mxu0
      %10436 = vmatprep.subr.bf16.mxu0 0
      %10437 = vmatpush1.bf16.msra.mxu0 %v7916
      %10438 = vmatprep.subr.bf16.mxu0 0
      %10439 = vmatpush1.bf16.msra.mxu0 %v7917
      %10440 = vmatprep.subr.bf16.mxu0 0
      %10441 = vmatpush1.bf16.msra.mxu0 %v7918
      %10442 = vmatprep.subr.bf16.mxu0 0
      %10443 = vmatpush1.bf16.msra.mxu0 %v7919
      %10444 = vmatprep.subr.bf16.mxu0 0
      %10445 = vmatpush1.bf16.msra.mxu0 %v7920
      %10446 = vmatprep.subr.bf16.mxu0 0
      %10447 = vmatpush1.bf16.msra.mxu0 %v7921
      %10448 = vmatprep.subr.bf16.mxu0 0
      %10449 = vmatpush1.bf16.msra.mxu0 %v7922
      %10450 = vmatprep.subr.bf16.mxu0 0
      %10451 = vmatpush1.bf16.msra.mxu0 %v7923
      %10452 = vmatprep.subr.bf16.mxu0 0
      %10453 = vmatpush1.bf16.msra.mxu0 %v7924
      %10454 = vmatprep.subr.bf16.mxu0 0
      %10455 = vmatpush1.bf16.msra.mxu0 %v7925
      %10456 = vmatprep.subr.bf16.mxu0 0
      %10457 = vmatpush1.bf16.msra.mxu0 %v7926
      %10458 = vmatprep.subr.bf16.mxu0 0
      %10459 = vmatpush1.bf16.msra.mxu0 %v7927
      %10460 = vmatprep.subr.bf16.mxu0 0
      %10461 = vmatpush1.bf16.msra.mxu0 %v7928
      %10462 = vmatprep.subr.bf16.mxu0 0
      %10463 = vmatpush1.bf16.msra.mxu0 %v7929
      %10464 = vmatprep.subr.bf16.mxu0 0
      %10465 = vmatpush1.bf16.msra.mxu0 %v7930
      %10466 = vmatprep.subr.bf16.mxu0 0
      %10467 = vmatpush1.bf16.msra.mxu0 %v7931
      %10468 = vmatprep.mubr.bf16.mxu0 %v2723
      %10469 = vmatmul.mubr.bf16.gmra.mrb[0].mxu0 %v2721
      %v10470 = vpop.f32.mrb[0].mxu0
      %v10471 = vadd.f32 %v10431, %v10470
      %v10472 = vpop.f32.mrb[0].mxu0
      %v10473 = vpop.f32.mrb[0].mxu0
      %v10474 = vpop.f32.mrb[0].mxu0
      %10475 = vdwg.mxu0
      %10476 = vmatprep.subr.bf16.mxu0 0
      %10477 = vmatpush1.bf16.msra.mxu0 %v7932
      %10478 = vmatprep.subr.bf16.mxu0 0
      %10479 = vmatpush1.bf16.msra.mxu0 %v7933
      %10480 = vmatprep.subr.bf16.mxu0 0
      %10481 = vmatpush1.bf16.msra.mxu0 %v7934
      %10482 = vmatprep.subr.bf16.mxu0 0
      %10483 = vmatpush1.bf16.msra.mxu0 %v7935
      %10484 = vmatprep.subr.bf16.mxu0 0
      %10485 = vmatpush1.bf16.msra.mxu0 %v7936
      %10486 = vmatprep.subr.bf16.mxu0 0
      %10487 = vmatpush1.bf16.msra.mxu0 %v7937
      %10488 = vmatprep.subr.bf16.mxu0 0
      %10489 = vmatpush1.bf16.msra.mxu0 %v7938
      %10490 = vmatprep.subr.bf16.mxu0 0
      %10491 = vmatpush1.bf16.msra.mxu0 %v7939
      %10492 = vmatprep.subr.bf16.mxu0 0
      %10493 = vmatpush1.bf16.msra.mxu0 %v7940
      %10494 = vmatprep.subr.bf16.mxu0 0
      %10495 = vmatpush1.bf16.msra.mxu0 %v7941
      %10496 = vmatprep.subr.bf16.mxu0 0
      %10497 = vmatpush1.bf16.msra.mxu0 %v7942
      %10498 = vmatprep.subr.bf16.mxu0 0
      %10499 = vmatpush1.bf16.msra.mxu0 %v7943
      %10500 = vmatprep.subr.bf16.mxu0 0
      %10501 = vmatpush1.bf16.msra.mxu0 %v7944
      %10502 = vmatprep.subr.bf16.mxu0 0
      %10503 = vmatpush1.bf16.msra.mxu0 %v7945
      %10504 = vmatprep.subr.bf16.mxu0 0
      %10505 = vmatpush1.bf16.msra.mxu0 %v7946
      %10506 = vmatprep.subr.bf16.mxu0 0
      %10507 = vmatpush1.bf16.msra.mxu0 %v7947
      %10508 = vmatprep.mubr.bf16.mxu0 %v2720
      %10509 = vmatmul.mubr.bf16.gmra.mrb[0].mxu0 %v2706
      %v10510 = vpop.f32.mrb[0].mxu0
      %v10511 = vadd.f32 %v10471, %v10510
      %v10512 = vpop.f32.mrb[0].mxu0
      %v10513 = vpop.f32.mrb[0].mxu0
      %v10514 = vpop.f32.mrb[0].mxu0
      %10515 = vdwg.mxu0
      %10516 = vmatprep.subr.bf16.mxu0 0
      %10517 = vmatpush1.bf16.msra.mxu0 %v7948
      %10518 = vmatprep.subr.bf16.mxu0 0
      %10519 = vmatpush1.bf16.msra.mxu0 %v7949
      %10520 = vmatprep.subr.bf16.mxu0 0
      %10521 = vmatpush1.bf16.msra.mxu0 %v7950
      %10522 = vmatprep.subr.bf16.mxu0 0
      %10523 = vmatpush1.bf16.msra.mxu0 %v7951
      %10524 = vmatprep.subr.bf16.mxu0 0
      %10525 = vmatpush1.bf16.msra.mxu0 %v7952
      %10526 = vmatprep.subr.bf16.mxu0 0
      %10527 = vmatpush1.bf16.msra.mxu0 %v7953
      %10528 = vmatprep.subr.bf16.mxu0 0
      %10529 = vmatpush1.bf16.msra.mxu0 %v7954
      %10530 = vmatprep.subr.bf16.mxu0 0
      %10531 = vmatpush1.bf16.msra.mxu0 %v7955
      %10532 = vmatprep.subr.bf16.mxu0 0
      %10533 = vmatpush1.bf16.msra.mxu0 %v7956
      %10534 = vmatprep.subr.bf16.mxu0 0
      %10535 = vmatpush1.bf16.msra.mxu0 %v7957
      %10536 = vmatprep.subr.bf16.mxu0 0
      %10537 = vmatpush1.bf16.msra.mxu0 %v7958
      %10538 = vmatprep.subr.bf16.mxu0 0
      %10539 = vmatpush1.bf16.msra.mxu0 %v7959
      %10540 = vmatprep.subr.bf16.mxu0 0
      %10541 = vmatpush1.bf16.msra.mxu0 %v7960
      %10542 = vmatprep.subr.bf16.mxu0 0
      %10543 = vmatpush1.bf16.msra.mxu0 %v7961
      %10544 = vmatprep.subr.bf16.mxu0 0
      %10545 = vmatpush1.bf16.msra.mxu0 %v7962
      %10546 = vmatprep.subr.bf16.mxu0 0
      %10547 = vmatpush1.bf16.msra.mxu0 %v7963
      %10548 = vmatprep.mubr.bf16.mxu0 %v2724
      %10549 = vmatmul.mubr.bf16.gmra.mrb[0].mxu0 %v2722
      %v10550 = vpop.f32.mrb[0].mxu0
      %v10551 = vadd.f32 %v10511, %v10550
      %v10552 = vpop.f32.mrb[0].mxu0
      %v10553 = vpop.f32.mrb[0].mxu0
      %v10554 = vpop.f32.mrb[0].mxu0
      %10555 = vdwg.mxu0
      %10556 = vmatprep.subr.bf16.mxu0 0
      %10557 = vmatpush1.bf16.msra.mxu0 %v7964
      %10558 = vmatprep.subr.bf16.mxu0 0
      %10559 = vmatpush1.bf16.msra.mxu0 %v7965
      %10560 = vmatprep.subr.bf16.mxu0 0
      %10561 = vmatpush1.bf16.msra.mxu0 %v7966
      %10562 = vmatprep.subr.bf16.mxu0 0
      %10563 = vmatpush1.bf16.msra.mxu0 %v7967
      %10564 = vmatprep.subr.bf16.mxu0 0
      %10565 = vmatpush1.bf16.msra.mxu0 %v7968
      %10566 = vmatprep.subr.bf16.mxu0 0
      %10567 = vmatpush1.bf16.msra.mxu0 %v7969
      %10568 = vmatprep.subr.bf16.mxu0 0
      %10569 = vmatpush1.bf16.msra.mxu0 %v7970
      %10570 = vmatprep.subr.bf16.mxu0 0
      %10571 = vmatpush1.bf16.msra.mxu0 %v7971
      %10572 = vmatprep.subr.bf16.mxu0 0
      %10573 = vmatpush1.bf16.msra.mxu0 %v7972
      %10574 = vmatprep.subr.bf16.mxu0 0
      %10575 = vmatpush1.bf16.msra.mxu0 %v7973
      %10576 = vmatprep.subr.bf16.mxu0 0
      %10577 = vmatpush1.bf16.msra.mxu0 %v7974
      %10578 = vmatprep.subr.bf16.mxu0 0
      %10579 = vmatpush1.bf16.msra.mxu0 %v7975
      %10580 = vmatprep.subr.bf16.mxu0 0
      %10581 = vmatpush1.bf16.msra.mxu0 %v7976
      %10582 = vmatprep.subr.bf16.mxu0 0
      %10583 = vmatpush1.bf16.msra.mxu0 %v7977
      %10584 = vmatprep.subr.bf16.mxu0 0
      %10585 = vmatpush1.bf16.msra.mxu0 %v7978
      %10586 = vmatprep.subr.bf16.mxu0 0
      %10587 = vmatpush1.bf16.msra.mxu0 %v7979
      %10588 = vmatprep.mubr.bf16.mxu0 %v2762
      %10589 = vmatmul.mubr.bf16.gmra.mrb[0].mxu0 %v2748
      %v10590 = vpop.f32.mrb[0].mxu0
      %v10591 = vadd.f32 %v10551, %v10590
      %v10592 = vpop.f32.mrb[0].mxu0
      %v10593 = vpop.f32.mrb[0].mxu0
      %v10594 = vpop.f32.mrb[0].mxu0
      %10595 = vdwg.mxu0
      %10596 = vmatprep.subr.bf16.mxu0 0
      %10597 = vmatpush1.bf16.msra.mxu0 %v7980
      %10598 = vmatprep.subr.bf16.mxu0 0
      %10599 = vmatpush1.bf16.msra.mxu0 %v7981
      %10600 = vmatprep.subr.bf16.mxu0 0
      %10601 = vmatpush1.bf16.msra.mxu0 %v7982
      %10602 = vmatprep.subr.bf16.mxu0 0
      %10603 = vmatpush1.bf16.msra.mxu0 %v7983
      %10604 = vmatprep.subr.bf16.mxu0 0
      %10605 = vmatpush1.bf16.msra.mxu0 %v7984
      %10606 = vmatprep.subr.bf16.mxu0 0
      %10607 = vmatpush1.bf16.msra.mxu0 %v7985
      %10608 = vmatprep.subr.bf16.mxu0 0
      %10609 = vmatpush1.bf16.msra.mxu0 %v7986
      %10610 = vmatprep.subr.bf16.mxu0 0
      %10611 = vmatpush1.bf16.msra.mxu0 %v7987
      %10612 = vmatprep.subr.bf16.mxu0 0
      %10613 = vmatpush1.bf16.msra.mxu0 %v7988
      %10614 = vmatprep.subr.bf16.mxu0 0
      %10615 = vmatpush1.bf16.msra.mxu0 %v7989
      %10616 = vmatprep.subr.bf16.mxu0 0
      %10617 = vmatpush1.bf16.msra.mxu0 %v7990
      %10618 = vmatprep.subr.bf16.mxu0 0
      %10619 = vmatpush1.bf16.msra.mxu0 %v7991
      %10620 = vmatprep.subr.bf16.mxu0 0
      %10621 = vmatpush1.bf16.msra.mxu0 %v7992
      %10622 = vmatprep.subr.bf16.mxu0 0
      %10623 = vmatpush1.bf16.msra.mxu0 %v7993
      %10624 = vmatprep.subr.bf16.mxu0 0
      %10625 = vmatpush1.bf16.msra.mxu0 %v7994
      %10626 = vmatprep.subr.bf16.mxu0 0
      %10627 = vmatpush1.bf16.msra.mxu0 %v7995
      %10628 = vmatprep.mubr.bf16.mxu0 %v2772
      %10629 = vmatmul.mubr.bf16.gmra.mrb[0].mxu0 %v2770
      %v10630 = vpop.f32.mrb[0].mxu0
      %v10631 = vadd.f32 %v10591, %v10630
      %v10632 = vpop.f32.mrb[0].mxu0
      %v10633 = vpop.f32.mrb[0].mxu0
      %v10634 = vpop.f32.mrb[0].mxu0
      %10635 = vdwg.mxu0
      %10636 = vmatprep.subr.bf16.mxu0 0
      %10637 = vmatpush1.bf16.msra.mxu0 %v7996
      %10638 = vmatprep.subr.bf16.mxu0 0
      %10639 = vmatpush1.bf16.msra.mxu0 %v7997
      %10640 = vmatprep.subr.bf16.mxu0 0
      %10641 = vmatpush1.bf16.msra.mxu0 %v7998
      %10642 = vmatprep.subr.bf16.mxu0 0
      %10643 = vmatpush1.bf16.msra.mxu0 %v7999
      %10644 = vmatprep.subr.bf16.mxu0 0
      %10645 = vmatpush1.bf16.msra.mxu0 %v8000
      %10646 = vmatprep.subr.bf16.mxu0 0
      %10647 = vmatpush1.bf16.msra.mxu0 %v8001
      %10648 = vmatprep.subr.bf16.mxu0 0
      %10649 = vmatpush1.bf16.msra.mxu0 %v8002
      %10650 = vmatprep.subr.bf16.mxu0 0
      %10651 = vmatpush1.bf16.msra.mxu0 %v8003
      %10652 = vmatprep.subr.bf16.mxu0 0
      %10653 = vmatpush1.bf16.msra.mxu0 %v8004
      %10654 = vmatprep.subr.bf16.mxu0 0
      %10655 = vmatpush1.bf16.msra.mxu0 %v8005
      %10656 = vmatprep.subr.bf16.mxu0 0
      %10657 = vmatpush1.bf16.msra.mxu0 %v8006
      %10658 = vmatprep.subr.bf16.mxu0 0
      %10659 = vmatpush1.bf16.msra.mxu0 %v8007
      %10660 = vmatprep.subr.bf16.mxu0 0
      %10661 = vmatpush1.bf16.msra.mxu0 %v8008
      %10662 = vmatprep.subr.bf16.mxu0 0
      %10663 = vmatpush1.bf16.msra.mxu0 %v8009
      %10664 = vmatprep.subr.bf16.mxu0 0
      %10665 = vmatpush1.bf16.msra.mxu0 %v8010
      %10666 = vmatprep.subr.bf16.mxu0 0
      %10667 = vmatpush1.bf16.msra.mxu0 %v8011
      %10668 = vmatprep.mubr.bf16.mxu0 %v2769
      %10669 = vmatmul.mubr.bf16.gmra.mrb[0].mxu0 %v2755
      %v10670 = vpop.f32.mrb[0].mxu0
      %v10671 = vadd.f32 %v10631, %v10670
      %v10672 = vpop.f32.mrb[0].mxu0
      %v10673 = vpop.f32.mrb[0].mxu0
      %v10674 = vpop.f32.mrb[0].mxu0
      %10675 = vdwg.mxu0
      %10676 = vmatprep.subr.bf16.mxu0 0
      %10677 = vmatpush1.bf16.msra.mxu0 %v8012
      %10678 = vmatprep.subr.bf16.mxu0 0
      %10679 = vmatpush1.bf16.msra.mxu0 %v8013
      %10680 = vmatprep.subr.bf16.mxu0 0
      %10681 = vmatpush1.bf16.msra.mxu0 %v8014
      %10682 = vmatprep.subr.bf16.mxu0 0
      %10683 = vmatpush1.bf16.msra.mxu0 %v8015
      %10684 = vmatprep.subr.bf16.mxu0 0
      %10685 = vmatpush1.bf16.msra.mxu0 %v8016
      %10686 = vmatprep.subr.bf16.mxu0 0
      %10687 = vmatpush1.bf16.msra.mxu0 %v8017
      %10688 = vmatprep.subr.bf16.mxu0 0
      %10689 = vmatpush1.bf16.msra.mxu0 %v8018
      %10690 = vmatprep.subr.bf16.mxu0 0
      %10691 = vmatpush1.bf16.msra.mxu0 %v8019
      %10692 = vmatprep.subr.bf16.mxu0 0
      %10693 = vmatpush1.bf16.msra.mxu0 %v8020
      %10694 = vmatprep.subr.bf16.mxu0 0
      %10695 = vmatpush1.bf16.msra.mxu0 %v8021
      %10696 = vmatprep.subr.bf16.mxu0 0
      %10697 = vmatpush1.bf16.msra.mxu0 %v8022
      %10698 = vmatprep.subr.bf16.mxu0 0
      %10699 = vmatpush1.bf16.msra.mxu0 %v8023
      %10700 = vmatprep.subr.bf16.mxu0 0
      %10701 = vmatpush1.bf16.msra.mxu0 %v8024
      %10702 = vmatprep.subr.bf16.mxu0 0
      %10703 = vmatpush1.bf16.msra.mxu0 %v8025
      %10704 = vmatprep.subr.bf16.mxu0 0
      %10705 = vmatpush1.bf16.msra.mxu0 %v8026
      %10706 = vmatprep.subr.bf16.mxu0 0
      %10707 = vmatpush1.bf16.msra.mxu0 %v8027
      %10708 = vmatprep.mubr.bf16.mxu0 %v2773
      %10709 = vmatmul.mubr.bf16.gmra.mrb[0].mxu0 %v2771
      %v10710 = vpop.f32.mrb[0].mxu0
      %v10711 = vadd.f32 %v10671, %v10710
      %v10712 = vpop.f32.mrb[0].mxu0
      %v10713 = vpop.f32.mrb[0].mxu0
      %v10714 = vpop.f32.mrb[0].mxu0
      %10715 = vdwg.mxu0
      %10716 = vmatprep.subr.bf16.mxu0 0
      %10717 = vmatpush1.bf16.msra.mxu0 %v8028
      %10718 = vmatprep.subr.bf16.mxu0 0
      %10719 = vmatpush1.bf16.msra.mxu0 %v8029
      %10720 = vmatprep.subr.bf16.mxu0 0
      %10721 = vmatpush1.bf16.msra.mxu0 %v8030
      %10722 = vmatprep.subr.bf16.mxu0 0
      %10723 = vmatpush1.bf16.msra.mxu0 %v8031
      %10724 = vmatprep.subr.bf16.mxu0 0
      %10725 = vmatpush1.bf16.msra.mxu0 %v8032
      %10726 = vmatprep.subr.bf16.mxu0 0
      %10727 = vmatpush1.bf16.msra.mxu0 %v8033
      %10728 = vmatprep.subr.bf16.mxu0 0
      %10729 = vmatpush1.bf16.msra.mxu0 %v8034
      %10730 = vmatprep.subr.bf16.mxu0 0
      %10731 = vmatpush1.bf16.msra.mxu0 %v8035
      %10732 = vmatprep.subr.bf16.mxu0 0
      %10733 = vmatpush1.bf16.msra.mxu0 %v8036
      %10734 = vmatprep.subr.bf16.mxu0 0
      %10735 = vmatpush1.bf16.msra.mxu0 %v8037
      %10736 = vmatprep.subr.bf16.mxu0 0
      %10737 = vmatpush1.bf16.msra.mxu0 %v8038
      %10738 = vmatprep.subr.bf16.mxu0 0
      %10739 = vmatpush1.bf16.msra.mxu0 %v8039
      %10740 = vmatprep.subr.bf16.mxu0 0
      %10741 = vmatpush1.bf16.msra.mxu0 %v8040
      %10742 = vmatprep.subr.bf16.mxu0 0
      %10743 = vmatpush1.bf16.msra.mxu0 %v8041
      %10744 = vmatprep.subr.bf16.mxu0 0
      %10745 = vmatpush1.bf16.msra.mxu0 %v8042
      %10746 = vmatprep.subr.bf16.mxu0 0
      %10747 = vmatpush1.bf16.msra.mxu0 %v8043
      %10748 = vmatprep.mubr.bf16.mxu0 %v2811
      %10749 = vmatmul.mubr.bf16.gmra.mrb[0].mxu0 %v2797
      %v10750 = vpop.f32.mrb[0].mxu0
      %v10751 = vadd.f32 %v10711, %v10750
      %v10752 = vpop.f32.mrb[0].mxu0
      %v10753 = vpop.f32.mrb[0].mxu0
      %v10754 = vpop.f32.mrb[0].mxu0
      %10755 = vdwg.mxu0
      %10756 = vmatprep.subr.bf16.mxu0 0
      %10757 = vmatpush1.bf16.msra.mxu0 %v8044
      %10758 = vmatprep.subr.bf16.mxu0 0
      %10759 = vmatpush1.bf16.msra.mxu0 %v8045
      %10760 = vmatprep.subr.bf16.mxu0 0
      %10761 = vmatpush1.bf16.msra.mxu0 %v8046
      %10762 = vmatprep.subr.bf16.mxu0 0
      %10763 = vmatpush1.bf16.msra.mxu0 %v8047
      %10764 = vmatprep.subr.bf16.mxu0 0
      %10765 = vmatpush1.bf16.msra.mxu0 %v8048
      %10766 = vmatprep.subr.bf16.mxu0 0
      %10767 = vmatpush1.bf16.msra.mxu0 %v8049
      %10768 = vmatprep.subr.bf16.mxu0 0
      %10769 = vmatpush1.bf16.msra.mxu0 %v8050
      %10770 = vmatprep.subr.bf16.mxu0 0
      %10771 = vmatpush1.bf16.msra.mxu0 %v8051
      %10772 = vmatprep.subr.bf16.mxu0 0
      %10773 = vmatpush1.bf16.msra.mxu0 %v8052
      %10774 = vmatprep.subr.bf16.mxu0 0
      %10775 = vmatpush1.bf16.msra.mxu0 %v8053
      %10776 = vmatprep.subr.bf16.mxu0 0
      %10777 = vmatpush1.bf16.msra.mxu0 %v8054
      %10778 = vmatprep.subr.bf16.mxu0 0
      %10779 = vmatpush1.bf16.msra.mxu0 %v8055
      %10780 = vmatprep.subr.bf16.mxu0 0
      %10781 = vmatpush1.bf16.msra.mxu0 %v8056
      %10782 = vmatprep.subr.bf16.mxu0 0
      %10783 = vmatpush1.bf16.msra.mxu0 %v8057
      %10784 = vmatprep.subr.bf16.mxu0 0
      %10785 = vmatpush1.bf16.msra.mxu0 %v8058
      %10786 = vmatprep.subr.bf16.mxu0 0
      %10787 = vmatpush1.bf16.msra.mxu0 %v8059
      %10788 = vmatprep.mubr.bf16.mxu0 %v2821
      %10789 = vmatmul.mubr.bf16.gmra.mrb[0].mxu0 %v2819
      %v10790 = vpop.f32.mrb[0].mxu0
      %v10791 = vadd.f32 %v10751, %v10790
      %v10792 = vpop.f32.mrb[0].mxu0
      %v10793 = vpop.f32.mrb[0].mxu0
      %v10794 = vpop.f32.mrb[0].mxu0
      %10795 = vdwg.mxu0
      %10796 = vmatprep.subr.bf16.mxu0 0
      %10797 = vmatpush1.bf16.msra.mxu0 %v8060
      %10798 = vmatprep.subr.bf16.mxu0 0
      %10799 = vmatpush1.bf16.msra.mxu0 %v8061
      %10800 = vmatprep.subr.bf16.mxu0 0
      %10801 = vmatpush1.bf16.msra.mxu0 %v8062
      %10802 = vmatprep.subr.bf16.mxu0 0
      %10803 = vmatpush1.bf16.msra.mxu0 %v8063
      %10804 = vmatprep.subr.bf16.mxu0 0
      %10805 = vmatpush1.bf16.msra.mxu0 %v8064
      %10806 = vmatprep.subr.bf16.mxu0 0
      %10807 = vmatpush1.bf16.msra.mxu0 %v8065
      %10808 = vmatprep.subr.bf16.mxu0 0
      %10809 = vmatpush1.bf16.msra.mxu0 %v8066
      %10810 = vmatprep.subr.bf16.mxu0 0
      %10811 = vmatpush1.bf16.msra.mxu0 %v8067
      %10812 = vmatprep.subr.bf16.mxu0 0
      %10813 = vmatpush1.bf16.msra.mxu0 %v8068
      %10814 = vmatprep.subr.bf16.mxu0 0
      %10815 = vmatpush1.bf16.msra.mxu0 %v8069
      %10816 = vmatprep.subr.bf16.mxu0 0
      %10817 = vmatpush1.bf16.msra.mxu0 %v8070
      %10818 = vmatprep.subr.bf16.mxu0 0
      %10819 = vmatpush1.bf16.msra.mxu0 %v8071
      %10820 = vmatprep.subr.bf16.mxu0 0
      %10821 = vmatpush1.bf16.msra.mxu0 %v8072
      %10822 = vmatprep.subr.bf16.mxu0 0
      %10823 = vmatpush1.bf16.msra.mxu0 %v8073
      %10824 = vmatprep.subr.bf16.mxu0 0
      %10825 = vmatpush1.bf16.msra.mxu0 %v8074
      %10826 = vmatprep.subr.bf16.mxu0 0
      %10827 = vmatpush1.bf16.msra.mxu0 %v8075
      %10828 = vmatprep.mubr.bf16.mxu0 %v2818
      %10829 = vmatmul.mubr.bf16.gmra.mrb[0].mxu0 %v2804
      %v10830 = vpop.f32.mrb[0].mxu0
      %v10831 = vadd.f32 %v10791, %v10830
      %v10832 = vpop.f32.mrb[0].mxu0
      %v10833 = vpop.f32.mrb[0].mxu0
      %v10834 = vpop.f32.mrb[0].mxu0
      %10835 = vdwg.mxu0
      %10836 = vmatprep.subr.bf16.mxu0 0
      %10837 = vmatpush1.bf16.msra.mxu0 %v8076
      %10838 = vmatprep.subr.bf16.mxu0 0
      %10839 = vmatpush1.bf16.msra.mxu0 %v8077
      %10840 = vmatprep.subr.bf16.mxu0 0
      %10841 = vmatpush1.bf16.msra.mxu0 %v8078
      %10842 = vmatprep.subr.bf16.mxu0 0
      %10843 = vmatpush1.bf16.msra.mxu0 %v8079
      %10844 = vmatprep.subr.bf16.mxu0 0
      %10845 = vmatpush1.bf16.msra.mxu0 %v8080
      %10846 = vmatprep.subr.bf16.mxu0 0
      %10847 = vmatpush1.bf16.msra.mxu0 %v8081
      %10848 = vmatprep.subr.bf16.mxu0 0
      %10849 = vmatpush1.bf16.msra.mxu0 %v8082
      %10850 = vmatprep.subr.bf16.mxu0 0
      %10851 = vmatpush1.bf16.msra.mxu0 %v8083
      %10852 = vmatprep.subr.bf16.mxu0 0
      %10853 = vmatpush1.bf16.msra.mxu0 %v8084
      %10854 = vmatprep.subr.bf16.mxu0 0
      %10855 = vmatpush1.bf16.msra.mxu0 %v8085
      %10856 = vmatprep.subr.bf16.mxu0 0
      %10857 = vmatpush1.bf16.msra.mxu0 %v8086
      %10858 = vmatprep.subr.bf16.mxu0 0
      %10859 = vmatpush1.bf16.msra.mxu0 %v8087
      %10860 = vmatprep.subr.bf16.mxu0 0
      %10861 = vmatpush1.bf16.msra.mxu0 %v8088
      %10862 = vmatprep.subr.bf16.mxu0 0
      %10863 = vmatpush1.bf16.msra.mxu0 %v8089
      %10864 = vmatprep.subr.bf16.mxu0 0
      %10865 = vmatpush1.bf16.msra.mxu0 %v8090
      %10866 = vmatprep.subr.bf16.mxu0 0
      %10867 = vmatpush1.bf16.msra.mxu0 %v8091
      %10868 = vmatprep.mubr.bf16.mxu0 %v2822
      %10869 = vmatmul.mubr.bf16.gmra.mrb[0].mxu0 %v2820
      %v10870 = vpop.f32.mrb[0].mxu0
      %v10871 = vadd.f32 %v10831, %v10870
      %v10872 = vpop.f32.mrb[0].mxu0
      %v10873 = vpop.f32.mrb[0].mxu0
      %v10874 = vpop.f32.mrb[0].mxu0
      %10875 = vdwg.mxu0
      %10876 = vmatprep.subr.bf16.mxu0 0
      %10877 = vmatpush1.bf16.msra.mxu0 %v8092
      %10878 = vmatprep.subr.bf16.mxu0 0
      %10879 = vmatpush1.bf16.msra.mxu0 %v8093
      %10880 = vmatprep.subr.bf16.mxu0 0
      %10881 = vmatpush1.bf16.msra.mxu0 %v8094
      %10882 = vmatprep.subr.bf16.mxu0 0
      %10883 = vmatpush1.bf16.msra.mxu0 %v8095
      %10884 = vmatprep.subr.bf16.mxu0 0
      %10885 = vmatpush1.bf16.msra.mxu0 %v8096
      %10886 = vmatprep.subr.bf16.mxu0 0
      %10887 = vmatpush1.bf16.msra.mxu0 %v8097
      %10888 = vmatprep.subr.bf16.mxu0 0
      %10889 = vmatpush1.bf16.msra.mxu0 %v8098
      %10890 = vmatprep.subr.bf16.mxu0 0
      %10891 = vmatpush1.bf16.msra.mxu0 %v8099
      %10892 = vmatprep.subr.bf16.mxu0 0
      %10893 = vmatpush1.bf16.msra.mxu0 %v8100
      %10894 = vmatprep.subr.bf16.mxu0 0
      %10895 = vmatpush1.bf16.msra.mxu0 %v8101
      %10896 = vmatprep.subr.bf16.mxu0 0
      %10897 = vmatpush1.bf16.msra.mxu0 %v8102
      %10898 = vmatprep.subr.bf16.mxu0 0
      %10899 = vmatpush1.bf16.msra.mxu0 %v8103
      %10900 = vmatprep.subr.bf16.mxu0 0
      %10901 = vmatpush1.bf16.msra.mxu0 %v8104
      %10902 = vmatprep.subr.bf16.mxu0 0
      %10903 = vmatpush1.bf16.msra.mxu0 %v8105
      %10904 = vmatprep.subr.bf16.mxu0 0
      %10905 = vmatpush1.bf16.msra.mxu0 %v8106
      %10906 = vmatprep.subr.bf16.mxu0 0
      %10907 = vmatpush1.bf16.msra.mxu0 %v8107
      %10908 = vmatprep.mubr.bf16.mxu0 %v2860
      %10909 = vmatmul.mubr.bf16.gmra.mrb[0].mxu0 %v2846
      %v10910 = vpop.f32.mrb[0].mxu0
      %v10911 = vadd.f32 %v10871, %v10910
      %v10912 = vpop.f32.mrb[0].mxu0
      %v10913 = vpop.f32.mrb[0].mxu0
      %v10914 = vpop.f32.mrb[0].mxu0
      %10915 = vdwg.mxu0
      %10916 = vmatprep.subr.bf16.mxu0 0
      %10917 = vmatpush1.bf16.msra.mxu0 %v8108
      %10918 = vmatprep.subr.bf16.mxu0 0
      %10919 = vmatpush1.bf16.msra.mxu0 %v8109
      %10920 = vmatprep.subr.bf16.mxu0 0
      %10921 = vmatpush1.bf16.msra.mxu0 %v8110
      %10922 = vmatprep.subr.bf16.mxu0 0
      %10923 = vmatpush1.bf16.msra.mxu0 %v8111
      %10924 = vmatprep.subr.bf16.mxu0 0
      %10925 = vmatpush1.bf16.msra.mxu0 %v8112
      %10926 = vmatprep.subr.bf16.mxu0 0
      %10927 = vmatpush1.bf16.msra.mxu0 %v8113
      %10928 = vmatprep.subr.bf16.mxu0 0
      %10929 = vmatpush1.bf16.msra.mxu0 %v8114
      %10930 = vmatprep.subr.bf16.mxu0 0
      %10931 = vmatpush1.bf16.msra.mxu0 %v8115
      %10932 = vmatprep.subr.bf16.mxu0 0
      %10933 = vmatpush1.bf16.msra.mxu0 %v8116
      %10934 = vmatprep.subr.bf16.mxu0 0
      %10935 = vmatpush1.bf16.msra.mxu0 %v8117
      %10936 = vmatprep.subr.bf16.mxu0 0
      %10937 = vmatpush1.bf16.msra.mxu0 %v8118
      %10938 = vmatprep.subr.bf16.mxu0 0
      %10939 = vmatpush1.bf16.msra.mxu0 %v8119
      %10940 = vmatprep.subr.bf16.mxu0 0
      %10941 = vmatpush1.bf16.msra.mxu0 %v8120
      %10942 = vmatprep.subr.bf16.mxu0 0
      %10943 = vmatpush1.bf16.msra.mxu0 %v8121
      %10944 = vmatprep.subr.bf16.mxu0 0
      %10945 = vmatpush1.bf16.msra.mxu0 %v8122
      %10946 = vmatprep.subr.bf16.mxu0 0
      %10947 = vmatpush1.bf16.msra.mxu0 %v8123
      %10948 = vmatprep.mubr.bf16.mxu0 %v2870
      %10949 = vmatmul.mubr.bf16.gmra.mrb[0].mxu0 %v2868
      %v10950 = vpop.f32.mrb[0].mxu0
      %v10951 = vadd.f32 %v10911, %v10950
      %v10952 = vpop.f32.mrb[0].mxu0
      %v10953 = vpop.f32.mrb[0].mxu0
      %v10954 = vpop.f32.mrb[0].mxu0
      %10955 = vdwg.mxu0
      %10956 = vmatprep.subr.bf16.mxu0 0
      %10957 = vmatpush1.bf16.msra.mxu0 %v8124
      %10958 = vmatprep.subr.bf16.mxu0 0
      %10959 = vmatpush1.bf16.msra.mxu0 %v8125
      %10960 = vmatprep.subr.bf16.mxu0 0
      %10961 = vmatpush1.bf16.msra.mxu0 %v8126
      %10962 = vmatprep.subr.bf16.mxu0 0
      %10963 = vmatpush1.bf16.msra.mxu0 %v8127
      %10964 = vmatprep.subr.bf16.mxu0 0
      %10965 = vmatpush1.bf16.msra.mxu0 %v8128
      %10966 = vmatprep.subr.bf16.mxu0 0
      %10967 = vmatpush1.bf16.msra.mxu0 %v8129
      %10968 = vmatprep.subr.bf16.mxu0 0
      %10969 = vmatpush1.bf16.msra.mxu0 %v8130
      %10970 = vmatprep.subr.bf16.mxu0 0
      %10971 = vmatpush1.bf16.msra.mxu0 %v8131
      %10972 = vmatprep.subr.bf16.mxu0 0
      %10973 = vmatpush1.bf16.msra.mxu0 %v8132
      %10974 = vmatprep.subr.bf16.mxu0 0
      %10975 = vmatpush1.bf16.msra.mxu0 %v8133
      %10976 = vmatprep.subr.bf16.mxu0 0
      %10977 = vmatpush1.bf16.msra.mxu0 %v8134
      %10978 = vmatprep.subr.bf16.mxu0 0
      %10979 = vmatpush1.bf16.msra.mxu0 %v8135
      %10980 = vmatprep.subr.bf16.mxu0 0
      %10981 = vmatpush1.bf16.msra.mxu0 %v8136
      %10982 = vmatprep.subr.bf16.mxu0 0
      %10983 = vmatpush1.bf16.msra.mxu0 %v8137
      %10984 = vmatprep.subr.bf16.mxu0 0
      %10985 = vmatpush1.bf16.msra.mxu0 %v8138
      %10986 = vmatprep.subr.bf16.mxu0 0
      %10987 = vmatpush1.bf16.msra.mxu0 %v8139
      %10988 = vmatprep.mubr.bf16.mxu0 %v2867
      %10989 = vmatmul.mubr.bf16.gmra.mrb[0].mxu0 %v2853
      %v10990 = vpop.f32.mrb[0].mxu0
      %v10991 = vadd.f32 %v10951, %v10990
      %v10992 = vpop.f32.mrb[0].mxu0
      %v10993 = vpop.f32.mrb[0].mxu0
      %v10994 = vpop.f32.mrb[0].mxu0
      %10995 = vdwg.mxu0
      %10996 = vmatprep.subr.bf16.mxu0 0
      %10997 = vmatpush1.bf16.msra.mxu0 %v8140
      %10998 = vmatprep.subr.bf16.mxu0 0
      %10999 = vmatpush1.bf16.msra.mxu0 %v8141
      %11000 = vmatprep.subr.bf16.mxu0 0
      %11001 = vmatpush1.bf16.msra.mxu0 %v8142
      %11002 = vmatprep.subr.bf16.mxu0 0
      %11003 = vmatpush1.bf16.msra.mxu0 %v8143
      %11004 = vmatprep.subr.bf16.mxu0 0
      %11005 = vmatpush1.bf16.msra.mxu0 %v8144
      %11006 = vmatprep.subr.bf16.mxu0 0
      %11007 = vmatpush1.bf16.msra.mxu0 %v8145
      %11008 = vmatprep.subr.bf16.mxu0 0
      %11009 = vmatpush1.bf16.msra.mxu0 %v8146
      %11010 = vmatprep.subr.bf16.mxu0 0
      %11011 = vmatpush1.bf16.msra.mxu0 %v8147
      %11012 = vmatprep.subr.bf16.mxu0 0
      %11013 = vmatpush1.bf16.msra.mxu0 %v8148
      %11014 = vmatprep.subr.bf16.mxu0 0
      %11015 = vmatpush1.bf16.msra.mxu0 %v8149
      %11016 = vmatprep.subr.bf16.mxu0 0
      %11017 = vmatpush1.bf16.msra.mxu0 %v8150
      %11018 = vmatprep.subr.bf16.mxu0 0
      %11019 = vmatpush1.bf16.msra.mxu0 %v8151
      %11020 = vmatprep.subr.bf16.mxu0 0
      %11021 = vmatpush1.bf16.msra.mxu0 %v8152
      %11022 = vmatprep.subr.bf16.mxu0 0
      %11023 = vmatpush1.bf16.msra.mxu0 %v8153
      %11024 = vmatprep.subr.bf16.mxu0 0
      %11025 = vmatpush1.bf16.msra.mxu0 %v8154
      %11026 = vmatprep.subr.bf16.mxu0 0
      %11027 = vmatpush1.bf16.msra.mxu0 %v8155
      %11028 = vmatprep.mubr.bf16.mxu0 %v2871
      %11029 = vmatmul.mubr.bf16.gmra.mrb[0].mxu0 %v2869
      %v11030 = vpop.f32.mrb[0].mxu0
      %v11031 = vadd.f32 %v10991, %v11030
      %v11032 = vpop.f32.mrb[0].mxu0
      %v11033 = vpop.f32.mrb[0].mxu0
      %v11034 = vpop.f32.mrb[0].mxu0
      %11035 = vdwg.mxu0
      %11036 = vmatprep.subr.bf16.mxu0 0
      %11037 = vmatpush1.bf16.msra.mxu0 %v8156
      %11038 = vmatprep.subr.bf16.mxu0 0
      %11039 = vmatpush1.bf16.msra.mxu0 %v8157
      %11040 = vmatprep.subr.bf16.mxu0 0
      %11041 = vmatpush1.bf16.msra.mxu0 %v8158
      %11042 = vmatprep.subr.bf16.mxu0 0
      %11043 = vmatpush1.bf16.msra.mxu0 %v8159
      %11044 = vmatprep.subr.bf16.mxu0 0
      %11045 = vmatpush1.bf16.msra.mxu0 %v8160
      %11046 = vmatprep.subr.bf16.mxu0 0
      %11047 = vmatpush1.bf16.msra.mxu0 %v8161
      %11048 = vmatprep.subr.bf16.mxu0 0
      %11049 = vmatpush1.bf16.msra.mxu0 %v8162
      %11050 = vmatprep.subr.bf16.mxu0 0
      %11051 = vmatpush1.bf16.msra.mxu0 %v8163
      %11052 = vmatprep.subr.bf16.mxu0 0
      %11053 = vmatpush1.bf16.msra.mxu0 %v8164
      %11054 = vmatprep.subr.bf16.mxu0 0
      %11055 = vmatpush1.bf16.msra.mxu0 %v8165
      %11056 = vmatprep.subr.bf16.mxu0 0
      %11057 = vmatpush1.bf16.msra.mxu0 %v8166
      %11058 = vmatprep.subr.bf16.mxu0 0
      %11059 = vmatpush1.bf16.msra.mxu0 %v8167
      %11060 = vmatprep.subr.bf16.mxu0 0
      %11061 = vmatpush1.bf16.msra.mxu0 %v8168
      %11062 = vmatprep.subr.bf16.mxu0 0
      %11063 = vmatpush1.bf16.msra.mxu0 %v8169
      %11064 = vmatprep.subr.bf16.mxu0 0
      %11065 = vmatpush1.bf16.msra.mxu0 %v8170
      %11066 = vmatprep.subr.bf16.mxu0 0
      %11067 = vmatpush1.bf16.msra.mxu0 %v8171
      %11068 = vmatprep.mubr.bf16.mxu0 %v2909
      %11069 = vmatmul.mubr.bf16.gmra.mrb[0].mxu0 %v2895
      %v11070 = vpop.f32.mrb[0].mxu0
      %v11071 = vadd.f32 %v11031, %v11070
      %v11072 = vpop.f32.mrb[0].mxu0
      %v11073 = vpop.f32.mrb[0].mxu0
      %v11074 = vpop.f32.mrb[0].mxu0
      %11075 = vdwg.mxu0
      %11076 = vmatprep.subr.bf16.mxu0 0
      %11077 = vmatpush1.bf16.msra.mxu0 %v8172
      %11078 = vmatprep.subr.bf16.mxu0 0
      %11079 = vmatpush1.bf16.msra.mxu0 %v8173
      %11080 = vmatprep.subr.bf16.mxu0 0
      %11081 = vmatpush1.bf16.msra.mxu0 %v8174
      %11082 = vmatprep.subr.bf16.mxu0 0
      %11083 = vmatpush1.bf16.msra.mxu0 %v8175
      %11084 = vmatprep.subr.bf16.mxu0 0
      %11085 = vmatpush1.bf16.msra.mxu0 %v8176
      %11086 = vmatprep.subr.bf16.mxu0 0
      %11087 = vmatpush1.bf16.msra.mxu0 %v8177
      %11088 = vmatprep.subr.bf16.mxu0 0
      %11089 = vmatpush1.bf16.msra.mxu0 %v8178
      %11090 = vmatprep.subr.bf16.mxu0 0
      %11091 = vmatpush1.bf16.msra.mxu0 %v8179
      %11092 = vmatprep.subr.bf16.mxu0 0
      %11093 = vmatpush1.bf16.msra.mxu0 %v8180
      %11094 = vmatprep.subr.bf16.mxu0 0
      %11095 = vmatpush1.bf16.msra.mxu0 %v8181
      %11096 = vmatprep.subr.bf16.mxu0 0
      %11097 = vmatpush1.bf16.msra.mxu0 %v8182
      %11098 = vmatprep.subr.bf16.mxu0 0
      %11099 = vmatpush1.bf16.msra.mxu0 %v8183
      %11100 = vmatprep.subr.bf16.mxu0 0
      %11101 = vmatpush1.bf16.msra.mxu0 %v8184
      %11102 = vmatprep.subr.bf16.mxu0 0
      %11103 = vmatpush1.bf16.msra.mxu0 %v8185
      %11104 = vmatprep.subr.bf16.mxu0 0
      %11105 = vmatpush1.bf16.msra.mxu0 %v8186
      %11106 = vmatprep.subr.bf16.mxu0 0
      %11107 = vmatpush1.bf16.msra.mxu0 %v8187
      %11108 = vmatprep.mubr.bf16.mxu0 %v2919
      %11109 = vmatmul.mubr.bf16.gmra.mrb[0].mxu0 %v2917
      %v11110 = vpop.f32.mrb[0].mxu0
      %v11111 = vadd.f32 %v11071, %v11110
      %v11112 = vpop.f32.mrb[0].mxu0
      %v11113 = vpop.f32.mrb[0].mxu0
      %v11114 = vpop.f32.mrb[0].mxu0
      %11115 = vdwg.mxu0
      %11116 = vmatprep.subr.bf16.mxu0 0
      %11117 = vmatpush1.bf16.msra.mxu0 %v8188
      %11118 = vmatprep.subr.bf16.mxu0 0
      %11119 = vmatpush1.bf16.msra.mxu0 %v8189
      %11120 = vmatprep.subr.bf16.mxu0 0
      %11121 = vmatpush1.bf16.msra.mxu0 %v8190
      %11122 = vmatprep.subr.bf16.mxu0 0
      %11123 = vmatpush1.bf16.msra.mxu0 %v8191
      %11124 = vmatprep.subr.bf16.mxu0 0
      %11125 = vmatpush1.bf16.msra.mxu0 %v8192
      %11126 = vmatprep.subr.bf16.mxu0 0
      %11127 = vmatpush1.bf16.msra.mxu0 %v8193
      %11128 = vmatprep.subr.bf16.mxu0 0
      %11129 = vmatpush1.bf16.msra.mxu0 %v8194
      %11130 = vmatprep.subr.bf16.mxu0 0
      %11131 = vmatpush1.bf16.msra.mxu0 %v8195
      %11132 = vmatprep.subr.bf16.mxu0 0
      %11133 = vmatpush1.bf16.msra.mxu0 %v8196
      %11134 = vmatprep.subr.bf16.mxu0 0
      %11135 = vmatpush1.bf16.msra.mxu0 %v8197
      %11136 = vmatprep.subr.bf16.mxu0 0
      %11137 = vmatpush1.bf16.msra.mxu0 %v8198
      %11138 = vmatprep.subr.bf16.mxu0 0
      %11139 = vmatpush1.bf16.msra.mxu0 %v8199
      %11140 = vmatprep.subr.bf16.mxu0 0
      %11141 = vmatpush1.bf16.msra.mxu0 %v8200
      %11142 = vmatprep.subr.bf16.mxu0 0
      %11143 = vmatpush1.bf16.msra.mxu0 %v8201
      %11144 = vmatprep.subr.bf16.mxu0 0
      %11145 = vmatpush1.bf16.msra.mxu0 %v8202
      %11146 = vmatprep.subr.bf16.mxu0 0
      %11147 = vmatpush1.bf16.msra.mxu0 %v8203
      %11148 = vmatprep.mubr.bf16.mxu0 %v2916
      %11149 = vmatmul.mubr.bf16.gmra.mrb[0].mxu0 %v2902
      %v11150 = vpop.f32.mrb[0].mxu0
      %v11151 = vadd.f32 %v11111, %v11150
      %v11152 = vpop.f32.mrb[0].mxu0
      %v11153 = vpop.f32.mrb[0].mxu0
      %v11154 = vpop.f32.mrb[0].mxu0
      %11155 = vdwg.mxu0
      %11156 = vmatprep.subr.bf16.mxu0 0
      %11157 = vmatpush1.bf16.msra.mxu0 %v8204
      %11158 = vmatprep.subr.bf16.mxu0 0
      %11159 = vmatpush1.bf16.msra.mxu0 %v8205
      %11160 = vmatprep.subr.bf16.mxu0 0
      %11161 = vmatpush1.bf16.msra.mxu0 %v8206
      %11162 = vmatprep.subr.bf16.mxu0 0
      %11163 = vmatpush1.bf16.msra.mxu0 %v8207
      %11164 = vmatprep.subr.bf16.mxu0 0
      %11165 = vmatpush1.bf16.msra.mxu0 %v8208
      %11166 = vmatprep.subr.bf16.mxu0 0
      %11167 = vmatpush1.bf16.msra.mxu0 %v8209
      %11168 = vmatprep.subr.bf16.mxu0 0
      %11169 = vmatpush1.bf16.msra.mxu0 %v8210
      %11170 = vmatprep.subr.bf16.mxu0 0
      %11171 = vmatpush1.bf16.msra.mxu0 %v8211
      %11172 = vmatprep.subr.bf16.mxu0 0
      %11173 = vmatpush1.bf16.msra.mxu0 %v8212
      %11174 = vmatprep.subr.bf16.mxu0 0
      %11175 = vmatpush1.bf16.msra.mxu0 %v8213
      %11176 = vmatprep.subr.bf16.mxu0 0
      %11177 = vmatpush1.bf16.msra.mxu0 %v8214
      %11178 = vmatprep.subr.bf16.mxu0 0
      %11179 = vmatpush1.bf16.msra.mxu0 %v8215
      %11180 = vmatprep.subr.bf16.mxu0 0
      %11181 = vmatpush1.bf16.msra.mxu0 %v8216
      %11182 = vmatprep.subr.bf16.mxu0 0
      %11183 = vmatpush1.bf16.msra.mxu0 %v8217
      %11184 = vmatprep.subr.bf16.mxu0 0
      %11185 = vmatpush1.bf16.msra.mxu0 %v8218
      %11186 = vmatprep.subr.bf16.mxu0 0
      %11187 = vmatpush1.bf16.msra.mxu0 %v8219
      %11188 = vmatprep.mubr.bf16.mxu0 %v2920
      %11189 = vmatmul.mubr.bf16.gmra.mrb[0].mxu0 %v2918
      %v11190 = vpop.f32.mrb[0].mxu0
      %v11191 = vadd.f32 %v11151, %v11190
      %v11192 = vpop.f32.mrb[0].mxu0
      %v11193 = vpop.f32.mrb[0].mxu0
      %v11194 = vpop.f32.mrb[0].mxu0
      %11195 = vdwg.mxu0
      %11196 = vmatprep.subr.bf16.mxu0 0
      %11197 = vmatpush1.bf16.msra.mxu0 %v8220
      %11198 = vmatprep.subr.bf16.mxu0 0
      %11199 = vmatpush1.bf16.msra.mxu0 %v8221
      %11200 = vmatprep.subr.bf16.mxu0 0
      %11201 = vmatpush1.bf16.msra.mxu0 %v8222
      %11202 = vmatprep.subr.bf16.mxu0 0
      %11203 = vmatpush1.bf16.msra.mxu0 %v8223
      %11204 = vmatprep.subr.bf16.mxu0 0
      %11205 = vmatpush1.bf16.msra.mxu0 %v8224
      %11206 = vmatprep.subr.bf16.mxu0 0
      %11207 = vmatpush1.bf16.msra.mxu0 %v8225
      %11208 = vmatprep.subr.bf16.mxu0 0
      %11209 = vmatpush1.bf16.msra.mxu0 %v8226
      %11210 = vmatprep.subr.bf16.mxu0 0
      %11211 = vmatpush1.bf16.msra.mxu0 %v8227
      %11212 = vmatprep.subr.bf16.mxu0 0
      %11213 = vmatpush1.bf16.msra.mxu0 %v8228
      %11214 = vmatprep.subr.bf16.mxu0 0
      %11215 = vmatpush1.bf16.msra.mxu0 %v8229
      %11216 = vmatprep.subr.bf16.mxu0 0
      %11217 = vmatpush1.bf16.msra.mxu0 %v8230
      %11218 = vmatprep.subr.bf16.mxu0 0
      %11219 = vmatpush1.bf16.msra.mxu0 %v8231
      %11220 = vmatprep.subr.bf16.mxu0 0
      %11221 = vmatpush1.bf16.msra.mxu0 %v8232
      %11222 = vmatprep.subr.bf16.mxu0 0
      %11223 = vmatpush1.bf16.msra.mxu0 %v8233
      %11224 = vmatprep.subr.bf16.mxu0 0
      %11225 = vmatpush1.bf16.msra.mxu0 %v8234
      %11226 = vmatprep.subr.bf16.mxu0 0
      %11227 = vmatpush1.bf16.msra.mxu0 %v8235
      %11228 = vmatprep.mubr.bf16.mxu0 %v2958
      %11229 = vmatmul.mubr.bf16.gmra.mrb[0].mxu0 %v2944
      %v11230 = vpop.f32.mrb[0].mxu0
      %v11231 = vadd.f32 %v11191, %v11230
      %v11232 = vpop.f32.mrb[0].mxu0
      %v11233 = vpop.f32.mrb[0].mxu0
      %v11234 = vpop.f32.mrb[0].mxu0
      %11235 = vdwg.mxu0
      %11236 = vmatprep.subr.bf16.mxu0 0
      %11237 = vmatpush1.bf16.msra.mxu0 %v8236
      %11238 = vmatprep.subr.bf16.mxu0 0
      %11239 = vmatpush1.bf16.msra.mxu0 %v8237
      %11240 = vmatprep.subr.bf16.mxu0 0
      %11241 = vmatpush1.bf16.msra.mxu0 %v8238
      %11242 = vmatprep.subr.bf16.mxu0 0
      %11243 = vmatpush1.bf16.msra.mxu0 %v8239
      %11244 = vmatprep.subr.bf16.mxu0 0
      %11245 = vmatpush1.bf16.msra.mxu0 %v8240
      %11246 = vmatprep.subr.bf16.mxu0 0
      %11247 = vmatpush1.bf16.msra.mxu0 %v8241
      %11248 = vmatprep.subr.bf16.mxu0 0
      %11249 = vmatpush1.bf16.msra.mxu0 %v8242
      %11250 = vmatprep.subr.bf16.mxu0 0
      %11251 = vmatpush1.bf16.msra.mxu0 %v8243
      %11252 = vmatprep.subr.bf16.mxu0 0
      %11253 = vmatpush1.bf16.msra.mxu0 %v8244
      %11254 = vmatprep.subr.bf16.mxu0 0
      %11255 = vmatpush1.bf16.msra.mxu0 %v8245
      %11256 = vmatprep.subr.bf16.mxu0 0
      %11257 = vmatpush1.bf16.msra.mxu0 %v8246
      %11258 = vmatprep.subr.bf16.mxu0 0
      %11259 = vmatpush1.bf16.msra.mxu0 %v8247
      %11260 = vmatprep.subr.bf16.mxu0 0
      %11261 = vmatpush1.bf16.msra.mxu0 %v8248
      %11262 = vmatprep.subr.bf16.mxu0 0
      %11263 = vmatpush1.bf16.msra.mxu0 %v8249
      %11264 = vmatprep.subr.bf16.mxu0 0
      %11265 = vmatpush1.bf16.msra.mxu0 %v8250
      %11266 = vmatprep.subr.bf16.mxu0 0
      %11267 = vmatpush1.bf16.msra.mxu0 %v8251
      %11268 = vmatprep.mubr.bf16.mxu0 %v2968
      %11269 = vmatmul.mubr.bf16.gmra.mrb[0].mxu0 %v2966
      %v11270 = vpop.f32.mrb[0].mxu0
      %v11271 = vadd.f32 %v11231, %v11270
      %v11272 = vpop.f32.mrb[0].mxu0
      %v11273 = vpop.f32.mrb[0].mxu0
      %v11274 = vpop.f32.mrb[0].mxu0
      %11275 = vdwg.mxu0
      %11276 = vmatprep.subr.bf16.mxu0 0
      %11277 = vmatpush1.bf16.msra.mxu0 %v8252
      %11278 = vmatprep.subr.bf16.mxu0 0
      %11279 = vmatpush1.bf16.msra.mxu0 %v8253
      %11280 = vmatprep.subr.bf16.mxu0 0
      %11281 = vmatpush1.bf16.msra.mxu0 %v8254
      %11282 = vmatprep.subr.bf16.mxu0 0
      %11283 = vmatpush1.bf16.msra.mxu0 %v8255
      %11284 = vmatprep.subr.bf16.mxu0 0
      %11285 = vmatpush1.bf16.msra.mxu0 %v8256
      %11286 = vmatprep.subr.bf16.mxu0 0
      %11287 = vmatpush1.bf16.msra.mxu0 %v8257
      %11288 = vmatprep.subr.bf16.mxu0 0
      %11289 = vmatpush1.bf16.msra.mxu0 %v8258
      %11290 = vmatprep.subr.bf16.mxu0 0
      %11291 = vmatpush1.bf16.msra.mxu0 %v8259
      %11292 = vmatprep.subr.bf16.mxu0 0
      %11293 = vmatpush1.bf16.msra.mxu0 %v8260
      %11294 = vmatprep.subr.bf16.mxu0 0
      %11295 = vmatpush1.bf16.msra.mxu0 %v8261
      %11296 = vmatprep.subr.bf16.mxu0 0
      %11297 = vmatpush1.bf16.msra.mxu0 %v8262
      %11298 = vmatprep.subr.bf16.mxu0 0
      %11299 = vmatpush1.bf16.msra.mxu0 %v8263
      %11300 = vmatprep.subr.bf16.mxu0 0
      %11301 = vmatpush1.bf16.msra.mxu0 %v8264
      %11302 = vmatprep.subr.bf16.mxu0 0
      %11303 = vmatpush1.bf16.msra.mxu0 %v8265
      %11304 = vmatprep.subr.bf16.mxu0 0
      %11305 = vmatpush1.bf16.msra.mxu0 %v8266
      %11306 = vmatprep.subr.bf16.mxu0 0
      %11307 = vmatpush1.bf16.msra.mxu0 %v8267
      %11308 = vmatprep.mubr.bf16.mxu0 %v2965
      %11309 = vmatmul.mubr.bf16.gmra.mrb[0].mxu0 %v2951
      %v11310 = vpop.f32.mrb[0].mxu0
      %v11311 = vadd.f32 %v11271, %v11310
      %v11312 = vpop.f32.mrb[0].mxu0
      %v11313 = vpop.f32.mrb[0].mxu0
      %v11314 = vpop.f32.mrb[0].mxu0
      %11315 = vdwg.mxu0
      %11316 = vmatprep.subr.bf16.mxu0 0
      %11317 = vmatpush1.bf16.msra.mxu0 %v8268
      %11318 = vmatprep.subr.bf16.mxu0 0
      %11319 = vmatpush1.bf16.msra.mxu0 %v8269
      %11320 = vmatprep.subr.bf16.mxu0 0
      %11321 = vmatpush1.bf16.msra.mxu0 %v8270
      %11322 = vmatprep.subr.bf16.mxu0 0
      %11323 = vmatpush1.bf16.msra.mxu0 %v8271
      %11324 = vmatprep.subr.bf16.mxu0 0
      %11325 = vmatpush1.bf16.msra.mxu0 %v8272
      %11326 = vmatprep.subr.bf16.mxu0 0
      %11327 = vmatpush1.bf16.msra.mxu0 %v8273
      %11328 = vmatprep.subr.bf16.mxu0 0
      %11329 = vmatpush1.bf16.msra.mxu0 %v8274
      %11330 = vmatprep.subr.bf16.mxu0 0
      %11331 = vmatpush1.bf16.msra.mxu0 %v8275
      %11332 = vmatprep.subr.bf16.mxu0 0
      %11333 = vmatpush1.bf16.msra.mxu0 %v8276
      %11334 = vmatprep.subr.bf16.mxu0 0
      %11335 = vmatpush1.bf16.msra.mxu0 %v8277
      %11336 = vmatprep.subr.bf16.mxu0 0
      %11337 = vmatpush1.bf16.msra.mxu0 %v8278
      %11338 = vmatprep.subr.bf16.mxu0 0
      %11339 = vmatpush1.bf16.msra.mxu0 %v8279
      %11340 = vmatprep.subr.bf16.mxu0 0
      %11341 = vmatpush1.bf16.msra.mxu0 %v8280
      %11342 = vmatprep.subr.bf16.mxu0 0
      %11343 = vmatpush1.bf16.msra.mxu0 %v8281
      %11344 = vmatprep.subr.bf16.mxu0 0
      %11345 = vmatpush1.bf16.msra.mxu0 %v8282
      %11346 = vmatprep.subr.bf16.mxu0 0
      %11347 = vmatpush1.bf16.msra.mxu0 %v8283
      %11348 = vmatprep.mubr.bf16.mxu0 %v2969
      %11349 = vmatmul.mubr.bf16.gmra.mrb[0].mxu0 %v2967
      %v11350 = vpop.f32.mrb[0].mxu0
      %v11351 = vadd.f32 %v11311, %v11350
      %v11352 = vpop.f32.mrb[0].mxu0
      %v11353 = vpop.f32.mrb[0].mxu0
      %v11354 = vpop.f32.mrb[0].mxu0
      %11355 = vdwg.mxu0
      %11356 = vmatprep.subr.bf16.mxu0 0
      %11357 = vmatpush1.bf16.msra.mxu0 %v8284
      %11358 = vmatprep.subr.bf16.mxu0 0
      %11359 = vmatpush1.bf16.msra.mxu0 %v8285
      %11360 = vmatprep.subr.bf16.mxu0 0
      %11361 = vmatpush1.bf16.msra.mxu0 %v8286
      %11362 = vmatprep.subr.bf16.mxu0 0
      %11363 = vmatpush1.bf16.msra.mxu0 %v8287
      %11364 = vmatprep.subr.bf16.mxu0 0
      %11365 = vmatpush1.bf16.msra.mxu0 %v8288
      %11366 = vmatprep.subr.bf16.mxu0 0
      %11367 = vmatpush1.bf16.msra.mxu0 %v8289
      %11368 = vmatprep.subr.bf16.mxu0 0
      %11369 = vmatpush1.bf16.msra.mxu0 %v8290
      %11370 = vmatprep.subr.bf16.mxu0 0
      %11371 = vmatpush1.bf16.msra.mxu0 %v8291
      %11372 = vmatprep.subr.bf16.mxu0 0
      %11373 = vmatpush1.bf16.msra.mxu0 %v8292
      %11374 = vmatprep.subr.bf16.mxu0 0
      %11375 = vmatpush1.bf16.msra.mxu0 %v8293
      %11376 = vmatprep.subr.bf16.mxu0 0
      %11377 = vmatpush1.bf16.msra.mxu0 %v8294
      %11378 = vmatprep.subr.bf16.mxu0 0
      %11379 = vmatpush1.bf16.msra.mxu0 %v8295
      %11380 = vmatprep.subr.bf16.mxu0 0
      %11381 = vmatpush1.bf16.msra.mxu0 %v8296
      %11382 = vmatprep.subr.bf16.mxu0 0
      %11383 = vmatpush1.bf16.msra.mxu0 %v8297
      %11384 = vmatprep.subr.bf16.mxu0 0
      %11385 = vmatpush1.bf16.msra.mxu0 %v8298
      %11386 = vmatprep.subr.bf16.mxu0 0
      %11387 = vmatpush1.bf16.msra.mxu0 %v8299
      %11388 = vmatprep.mubr.bf16.mxu0 %v3007
      %11389 = vmatmul.mubr.bf16.gmra.mrb[0].mxu0 %v2993
      %v11390 = vpop.f32.mrb[0].mxu0
      %v11391 = vadd.f32 %v11351, %v11390
      %v11392 = vpop.f32.mrb[0].mxu0
      %v11393 = vpop.f32.mrb[0].mxu0
      %v11394 = vpop.f32.mrb[0].mxu0
      %11395 = vdwg.mxu0
      %11396 = vmatprep.subr.bf16.mxu0 0
      %11397 = vmatpush1.bf16.msra.mxu0 %v8300
      %11398 = vmatprep.subr.bf16.mxu0 0
      %11399 = vmatpush1.bf16.msra.mxu0 %v8301
      %11400 = vmatprep.subr.bf16.mxu0 0
      %11401 = vmatpush1.bf16.msra.mxu0 %v8302
      %11402 = vmatprep.subr.bf16.mxu0 0
      %11403 = vmatpush1.bf16.msra.mxu0 %v8303
      %11404 = vmatprep.subr.bf16.mxu0 0
      %11405 = vmatpush1.bf16.msra.mxu0 %v8304
      %11406 = vmatprep.subr.bf16.mxu0 0
      %11407 = vmatpush1.bf16.msra.mxu0 %v8305
      %11408 = vmatprep.subr.bf16.mxu0 0
      %11409 = vmatpush1.bf16.msra.mxu0 %v8306
      %11410 = vmatprep.subr.bf16.mxu0 0
      %11411 = vmatpush1.bf16.msra.mxu0 %v8307
      %11412 = vmatprep.subr.bf16.mxu0 0
      %11413 = vmatpush1.bf16.msra.mxu0 %v8308
      %11414 = vmatprep.subr.bf16.mxu0 0
      %11415 = vmatpush1.bf16.msra.mxu0 %v8309
      %11416 = vmatprep.subr.bf16.mxu0 0
      %11417 = vmatpush1.bf16.msra.mxu0 %v8310
      %11418 = vmatprep.subr.bf16.mxu0 0
      %11419 = vmatpush1.bf16.msra.mxu0 %v8311
      %11420 = vmatprep.subr.bf16.mxu0 0
      %11421 = vmatpush1.bf16.msra.mxu0 %v8312
      %11422 = vmatprep.subr.bf16.mxu0 0
      %11423 = vmatpush1.bf16.msra.mxu0 %v8313
      %11424 = vmatprep.subr.bf16.mxu0 0
      %11425 = vmatpush1.bf16.msra.mxu0 %v8314
      %11426 = vmatprep.subr.bf16.mxu0 0
      %11427 = vmatpush1.bf16.msra.mxu0 %v8315
      %11428 = vmatprep.mubr.bf16.mxu0 %v3017
      %11429 = vmatmul.mubr.bf16.gmra.mrb[0].mxu0 %v3015
      %v11430 = vpop.f32.mrb[0].mxu0
      %v11431 = vadd.f32 %v11391, %v11430
      %v11432 = vpop.f32.mrb[0].mxu0
      %v11433 = vpop.f32.mrb[0].mxu0
      %v11434 = vpop.f32.mrb[0].mxu0
      %11435 = vdwg.mxu0
      %11436 = vmatprep.subr.bf16.mxu0 0
      %11437 = vmatpush1.bf16.msra.mxu0 %v8316
      %11438 = vmatprep.subr.bf16.mxu0 0
      %11439 = vmatpush1.bf16.msra.mxu0 %v8317
      %11440 = vmatprep.subr.bf16.mxu0 0
      %11441 = vmatpush1.bf16.msra.mxu0 %v8318
      %11442 = vmatprep.subr.bf16.mxu0 0
      %11443 = vmatpush1.bf16.msra.mxu0 %v8319
      %11444 = vmatprep.subr.bf16.mxu0 0
      %11445 = vmatpush1.bf16.msra.mxu0 %v8320
      %11446 = vmatprep.subr.bf16.mxu0 0
      %11447 = vmatpush1.bf16.msra.mxu0 %v8321
      %11448 = vmatprep.subr.bf16.mxu0 0
      %11449 = vmatpush1.bf16.msra.mxu0 %v8322
      %11450 = vmatprep.subr.bf16.mxu0 0
      %11451 = vmatpush1.bf16.msra.mxu0 %v8323
      %11452 = vmatprep.subr.bf16.mxu0 0
      %11453 = vmatpush1.bf16.msra.mxu0 %v8324
      %11454 = vmatprep.subr.bf16.mxu0 0
      %11455 = vmatpush1.bf16.msra.mxu0 %v8325
      %11456 = vmatprep.subr.bf16.mxu0 0
      %11457 = vmatpush1.bf16.msra.mxu0 %v8326
      %11458 = vmatprep.subr.bf16.mxu0 0
      %11459 = vmatpush1.bf16.msra.mxu0 %v8327
      %11460 = vmatprep.subr.bf16.mxu0 0
      %11461 = vmatpush1.bf16.msra.mxu0 %v8328
      %11462 = vmatprep.subr.bf16.mxu0 0
      %11463 = vmatpush1.bf16.msra.mxu0 %v8329
      %11464 = vmatprep.subr.bf16.mxu0 0
      %11465 = vmatpush1.bf16.msra.mxu0 %v8330
      %11466 = vmatprep.subr.bf16.mxu0 0
      %11467 = vmatpush1.bf16.msra.mxu0 %v8331
      %11468 = vmatprep.mubr.bf16.mxu0 %v3014
      %11469 = vmatmul.mubr.bf16.gmra.mrb[0].mxu0 %v3000
      %v11470 = vpop.f32.mrb[0].mxu0
      %v11471 = vadd.f32 %v11431, %v11470
      %v11472 = vpop.f32.mrb[0].mxu0
      %v11473 = vpop.f32.mrb[0].mxu0
      %v11474 = vpop.f32.mrb[0].mxu0
      %11475 = vdwg.mxu0
      %11476 = vmatprep.subr.bf16.mxu0 0
      %11477 = vmatpush1.bf16.msra.mxu0 %v8332
      %11478 = vmatprep.subr.bf16.mxu0 0
      %11479 = vmatpush1.bf16.msra.mxu0 %v8333
      %11480 = vmatprep.subr.bf16.mxu0 0
      %11481 = vmatpush1.bf16.msra.mxu0 %v8334
      %11482 = vmatprep.subr.bf16.mxu0 0
      %11483 = vmatpush1.bf16.msra.mxu0 %v8335
      %11484 = vmatprep.subr.bf16.mxu0 0
      %11485 = vmatpush1.bf16.msra.mxu0 %v8336
      %11486 = vmatprep.subr.bf16.mxu0 0
      %11487 = vmatpush1.bf16.msra.mxu0 %v8337
      %11488 = vmatprep.subr.bf16.mxu0 0
      %11489 = vmatpush1.bf16.msra.mxu0 %v8338
      %11490 = vmatprep.subr.bf16.mxu0 0
      %11491 = vmatpush1.bf16.msra.mxu0 %v8339
      %11492 = vmatprep.subr.bf16.mxu0 0
      %11493 = vmatpush1.bf16.msra.mxu0 %v8340
      %11494 = vmatprep.subr.bf16.mxu0 0
      %11495 = vmatpush1.bf16.msra.mxu0 %v8341
      %11496 = vmatprep.subr.bf16.mxu0 0
      %11497 = vmatpush1.bf16.msra.mxu0 %v8342
      %11498 = vmatprep.subr.bf16.mxu0 0
      %11499 = vmatpush1.bf16.msra.mxu0 %v8343
      %11500 = vmatprep.subr.bf16.mxu0 0
      %11501 = vmatpush1.bf16.msra.mxu0 %v8344
      %11502 = vmatprep.subr.bf16.mxu0 0
      %11503 = vmatpush1.bf16.msra.mxu0 %v8345
      %11504 = vmatprep.subr.bf16.mxu0 0
      %11505 = vmatpush1.bf16.msra.mxu0 %v8346
      %11506 = vmatprep.subr.bf16.mxu0 0
      %11507 = vmatpush1.bf16.msra.mxu0 %v8347
      %11508 = vmatprep.mubr.bf16.mxu0 %v3018
      %11509 = vmatmul.mubr.bf16.gmra.mrb[0].mxu0 %v3016
      %v11510 = vpop.f32.mrb[0].mxu0
      %v11511 = vadd.f32 %v11471, %v11510
      %v11512 = vpop.f32.mrb[0].mxu0
      %v11513 = vpop.f32.mrb[0].mxu0
      %v11514 = vpop.f32.mrb[0].mxu0
      %11515 = vdwg.mxu0
      %11516 = vmatprep.subr.bf16.mxu0 0
      %11517 = vmatpush1.bf16.msra.mxu0 %v8348
      %11518 = vmatprep.subr.bf16.mxu0 0
      %11519 = vmatpush1.bf16.msra.mxu0 %v8349
      %11520 = vmatprep.subr.bf16.mxu0 0
      %11521 = vmatpush1.bf16.msra.mxu0 %v8350
      %11522 = vmatprep.subr.bf16.mxu0 0
      %11523 = vmatpush1.bf16.msra.mxu0 %v8351
      %11524 = vmatprep.subr.bf16.mxu0 0
      %11525 = vmatpush1.bf16.msra.mxu0 %v8352
      %11526 = vmatprep.subr.bf16.mxu0 0
      %11527 = vmatpush1.bf16.msra.mxu0 %v8353
      %11528 = vmatprep.subr.bf16.mxu0 0
      %11529 = vmatpush1.bf16.msra.mxu0 %v8354
      %11530 = vmatprep.subr.bf16.mxu0 0
      %11531 = vmatpush1.bf16.msra.mxu0 %v8355
      %11532 = vmatprep.subr.bf16.mxu0 0
      %11533 = vmatpush1.bf16.msra.mxu0 %v8356
      %11534 = vmatprep.subr.bf16.mxu0 0
      %11535 = vmatpush1.bf16.msra.mxu0 %v8357
      %11536 = vmatprep.subr.bf16.mxu0 0
      %11537 = vmatpush1.bf16.msra.mxu0 %v8358
      %11538 = vmatprep.subr.bf16.mxu0 0
      %11539 = vmatpush1.bf16.msra.mxu0 %v8359
      %11540 = vmatprep.subr.bf16.mxu0 0
      %11541 = vmatpush1.bf16.msra.mxu0 %v8360
      %11542 = vmatprep.subr.bf16.mxu0 0
      %11543 = vmatpush1.bf16.msra.mxu0 %v8361
      %11544 = vmatprep.subr.bf16.mxu0 0
      %11545 = vmatpush1.bf16.msra.mxu0 %v8362
      %11546 = vmatprep.subr.bf16.mxu0 0
      %11547 = vmatpush1.bf16.msra.mxu0 %v8363
      %11548 = vmatprep.mubr.bf16.mxu0 %v3056
      %11549 = vmatmul.mubr.bf16.gmra.mrb[0].mxu0 %v3042
      %v11550 = vpop.f32.mrb[0].mxu0
      %v11551 = vadd.f32 %v11511, %v11550
      %v11552 = vpop.f32.mrb[0].mxu0
      %v11553 = vpop.f32.mrb[0].mxu0
      %v11554 = vpop.f32.mrb[0].mxu0
      %11555 = vdwg.mxu0
      %11556 = vmatprep.subr.bf16.mxu0 0
      %11557 = vmatpush1.bf16.msra.mxu0 %v8364
      %11558 = vmatprep.subr.bf16.mxu0 0
      %11559 = vmatpush1.bf16.msra.mxu0 %v8365
      %11560 = vmatprep.subr.bf16.mxu0 0
      %11561 = vmatpush1.bf16.msra.mxu0 %v8366
      %11562 = vmatprep.subr.bf16.mxu0 0
      %11563 = vmatpush1.bf16.msra.mxu0 %v8367
      %11564 = vmatprep.subr.bf16.mxu0 0
      %11565 = vmatpush1.bf16.msra.mxu0 %v8368
      %11566 = vmatprep.subr.bf16.mxu0 0
      %11567 = vmatpush1.bf16.msra.mxu0 %v8369
      %11568 = vmatprep.subr.bf16.mxu0 0
      %11569 = vmatpush1.bf16.msra.mxu0 %v8370
      %11570 = vmatprep.subr.bf16.mxu0 0
      %11571 = vmatpush1.bf16.msra.mxu0 %v8371
      %11572 = vmatprep.subr.bf16.mxu0 0
      %11573 = vmatpush1.bf16.msra.mxu0 %v8372
      %11574 = vmatprep.subr.bf16.mxu0 0
      %11575 = vmatpush1.bf16.msra.mxu0 %v8373
      %11576 = vmatprep.subr.bf16.mxu0 0
      %11577 = vmatpush1.bf16.msra.mxu0 %v8374
      %11578 = vmatprep.subr.bf16.mxu0 0
      %11579 = vmatpush1.bf16.msra.mxu0 %v8375
      %11580 = vmatprep.subr.bf16.mxu0 0
      %11581 = vmatpush1.bf16.msra.mxu0 %v8376
      %11582 = vmatprep.subr.bf16.mxu0 0
      %11583 = vmatpush1.bf16.msra.mxu0 %v8377
      %11584 = vmatprep.subr.bf16.mxu0 0
      %11585 = vmatpush1.bf16.msra.mxu0 %v8378
      %11586 = vmatprep.subr.bf16.mxu0 0
      %11587 = vmatpush1.bf16.msra.mxu0 %v8379
      %11588 = vmatprep.mubr.bf16.mxu0 %v3066
      %11589 = vmatmul.mubr.bf16.gmra.mrb[0].mxu0 %v3064
      %v11590 = vpop.f32.mrb[0].mxu0
      %v11591 = vadd.f32 %v11551, %v11590
      %v11592 = vpop.f32.mrb[0].mxu0
      %v11593 = vpop.f32.mrb[0].mxu0
      %v11594 = vpop.f32.mrb[0].mxu0
      %11595 = vdwg.mxu0
      %11596 = vmatprep.subr.bf16.mxu0 0
      %11597 = vmatpush1.bf16.msra.mxu0 %v8380
      %11598 = vmatprep.subr.bf16.mxu0 0
      %11599 = vmatpush1.bf16.msra.mxu0 %v8381
      %11600 = vmatprep.subr.bf16.mxu0 0
      %11601 = vmatpush1.bf16.msra.mxu0 %v8382
      %11602 = vmatprep.subr.bf16.mxu0 0
      %11603 = vmatpush1.bf16.msra.mxu0 %v8383
      %11604 = vmatprep.subr.bf16.mxu0 0
      %11605 = vmatpush1.bf16.msra.mxu0 %v8384
      %11606 = vmatprep.subr.bf16.mxu0 0
      %11607 = vmatpush1.bf16.msra.mxu0 %v8385
      %11608 = vmatprep.subr.bf16.mxu0 0
      %11609 = vmatpush1.bf16.msra.mxu0 %v8386
      %11610 = vmatprep.subr.bf16.mxu0 0
      %11611 = vmatpush1.bf16.msra.mxu0 %v8387
      %11612 = vmatprep.subr.bf16.mxu0 0
      %11613 = vmatpush1.bf16.msra.mxu0 %v8388
      %11614 = vmatprep.subr.bf16.mxu0 0
      %11615 = vmatpush1.bf16.msra.mxu0 %v8389
      %11616 = vmatprep.subr.bf16.mxu0 0
      %11617 = vmatpush1.bf16.msra.mxu0 %v8390
      %11618 = vmatprep.subr.bf16.mxu0 0
      %11619 = vmatpush1.bf16.msra.mxu0 %v8391
      %11620 = vmatprep.subr.bf16.mxu0 0
      %11621 = vmatpush1.bf16.msra.mxu0 %v8392
      %11622 = vmatprep.subr.bf16.mxu0 0
      %11623 = vmatpush1.bf16.msra.mxu0 %v8393
      %11624 = vmatprep.subr.bf16.mxu0 0
      %11625 = vmatpush1.bf16.msra.mxu0 %v8394
      %11626 = vmatprep.subr.bf16.mxu0 0
      %11627 = vmatpush1.bf16.msra.mxu0 %v8395
      %11628 = vmatprep.mubr.bf16.mxu0 %v3063
      %11629 = vmatmul.mubr.bf16.gmra.mrb[0].mxu0 %v3049
      %v11630 = vpop.f32.mrb[0].mxu0
      %v11631 = vadd.f32 %v11591, %v11630
      %v11632 = vpop.f32.mrb[0].mxu0
      %v11633 = vpop.f32.mrb[0].mxu0
      %v11634 = vpop.f32.mrb[0].mxu0
      %11635 = vdwg.mxu0
      %11636 = vmatprep.subr.bf16.mxu0 0
      %11637 = vmatpush1.bf16.msra.mxu0 %v8396
      %11638 = vmatprep.subr.bf16.mxu0 0
      %11639 = vmatpush1.bf16.msra.mxu0 %v8397
      %11640 = vmatprep.subr.bf16.mxu0 0
      %11641 = vmatpush1.bf16.msra.mxu0 %v8398
      %11642 = vmatprep.subr.bf16.mxu0 0
      %11643 = vmatpush1.bf16.msra.mxu0 %v8399
      %11644 = vmatprep.subr.bf16.mxu0 0
      %11645 = vmatpush1.bf16.msra.mxu0 %v8400
      %11646 = vmatprep.subr.bf16.mxu0 0
      %11647 = vmatpush1.bf16.msra.mxu0 %v8401
      %11648 = vmatprep.subr.bf16.mxu0 0
      %11649 = vmatpush1.bf16.msra.mxu0 %v8402
      %11650 = vmatprep.subr.bf16.mxu0 0
      %11651 = vmatpush1.bf16.msra.mxu0 %v8403
      %11652 = vmatprep.subr.bf16.mxu0 0
      %11653 = vmatpush1.bf16.msra.mxu0 %v8404
      %11654 = vmatprep.subr.bf16.mxu0 0
      %11655 = vmatpush1.bf16.msra.mxu0 %v8405
      %11656 = vmatprep.subr.bf16.mxu0 0
      %11657 = vmatpush1.bf16.msra.mxu0 %v8406
      %11658 = vmatprep.subr.bf16.mxu0 0
      %11659 = vmatpush1.bf16.msra.mxu0 %v8407
      %11660 = vmatprep.subr.bf16.mxu0 0
      %11661 = vmatpush1.bf16.msra.mxu0 %v8408
      %11662 = vmatprep.subr.bf16.mxu0 0
      %11663 = vmatpush1.bf16.msra.mxu0 %v8409
      %11664 = vmatprep.subr.bf16.mxu0 0
      %11665 = vmatpush1.bf16.msra.mxu0 %v8410
      %11666 = vmatprep.subr.bf16.mxu0 0
      %11667 = vmatpush1.bf16.msra.mxu0 %v8411
      %11668 = vmatprep.mubr.bf16.mxu0 %v3067
      %11669 = vmatmul.mubr.bf16.gmra.mrb[0].mxu0 %v3065
      %v11670 = vpop.f32.mrb[0].mxu0
      %v11671 = vadd.f32 %v11631, %v11670
      %v11672 = vpop.f32.mrb[0].mxu0
      %v11673 = vpop.f32.mrb[0].mxu0
      %v11674 = vpop.f32.mrb[0].mxu0
      %11675 = vdwg.mxu0
      %11676 = vmatprep.subr.bf16.mxu0 0
      %11677 = vmatpush1.bf16.msra.mxu0 %v8412
      %11678 = vmatprep.subr.bf16.mxu0 0
      %11679 = vmatpush1.bf16.msra.mxu0 %v8413
      %11680 = vmatprep.subr.bf16.mxu0 0
      %11681 = vmatpush1.bf16.msra.mxu0 %v8414
      %11682 = vmatprep.subr.bf16.mxu0 0
      %11683 = vmatpush1.bf16.msra.mxu0 %v8415
      %11684 = vmatprep.subr.bf16.mxu0 0
      %11685 = vmatpush1.bf16.msra.mxu0 %v8416
      %11686 = vmatprep.subr.bf16.mxu0 0
      %11687 = vmatpush1.bf16.msra.mxu0 %v8417
      %11688 = vmatprep.subr.bf16.mxu0 0
      %11689 = vmatpush1.bf16.msra.mxu0 %v8418
      %11690 = vmatprep.subr.bf16.mxu0 0
      %11691 = vmatpush1.bf16.msra.mxu0 %v8419
      %11692 = vmatprep.subr.bf16.mxu0 0
      %11693 = vmatpush1.bf16.msra.mxu0 %v8420
      %11694 = vmatprep.subr.bf16.mxu0 0
      %11695 = vmatpush1.bf16.msra.mxu0 %v8421
      %11696 = vmatprep.subr.bf16.mxu0 0
      %11697 = vmatpush1.bf16.msra.mxu0 %v8422
      %11698 = vmatprep.subr.bf16.mxu0 0
      %11699 = vmatpush1.bf16.msra.mxu0 %v8423
      %11700 = vmatprep.subr.bf16.mxu0 0
      %11701 = vmatpush1.bf16.msra.mxu0 %v8424
      %11702 = vmatprep.subr.bf16.mxu0 0
      %11703 = vmatpush1.bf16.msra.mxu0 %v8425
      %11704 = vmatprep.subr.bf16.mxu0 0
      %11705 = vmatpush1.bf16.msra.mxu0 %v8426
      %11706 = vmatprep.subr.bf16.mxu0 0
      %11707 = vmatpush1.bf16.msra.mxu0 %v8427
      %11708 = vmatprep.mubr.bf16.mxu0 %v3105
      %11709 = vmatmul.mubr.bf16.gmra.mrb[0].mxu0 %v3091
      %v11710 = vpop.f32.mrb[0].mxu0
      %v11711 = vadd.f32 %v11671, %v11710
      %v11712 = vpop.f32.mrb[0].mxu0
      %v11713 = vpop.f32.mrb[0].mxu0
      %v11714 = vpop.f32.mrb[0].mxu0
      %11715 = vdwg.mxu0
      %11716 = vmatprep.subr.bf16.mxu0 0
      %11717 = vmatpush1.bf16.msra.mxu0 %v8428
      %11718 = vmatprep.subr.bf16.mxu0 0
      %11719 = vmatpush1.bf16.msra.mxu0 %v8429
      %11720 = vmatprep.subr.bf16.mxu0 0
      %11721 = vmatpush1.bf16.msra.mxu0 %v8430
      %11722 = vmatprep.subr.bf16.mxu0 0
      %11723 = vmatpush1.bf16.msra.mxu0 %v8431
      %11724 = vmatprep.subr.bf16.mxu0 0
      %11725 = vmatpush1.bf16.msra.mxu0 %v8432
      %11726 = vmatprep.subr.bf16.mxu0 0
      %11727 = vmatpush1.bf16.msra.mxu0 %v8433
      %11728 = vmatprep.subr.bf16.mxu0 0
      %11729 = vmatpush1.bf16.msra.mxu0 %v8434
      %11730 = vmatprep.subr.bf16.mxu0 0
      %11731 = vmatpush1.bf16.msra.mxu0 %v8435
      %11732 = vmatprep.subr.bf16.mxu0 0
      %11733 = vmatpush1.bf16.msra.mxu0 %v8436
      %11734 = vmatprep.subr.bf16.mxu0 0
      %11735 = vmatpush1.bf16.msra.mxu0 %v8437
      %11736 = vmatprep.subr.bf16.mxu0 0
      %11737 = vmatpush1.bf16.msra.mxu0 %v8438
      %11738 = vmatprep.subr.bf16.mxu0 0
      %11739 = vmatpush1.bf16.msra.mxu0 %v8439
      %11740 = vmatprep.subr.bf16.mxu0 0
      %11741 = vmatpush1.bf16.msra.mxu0 %v8440
      %11742 = vmatprep.subr.bf16.mxu0 0
      %11743 = vmatpush1.bf16.msra.mxu0 %v8441
      %11744 = vmatprep.subr.bf16.mxu0 0
      %11745 = vmatpush1.bf16.msra.mxu0 %v8442
      %11746 = vmatprep.subr.bf16.mxu0 0
      %11747 = vmatpush1.bf16.msra.mxu0 %v8443
      %11748 = vmatprep.mubr.bf16.mxu0 %v3115
      %11749 = vmatmul.mubr.bf16.gmra.mrb[0].mxu0 %v3113
      %v11750 = vpop.f32.mrb[0].mxu0
      %v11751 = vadd.f32 %v11711, %v11750
      %v11752 = vpop.f32.mrb[0].mxu0
      %v11753 = vpop.f32.mrb[0].mxu0
      %v11754 = vpop.f32.mrb[0].mxu0
      %11755 = vdwg.mxu0
      %11756 = vmatprep.subr.bf16.mxu0 0
      %11757 = vmatpush1.bf16.msra.mxu0 %v8444
      %11758 = vmatprep.subr.bf16.mxu0 0
      %11759 = vmatpush1.bf16.msra.mxu0 %v8445
      %11760 = vmatprep.subr.bf16.mxu0 0
      %11761 = vmatpush1.bf16.msra.mxu0 %v8446
      %11762 = vmatprep.subr.bf16.mxu0 0
      %11763 = vmatpush1.bf16.msra.mxu0 %v8447
      %11764 = vmatprep.subr.bf16.mxu0 0
      %11765 = vmatpush1.bf16.msra.mxu0 %v8448
      %11766 = vmatprep.subr.bf16.mxu0 0
      %11767 = vmatpush1.bf16.msra.mxu0 %v8449
      %11768 = vmatprep.subr.bf16.mxu0 0
      %11769 = vmatpush1.bf16.msra.mxu0 %v8450
      %11770 = vmatprep.subr.bf16.mxu0 0
      %11771 = vmatpush1.bf16.msra.mxu0 %v8451
      %11772 = vmatprep.subr.bf16.mxu0 0
      %11773 = vmatpush1.bf16.msra.mxu0 %v8452
      %11774 = vmatprep.subr.bf16.mxu0 0
      %11775 = vmatpush1.bf16.msra.mxu0 %v8453
      %11776 = vmatprep.subr.bf16.mxu0 0
      %11777 = vmatpush1.bf16.msra.mxu0 %v8454
      %11778 = vmatprep.subr.bf16.mxu0 0
      %11779 = vmatpush1.bf16.msra.mxu0 %v8455
      %11780 = vmatprep.subr.bf16.mxu0 0
      %11781 = vmatpush1.bf16.msra.mxu0 %v8456
      %11782 = vmatprep.subr.bf16.mxu0 0
      %11783 = vmatpush1.bf16.msra.mxu0 %v8457
      %11784 = vmatprep.subr.bf16.mxu0 0
      %11785 = vmatpush1.bf16.msra.mxu0 %v8458
      %11786 = vmatprep.subr.bf16.mxu0 0
      %11787 = vmatpush1.bf16.msra.mxu0 %v8459
      %11788 = vmatprep.mubr.bf16.mxu0 %v3112
      %11789 = vmatmul.mubr.bf16.gmra.mrb[0].mxu0 %v3098
      %v11790 = vpop.f32.mrb[0].mxu0
      %v11791 = vadd.f32 %v11751, %v11790
      %v11792 = vpop.f32.mrb[0].mxu0
      %v11793 = vpop.f32.mrb[0].mxu0
      %v11794 = vpop.f32.mrb[0].mxu0
      %11795 = vdwg.mxu0
      %11796 = vmatprep.subr.bf16.mxu0 0
      %11797 = vmatpush1.bf16.msra.mxu0 %v8460
      %11798 = vmatprep.subr.bf16.mxu0 0
      %11799 = vmatpush1.bf16.msra.mxu0 %v8461
      %11800 = vmatprep.subr.bf16.mxu0 0
      %11801 = vmatpush1.bf16.msra.mxu0 %v8462
      %11802 = vmatprep.subr.bf16.mxu0 0
      %11803 = vmatpush1.bf16.msra.mxu0 %v8463
      %11804 = vmatprep.subr.bf16.mxu0 0
      %11805 = vmatpush1.bf16.msra.mxu0 %v8464
      %11806 = vmatprep.subr.bf16.mxu0 0
      %11807 = vmatpush1.bf16.msra.mxu0 %v8465
      %11808 = vmatprep.subr.bf16.mxu0 0
      %11809 = vmatpush1.bf16.msra.mxu0 %v8466
      %11810 = vmatprep.subr.bf16.mxu0 0
      %11811 = vmatpush1.bf16.msra.mxu0 %v8467
      %11812 = vmatprep.subr.bf16.mxu0 0
      %11813 = vmatpush1.bf16.msra.mxu0 %v8468
      %11814 = vmatprep.subr.bf16.mxu0 0
      %11815 = vmatpush1.bf16.msra.mxu0 %v8469
      %11816 = vmatprep.subr.bf16.mxu0 0
      %11817 = vmatpush1.bf16.msra.mxu0 %v8470
      %11818 = vmatprep.subr.bf16.mxu0 0
      %11819 = vmatpush1.bf16.msra.mxu0 %v8471
      %11820 = vmatprep.subr.bf16.mxu0 0
      %11821 = vmatpush1.bf16.msra.mxu0 %v8472
      %11822 = vmatprep.subr.bf16.mxu0 0
      %11823 = vmatpush1.bf16.msra.mxu0 %v8473
      %11824 = vmatprep.subr.bf16.mxu0 0
      %11825 = vmatpush1.bf16.msra.mxu0 %v8474
      %11826 = vmatprep.subr.bf16.mxu0 0
      %11827 = vmatpush1.bf16.msra.mxu0 %v8475
      %11828 = vmatprep.mubr.bf16.mxu0 %v3116
      %11829 = vmatmul.mubr.bf16.gmra.mrb[0].mxu0 %v3114
      %v11830 = vpop.f32.mrb[0].mxu0
      %v11831 = vadd.f32 %v11791, %v11830
      %v11832 = vpop.f32.mrb[0].mxu0
      %v11833 = vpop.f32.mrb[0].mxu0
      %v11834 = vpop.f32.mrb[0].mxu0
      %11835 = vdwg.mxu0
      %11836 = vmatprep.subr.bf16.mxu0 0
      %11837 = vmatpush1.bf16.msra.mxu0 %v8476
      %11838 = vmatprep.subr.bf16.mxu0 0
      %11839 = vmatpush1.bf16.msra.mxu0 %v8477
      %11840 = vmatprep.subr.bf16.mxu0 0
      %11841 = vmatpush1.bf16.msra.mxu0 %v8478
      %11842 = vmatprep.subr.bf16.mxu0 0
      %11843 = vmatpush1.bf16.msra.mxu0 %v8479
      %11844 = vmatprep.subr.bf16.mxu0 0
      %11845 = vmatpush1.bf16.msra.mxu0 %v8480
      %11846 = vmatprep.subr.bf16.mxu0 0
      %11847 = vmatpush1.bf16.msra.mxu0 %v8481
      %11848 = vmatprep.subr.bf16.mxu0 0
      %11849 = vmatpush1.bf16.msra.mxu0 %v8482
      %11850 = vmatprep.subr.bf16.mxu0 0
      %11851 = vmatpush1.bf16.msra.mxu0 %v8483
      %11852 = vmatprep.subr.bf16.mxu0 0
      %11853 = vmatpush1.bf16.msra.mxu0 %v8484
      %11854 = vmatprep.subr.bf16.mxu0 0
      %11855 = vmatpush1.bf16.msra.mxu0 %v8485
      %11856 = vmatprep.subr.bf16.mxu0 0
      %11857 = vmatpush1.bf16.msra.mxu0 %v8486
      %11858 = vmatprep.subr.bf16.mxu0 0
      %11859 = vmatpush1.bf16.msra.mxu0 %v8487
      %11860 = vmatprep.subr.bf16.mxu0 0
      %11861 = vmatpush1.bf16.msra.mxu0 %v8488
      %11862 = vmatprep.subr.bf16.mxu0 0
      %11863 = vmatpush1.bf16.msra.mxu0 %v8489
      %11864 = vmatprep.subr.bf16.mxu0 0
      %11865 = vmatpush1.bf16.msra.mxu0 %v8490
      %11866 = vmatprep.subr.bf16.mxu0 0
      %11867 = vmatpush1.bf16.msra.mxu0 %v8491
      %11868 = vmatprep.mubr.bf16.mxu0 %v3154
      %11869 = vmatmul.mubr.bf16.gmra.mrb[0].mxu0 %v3140
      %v11870 = vpop.f32.mrb[0].mxu0
      %v11871 = vadd.f32 %v11831, %v11870
      %v11872 = vpop.f32.mrb[0].mxu0
      %v11873 = vpop.f32.mrb[0].mxu0
      %v11874 = vpop.f32.mrb[0].mxu0
      %11875 = vdwg.mxu0
      %11876 = vmatprep.subr.bf16.mxu0 0
      %11877 = vmatpush1.bf16.msra.mxu0 %v8492
      %11878 = vmatprep.subr.bf16.mxu0 0
      %11879 = vmatpush1.bf16.msra.mxu0 %v8493
      %11880 = vmatprep.subr.bf16.mxu0 0
      %11881 = vmatpush1.bf16.msra.mxu0 %v8494
      %11882 = vmatprep.subr.bf16.mxu0 0
      %11883 = vmatpush1.bf16.msra.mxu0 %v8495
      %11884 = vmatprep.subr.bf16.mxu0 0
      %11885 = vmatpush1.bf16.msra.mxu0 %v8496
      %11886 = vmatprep.subr.bf16.mxu0 0
      %11887 = vmatpush1.bf16.msra.mxu0 %v8497
      %11888 = vmatprep.subr.bf16.mxu0 0
      %11889 = vmatpush1.bf16.msra.mxu0 %v8498
      %11890 = vmatprep.subr.bf16.mxu0 0
      %11891 = vmatpush1.bf16.msra.mxu0 %v8499
      %11892 = vmatprep.subr.bf16.mxu0 0
      %11893 = vmatpush1.bf16.msra.mxu0 %v8500
      %11894 = vmatprep.subr.bf16.mxu0 0
      %11895 = vmatpush1.bf16.msra.mxu0 %v8501
      %11896 = vmatprep.subr.bf16.mxu0 0
      %11897 = vmatpush1.bf16.msra.mxu0 %v8502
      %11898 = vmatprep.subr.bf16.mxu0 0
      %11899 = vmatpush1.bf16.msra.mxu0 %v8503
      %11900 = vmatprep.subr.bf16.mxu0 0
      %11901 = vmatpush1.bf16.msra.mxu0 %v8504
      %11902 = vmatprep.subr.bf16.mxu0 0
      %11903 = vmatpush1.bf16.msra.mxu0 %v8505
      %11904 = vmatprep.subr.bf16.mxu0 0
      %11905 = vmatpush1.bf16.msra.mxu0 %v8506
      %11906 = vmatprep.subr.bf16.mxu0 0
      %11907 = vmatpush1.bf16.msra.mxu0 %v8507
      %11908 = vmatprep.mubr.bf16.mxu0 %v3164
      %11909 = vmatmul.mubr.bf16.gmra.mrb[0].mxu0 %v3162
      %v11910 = vpop.f32.mrb[0].mxu0
      %v11911 = vadd.f32 %v11871, %v11910
      %v11912 = vpop.f32.mrb[0].mxu0
      %v11913 = vpop.f32.mrb[0].mxu0
      %v11914 = vpop.f32.mrb[0].mxu0
      %11915 = vdwg.mxu0
      %11916 = vmatprep.subr.bf16.mxu0 0
      %11917 = vmatpush1.bf16.msra.mxu0 %v8508
      %11918 = vmatprep.subr.bf16.mxu0 0
      %11919 = vmatpush1.bf16.msra.mxu0 %v8509
      %11920 = vmatprep.subr.bf16.mxu0 0
      %11921 = vmatpush1.bf16.msra.mxu0 %v8510
      %11922 = vmatprep.subr.bf16.mxu0 0
      %11923 = vmatpush1.bf16.msra.mxu0 %v8511
      %11924 = vmatprep.subr.bf16.mxu0 0
      %11925 = vmatpush1.bf16.msra.mxu0 %v8512
      %11926 = vmatprep.subr.bf16.mxu0 0
      %11927 = vmatpush1.bf16.msra.mxu0 %v8513
      %11928 = vmatprep.subr.bf16.mxu0 0
      %11929 = vmatpush1.bf16.msra.mxu0 %v8514
      %11930 = vmatprep.subr.bf16.mxu0 0
      %11931 = vmatpush1.bf16.msra.mxu0 %v8515
      %11932 = vmatprep.subr.bf16.mxu0 0
      %11933 = vmatpush1.bf16.msra.mxu0 %v8516
      %11934 = vmatprep.subr.bf16.mxu0 0
      %11935 = vmatpush1.bf16.msra.mxu0 %v8517
      %11936 = vmatprep.subr.bf16.mxu0 0
      %11937 = vmatpush1.bf16.msra.mxu0 %v8518
      %11938 = vmatprep.subr.bf16.mxu0 0
      %11939 = vmatpush1.bf16.msra.mxu0 %v8519
      %11940 = vmatprep.subr.bf16.mxu0 0
      %11941 = vmatpush1.bf16.msra.mxu0 %v8520
      %11942 = vmatprep.subr.bf16.mxu0 0
      %11943 = vmatpush1.bf16.msra.mxu0 %v8521
      %11944 = vmatprep.subr.bf16.mxu0 0
      %11945 = vmatpush1.bf16.msra.mxu0 %v8522
      %11946 = vmatprep.subr.bf16.mxu0 0
      %11947 = vmatpush1.bf16.msra.mxu0 %v8523
      %11948 = vmatprep.mubr.bf16.mxu0 %v3161
      %11949 = vmatmul.mubr.bf16.gmra.mrb[0].mxu0 %v3147
      %v11950 = vpop.f32.mrb[0].mxu0
      %v11951 = vadd.f32 %v11911, %v11950
      %v11952 = vpop.f32.mrb[0].mxu0
      %v11953 = vpop.f32.mrb[0].mxu0
      %v11954 = vpop.f32.mrb[0].mxu0
      %11955 = vdwg.mxu0
      %11956 = vmatprep.subr.bf16.mxu0 0
      %11957 = vmatpush1.bf16.msra.mxu0 %v8524
      %11958 = vmatprep.subr.bf16.mxu0 0
      %11959 = vmatpush1.bf16.msra.mxu0 %v8525
      %11960 = vmatprep.subr.bf16.mxu0 0
      %11961 = vmatpush1.bf16.msra.mxu0 %v8526
      %11962 = vmatprep.subr.bf16.mxu0 0
      %11963 = vmatpush1.bf16.msra.mxu0 %v8527
      %11964 = vmatprep.subr.bf16.mxu0 0
      %11965 = vmatpush1.bf16.msra.mxu0 %v8528
      %11966 = vmatprep.subr.bf16.mxu0 0
      %11967 = vmatpush1.bf16.msra.mxu0 %v8529
      %11968 = vmatprep.subr.bf16.mxu0 0
      %11969 = vmatpush1.bf16.msra.mxu0 %v8530
      %11970 = vmatprep.subr.bf16.mxu0 0
      %11971 = vmatpush1.bf16.msra.mxu0 %v8531
      %11972 = vmatprep.subr.bf16.mxu0 0
      %11973 = vmatpush1.bf16.msra.mxu0 %v8532
      %11974 = vmatprep.subr.bf16.mxu0 0
      %11975 = vmatpush1.bf16.msra.mxu0 %v8533
      %11976 = vmatprep.subr.bf16.mxu0 0
      %11977 = vmatpush1.bf16.msra.mxu0 %v8534
      %11978 = vmatprep.subr.bf16.mxu0 0
      %11979 = vmatpush1.bf16.msra.mxu0 %v8535
      %11980 = vmatprep.subr.bf16.mxu0 0
      %11981 = vmatpush1.bf16.msra.mxu0 %v8536
      %11982 = vmatprep.subr.bf16.mxu0 0
      %11983 = vmatpush1.bf16.msra.mxu0 %v8537
      %11984 = vmatprep.subr.bf16.mxu0 0
      %11985 = vmatpush1.bf16.msra.mxu0 %v8538
      %11986 = vmatprep.subr.bf16.mxu0 0
      %11987 = vmatpush1.bf16.msra.mxu0 %v8539
      %11988 = vmatprep.mubr.bf16.mxu0 %v3165
      %11989 = vmatmul.mubr.bf16.gmra.mrb[0].mxu0 %v3163
      %v11990 = vpop.f32.mrb[0].mxu0
      %v11991 = vadd.f32 %v11951, %v11990
      %v11992 = vpop.f32.mrb[0].mxu0
      %v11993 = vpop.f32.mrb[0].mxu0
      %v11994 = vpop.f32.mrb[0].mxu0
      %11995 = vdwg.mxu0
      %11996 = vmatprep.subr.bf16.mxu0 0
      %11997 = vmatpush1.bf16.msra.mxu0 %v8540
      %11998 = vmatprep.subr.bf16.mxu0 0
      %11999 = vmatpush1.bf16.msra.mxu0 %v8541
      %12000 = vmatprep.subr.bf16.mxu0 0
      %12001 = vmatpush1.bf16.msra.mxu0 %v8542
      %12002 = vmatprep.subr.bf16.mxu0 0
      %12003 = vmatpush1.bf16.msra.mxu0 %v8543
      %12004 = vmatprep.subr.bf16.mxu0 0
      %12005 = vmatpush1.bf16.msra.mxu0 %v8544
      %12006 = vmatprep.subr.bf16.mxu0 0
      %12007 = vmatpush1.bf16.msra.mxu0 %v8545
      %12008 = vmatprep.subr.bf16.mxu0 0
      %12009 = vmatpush1.bf16.msra.mxu0 %v8546
      %12010 = vmatprep.subr.bf16.mxu0 0
      %12011 = vmatpush1.bf16.msra.mxu0 %v8547
      %12012 = vmatprep.subr.bf16.mxu0 0
      %12013 = vmatpush1.bf16.msra.mxu0 %v8548
      %12014 = vmatprep.subr.bf16.mxu0 0
      %12015 = vmatpush1.bf16.msra.mxu0 %v8549
      %12016 = vmatprep.subr.bf16.mxu0 0
      %12017 = vmatpush1.bf16.msra.mxu0 %v8550
      %12018 = vmatprep.subr.bf16.mxu0 0
      %12019 = vmatpush1.bf16.msra.mxu0 %v8551
      %12020 = vmatprep.subr.bf16.mxu0 0
      %12021 = vmatpush1.bf16.msra.mxu0 %v8552
      %12022 = vmatprep.subr.bf16.mxu0 0
      %12023 = vmatpush1.bf16.msra.mxu0 %v8553
      %12024 = vmatprep.subr.bf16.mxu0 0
      %12025 = vmatpush1.bf16.msra.mxu0 %v8554
      %12026 = vmatprep.subr.bf16.mxu0 0
      %12027 = vmatpush1.bf16.msra.mxu0 %v8555
      %12028 = vmatprep.mubr.bf16.mxu0 %v3203
      %12029 = vmatmul.mubr.bf16.gmra.mrb[0].mxu0 %v3189
      %v12030 = vpop.f32.mrb[0].mxu0
      %v12031 = vadd.f32 %v11991, %v12030
      %v12032 = vpop.f32.mrb[0].mxu0
      %v12033 = vpop.f32.mrb[0].mxu0
      %v12034 = vpop.f32.mrb[0].mxu0
      %12035 = vdwg.mxu0
      %12036 = vmatprep.subr.bf16.mxu0 0
      %12037 = vmatpush1.bf16.msra.mxu0 %v8556
      %12038 = vmatprep.subr.bf16.mxu0 0
      %12039 = vmatpush1.bf16.msra.mxu0 %v8557
      %12040 = vmatprep.subr.bf16.mxu0 0
      %12041 = vmatpush1.bf16.msra.mxu0 %v8558
      %12042 = vmatprep.subr.bf16.mxu0 0
      %12043 = vmatpush1.bf16.msra.mxu0 %v8559
      %12044 = vmatprep.subr.bf16.mxu0 0
      %12045 = vmatpush1.bf16.msra.mxu0 %v8560
      %12046 = vmatprep.subr.bf16.mxu0 0
      %12047 = vmatpush1.bf16.msra.mxu0 %v8561
      %12048 = vmatprep.subr.bf16.mxu0 0
      %12049 = vmatpush1.bf16.msra.mxu0 %v8562
      %12050 = vmatprep.subr.bf16.mxu0 0
      %12051 = vmatpush1.bf16.msra.mxu0 %v8563
      %12052 = vmatprep.subr.bf16.mxu0 0
      %12053 = vmatpush1.bf16.msra.mxu0 %v8564
      %12054 = vmatprep.subr.bf16.mxu0 0
      %12055 = vmatpush1.bf16.msra.mxu0 %v8565
      %12056 = vmatprep.subr.bf16.mxu0 0
      %12057 = vmatpush1.bf16.msra.mxu0 %v8566
      %12058 = vmatprep.subr.bf16.mxu0 0
      %12059 = vmatpush1.bf16.msra.mxu0 %v8567
      %12060 = vmatprep.subr.bf16.mxu0 0
      %12061 = vmatpush1.bf16.msra.mxu0 %v8568
      %12062 = vmatprep.subr.bf16.mxu0 0
      %12063 = vmatpush1.bf16.msra.mxu0 %v8569
      %12064 = vmatprep.subr.bf16.mxu0 0
      %12065 = vmatpush1.bf16.msra.mxu0 %v8570
      %12066 = vmatprep.subr.bf16.mxu0 0
      %12067 = vmatpush1.bf16.msra.mxu0 %v8571
      %12068 = vmatprep.mubr.bf16.mxu0 %v3213
      %12069 = vmatmul.mubr.bf16.gmra.mrb[0].mxu0 %v3211
      %v12070 = vpop.f32.mrb[0].mxu0
      %v12071 = vadd.f32 %v12031, %v12070
      %v12072 = vpop.f32.mrb[0].mxu0
      %v12073 = vpop.f32.mrb[0].mxu0
      %v12074 = vpop.f32.mrb[0].mxu0
      %12075 = vdwg.mxu0
      %12076 = vmatprep.subr.bf16.mxu0 0
      %12077 = vmatpush1.bf16.msra.mxu0 %v8572
      %12078 = vmatprep.subr.bf16.mxu0 0
      %12079 = vmatpush1.bf16.msra.mxu0 %v8573
      %12080 = vmatprep.subr.bf16.mxu0 0
      %12081 = vmatpush1.bf16.msra.mxu0 %v8574
      %12082 = vmatprep.subr.bf16.mxu0 0
      %12083 = vmatpush1.bf16.msra.mxu0 %v8575
      %12084 = vmatprep.subr.bf16.mxu0 0
      %12085 = vmatpush1.bf16.msra.mxu0 %v8576
      %12086 = vmatprep.subr.bf16.mxu0 0
      %12087 = vmatpush1.bf16.msra.mxu0 %v8577
      %12088 = vmatprep.subr.bf16.mxu0 0
      %12089 = vmatpush1.bf16.msra.mxu0 %v8578
      %12090 = vmatprep.subr.bf16.mxu0 0
      %12091 = vmatpush1.bf16.msra.mxu0 %v8579
      %12092 = vmatprep.subr.bf16.mxu0 0
      %12093 = vmatpush1.bf16.msra.mxu0 %v8580
      %12094 = vmatprep.subr.bf16.mxu0 0
      %12095 = vmatpush1.bf16.msra.mxu0 %v8581
      %12096 = vmatprep.subr.bf16.mxu0 0
      %12097 = vmatpush1.bf16.msra.mxu0 %v8582
      %12098 = vmatprep.subr.bf16.mxu0 0
      %12099 = vmatpush1.bf16.msra.mxu0 %v8583
      %12100 = vmatprep.subr.bf16.mxu0 0
      %12101 = vmatpush1.bf16.msra.mxu0 %v8584
      %12102 = vmatprep.subr.bf16.mxu0 0
      %12103 = vmatpush1.bf16.msra.mxu0 %v8585
      %12104 = vmatprep.subr.bf16.mxu0 0
      %12105 = vmatpush1.bf16.msra.mxu0 %v8586
      %12106 = vmatprep.subr.bf16.mxu0 0
      %12107 = vmatpush1.bf16.msra.mxu0 %v8587
      %12108 = vmatprep.mubr.bf16.mxu0 %v3210
      %12109 = vmatmul.mubr.bf16.gmra.mrb[0].mxu0 %v3196
      %v12110 = vpop.f32.mrb[0].mxu0
      %v12111 = vadd.f32 %v12071, %v12110
      %v12112 = vpop.f32.mrb[0].mxu0
      %v12113 = vpop.f32.mrb[0].mxu0
      %v12114 = vpop.f32.mrb[0].mxu0
      %12115 = vdwg.mxu0
      %12116 = vmatprep.subr.bf16.mxu0 0
      %12117 = vmatpush1.bf16.msra.mxu0 %v8588
      %12118 = vmatprep.subr.bf16.mxu0 0
      %12119 = vmatpush1.bf16.msra.mxu0 %v8589
      %12120 = vmatprep.subr.bf16.mxu0 0
      %12121 = vmatpush1.bf16.msra.mxu0 %v8590
      %12122 = vmatprep.subr.bf16.mxu0 0
      %12123 = vmatpush1.bf16.msra.mxu0 %v8591
      %12124 = vmatprep.subr.bf16.mxu0 0
      %12125 = vmatpush1.bf16.msra.mxu0 %v8592
      %12126 = vmatprep.subr.bf16.mxu0 0
      %12127 = vmatpush1.bf16.msra.mxu0 %v8593
      %12128 = vmatprep.subr.bf16.mxu0 0
      %12129 = vmatpush1.bf16.msra.mxu0 %v8594
      %12130 = vmatprep.subr.bf16.mxu0 0
      %12131 = vmatpush1.bf16.msra.mxu0 %v8595
      %12132 = vmatprep.subr.bf16.mxu0 0
      %12133 = vmatpush1.bf16.msra.mxu0 %v8596
      %12134 = vmatprep.subr.bf16.mxu0 0
      %12135 = vmatpush1.bf16.msra.mxu0 %v8597
      %12136 = vmatprep.subr.bf16.mxu0 0
      %12137 = vmatpush1.bf16.msra.mxu0 %v8598
      %12138 = vmatprep.subr.bf16.mxu0 0
      %12139 = vmatpush1.bf16.msra.mxu0 %v8599
      %12140 = vmatprep.subr.bf16.mxu0 0
      %12141 = vmatpush1.bf16.msra.mxu0 %v8600
      %12142 = vmatprep.subr.bf16.mxu0 0
      %12143 = vmatpush1.bf16.msra.mxu0 %v8601
      %12144 = vmatprep.subr.bf16.mxu0 0
      %12145 = vmatpush1.bf16.msra.mxu0 %v8602
      %12146 = vmatprep.subr.bf16.mxu0 0
      %12147 = vmatpush1.bf16.msra.mxu0 %v8603
      %12148 = vmatprep.mubr.bf16.mxu0 %v3214
      %12149 = vmatmul.mubr.bf16.gmra.mrb[0].mxu0 %v3212
      %v12150 = vpop.f32.mrb[0].mxu0
      %v12151 = vadd.f32 %v12111, %v12150
      %v12152 = vpop.f32.mrb[0].mxu0
      %v12153 = vpop.f32.mrb[0].mxu0
      %v12154 = vpop.f32.mrb[0].mxu0
      %12155 = vdwg.mxu0
      %12156 = vmatprep.subr.bf16.mxu0 0
      %12157 = vmatpush1.bf16.msra.mxu0 %v8604
      %12158 = vmatprep.subr.bf16.mxu0 0
      %12159 = vmatpush1.bf16.msra.mxu0 %v8605
      %12160 = vmatprep.subr.bf16.mxu0 0
      %12161 = vmatpush1.bf16.msra.mxu0 %v8606
      %12162 = vmatprep.subr.bf16.mxu0 0
      %12163 = vmatpush1.bf16.msra.mxu0 %v8607
      %12164 = vmatprep.subr.bf16.mxu0 0
      %12165 = vmatpush1.bf16.msra.mxu0 %v8608
      %12166 = vmatprep.subr.bf16.mxu0 0
      %12167 = vmatpush1.bf16.msra.mxu0 %v8609
      %12168 = vmatprep.subr.bf16.mxu0 0
      %12169 = vmatpush1.bf16.msra.mxu0 %v8610
      %12170 = vmatprep.subr.bf16.mxu0 0
      %12171 = vmatpush1.bf16.msra.mxu0 %v8611
      %12172 = vmatprep.subr.bf16.mxu0 0
      %12173 = vmatpush1.bf16.msra.mxu0 %v8612
      %12174 = vmatprep.subr.bf16.mxu0 0
      %12175 = vmatpush1.bf16.msra.mxu0 %v8613
      %12176 = vmatprep.subr.bf16.mxu0 0
      %12177 = vmatpush1.bf16.msra.mxu0 %v8614
      %12178 = vmatprep.subr.bf16.mxu0 0
      %12179 = vmatpush1.bf16.msra.mxu0 %v8615
      %12180 = vmatprep.subr.bf16.mxu0 0
      %12181 = vmatpush1.bf16.msra.mxu0 %v8616
      %12182 = vmatprep.subr.bf16.mxu0 0
      %12183 = vmatpush1.bf16.msra.mxu0 %v8617
      %12184 = vmatprep.subr.bf16.mxu0 0
      %12185 = vmatpush1.bf16.msra.mxu0 %v8618
      %12186 = vmatprep.subr.bf16.mxu0 0
      %12187 = vmatpush1.bf16.msra.mxu0 %v8619
      %12188 = vmatprep.mubr.bf16.mxu0 %v3252
      %12189 = vmatmul.mubr.bf16.gmra.mrb[0].mxu0 %v3238
      %v12190 = vpop.f32.mrb[0].mxu0
      %v12191 = vadd.f32 %v12151, %v12190
      %v12192 = vpop.f32.mrb[0].mxu0
      %v12193 = vpop.f32.mrb[0].mxu0
      %v12194 = vpop.f32.mrb[0].mxu0
      %12195 = vdwg.mxu0
      %12196 = vmatprep.subr.bf16.mxu0 0
      %12197 = vmatpush1.bf16.msra.mxu0 %v8620
      %12198 = vmatprep.subr.bf16.mxu0 0
      %12199 = vmatpush1.bf16.msra.mxu0 %v8621
      %12200 = vmatprep.subr.bf16.mxu0 0
      %12201 = vmatpush1.bf16.msra.mxu0 %v8622
      %12202 = vmatprep.subr.bf16.mxu0 0
      %12203 = vmatpush1.bf16.msra.mxu0 %v8623
      %12204 = vmatprep.subr.bf16.mxu0 0
      %12205 = vmatpush1.bf16.msra.mxu0 %v8624
      %12206 = vmatprep.subr.bf16.mxu0 0
      %12207 = vmatpush1.bf16.msra.mxu0 %v8625
      %12208 = vmatprep.subr.bf16.mxu0 0
      %12209 = vmatpush1.bf16.msra.mxu0 %v8626
      %12210 = vmatprep.subr.bf16.mxu0 0
      %12211 = vmatpush1.bf16.msra.mxu0 %v8627
      %12212 = vmatprep.subr.bf16.mxu0 0
      %12213 = vmatpush1.bf16.msra.mxu0 %v8628
      %12214 = vmatprep.subr.bf16.mxu0 0
      %12215 = vmatpush1.bf16.msra.mxu0 %v8629
      %12216 = vmatprep.subr.bf16.mxu0 0
      %12217 = vmatpush1.bf16.msra.mxu0 %v8630
      %12218 = vmatprep.subr.bf16.mxu0 0
      %12219 = vmatpush1.bf16.msra.mxu0 %v8631
      %12220 = vmatprep.subr.bf16.mxu0 0
      %12221 = vmatpush1.bf16.msra.mxu0 %v8632
      %12222 = vmatprep.subr.bf16.mxu0 0
      %12223 = vmatpush1.bf16.msra.mxu0 %v8633
      %12224 = vmatprep.subr.bf16.mxu0 0
      %12225 = vmatpush1.bf16.msra.mxu0 %v8634
      %12226 = vmatprep.subr.bf16.mxu0 0
      %12227 = vmatpush1.bf16.msra.mxu0 %v8635
      %12228 = vmatprep.mubr.bf16.mxu0 %v3262
      %12229 = vmatmul.mubr.bf16.gmra.mrb[0].mxu0 %v3260
      %v12230 = vpop.f32.mrb[0].mxu0
      %v12231 = vadd.f32 %v12191, %v12230
      %v12232 = vpop.f32.mrb[0].mxu0
      %v12233 = vpop.f32.mrb[0].mxu0
      %v12234 = vpop.f32.mrb[0].mxu0
      %12235 = vdwg.mxu0
      %12236 = vmatprep.subr.bf16.mxu0 0
      %12237 = vmatpush1.bf16.msra.mxu0 %v8636
      %12238 = vmatprep.subr.bf16.mxu0 0
      %12239 = vmatpush1.bf16.msra.mxu0 %v8637
      %12240 = vmatprep.subr.bf16.mxu0 0
      %12241 = vmatpush1.bf16.msra.mxu0 %v8638
      %12242 = vmatprep.subr.bf16.mxu0 0
      %12243 = vmatpush1.bf16.msra.mxu0 %v8639
      %12244 = vmatprep.subr.bf16.mxu0 0
      %12245 = vmatpush1.bf16.msra.mxu0 %v8640
      %12246 = vmatprep.subr.bf16.mxu0 0
      %12247 = vmatpush1.bf16.msra.mxu0 %v8641
      %12248 = vmatprep.subr.bf16.mxu0 0
      %12249 = vmatpush1.bf16.msra.mxu0 %v8642
      %12250 = vmatprep.subr.bf16.mxu0 0
      %12251 = vmatpush1.bf16.msra.mxu0 %v8643
      %12252 = vmatprep.subr.bf16.mxu0 0
      %12253 = vmatpush1.bf16.msra.mxu0 %v8644
      %12254 = vmatprep.subr.bf16.mxu0 0
      %12255 = vmatpush1.bf16.msra.mxu0 %v8645
      %12256 = vmatprep.subr.bf16.mxu0 0
      %12257 = vmatpush1.bf16.msra.mxu0 %v8646
      %12258 = vmatprep.subr.bf16.mxu0 0
      %12259 = vmatpush1.bf16.msra.mxu0 %v8647
      %12260 = vmatprep.subr.bf16.mxu0 0
      %12261 = vmatpush1.bf16.msra.mxu0 %v8648
      %12262 = vmatprep.subr.bf16.mxu0 0
      %12263 = vmatpush1.bf16.msra.mxu0 %v8649
      %12264 = vmatprep.subr.bf16.mxu0 0
      %12265 = vmatpush1.bf16.msra.mxu0 %v8650
      %12266 = vmatprep.subr.bf16.mxu0 0
      %12267 = vmatpush1.bf16.msra.mxu0 %v8651
      %12268 = vmatprep.mubr.bf16.mxu0 %v3259
      %12269 = vmatmul.mubr.bf16.gmra.mrb[0].mxu0 %v3245
      %v12270 = vpop.f32.mrb[0].mxu0
      %v12271 = vadd.f32 %v12231, %v12270
      %v12272 = vpop.f32.mrb[0].mxu0
      %v12273 = vpop.f32.mrb[0].mxu0
      %v12274 = vpop.f32.mrb[0].mxu0
      %12275 = vdwg.mxu0
      %12276 = vmatprep.subr.bf16.mxu0 0
      %12277 = vmatpush1.bf16.msra.mxu0 %v8652
      %12278 = vmatprep.subr.bf16.mxu0 0
      %12279 = vmatpush1.bf16.msra.mxu0 %v8653
      %12280 = vmatprep.subr.bf16.mxu0 0
      %12281 = vmatpush1.bf16.msra.mxu0 %v8654
      %12282 = vmatprep.subr.bf16.mxu0 0
      %12283 = vmatpush1.bf16.msra.mxu0 %v8655
      %12284 = vmatprep.subr.bf16.mxu0 0
      %12285 = vmatpush1.bf16.msra.mxu0 %v8656
      %12286 = vmatprep.subr.bf16.mxu0 0
      %12287 = vmatpush1.bf16.msra.mxu0 %v8657
      %12288 = vmatprep.subr.bf16.mxu0 0
      %12289 = vmatpush1.bf16.msra.mxu0 %v8658
      %12290 = vmatprep.subr.bf16.mxu0 0
      %12291 = vmatpush1.bf16.msra.mxu0 %v8659
      %12292 = vmatprep.subr.bf16.mxu0 0
      %12293 = vmatpush1.bf16.msra.mxu0 %v8660
      %12294 = vmatprep.subr.bf16.mxu0 0
      %12295 = vmatpush1.bf16.msra.mxu0 %v8661
      %12296 = vmatprep.subr.bf16.mxu0 0
      %12297 = vmatpush1.bf16.msra.mxu0 %v8662
      %12298 = vmatprep.subr.bf16.mxu0 0
      %12299 = vmatpush1.bf16.msra.mxu0 %v8663
      %12300 = vmatprep.subr.bf16.mxu0 0
      %12301 = vmatpush1.bf16.msra.mxu0 %v8664
      %12302 = vmatprep.subr.bf16.mxu0 0
      %12303 = vmatpush1.bf16.msra.mxu0 %v8665
      %12304 = vmatprep.subr.bf16.mxu0 0
      %12305 = vmatpush1.bf16.msra.mxu0 %v8666
      %12306 = vmatprep.subr.bf16.mxu0 0
      %12307 = vmatpush1.bf16.msra.mxu0 %v8667
      %12308 = vmatprep.mubr.bf16.mxu0 %v3263
      %12309 = vmatmul.mubr.bf16.gmra.mrb[0].mxu0 %v3261
      %v12310 = vpop.f32.mrb[0].mxu0
      %v12311 = vadd.f32 %v12271, %v12310
      %v12312 = vpop.f32.mrb[0].mxu0
      %v12313 = vpop.f32.mrb[0].mxu0
      %v12314 = vpop.f32.mrb[0].mxu0
      %12315 = vdwg.mxu0
      %12316 = vmatprep.subr.bf16.mxu0 0
      %12317 = vmatpush1.bf16.msra.mxu0 %v8668
      %12318 = vmatprep.subr.bf16.mxu0 0
      %12319 = vmatpush1.bf16.msra.mxu0 %v8669
      %12320 = vmatprep.subr.bf16.mxu0 0
      %12321 = vmatpush1.bf16.msra.mxu0 %v8670
      %12322 = vmatprep.subr.bf16.mxu0 0
      %12323 = vmatpush1.bf16.msra.mxu0 %v8671
      %12324 = vmatprep.subr.bf16.mxu0 0
      %12325 = vmatpush1.bf16.msra.mxu0 %v8672
      %12326 = vmatprep.subr.bf16.mxu0 0
      %12327 = vmatpush1.bf16.msra.mxu0 %v8673
      %12328 = vmatprep.subr.bf16.mxu0 0
      %12329 = vmatpush1.bf16.msra.mxu0 %v8674
      %12330 = vmatprep.subr.bf16.mxu0 0
      %12331 = vmatpush1.bf16.msra.mxu0 %v8675
      %12332 = vmatprep.subr.bf16.mxu0 0
      %12333 = vmatpush1.bf16.msra.mxu0 %v8676
      %12334 = vmatprep.subr.bf16.mxu0 0
      %12335 = vmatpush1.bf16.msra.mxu0 %v8677
      %12336 = vmatprep.subr.bf16.mxu0 0
      %12337 = vmatpush1.bf16.msra.mxu0 %v8678
      %12338 = vmatprep.subr.bf16.mxu0 0
      %12339 = vmatpush1.bf16.msra.mxu0 %v8679
      %12340 = vmatprep.subr.bf16.mxu0 0
      %12341 = vmatpush1.bf16.msra.mxu0 %v8680
      %12342 = vmatprep.subr.bf16.mxu0 0
      %12343 = vmatpush1.bf16.msra.mxu0 %v8681
      %12344 = vmatprep.subr.bf16.mxu0 0
      %12345 = vmatpush1.bf16.msra.mxu0 %v8682
      %12346 = vmatprep.subr.bf16.mxu0 0
      %12347 = vmatpush1.bf16.msra.mxu0 %v8683
      %12348 = vmatprep.mubr.bf16.mxu0 %v3285
      %12349 = vmatmul.mubr.bf16.gmra.mrb[0].mxu0 %v3278
      %v12350 = vpop.f32.mrb[0].mxu0
      %v12351 = vadd.f32 %v12311, %v12350
      %v12352 = vpop.f32.mrb[0].mxu0
      %v12353 = vpop.f32.mrb[0].mxu0
      %v12354 = vpop.f32.mrb[0].mxu0
      %12355 = vdwg.mxu0
      %12356 = vmatprep.subr.bf16.mxu0 0
      %12357 = vmatpush1.bf16.msra.mxu0 %v8684
      %12358 = vmatprep.subr.bf16.mxu0 0
      %12359 = vmatpush1.bf16.msra.mxu0 %v8685
      %12360 = vmatprep.subr.bf16.mxu0 0
      %12361 = vmatpush1.bf16.msra.mxu0 %v8686
      %12362 = vmatprep.subr.bf16.mxu0 0
      %12363 = vmatpush1.bf16.msra.mxu0 %v8687
      %12364 = vmatprep.subr.bf16.mxu0 0
      %12365 = vmatpush1.bf16.msra.mxu0 %v8688
      %12366 = vmatprep.subr.bf16.mxu0 0
      %12367 = vmatpush1.bf16.msra.mxu0 %v8689
      %12368 = vmatprep.subr.bf16.mxu0 0
      %12369 = vmatpush1.bf16.msra.mxu0 %v8690
      %12370 = vmatprep.subr.bf16.mxu0 0
      %12371 = vmatpush1.bf16.msra.mxu0 %v8691
      %12372 = vmatprep.subr.bf16.mxu0 0
      %12373 = vmatpush1.bf16.msra.mxu0 %v8692
      %12374 = vmatprep.subr.bf16.mxu0 0
      %12375 = vmatpush1.bf16.msra.mxu0 %v8693
      %12376 = vmatprep.subr.bf16.mxu0 0
      %12377 = vmatpush1.bf16.msra.mxu0 %v8694
      %12378 = vmatprep.subr.bf16.mxu0 0
      %12379 = vmatpush1.bf16.msra.mxu0 %v8695
      %12380 = vmatprep.subr.bf16.mxu0 0
      %12381 = vmatpush1.bf16.msra.mxu0 %v8696
      %12382 = vmatprep.subr.bf16.mxu0 0
      %12383 = vmatpush1.bf16.msra.mxu0 %v8697
      %12384 = vmatprep.subr.bf16.mxu0 0
      %12385 = vmatpush1.bf16.msra.mxu0 %v8698
      %12386 = vmatprep.subr.bf16.mxu0 0
      %12387 = vmatpush1.bf16.msra.mxu0 %v8699
      %12388 = vmatprep.mubr.bf16.mxu0 %v3287
      %12389 = vmatmul.mubr.bf16.gmra.mrb[0].mxu0 %v3286
      %v12390 = vpop.f32.mrb[0].mxu0
      %v12391 = vadd.f32 %v12351, %v12390
      %v12392 = vpop.f32.mrb[0].mxu0
      %v12393 = vpop.f32.mrb[0].mxu0
      %v12394 = vpop.f32.mrb[0].mxu0
      %12395 = vdwg.mxu0
      %v12396 = vadd.f32 %v333, %v12391
      %vm12397 = vcmask 517120
      %12398 = vst.msk [vmem:[#allocation2] sm:$0x3] %vm12397, %v12396
      %p12399 = scmp.eq.s32.totalorder %s25, 1
      // Predicated region
      $region53: #{tpu_custom_call.1} parent=47 // pred_check
        %p12400 = pneg %p12399
      $region54: #{tpu_custom_call.1} parent=47 // pred_check_branch
        %12402 = sbr.rel (%p12400) target = $region56
      $region55: #{tpu_custom_call.1} parent=47 // pred_region
        %v12403 = vld [vmem:[#allocation2] sm:$0x3]
        %v12404 = vld [vmem:[%s2] sm:$0x1]
        %v12406 = vlaneseq
        %v12407 = vshrl.u32 %v12406, 7
        %v12408 = vsub.s32 0, %v12407
        %v12409 = vrot.slane %v12404, %v12408
        %v12411 = vadd.f32 %v12403, %v12409
        %vm12412 = vcmp.gt.f32.partialorder %v12411, 0.0
        %v12413 = vmul.f32 %v12411, 0.1
        %v12414 = vsel %vm12412, %v12411, %v12413
        %v12415 = vld [vmem:[%s3] sm:$0xff]
        %v12416 = vld [vmem:[%s3 + $0x8] sm:$0xff]
        %v12417 = vld [vmem:[%s3 + $0x10] sm:$0xff]
        %v12418 = vld [vmem:[%s3 + $0x18] sm:$0xff]
        %v12419 = vld [vmem:[%s3 + $0x20] sm:$0xff]
        %v12420 = vld [vmem:[%s3 + $0x28] sm:$0xff]
        %v12421 = vld [vmem:[%s3 + $0x30] sm:$0xff]
        %v12422 = vld [vmem:[%s3 + $0x38] sm:$0xff]
        %v12423 = vld [vmem:[%s4] sm:$0x1]
        %v12425 = vlaneseq
        %v12426 = vshrl.u32 %v12425, 7
        %v12427 = vsub.s32 0, %v12426
        %v12428 = vrot.slane %v12423, %v12427
        %vm12430 = vcmask 523264
        %v12432 = vsel %vm12430, %v12414, 0
        %12434 = vmatprep.subr.mxu0 0.0
        %12435 = vmatpush1.msra.mxu0 %v12415
        %12436 = vmatprep.subr.mxu0 0.0
        %12437 = vmatpush1.msra.mxu0 %v12416
        %12438 = vmatprep.subr.mxu0 0.0
        %12439 = vmatpush1.msra.mxu0 %v12417
        %12440 = vmatprep.subr.mxu0 0.0
        %12441 = vmatpush1.msra.mxu0 %v12418
        %12442 = vmatprep.subr.mxu0 0.0
        %12443 = vmatpush1.msra.mxu0 %v12419
        %12444 = vmatprep.subr.mxu0 0.0
        %12445 = vmatpush1.msra.mxu0 %v12420
        %12446 = vmatprep.subr.mxu0 0.0
        %12447 = vmatpush1.msra.mxu0 %v12421
        %12448 = vmatprep.subr.mxu0 0.0
        %12449 = vmatpush1.msra.mxu0 %v12422
        %12450 = vmatprep.subr.mxu0 0.0
        %12451 = vmatpush1.msra.mxu0 0.0
        %12452 = vmatprep.subr.mxu0 0.0
        %12453 = vmatpush1.msra.mxu0 0.0
        %12454 = vmatprep.subr.mxu0 0.0
        %12455 = vmatpush1.msra.mxu0 0.0
        %12456 = vmatprep.subr.mxu0 0.0
        %12457 = vmatpush1.msra.mxu0 0.0
        %12458 = vmatprep.subr.mxu0 0.0
        %12459 = vmatpush1.msra.mxu0 0.0
        %12460 = vmatprep.subr.mxu0 0.0
        %12461 = vmatpush1.msra.mxu0 0.0
        %12462 = vmatprep.subr.mxu0 0.0
        %12463 = vmatpush1.msra.mxu0 0.0
        %12464 = vmatprep.subr.mxu0 0.0
        %12465 = vmatpush1.msra.mxu0 0.0
        %12466 = vmatprep.subr.mxu0 0.0
        %12467 = vmatpush1.msra.mxu0 0.0
        %12468 = vmatprep.subr.mxu0 0.0
        %12469 = vmatpush1.msra.mxu0 0.0
        %12470 = vmatprep.subr.mxu0 0.0
        %12471 = vmatpush1.msra.mxu0 0.0
        %12472 = vmatprep.subr.mxu0 0.0
        %12473 = vmatpush1.msra.mxu0 0.0
        %12474 = vmatprep.subr.mxu0 0.0
        %12475 = vmatpush1.msra.mxu0 0.0
        %12476 = vmatprep.subr.mxu0 0.0
        %12477 = vmatpush1.msra.mxu0 0.0
        %12478 = vmatprep.subr.mxu0 0.0
        %12479 = vmatpush1.msra.mxu0 0.0
        %12480 = vmatprep.subr.mxu0 0.0
        %12481 = vmatpush1.msra.mxu0 0.0
        %12482 = vmatprep.subr.mxu0 0.0
        %12483 = vmatpush1.msra.mxu0 0.0
        %12484 = vmatprep.subr.mxu0 0.0
        %12485 = vmatpush1.msra.mxu0 0.0
        %12486 = vmatprep.subr.mxu0 0.0
        %12487 = vmatpush1.msra.mxu0 0.0
        %12488 = vmatprep.subr.mxu0 0.0
        %12489 = vmatpush1.msra.mxu0 0.0
        %12490 = vmatprep.subr.mxu0 0.0
        %12491 = vmatpush1.msra.mxu0 0.0
        %12492 = vmatprep.subr.mxu0 0.0
        %12493 = vmatpush1.msra.mxu0 0.0
        %12494 = vmatprep.subr.mxu0 0.0
        %12495 = vmatpush1.msra.mxu0 0.0
        %12496 = vmatprep.subr.mxu0 0.0
        %12497 = vmatpush1.msra.mxu0 0.0
        %12498 = vmatprep.mubr.f32.mxu0 0.0
        %12499 = vmatmul.mubr.f32.gmra.mrb[0].mxu0 %v12432
        %v12500 = vpop.f32.mrb[0].mxu0
        %v12501 = vadd.f32 %v12428, %v12500
        %v12502 = vpop.f32.mrb[0].mxu0
        %12503 = vdwg.mxu0
        %vm12504 = vcmp.gt.f32.partialorder %v12501, 0.0
        %v12505 = vmul.f32 %v12501, 0.1
        %v12506 = vsel %vm12504, %v12501, %v12505
        %v12507 = vld [vmem:[%s5] sm:$0xff]
        %v12508 = vld [vmem:[%s5 + $0x8] sm:$0xff]
        %v12509 = vld [vmem:[%s5 + $0x10] sm:$0xff]
        %v12510 = vld [vmem:[%s5 + $0x18] sm:$0xff]
        %v12511 = vld [vmem:[%s5 + $0x20] sm:$0xff]
        %v12512 = vld [vmem:[%s5 + $0x28] sm:$0xff]
        %v12513 = vld [vmem:[%s5 + $0x30] sm:$0xff]
        %v12514 = vld [vmem:[%s5 + $0x38] sm:$0xff]
        %v12515 = vld [vmem:[#allocation3] sm:$0x1]
        %v12517 = vlaneseq
        %v12518 = vshrl.u32 %v12517, 7
        %v12519 = vsub.s32 0, %v12518
        %v12520 = vrot.slane %v12515, %v12519
        %v12523 = vsel %vm12430, %v12506, 0
        %12525 = vmatprep.subr.mxu0 0.0
        %12526 = vmatpush1.msra.mxu0 %v12507
        %12527 = vmatprep.subr.mxu0 0.0
        %12528 = vmatpush1.msra.mxu0 %v12508
        %12529 = vmatprep.subr.mxu0 0.0
        %12530 = vmatpush1.msra.mxu0 %v12509
        %12531 = vmatprep.subr.mxu0 0.0
        %12532 = vmatpush1.msra.mxu0 %v12510
        %12533 = vmatprep.subr.mxu0 0.0
        %12534 = vmatpush1.msra.mxu0 %v12511
        %12535 = vmatprep.subr.mxu0 0.0
        %12536 = vmatpush1.msra.mxu0 %v12512
        %12537 = vmatprep.subr.mxu0 0.0
        %12538 = vmatpush1.msra.mxu0 %v12513
        %12539 = vmatprep.subr.mxu0 0.0
        %12540 = vmatpush1.msra.mxu0 %v12514
        %12541 = vmatprep.subr.mxu0 0.0
        %12542 = vmatpush1.msra.mxu0 0.0
        %12543 = vmatprep.subr.mxu0 0.0
        %12544 = vmatpush1.msra.mxu0 0.0
        %12545 = vmatprep.subr.mxu0 0.0
        %12546 = vmatpush1.msra.mxu0 0.0
        %12547 = vmatprep.subr.mxu0 0.0
        %12548 = vmatpush1.msra.mxu0 0.0
        %12549 = vmatprep.subr.mxu0 0.0
        %12550 = vmatpush1.msra.mxu0 0.0
        %12551 = vmatprep.subr.mxu0 0.0
        %12552 = vmatpush1.msra.mxu0 0.0
        %12553 = vmatprep.subr.mxu0 0.0
        %12554 = vmatpush1.msra.mxu0 0.0
        %12555 = vmatprep.subr.mxu0 0.0
        %12556 = vmatpush1.msra.mxu0 0.0
        %12557 = vmatprep.subr.mxu0 0.0
        %12558 = vmatpush1.msra.mxu0 0.0
        %12559 = vmatprep.subr.mxu0 0.0
        %12560 = vmatpush1.msra.mxu0 0.0
        %12561 = vmatprep.subr.mxu0 0.0
        %12562 = vmatpush1.msra.mxu0 0.0
        %12563 = vmatprep.subr.mxu0 0.0
        %12564 = vmatpush1.msra.mxu0 0.0
        %12565 = vmatprep.subr.mxu0 0.0
        %12566 = vmatpush1.msra.mxu0 0.0
        %12567 = vmatprep.subr.mxu0 0.0
        %12568 = vmatpush1.msra.mxu0 0.0
        %12569 = vmatprep.subr.mxu0 0.0
        %12570 = vmatpush1.msra.mxu0 0.0
        %12571 = vmatprep.subr.mxu0 0.0
        %12572 = vmatpush1.msra.mxu0 0.0
        %12573 = vmatprep.subr.mxu0 0.0
        %12574 = vmatpush1.msra.mxu0 0.0
        %12575 = vmatprep.subr.mxu0 0.0
        %12576 = vmatpush1.msra.mxu0 0.0
        %12577 = vmatprep.subr.mxu0 0.0
        %12578 = vmatpush1.msra.mxu0 0.0
        %12579 = vmatprep.subr.mxu0 0.0
        %12580 = vmatpush1.msra.mxu0 0.0
        %12581 = vmatprep.subr.mxu0 0.0
        %12582 = vmatpush1.msra.mxu0 0.0
        %12583 = vmatprep.subr.mxu0 0.0
        %12584 = vmatpush1.msra.mxu0 0.0
        %12585 = vmatprep.subr.mxu0 0.0
        %12586 = vmatpush1.msra.mxu0 0.0
        %12587 = vmatprep.subr.mxu0 0.0
        %12588 = vmatpush1.msra.mxu0 0.0
        %12589 = vmatprep.mubr.f32.mxu0 0.0
        %12590 = vmatmul.mubr.f32.gmra.mrb[0].mxu0 %v12523
        %v12591 = vpop.f32.mrb[0].mxu0
        %v12592 = vadd.f32 %v12520, %v12591
        %v12593 = vpop.f32.mrb[0].mxu0
        %12594 = vdwg.mxu0
        %vm12595 = vcmask 1024
        %12596 = vst.msk [vmem:[%s325] sm:$0x3] %vm12595, %v12592
      $region56: #{tpu_custom_call.1} parent=47 // pred_fallthru
        _
      %p12597 = scmp.lt.s32.totalorder %s24, 0
      %s12598 = scalar_select %p12597, %s24, 0
      %s12599 = smul.addr %s12598, 2
      %s12600 = scalar_lea.vmem %s7, %s12599
      // Predicated region
      $region57: #{tpu_custom_call.1} parent=47 // pred_check
        %p12601 = pneg %p209
      $region58: #{tpu_custom_call.1} parent=47 // pred_check_branch
        %12603 = sbr.rel (%p12601) target = $region60
      $region59: #{tpu_custom_call.1} parent=47 // pred_region
        _
      $region60: #{tpu_custom_call.1} parent=47 // pred_fallthru
        _
      // Predicated region
      $region61: #{tpu_custom_call.1} parent=47 // pred_check
        %p12604 = pneg %p209
      $region62: #{tpu_custom_call.1} parent=47 // pred_check_branch
        %12606 = sbr.rel (%p12604) target = $region64
      $region63: #{tpu_custom_call.1} parent=47 // pred_region
        %p12607 = scmp.lt.s32.totalorder %s24, 0
        %s12608 = scalar_select %p12607, %s24, 0
        %s12609 = smul.addr %s12608, 2
        %s12610 = scalar_lea.vmem %s7, %s12609
      $region64: #{tpu_custom_call.1} parent=47 // pred_fallthru
        _
    $region48: #{tpu_custom_call.1} parent=5 // pred_fallthru
      _
    %p12611 = scmp.le.s32.totalorder 2, %s15
    // Predicated region
    $region65: #{tpu_custom_call.1} parent=5 // pred_check
      %p12612 = pneg %p12611
    $region66: #{tpu_custom_call.1} parent=5 // pred_check_branch
      %12614 = sbr.rel (%p12612) target = $region68
    $region67: #{tpu_custom_call.1} parent=5 // pred_region
      %s12615 = ssub.s32 %s15, 2
    $region68: #{tpu_custom_call.1} parent=5 // pred_fallthru
      _
  $region6: #{tpu_custom_call.1} parent=0 // loop_footer
    %s19 = sadd.s32 1, %s15
  $region7: #{tpu_custom_call.1} parent=0 // loop_footer_branch
    %14 = sbr.rel target = $region3
  $region8: #{tpu_custom_call.1} parent=0 // loop_exit
    _

</llo_original>
